<compile_context>
chip_gen: v6e
topology: v6e:2x2x1
jax: 0.10.0
libtpu: 0.0.40
codegen_flags: <defaults>
</compile_context>

<pallas_src>
import numpy as np
import jax
import jax.numpy as jnp
from jax.experimental import pallas as pl
from jax.experimental.pallas import tpu as pltpu

DIFFUSION_LEVELS = 16
SCALES = (0, 1, 2, 4, 8, 16)          # default scale_list of HyperScatteringModule
NUM_WAVELETS = len(SCALES)


def _default_wavelet_constructor():
    # Identical to the default torch.nn.Parameter in HyperScatteringModule.__init__.
    W = np.zeros((NUM_WAVELETS, DIFFUSION_LEVELS + 1), dtype=np.float32)
    for i in range(NUM_WAVELETS - 1):
        W[i, SCALES[i]] = 1.0
        W[i, SCALES[i + 1]] = -1.0
    W[-1, -1] = 1.0
    return W


WAVELET_CONSTRUCTOR = _default_wavelet_constructor()   # used by the numpy reference


def _round_up(x, m):
    return ((x + m - 1) // m) * m


def _vmem_budget_bytes():
    """Physical per-core VMEM minus headroom (v7x=64MiB is the binding case)."""
    try:
        cap = int(pltpu.get_tpu_info().vmem_capacity_bytes)
    except Exception:
        cap = 64 * 2**20            # conservative: v7x per-TensorCore capacity
    return cap - 8 * 2**20          # headroom for Mosaic internal scratch


def _vmem_estimate(n_pad, e_pad, tf, cdt_size, out_size, b_bufs):
    b_bytes = 2 * n_pad * e_pad * cdt_size * b_bufs                 # resident B and B^T
    in_bytes = 2 * (n_pad + e_pad) * tf * cdt_size                  # double-buffered x/attr tiles
    out_bytes = 2 * NUM_WAVELETS * (n_pad + e_pad) * tf * out_size  # double-buffered outputs
    tmp_bytes = 4 * (n_pad + e_pad) * tf * 4                        # live f32 loop temporaries
    return b_bytes + in_bytes + out_bytes + tmp_bytes


def hyper_scattering_kernel(b_ref, bt_ref, x_ref, attr_ref, node_out_ref, edge_out_ref):
    # b_ref        : VMEM (N_pad, E_pad)   B  = Dv^-1 H Dhe^-1   (resident across grid)
    # bt_ref       : VMEM (E_pad, N_pad)   B^T (resident; avoids per-step transposed dots)
    # x_ref        : VMEM (N_pad, TF)      node-feature tile (diffusion level 0)
    # attr_ref     : VMEM (E_pad, TF)      hyperedge_attr tile (edge level 0)
    # node_out_ref : VMEM (6, N_pad, TF)   wavelet node embeddings (w, n, f)
    # edge_out_ref : VMEM (6, E_pad, TF)   wavelet edge embeddings (w, e, f)
    B = b_ref[...]
    Bt = bt_ref[...]
    node_op = x_ref[...]                              # matmul operand (compute dtype)
    prev_node = node_op.astype(jnp.float32)           # level-0 snapshots kept in f32
    prev_edge = attr_ref[...].astype(jnp.float32)
    node_f32 = prev_node
    edge_f32 = prev_edge

    w = 0
    for t in range(1, DIFFUSION_LEVELS + 1):
        # 'right'-normalized diffusion with the normalization folded into B:
        #   edge_t = B^T @ node_{t-1}    node_t = B @ edge_t
        # Operands stay in compute dtype (bf16 fast path), accumulation in f32.
        edge_f32 = jnp.dot(Bt, node_op, preferred_element_type=jnp.float32)
        node_f32 = jnp.dot(B, edge_f32.astype(B.dtype), preferred_element_type=jnp.float32)
        node_op = node_f32.astype(B.dtype)
        if t in SCALES:
            # Difference-of-diffusion wavelet: W[w] = level[scales[w]] - level[scales[w+1]]
            node_out_ref[w, :, :] = (prev_node - node_f32).astype(node_out_ref.dtype)
            edge_out_ref[w, :, :] = (prev_edge - edge_f32).astype(edge_out_ref.dtype)
            prev_node = node_f32
            prev_edge = edge_f32
            w += 1
    # Last wavelet row is the raw deepest diffusion level.
    node_out_ref[NUM_WAVELETS - 1, :, :] = node_f32.astype(node_out_ref.dtype)
    edge_out_ref[NUM_WAVELETS - 1, :, :] = edge_f32.astype(edge_out_ref.dtype)


def hyper_scattering(x, hyperedge_index, hyperedge_attr, hyperedge_weight=None,
                     num_edges=None, compute_dtype=jnp.bfloat16):
    """Forward pass of HyperScatteringModule (default config)."""
    num_nodes, feat = x.shape
    if num_edges is None:
        # NOTE: prefer passing num_edges statically — this forces a host sync.
        num_edges = int(hyperedge_index[1].max()) + 1
    if hyperedge_weight is None:
        hyperedge_weight = jnp.ones((num_edges,), jnp.float32)

    # --- Dense incidence + 'right' degree normalization, once in the wrapper. ---
    # Note: as in the PyTorch reference, hyperedge_weight enters ONLY the node degrees
    # d_v (D_v_inv); the message passing itself carries no extra weight factor.
    H = jnp.zeros((num_nodes, num_edges), jnp.float32).at[
        hyperedge_index[0], hyperedge_index[1]].add(1.0)
    d_v = H @ hyperedge_weight.astype(jnp.float32)    # (N,) weighted node degrees
    d_he = jnp.sum(H, axis=0)                         # (E,) hyperedge degrees
    d_v_inv = jnp.where(d_v > 0, 1.0 / jnp.where(d_v > 0, d_v, 1.0), 0.0)
    d_he_inv = jnp.where(d_he > 0, 1.0 / jnp.where(d_he > 0, d_he, 1.0), 0.0)
    B = d_v_inv[:, None] * H * d_he_inv[None, :]      # (N, E), f32

    compute_dtype = jnp.dtype(compute_dtype)
    out_dtype = jnp.float32 if compute_dtype == jnp.dtype(jnp.float32) else jnp.bfloat16
    cdt_size = compute_dtype.itemsize
    out_size = jnp.dtype(out_dtype).itemsize

    # --- Padding: N/E to 128 (full MXU lanes / contraction width), F per VMEM budget. ---
    n_pad = _round_up(num_nodes, 128)
    e_pad = _round_up(num_edges, 128)

    budget = _vmem_budget_bytes()
    f_base = _round_up(feat, 128)
    tf = min(512, f_base)
    if f_base >= 256:
        # keep >= 2 feature tiles so the 'parallel' grid axis spans both v7x TensorCores
        tf = min(tf, max(128, ((f_base // 2) // 128) * 128))
    while tf > 128 and _vmem_estimate(n_pad, e_pad, tf, cdt_size, out_size, 1) > budget:
        tf -= 128
    f_pad = _round_up(feat, tf)

    B_pad = jnp.pad(B, ((0, n_pad - num_nodes), (0, e_pad - num_edges))).astype(compute_dtype)
    Bt_pad = B_pad.T                                  # transposed ONCE, outside the loop
    x_pad = jnp.pad(x.astype(compute_dtype),
                    ((0, n_pad - num_nodes), (0, f_pad - feat)))
    attr_pad = jnp.pad(hyperedge_attr.astype(compute_dtype),
                       ((0, e_pad - num_edges), (0, f_pad - feat)))

    # --- VMEM limit: request what we need, clamped to physical capacity - headroom. ---
    est = _vmem_estimate(n_pad, e_pad, tf, cdt_size, out_size, 2)   # worst case (no Buffered(1))
    vmem_limit = int(min(budget, max(32 * 2**20, int(1.25 * est))))

    flops = 2 * 2 * DIFFUSION_LEVELS * n_pad * e_pad * f_pad
    bytes_accessed = int((2 * n_pad * e_pad + (n_pad + e_pad) * f_pad) * cdt_size
                         + NUM_WAVELETS * (n_pad + e_pad) * f_pad * out_size)
    cost = pl.CostEstimate(flops=flops, transcendentals=0, bytes_accessed=bytes_accessed)

    grid = (f_pad // tf,)

    def _build(single_buffer_b):
        # B / B^T have constant index_maps -> they are DMA'd once; single-buffer them
        # so they don't cost 2x VMEM. Fall back to default buffering if unsupported.
        resident_kwargs = dict(pipeline_mode=pl.Buffered(1)) if single_buffer_b else {}
        return pl.pallas_call(
            hyper_scattering_kernel,
            out_shape=(
                jax.ShapeDtypeStruct((NUM_WAVELETS, n_pad, f_pad), out_dtype),
                jax.ShapeDtypeStruct((NUM_WAVELETS, e_pad, f_pad), out_dtype),
            ),
            grid=grid,
            in_specs=[
                pl.BlockSpec((n_pad, e_pad), lambda j: (0, 0), **resident_kwargs),  # B
                pl.BlockSpec((e_pad, n_pad), lambda j: (0, 0), **resident_kwargs),  # B^T
                pl.BlockSpec((n_pad, tf), lambda j: (0, j)),                         # x tile
                pl.BlockSpec((e_pad, tf), lambda j: (0, j)),                         # attr tile
            ],
            out_specs=(
                pl.BlockSpec((NUM_WAVELETS, n_pad, tf), lambda j: (0, 0, j)),
                pl.BlockSpec((NUM_WAVELETS, e_pad, tf), lambda j: (0, 0, j)),
            ),
            compiler_params=pltpu.CompilerParams(
                dimension_semantics=("parallel",),
                vmem_limit_bytes=vmem_limit,
            ),
            cost_estimate=cost,
        )

    try:
        node_out, edge_out = _build(True)(B_pad, Bt_pad, x_pad, attr_pad)
    except Exception:
        # Older jax without BlockSpec pipeline_mode / Buffered(1): default buffering.
        node_out, edge_out = _build(False)(B_pad, Bt_pad, x_pad, attr_pad)

    # rearrange 'w n f -> n (w f)' (and crop padding) in the wrapper; return f32 to
    # match the PyTorch module's float output.
    node_emb = jnp.transpose(node_out[:, :num_nodes, :feat], (1, 0, 2)).reshape(
        num_nodes, NUM_WAVELETS * feat).astype(jnp.float32)
    edge_emb = jnp.transpose(edge_out[:, :num_edges, :feat], (1, 0, 2)).reshape(
        num_edges, NUM_WAVELETS * feat).astype(jnp.float32)
    return node_emb, edge_emb


def _reference_numpy(x, hyperedge_index, hyperedge_attr, num_edges):
    """Pure numpy re-implementation of the PyTorch forward (float64)."""
    N, F = x.shape
    H = np.zeros((N, num_edges), np.float64)
    np.add.at(H, (hyperedge_index[0], hyperedge_index[1]), 1.0)
    w = np.ones(num_edges, np.float64)
    d_v = H @ w
    d_v_inv = np.where(d_v == 0.0, 0.0, 1.0 / np.where(d_v == 0.0, 1.0, d_v))[:, None]
    d_he = H.sum(axis=0)
    d_he_inv = np.where(d_he == 0.0, 0.0, 1.0 / np.where(d_he == 0.0, 1.0, d_he))[:, None]

    node_feats = [x.astype(np.float64)]
    edge_feats = [hyperedge_attr.astype(np.float64)]
    for _ in range(DIFFUSION_LEVELS):
        e = d_he_inv * (H.T @ (d_v_inv * node_feats[-1]))
        n = d_v_inv * (H @ (d_he_inv * e))
        node_feats.append(n)
        edge_feats.append(e)

    W = WAVELET_CONSTRUCTOR.astype(np.float64)
    node_lv = np.stack(node_feats)   # (17, N, F)
    edge_lv = np.stack(edge_feats)   # (17, E, F)
    node_emb = np.einsum('ij,jkl->ikl', W, node_lv)   # (6, N, F)
    edge_emb = np.einsum('ij,jkl->ikl', W, edge_lv)   # (6, E, F)
    node_emb = np.transpose(node_emb, (1, 0, 2)).reshape(N, -1)        # n (w f)
    edge_emb = np.transpose(edge_emb, (1, 0, 2)).reshape(num_edges, -1)
    return node_emb, edge_emb


if __name__ == "__main__":
    N, E, F, M = 16, 8, 4, 32   # nodes, hyperedges, channels, incidences

    key = jax.random.PRNGKey(0)
    k_x, k_attr, k_idx = jax.random.split(key, 3)
    x = jax.random.normal(k_x, (N, F), jnp.float32)
    hyperedge_attr = jax.random.normal(k_attr, (E, F), jnp.float32)
    node_idx = jax.random.randint(k_idx, (M,), 0, N, dtype=jnp.int32)
    edge_idx = jnp.arange(M, dtype=jnp.int32) % E    # every edge index present
    hyperedge_index = jnp.stack([node_idx, edge_idx], axis=0)  # (2, M)

    node_ref, edge_ref = _reference_numpy(np.asarray(x), np.asarray(hyperedge_index),
                                          np.asarray(hyperedge_attr), E)

    # f32 compute path: tight structural check of the kernel.
    node_f32, edge_f32 = hyper_scattering(x, hyperedge_index, hyperedge_attr,
                                          num_edges=E, compute_dtype=jnp.float32)
    jax.block_until_ready((node_f32, edge_f32))
    assert node_f32.shape == (N, NUM_WAVELETS * F)
    assert edge_f32.shape == (E, NUM_WAVELETS * F)
    assert np.allclose(np.asarray(node_f32), node_ref, atol=1e-3, rtol=1e-3)
    assert np.allclose(np.asarray(edge_f32), edge_ref, atol=1e-3, rtol=1e-3)

    # Default bf16-operand fast path (f32 accumulation): looser tolerance for the
    # 16-step compounding of bf16 operand rounding.
    node_emb, edge_emb = hyper_scattering(x, hyperedge_index, hyperedge_attr, num_edges=E)
    jax.block_until_ready((node_emb, edge_emb))
    assert node_emb.shape == (N, NUM_WAVELETS * F)
    assert edge_emb.shape == (E, NUM_WAVELETS * F)
    assert np.allclose(np.asarray(node_emb), node_ref, atol=5e-2, rtol=5e-2)
    assert np.allclose(np.asarray(edge_emb), edge_ref, atol=5e-2, rtol=5e-2)

    print("KERNEL_OK")
</pallas_src>

<mosaic_0001>
module attributes {stable_mosaic.version = 11 : i64} {
  func.func @hyper_scattering_kernel(%arg0: i32, %arg1: memref<128x128xf32, #tpu.memory_space<vmem>>, %arg2: memref<128x128xf32, #tpu.memory_space<vmem>>, %arg3: memref<128x128xf32, #tpu.memory_space<vmem>>, %arg4: memref<128x128xf32, #tpu.memory_space<vmem>>, %arg5: memref<6x128x128xf32, #tpu.memory_space<vmem>>, %arg6: memref<6x128x128xf32, #tpu.memory_space<vmem>>) attributes {dimension_semantics = [#tpu.dimension_semantics<parallel>], iteration_bounds = array<i64: 1>, scalar_prefetch = 0 : i64, scratch_operands = 0 : i64, tpu.core_type = #tpu.core_type<tc>, window_params = [{pipeline_mode = #tpu.pipeline_mode<synchronous>, transform_indices = @transform_0, window_bounds = array<i64: 128, 128>}, {pipeline_mode = #tpu.pipeline_mode<synchronous>, transform_indices = @transform_1, window_bounds = array<i64: 128, 128>}, {transform_indices = @transform_2, window_bounds = array<i64: 128, 128>}, {transform_indices = @transform_3, window_bounds = array<i64: 128, 128>}, {transform_indices = @transform_4, window_bounds = array<i64: 6, 128, 128>}, {transform_indices = @transform_5, window_bounds = array<i64: 6, 128, 128>}]} {
    %c0 = arith.constant 0 : index
    %c0_0 = arith.constant 0 : index
    %0 = vector.load %arg1[%c0, %c0_0] : memref<128x128xf32, #tpu.memory_space<vmem>>, vector<128x128xf32>
    %c0_1 = arith.constant 0 : index
    %c0_2 = arith.constant 0 : index
    %1 = vector.load %arg2[%c0_1, %c0_2] : memref<128x128xf32, #tpu.memory_space<vmem>>, vector<128x128xf32>
    %c0_3 = arith.constant 0 : index
    %c0_4 = arith.constant 0 : index
    %2 = vector.load %arg3[%c0_3, %c0_4] : memref<128x128xf32, #tpu.memory_space<vmem>>, vector<128x128xf32>
    %c0_5 = arith.constant 0 : index
    %c0_6 = arith.constant 0 : index
    %3 = vector.load %arg4[%c0_5, %c0_6] : memref<128x128xf32, #tpu.memory_space<vmem>>, vector<128x128xf32>
    %cst = arith.constant dense<0.000000e+00> : vector<128x128xf32>
    %4 = tpu.matmul %1, %2, %cst {dimension_numbers = #tpu.dot_dimension_numbers<[1], [0], [0], [1], [0, 0, 1, 1], [], []>} : vector<128x128xf32>, vector<128x128xf32>, vector<128x128xf32> -> vector<128x128xf32>
    %cst_7 = arith.constant dense<0.000000e+00> : vector<128x128xf32>
    %5 = tpu.matmul %0, %4, %cst_7 {dimension_numbers = #tpu.dot_dimension_numbers<[1], [0], [0], [1], [0, 0, 1, 1], [], []>} : vector<128x128xf32>, vector<128x128xf32>, vector<128x128xf32> -> vector<128x128xf32>
    %6 = arith.subf %2, %5 : vector<128x128xf32>
    %c0_8 = arith.constant 0 : index
    %c0_9 = arith.constant 0 : index
    %c0_10 = arith.constant 0 : index
    %7 = vector.load %arg5[%c0_8, %c0_9, %c0_10] : memref<6x128x128xf32, #tpu.memory_space<vmem>>, vector<1x128x128xf32>
    %8 = vector.shape_cast %7 : vector<1x128x128xf32> to vector<128x128xf32>
    %9 = vector.shape_cast %6 : vector<128x128xf32> to vector<1x128x128xf32>
    tpu.vector_store %arg5[%c0_8, %c0_9, %c0_10], %9 {strides = array<i32>} : memref<6x128x128xf32, #tpu.memory_space<vmem>>, vector<1x128x128xf32>,
    %10 = arith.subf %3, %4 : vector<128x128xf32>
    %c0_11 = arith.constant 0 : index
    %c0_12 = arith.constant 0 : index
    %c0_13 = arith.constant 0 : index
    %11 = vector.load %arg6[%c0_11, %c0_12, %c0_13] : memref<6x128x128xf32, #tpu.memory_space<vmem>>, vector<1x128x128xf32>
    %12 = vector.shape_cast %11 : vector<1x128x128xf32> to vector<128x128xf32>
    %13 = vector.shape_cast %10 : vector<128x128xf32> to vector<1x128x128xf32>
    tpu.vector_store %arg6[%c0_11, %c0_12, %c0_13], %13 {strides = array<i32>} : memref<6x128x128xf32, #tpu.memory_space<vmem>>, vector<1x128x128xf32>,
    %cst_14 = arith.constant dense<0.000000e+00> : vector<128x128xf32>
    %14 = tpu.matmul %1, %5, %cst_14 {dimension_numbers = #tpu.dot_dimension_numbers<[1], [0], [0], [1], [0, 0, 1, 1], [], []>} : vector<128x128xf32>, vector<128x128xf32>, vector<128x128xf32> -> vector<128x128xf32>
    %cst_15 = arith.constant dense<0.000000e+00> : vector<128x128xf32>
    %15 = tpu.matmul %0, %14, %cst_15 {dimension_numbers = #tpu.dot_dimension_numbers<[1], [0], [0], [1], [0, 0, 1, 1], [], []>} : vector<128x128xf32>, vector<128x128xf32>, vector<128x128xf32> -> vector<128x128xf32>
    %16 = arith.subf %5, %15 : vector<128x128xf32>
    %c1 = arith.constant 1 : index
    %c0_16 = arith.constant 0 : index
    %c0_17 = arith.constant 0 : index
    %17 = vector.load %arg5[%c1, %c0_16, %c0_17] : memref<6x128x128xf32, #tpu.memory_space<vmem>>, vector<1x128x128xf32>
    %18 = vector.shape_cast %17 : vector<1x128x128xf32> to vector<128x128xf32>
    %19 = vector.shape_cast %16 : vector<128x128xf32> to vector<1x128x128xf32>
    tpu.vector_store %arg5[%c1, %c0_16, %c0_17], %19 {strides = array<i32>} : memref<6x128x128xf32, #tpu.memory_space<vmem>>, vector<1x128x128xf32>,
    %20 = arith.subf %4, %14 : vector<128x128xf32>
    %c1_18 = arith.constant 1 : index
    %c0_19 = arith.constant 0 : index
    %c0_20 = arith.constant 0 : index
    %21 = vector.load %arg6[%c1_18, %c0_19, %c0_20] : memref<6x128x128xf32, #tpu.memory_space<vmem>>, vector<1x128x128xf32>
    %22 = vector.shape_cast %21 : vector<1x128x128xf32> to vector<128x128xf32>
    %23 = vector.shape_cast %20 : vector<128x128xf32> to vector<1x128x128xf32>
    tpu.vector_store %arg6[%c1_18, %c0_19, %c0_20], %23 {strides = array<i32>} : memref<6x128x128xf32, #tpu.memory_space<vmem>>, vector<1x128x128xf32>,
    %cst_21 = arith.constant dense<0.000000e+00> : vector<128x128xf32>
    %24 = tpu.matmul %1, %15, %cst_21 {dimension_numbers = #tpu.dot_dimension_numbers<[1], [0], [0], [1], [0, 0, 1, 1], [], []>} : vector<128x128xf32>, vector<128x128xf32>, vector<128x128xf32> -> vector<128x128xf32>
    %cst_22 = arith.constant dense<0.000000e+00> : vector<128x128xf32>
    %25 = tpu.matmul %0, %24, %cst_22 {dimension_numbers = #tpu.dot_dimension_numbers<[1], [0], [0], [1], [0, 0, 1, 1], [], []>} : vector<128x128xf32>, vector<128x128xf32>, vector<128x128xf32> -> vector<128x128xf32>
    %cst_23 = arith.constant dense<0.000000e+00> : vector<128x128xf32>
    %26 = tpu.matmul %1, %25, %cst_23 {dimension_numbers = #tpu.dot_dimension_numbers<[1], [0], [0], [1], [0, 0, 1, 1], [], []>} : vector<128x128xf32>, vector<128x128xf32>, vector<128x128xf32> -> vector<128x128xf32>
    %cst_24 = arith.constant dense<0.000000e+00> : vector<128x128xf32>
    %27 = tpu.matmul %0, %26, %cst_24 {dimension_numbers = #tpu.dot_dimension_numbers<[1], [0], [0], [1], [0, 0, 1, 1], [], []>} : vector<128x128xf32>, vector<128x128xf32>, vector<128x128xf32> -> vector<128x128xf32>
    %28 = arith.subf %15, %27 : vector<128x128xf32>
    %c2 = arith.constant 2 : index
    %c0_25 = arith.constant 0 : index
    %c0_26 = arith.constant 0 : index
    %29 = vector.load %arg5[%c2, %c0_25, %c0_26] : memref<6x128x128xf32, #tpu.memory_space<vmem>>, vector<1x128x128xf32>
    %30 = vector.shape_cast %29 : vector<1x128x128xf32> to vector<128x128xf32>
    %31 = vector.shape_cast %28 : vector<128x128xf32> to vector<1x128x128xf32>
    tpu.vector_store %arg5[%c2, %c0_25, %c0_26], %31 {strides = array<i32>} : memref<6x128x128xf32, #tpu.memory_space<vmem>>, vector<1x128x128xf32>,
    %32 = arith.subf %14, %26 : vector<128x128xf32>
    %c2_27 = arith.constant 2 : index
    %c0_28 = arith.constant 0 : index
    %c0_29 = arith.constant 0 : index
    %33 = vector.load %arg6[%c2_27, %c0_28, %c0_29] : memref<6x128x128xf32, #tpu.memory_space<vmem>>, vector<1x128x128xf32>
    %34 = vector.shape_cast %33 : vector<1x128x128xf32> to vector<128x128xf32>
    %35 = vector.shape_cast %32 : vector<128x128xf32> to vector<1x128x128xf32>
    tpu.vector_store %arg6[%c2_27, %c0_28, %c0_29], %35 {strides = array<i32>} : memref<6x128x128xf32, #tpu.memory_space<vmem>>, vector<1x128x128xf32>,
    %cst_30 = arith.constant dense<0.000000e+00> : vector<128x128xf32>
    %36 = tpu.matmul %1, %27, %cst_30 {dimension_numbers = #tpu.dot_dimension_numbers<[1], [0], [0], [1], [0, 0, 1, 1], [], []>} : vector<128x128xf32>, vector<128x128xf32>, vector<128x128xf32> -> vector<128x128xf32>
    %cst_31 = arith.constant dense<0.000000e+00> : vector<128x128xf32>
    %37 = tpu.matmul %0, %36, %cst_31 {dimension_numbers = #tpu.dot_dimension_numbers<[1], [0], [0], [1], [0, 0, 1, 1], [], []>} : vector<128x128xf32>, vector<128x128xf32>, vector<128x128xf32> -> vector<128x128xf32>
    %cst_32 = arith.constant dense<0.000000e+00> : vector<128x128xf32>
    %38 = tpu.matmul %1, %37, %cst_32 {dimension_numbers = #tpu.dot_dimension_numbers<[1], [0], [0], [1], [0, 0, 1, 1], [], []>} : vector<128x128xf32>, vector<128x128xf32>, vector<128x128xf32> -> vector<128x128xf32>
    %cst_33 = arith.constant dense<0.000000e+00> : vector<128x128xf32>
    %39 = tpu.matmul %0, %38, %cst_33 {dimension_numbers = #tpu.dot_dimension_numbers<[1], [0], [0], [1], [0, 0, 1, 1], [], []>} : vector<128x128xf32>, vector<128x128xf32>, vector<128x128xf32> -> vector<128x128xf32>
    %cst_34 = arith.constant dense<0.000000e+00> : vector<128x128xf32>
    %40 = tpu.matmul %1, %39, %cst_34 {dimension_numbers = #tpu.dot_dimension_numbers<[1], [0], [0], [1], [0, 0, 1, 1], [], []>} : vector<128x128xf32>, vector<128x128xf32>, vector<128x128xf32> -> vector<128x128xf32>
    %cst_35 = arith.constant dense<0.000000e+00> : vector<128x128xf32>
    %41 = tpu.matmul %0, %40, %cst_35 {dimension_numbers = #tpu.dot_dimension_numbers<[1], [0], [0], [1], [0, 0, 1, 1], [], []>} : vector<128x128xf32>, vector<128x128xf32>, vector<128x128xf32> -> vector<128x128xf32>
    %cst_36 = arith.constant dense<0.000000e+00> : vector<128x128xf32>
    %42 = tpu.matmul %1, %41, %cst_36 {dimension_numbers = #tpu.dot_dimension_numbers<[1], [0], [0], [1], [0, 0, 1, 1], [], []>} : vector<128x128xf32>, vector<128x128xf32>, vector<128x128xf32> -> vector<128x128xf32>
    %cst_37 = arith.constant dense<0.000000e+00> : vector<128x128xf32>
    %43 = tpu.matmul %0, %42, %cst_37 {dimension_numbers = #tpu.dot_dimension_numbers<[1], [0], [0], [1], [0, 0, 1, 1], [], []>} : vector<128x128xf32>, vector<128x128xf32>, vector<128x128xf32> -> vector<128x128xf32>
    %44 = arith.subf %27, %43 : vector<128x128xf32>
    %c3 = arith.constant 3 : index
    %c0_38 = arith.constant 0 : index
    %c0_39 = arith.constant 0 : index
    %45 = vector.load %arg5[%c3, %c0_38, %c0_39] : memref<6x128x128xf32, #tpu.memory_space<vmem>>, vector<1x128x128xf32>
    %46 = vector.shape_cast %45 : vector<1x128x128xf32> to vector<128x128xf32>
    %47 = vector.shape_cast %44 : vector<128x128xf32> to vector<1x128x128xf32>
    tpu.vector_store %arg5[%c3, %c0_38, %c0_39], %47 {strides = array<i32>} : memref<6x128x128xf32, #tpu.memory_space<vmem>>, vector<1x128x128xf32>,
    %48 = arith.subf %26, %42 : vector<128x128xf32>
    %c3_40 = arith.constant 3 : index
    %c0_41 = arith.constant 0 : index
    %c0_42 = arith.constant 0 : index
    %49 = vector.load %arg6[%c3_40, %c0_41, %c0_42] : memref<6x128x128xf32, #tpu.memory_space<vmem>>, vector<1x128x128xf32>
    %50 = vector.shape_cast %49 : vector<1x128x128xf32> to vector<128x128xf32>
    %51 = vector.shape_cast %48 : vector<128x128xf32> to vector<1x128x128xf32>
    tpu.vector_store %arg6[%c3_40, %c0_41, %c0_42], %51 {strides = array<i32>} : memref<6x128x128xf32, #tpu.memory_space<vmem>>, vector<1x128x128xf32>,
    %cst_43 = arith.constant dense<0.000000e+00> : vector<128x128xf32>
    %52 = tpu.matmul %1, %43, %cst_43 {dimension_numbers = #tpu.dot_dimension_numbers<[1], [0], [0], [1], [0, 0, 1, 1], [], []>} : vector<128x128xf32>, vector<128x128xf32>, vector<128x128xf32> -> vector<128x128xf32>
    %cst_44 = arith.constant dense<0.000000e+00> : vector<128x128xf32>
    %53 = tpu.matmul %0, %52, %cst_44 {dimension_numbers = #tpu.dot_dimension_numbers<[1], [0], [0], [1], [0, 0, 1, 1], [], []>} : vector<128x128xf32>, vector<128x128xf32>, vector<128x128xf32> -> vector<128x128xf32>
    %cst_45 = arith.constant dense<0.000000e+00> : vector<128x128xf32>
    %54 = tpu.matmul %1, %53, %cst_45 {dimension_numbers = #tpu.dot_dimension_numbers<[1], [0], [0], [1], [0, 0, 1, 1], [], []>} : vector<128x128xf32>, vector<128x128xf32>, vector<128x128xf32> -> vector<128x128xf32>
    %cst_46 = arith.constant dense<0.000000e+00> : vector<128x128xf32>
    %55 = tpu.matmul %0, %54, %cst_46 {dimension_numbers = #tpu.dot_dimension_numbers<[1], [0], [0], [1], [0, 0, 1, 1], [], []>} : vector<128x128xf32>, vector<128x128xf32>, vector<128x128xf32> -> vector<128x128xf32>
    %cst_47 = arith.constant dense<0.000000e+00> : vector<128x128xf32>
    %56 = tpu.matmul %1, %55, %cst_47 {dimension_numbers = #tpu.dot_dimension_numbers<[1], [0], [0], [1], [0, 0, 1, 1], [], []>} : vector<128x128xf32>, vector<128x128xf32>, vector<128x128xf32> -> vector<128x128xf32>
    %cst_48 = arith.constant dense<0.000000e+00> : vector<128x128xf32>
    %57 = tpu.matmul %0, %56, %cst_48 {dimension_numbers = #tpu.dot_dimension_numbers<[1], [0], [0], [1], [0, 0, 1, 1], [], []>} : vector<128x128xf32>, vector<128x128xf32>, vector<128x128xf32> -> vector<128x128xf32>
    %cst_49 = arith.constant dense<0.000000e+00> : vector<128x128xf32>
    %58 = tpu.matmul %1, %57, %cst_49 {dimension_numbers = #tpu.dot_dimension_numbers<[1], [0], [0], [1], [0, 0, 1, 1], [], []>} : vector<128x128xf32>, vector<128x128xf32>, vector<128x128xf32> -> vector<128x128xf32>
    %cst_50 = arith.constant dense<0.000000e+00> : vector<128x128xf32>
    %59 = tpu.matmul %0, %58, %cst_50 {dimension_numbers = #tpu.dot_dimension_numbers<[1], [0], [0], [1], [0, 0, 1, 1], [], []>} : vector<128x128xf32>, vector<128x128xf32>, vector<128x128xf32> -> vector<128x128xf32>
    %cst_51 = arith.constant dense<0.000000e+00> : vector<128x128xf32>
    %60 = tpu.matmul %1, %59, %cst_51 {dimension_numbers = #tpu.dot_dimension_numbers<[1], [0], [0], [1], [0, 0, 1, 1], [], []>} : vector<128x128xf32>, vector<128x128xf32>, vector<128x128xf32> -> vector<128x128xf32>
    %cst_52 = arith.constant dense<0.000000e+00> : vector<128x128xf32>
    %61 = tpu.matmul %0, %60, %cst_52 {dimension_numbers = #tpu.dot_dimension_numbers<[1], [0], [0], [1], [0, 0, 1, 1], [], []>} : vector<128x128xf32>, vector<128x128xf32>, vector<128x128xf32> -> vector<128x128xf32>
    %cst_53 = arith.constant dense<0.000000e+00> : vector<128x128xf32>
    %62 = tpu.matmul %1, %61, %cst_53 {dimension_numbers = #tpu.dot_dimension_numbers<[1], [0], [0], [1], [0, 0, 1, 1], [], []>} : vector<128x128xf32>, vector<128x128xf32>, vector<128x128xf32> -> vector<128x128xf32>
    %cst_54 = arith.constant dense<0.000000e+00> : vector<128x128xf32>
    %63 = tpu.matmul %0, %62, %cst_54 {dimension_numbers = #tpu.dot_dimension_numbers<[1], [0], [0], [1], [0, 0, 1, 1], [], []>} : vector<128x128xf32>, vector<128x128xf32>, vector<128x128xf32> -> vector<128x128xf32>
    %cst_55 = arith.constant dense<0.000000e+00> : vector<128x128xf32>
    %64 = tpu.matmul %1, %63, %cst_55 {dimension_numbers = #tpu.dot_dimension_numbers<[1], [0], [0], [1], [0, 0, 1, 1], [], []>} : vector<128x128xf32>, vector<128x128xf32>, vector<128x128xf32> -> vector<128x128xf32>
    %cst_56 = arith.constant dense<0.000000e+00> : vector<128x128xf32>
    %65 = tpu.matmul %0, %64, %cst_56 {dimension_numbers = #tpu.dot_dimension_numbers<[1], [0], [0], [1], [0, 0, 1, 1], [], []>} : vector<128x128xf32>, vector<128x128xf32>, vector<128x128xf32> -> vector<128x128xf32>
    %cst_57 = arith.constant dense<0.000000e+00> : vector<128x128xf32>
    %66 = tpu.matmul %1, %65, %cst_57 {dimension_numbers = #tpu.dot_dimension_numbers<[1], [0], [0], [1], [0, 0, 1, 1], [], []>} : vector<128x128xf32>, vector<128x128xf32>, vector<128x128xf32> -> vector<128x128xf32>
    %cst_58 = arith.constant dense<0.000000e+00> : vector<128x128xf32>
    %67 = tpu.matmul %0, %66, %cst_58 {dimension_numbers = #tpu.dot_dimension_numbers<[1], [0], [0], [1], [0, 0, 1, 1], [], []>} : vector<128x128xf32>, vector<128x128xf32>, vector<128x128xf32> -> vector<128x128xf32>
    %68 = arith.subf %43, %67 : vector<128x128xf32>
    %c4 = arith.constant 4 : index
    %c0_59 = arith.constant 0 : index
    %c0_60 = arith.constant 0 : index
    %69 = vector.load %arg5[%c4, %c0_59, %c0_60] : memref<6x128x128xf32, #tpu.memory_space<vmem>>, vector<1x128x128xf32>
    %70 = vector.shape_cast %69 : vector<1x128x128xf32> to vector<128x128xf32>
    %71 = vector.shape_cast %68 : vector<128x128xf32> to vector<1x128x128xf32>
    tpu.vector_store %arg5[%c4, %c0_59, %c0_60], %71 {strides = array<i32>} : memref<6x128x128xf32, #tpu.memory_space<vmem>>, vector<1x128x128xf32>,
    %72 = arith.subf %42, %66 : vector<128x128xf32>
    %c4_61 = arith.constant 4 : index
    %c0_62 = arith.constant 0 : index
    %c0_63 = arith.constant 0 : index
    %73 = vector.load %arg6[%c4_61, %c0_62, %c0_63] : memref<6x128x128xf32, #tpu.memory_space<vmem>>, vector<1x128x128xf32>
    %74 = vector.shape_cast %73 : vector<1x128x128xf32> to vector<128x128xf32>
    %75 = vector.shape_cast %72 : vector<128x128xf32> to vector<1x128x128xf32>
    tpu.vector_store %arg6[%c4_61, %c0_62, %c0_63], %75 {strides = array<i32>} : memref<6x128x128xf32, #tpu.memory_space<vmem>>, vector<1x128x128xf32>,
    %c5 = arith.constant 5 : index
    %c0_64 = arith.constant 0 : index
    %c0_65 = arith.constant 0 : index
    %76 = vector.load %arg5[%c5, %c0_64, %c0_65] : memref<6x128x128xf32, #tpu.memory_space<vmem>>, vector<1x128x128xf32>
    %77 = vector.shape_cast %76 : vector<1x128x128xf32> to vector<128x128xf32>
    %78 = vector.shape_cast %67 : vector<128x128xf32> to vector<1x128x128xf32>
    tpu.vector_store %arg5[%c5, %c0_64, %c0_65], %78 {strides = array<i32>} : memref<6x128x128xf32, #tpu.memory_space<vmem>>, vector<1x128x128xf32>,
    %c5_66 = arith.constant 5 : index
    %c0_67 = arith.constant 0 : index
    %c0_68 = arith.constant 0 : index
    %79 = vector.load %arg6[%c5_66, %c0_67, %c0_68] : memref<6x128x128xf32, #tpu.memory_space<vmem>>, vector<1x128x128xf32>
    %80 = vector.shape_cast %79 : vector<1x128x128xf32> to vector<128x128xf32>
    %81 = vector.shape_cast %66 : vector<128x128xf32> to vector<1x128x128xf32>
    tpu.vector_store %arg6[%c5_66, %c0_67, %c0_68], %81 {strides = array<i32>} : memref<6x128x128xf32, #tpu.memory_space<vmem>>, vector<1x128x128xf32>,
    return
  }
  func.func @transform_0(%arg0: i32) -> (i32, i32) {
    %c0_i32 = arith.constant 0 : i32
    %c0_i32_0 = arith.constant 0 : i32
    %c0_i32_1 = arith.constant 0 : i32
    return %c0_i32, %c0_i32_0 : i32, i32
  }
  func.func @transform_1(%arg0: i32) -> (i32, i32) {
    %c0_i32 = arith.constant 0 : i32
    %c0_i32_0 = arith.constant 0 : i32
    %c0_i32_1 = arith.constant 0 : i32
    return %c0_i32, %c0_i32_0 : i32, i32
  }
  func.func @transform_2(%arg0: i32) -> (i32, i32) {
    %c0_i32 = arith.constant 0 : i32
    %c0_i32_0 = arith.constant 0 : i32
    return %c0_i32, %arg0 : i32, i32
  }
  func.func @transform_3(%arg0: i32) -> (i32, i32) {
    %c0_i32 = arith.constant 0 : i32
    %c0_i32_0 = arith.constant 0 : i32
    return %c0_i32, %arg0 : i32, i32
  }
  func.func @transform_4(%arg0: i32) -> (i32, i32, i32) {
    %c0_i32 = arith.constant 0 : i32
    %c0_i32_0 = arith.constant 0 : i32
    %c0_i32_1 = arith.constant 0 : i32
    return %c0_i32, %c0_i32_0, %arg0 : i32, i32, i32
  }
  func.func @transform_5(%arg0: i32) -> (i32, i32, i32) {
    %c0_i32 = arith.constant 0 : i32
    %c0_i32_0 = arith.constant 0 : i32
    %c0_i32_1 = arith.constant 0 : i32
    return %c0_i32, %c0_i32_0, %arg0 : i32, i32, i32
  }
}

module attributes {stable_mosaic.version = 11 : i64} {
  func.func @hyper_scattering_kernel(%arg0: i32, %arg1: memref<128x128xf32, #tpu.memory_space<vmem>>, %arg2: memref<128x128xf32, #tpu.memory_space<vmem>>, %arg3: memref<128x128xf32, #tpu.memory_space<vmem>>, %arg4: memref<128x128xf32, #tpu.memory_space<vmem>>, %arg5: memref<6x128x128xf32, #tpu.memory_space<vmem>>, %arg6: memref<6x128x128xf32, #tpu.memory_space<vmem>>) attributes {dimension_semantics = [#tpu.dimension_semantics<parallel>], iteration_bounds = array<i64: 1>, scalar_prefetch = 0 : i64, scratch_operands = 0 : i64, tpu.core_type = #tpu.core_type<tc>, window_params = [{pipeline_mode = #tpu.pipeline_mode<synchronous>, transform_indices = @transform_0, window_bounds = array<i64: 128, 128>}, {pipeline_mode = #tpu.pipeline_mode<synchronous>, transform_indices = @transform_1, window_bounds = array<i64: 128, 128>}, {transform_indices = @transform_2, window_bounds = array<i64: 128, 128>}, {transform_indices = @transform_3, window_bounds = array<i64: 128, 128>}, {transform_indices = @transform_4, window_bounds = array<i64: 6, 128, 128>}, {transform_indices = @transform_5, window_bounds = array<i64: 6, 128, 128>}]} {
    %c0 = arith.constant 0 : index
    %c0_0 = arith.constant 0 : index
    %0 = vector.load %arg1[%c0, %c0_0] : memref<128x128xf32, #tpu.memory_space<vmem>>, vector<128x128xf32>
    %c0_1 = arith.constant 0 : index
    %c0_2 = arith.constant 0 : index
    %1 = vector.load %arg2[%c0_1, %c0_2] : memref<128x128xf32, #tpu.memory_space<vmem>>, vector<128x128xf32>
    %c0_3 = arith.constant 0 : index
    %c0_4 = arith.constant 0 : index
    %2 = vector.load %arg3[%c0_3, %c0_4] : memref<128x128xf32, #tpu.memory_space<vmem>>, vector<128x128xf32>
    %c0_5 = arith.constant 0 : index
    %c0_6 = arith.constant 0 : index
    %3 = vector.load %arg4[%c0_5, %c0_6] : memref<128x128xf32, #tpu.memory_space<vmem>>, vector<128x128xf32>
    %cst = arith.constant dense<0.000000e+00> : vector<128x128xf32>
    %4 = tpu.matmul %1, %2, %cst {dimension_numbers = #tpu.dot_dimension_numbers<[1], [0], [0], [1], [0, 0, 1, 1], [], []>} : vector<128x128xf32>, vector<128x128xf32>, vector<128x128xf32> -> vector<128x128xf32>
    %cst_7 = arith.constant dense<0.000000e+00> : vector<128x128xf32>
    %5 = tpu.matmul %0, %4, %cst_7 {dimension_numbers = #tpu.dot_dimension_numbers<[1], [0], [0], [1], [0, 0, 1, 1], [], []>} : vector<128x128xf32>, vector<128x128xf32>, vector<128x128xf32> -> vector<128x128xf32>
    %6 = arith.subf %2, %5 : vector<128x128xf32>
    %c0_8 = arith.constant 0 : index
    %c0_9 = arith.constant 0 : index
    %c0_10 = arith.constant 0 : index
    %7 = vector.load %arg5[%c0_8, %c0_9, %c0_10] : memref<6x128x128xf32, #tpu.memory_space<vmem>>, vector<1x128x128xf32>
    %8 = vector.shape_cast %7 : vector<1x128x128xf32> to vector<128x128xf32>
    %9 = vector.shape_cast %6 : vector<128x128xf32> to vector<1x128x128xf32>
    tpu.vector_store %arg5[%c0_8, %c0_9, %c0_10], %9 {strides = array<i32>} : memref<6x128x128xf32, #tpu.memory_space<vmem>>, vector<1x128x128xf32>,
    %10 = arith.subf %3, %4 : vector<128x128xf32>
    %c0_11 = arith.constant 0 : index
    %c0_12 = arith.constant 0 : index
    %c0_13 = arith.constant 0 : index
    %11 = vector.load %arg6[%c0_11, %c0_12, %c0_13] : memref<6x128x128xf32, #tpu.memory_space<vmem>>, vector<1x128x128xf32>
    %12 = vector.shape_cast %11 : vector<1x128x128xf32> to vector<128x128xf32>
    %13 = vector.shape_cast %10 : vector<128x128xf32> to vector<1x128x128xf32>
    tpu.vector_store %arg6[%c0_11, %c0_12, %c0_13], %13 {strides = array<i32>} : memref<6x128x128xf32, #tpu.memory_space<vmem>>, vector<1x128x128xf32>,
    %cst_14 = arith.constant dense<0.000000e+00> : vector<128x128xf32>
    %14 = tpu.matmul %1, %5, %cst_14 {dimension_numbers = #tpu.dot_dimension_numbers<[1], [0], [0], [1], [0, 0, 1, 1], [], []>} : vector<128x128xf32>, vector<128x128xf32>, vector<128x128xf32> -> vector<128x128xf32>
    %cst_15 = arith.constant dense<0.000000e+00> : vector<128x128xf32>
    %15 = tpu.matmul %0, %14, %cst_15 {dimension_numbers = #tpu.dot_dimension_numbers<[1], [0], [0], [1], [0, 0, 1, 1], [], []>} : vector<128x128xf32>, vector<128x128xf32>, vector<128x128xf32> -> vector<128x128xf32>
    %16 = arith.subf %5, %15 : vector<128x128xf32>
    %c1 = arith.constant 1 : index
    %c0_16 = arith.constant 0 : index
    %c0_17 = arith.constant 0 : index
    %17 = vector.load %arg5[%c1, %c0_16, %c0_17] : memref<6x128x128xf32, #tpu.memory_space<vmem>>, vector<1x128x128xf32>
    %18 = vector.shape_cast %17 : vector<1x128x128xf32> to vector<128x128xf32>
    %19 = vector.shape_cast %16 : vector<128x128xf32> to vector<1x128x128xf32>
    tpu.vector_store %arg5[%c1, %c0_16, %c0_17], %19 {strides = array<i32>} : memref<6x128x128xf32, #tpu.memory_space<vmem>>, vector<1x128x128xf32>,
    %20 = arith.subf %4, %14 : vector<128x128xf32>
    %c1_18 = arith.constant 1 : index
    %c0_19 = arith.constant 0 : index
    %c0_20 = arith.constant 0 : index
    %21 = vector.load %arg6[%c1_18, %c0_19, %c0_20] : memref<6x128x128xf32, #tpu.memory_space<vmem>>, vector<1x128x128xf32>
    %22 = vector.shape_cast %21 : vector<1x128x128xf32> to vector<128x128xf32>
    %23 = vector.shape_cast %20 : vector<128x128xf32> to vector<1x128x128xf32>
    tpu.vector_store %arg6[%c1_18, %c0_19, %c0_20], %23 {strides = array<i32>} : memref<6x128x128xf32, #tpu.memory_space<vmem>>, vector<1x128x128xf32>,
    %cst_21 = arith.constant dense<0.000000e+00> : vector<128x128xf32>
    %24 = tpu.matmul %1, %15, %cst_21 {dimension_numbers = #tpu.dot_dimension_numbers<[1], [0], [0], [1], [0, 0, 1, 1], [], []>} : vector<128x128xf32>, vector<128x128xf32>, vector<128x128xf32> -> vector<128x128xf32>
    %cst_22 = arith.constant dense<0.000000e+00> : vector<128x128xf32>
    %25 = tpu.matmul %0, %24, %cst_22 {dimension_numbers = #tpu.dot_dimension_numbers<[1], [0], [0], [1], [0, 0, 1, 1], [], []>} : vector<128x128xf32>, vector<128x128xf32>, vector<128x128xf32> -> vector<128x128xf32>
    %cst_23 = arith.constant dense<0.000000e+00> : vector<128x128xf32>
    %26 = tpu.matmul %1, %25, %cst_23 {dimension_numbers = #tpu.dot_dimension_numbers<[1], [0], [0], [1], [0, 0, 1, 1], [], []>} : vector<128x128xf32>, vector<128x128xf32>, vector<128x128xf32> -> vector<128x128xf32>
    %cst_24 = arith.constant dense<0.000000e+00> : vector<128x128xf32>
    %27 = tpu.matmul %0, %26, %cst_24 {dimension_numbers = #tpu.dot_dimension_numbers<[1], [0], [0], [1], [0, 0, 1, 1], [], []>} : vector<128x128xf32>, vector<128x128xf32>, vector<128x128xf32> -> vector<128x128xf32>
    %28 = arith.subf %15, %27 : vector<128x128xf32>
    %c2 = arith.constant 2 : index
    %c0_25 = arith.constant 0 : index
    %c0_26 = arith.constant 0 : index
    %29 = vector.load %arg5[%c2, %c0_25, %c0_26] : memref<6x128x128xf32, #tpu.memory_space<vmem>>, vector<1x128x128xf32>
    %30 = vector.shape_cast %29 : vector<1x128x128xf32> to vector<128x128xf32>
    %31 = vector.shape_cast %28 : vector<128x128xf32> to vector<1x128x128xf32>
    tpu.vector_store %arg5[%c2, %c0_25, %c0_26], %31 {strides = array<i32>} : memref<6x128x128xf32, #tpu.memory_space<vmem>>, vector<1x128x128xf32>,
    %32 = arith.subf %14, %26 : vector<128x128xf32>
    %c2_27 = arith.constant 2 : index
    %c0_28 = arith.constant 0 : index
    %c0_29 = arith.constant 0 : index
    %33 = vector.load %arg6[%c2_27, %c0_28, %c0_29] : memref<6x128x128xf32, #tpu.memory_space<vmem>>, vector<1x128x128xf32>
    %34 = vector.shape_cast %33 : vector<1x128x128xf32> to vector<128x128xf32>
    %35 = vector.shape_cast %32 : vector<128x128xf32> to vector<1x128x128xf32>
    tpu.vector_store %arg6[%c2_27, %c0_28, %c0_29], %35 {strides = array<i32>} : memref<6x128x128xf32, #tpu.memory_space<vmem>>, vector<1x128x128xf32>,
    %cst_30 = arith.constant dense<0.000000e+00> : vector<128x128xf32>
    %36 = tpu.matmul %1, %27, %cst_30 {dimension_numbers = #tpu.dot_dimension_numbers<[1], [0], [0], [1], [0, 0, 1, 1], [], []>} : vector<128x128xf32>, vector<128x128xf32>, vector<128x128xf32> -> vector<128x128xf32>
    %cst_31 = arith.constant dense<0.000000e+00> : vector<128x128xf32>
    %37 = tpu.matmul %0, %36, %cst_31 {dimension_numbers = #tpu.dot_dimension_numbers<[1], [0], [0], [1], [0, 0, 1, 1], [], []>} : vector<128x128xf32>, vector<128x128xf32>, vector<128x128xf32> -> vector<128x128xf32>
    %cst_32 = arith.constant dense<0.000000e+00> : vector<128x128xf32>
    %38 = tpu.matmul %1, %37, %cst_32 {dimension_numbers = #tpu.dot_dimension_numbers<[1], [0], [0], [1], [0, 0, 1, 1], [], []>} : vector<128x128xf32>, vector<128x128xf32>, vector<128x128xf32> -> vector<128x128xf32>
    %cst_33 = arith.constant dense<0.000000e+00> : vector<128x128xf32>
    %39 = tpu.matmul %0, %38, %cst_33 {dimension_numbers = #tpu.dot_dimension_numbers<[1], [0], [0], [1], [0, 0, 1, 1], [], []>} : vector<128x128xf32>, vector<128x128xf32>, vector<128x128xf32> -> vector<128x128xf32>
    %cst_34 = arith.constant dense<0.000000e+00> : vector<128x128xf32>
    %40 = tpu.matmul %1, %39, %cst_34 {dimension_numbers = #tpu.dot_dimension_numbers<[1], [0], [0], [1], [0, 0, 1, 1], [], []>} : vector<128x128xf32>, vector<128x128xf32>, vector<128x128xf32> -> vector<128x128xf32>
    %cst_35 = arith.constant dense<0.000000e+00> : vector<128x128xf32>
    %41 = tpu.matmul %0, %40, %cst_35 {dimension_numbers = #tpu.dot_dimension_numbers<[1], [0], [0], [1], [0, 0, 1, 1], [], []>} : vector<128x128xf32>, vector<128x128xf32>, vector<128x128xf32> -> vector<128x128xf32>
    %cst_36 = arith.constant dense<0.000000e+00> : vector<128x128xf32>
    %42 = tpu.matmul %1, %41, %cst_36 {dimension_numbers = #tpu.dot_dimension_numbers<[1], [0], [0], [1], [0, 0, 1, 1], [], []>} : vector<128x128xf32>, vector<128x128xf32>, vector<128x128xf32> -> vector<128x128xf32>
    %cst_37 = arith.constant dense<0.000000e+00> : vector<128x128xf32>
    %43 = tpu.matmul %0, %42, %cst_37 {dimension_numbers = #tpu.dot_dimension_numbers<[1], [0], [0], [1], [0, 0, 1, 1], [], []>} : vector<128x128xf32>, vector<128x128xf32>, vector<128x128xf32> -> vector<128x128xf32>
    %44 = arith.subf %27, %43 : vector<128x128xf32>
    %c3 = arith.constant 3 : index
    %c0_38 = arith.constant 0 : index
    %c0_39 = arith.constant 0 : index
    %45 = vector.load %arg5[%c3, %c0_38, %c0_39] : memref<6x128x128xf32, #tpu.memory_space<vmem>>, vector<1x128x128xf32>
    %46 = vector.shape_cast %45 : vector<1x128x128xf32> to vector<128x128xf32>
    %47 = vector.shape_cast %44 : vector<128x128xf32> to vector<1x128x128xf32>
    tpu.vector_store %arg5[%c3, %c0_38, %c0_39], %47 {strides = array<i32>} : memref<6x128x128xf32, #tpu.memory_space<vmem>>, vector<1x128x128xf32>,
    %48 = arith.subf %26, %42 : vector<128x128xf32>
    %c3_40 = arith.constant 3 : index
    %c0_41 = arith.constant 0 : index
    %c0_42 = arith.constant 0 : index
    %49 = vector.load %arg6[%c3_40, %c0_41, %c0_42] : memref<6x128x128xf32, #tpu.memory_space<vmem>>, vector<1x128x128xf32>
    %50 = vector.shape_cast %49 : vector<1x128x128xf32> to vector<128x128xf32>
    %51 = vector.shape_cast %48 : vector<128x128xf32> to vector<1x128x128xf32>
    tpu.vector_store %arg6[%c3_40, %c0_41, %c0_42], %51 {strides = array<i32>} : memref<6x128x128xf32, #tpu.memory_space<vmem>>, vector<1x128x128xf32>,
    %cst_43 = arith.constant dense<0.000000e+00> : vector<128x128xf32>
    %52 = tpu.matmul %1, %43, %cst_43 {dimension_numbers = #tpu.dot_dimension_numbers<[1], [0], [0], [1], [0, 0, 1, 1], [], []>} : vector<128x128xf32>, vector<128x128xf32>, vector<128x128xf32> -> vector<128x128xf32>
    %cst_44 = arith.constant dense<0.000000e+00> : vector<128x128xf32>
    %53 = tpu.matmul %0, %52, %cst_44 {dimension_numbers = #tpu.dot_dimension_numbers<[1], [0], [0], [1], [0, 0, 1, 1], [], []>} : vector<128x128xf32>, vector<128x128xf32>, vector<128x128xf32> -> vector<128x128xf32>
    %cst_45 = arith.constant dense<0.000000e+00> : vector<128x128xf32>
    %54 = tpu.matmul %1, %53, %cst_45 {dimension_numbers = #tpu.dot_dimension_numbers<[1], [0], [0], [1], [0, 0, 1, 1], [], []>} : vector<128x128xf32>, vector<128x128xf32>, vector<128x128xf32> -> vector<128x128xf32>
    %cst_46 = arith.constant dense<0.000000e+00> : vector<128x128xf32>
    %55 = tpu.matmul %0, %54, %cst_46 {dimension_numbers = #tpu.dot_dimension_numbers<[1], [0], [0], [1], [0, 0, 1, 1], [], []>} : vector<128x128xf32>, vector<128x128xf32>, vector<128x128xf32> -> vector<128x128xf32>
    %cst_47 = arith.constant dense<0.000000e+00> : vector<128x128xf32>
    %56 = tpu.matmul %1, %55, %cst_47 {dimension_numbers = #tpu.dot_dimension_numbers<[1], [0], [0], [1], [0, 0, 1, 1], [], []>} : vector<128x128xf32>, vector<128x128xf32>, vector<128x128xf32> -> vector<128x128xf32>
    %cst_48 = arith.constant dense<0.000000e+00> : vector<128x128xf32>
    %57 = tpu.matmul %0, %56, %cst_48 {dimension_numbers = #tpu.dot_dimension_numbers<[1], [0], [0], [1], [0, 0, 1, 1], [], []>} : vector<128x128xf32>, vector<128x128xf32>, vector<128x128xf32> -> vector<128x128xf32>
    %cst_49 = arith.constant dense<0.000000e+00> : vector<128x128xf32>
    %58 = tpu.matmul %1, %57, %cst_49 {dimension_numbers = #tpu.dot_dimension_numbers<[1], [0], [0], [1], [0, 0, 1, 1], [], []>} : vector<128x128xf32>, vector<128x128xf32>, vector<128x128xf32> -> vector<128x128xf32>
    %cst_50 = arith.constant dense<0.000000e+00> : vector<128x128xf32>
    %59 = tpu.matmul %0, %58, %cst_50 {dimension_numbers = #tpu.dot_dimension_numbers<[1], [0], [0], [1], [0, 0, 1, 1], [], []>} : vector<128x128xf32>, vector<128x128xf32>, vector<128x128xf32> -> vector<128x128xf32>
    %cst_51 = arith.constant dense<0.000000e+00> : vector<128x128xf32>
    %60 = tpu.matmul %1, %59, %cst_51 {dimension_numbers = #tpu.dot_dimension_numbers<[1], [0], [0], [1], [0, 0, 1, 1], [], []>} : vector<128x128xf32>, vector<128x128xf32>, vector<128x128xf32> -> vector<128x128xf32>
    %cst_52 = arith.constant dense<0.000000e+00> : vector<128x128xf32>
    %61 = tpu.matmul %0, %60, %cst_52 {dimension_numbers = #tpu.dot_dimension_numbers<[1], [0], [0], [1], [0, 0, 1, 1], [], []>} : vector<128x128xf32>, vector<128x128xf32>, vector<128x128xf32> -> vector<128x128xf32>
    %cst_53 = arith.constant dense<0.000000e+00> : vector<128x128xf32>
    %62 = tpu.matmul %1, %61, %cst_53 {dimension_numbers = #tpu.dot_dimension_numbers<[1], [0], [0], [1], [0, 0, 1, 1], [], []>} : vector<128x128xf32>, vector<128x128xf32>, vector<128x128xf32> -> vector<128x128xf32>
    %cst_54 = arith.constant dense<0.000000e+00> : vector<128x128xf32>
    %63 = tpu.matmul %0, %62, %cst_54 {dimension_numbers = #tpu.dot_dimension_numbers<[1], [0], [0], [1], [0, 0, 1, 1], [], []>} : vector<128x128xf32>, vector<128x128xf32>, vector<128x128xf32> -> vector<128x128xf32>
    %cst_55 = arith.constant dense<0.000000e+00> : vector<128x128xf32>
    %64 = tpu.matmul %1, %63, %cst_55 {dimension_numbers = #tpu.dot_dimension_numbers<[1], [0], [0], [1], [0, 0, 1, 1], [], []>} : vector<128x128xf32>, vector<128x128xf32>, vector<128x128xf32> -> vector<128x128xf32>
    %cst_56 = arith.constant dense<0.000000e+00> : vector<128x128xf32>
    %65 = tpu.matmul %0, %64, %cst_56 {dimension_numbers = #tpu.dot_dimension_numbers<[1], [0], [0], [1], [0, 0, 1, 1], [], []>} : vector<128x128xf32>, vector<128x128xf32>, vector<128x128xf32> -> vector<128x128xf32>
    %cst_57 = arith.constant dense<0.000000e+00> : vector<128x128xf32>
    %66 = tpu.matmul %1, %65, %cst_57 {dimension_numbers = #tpu.dot_dimension_numbers<[1], [0], [0], [1], [0, 0, 1, 1], [], []>} : vector<128x128xf32>, vector<128x128xf32>, vector<128x128xf32> -> vector<128x128xf32>
    %cst_58 = arith.constant dense<0.000000e+00> : vector<128x128xf32>
    %67 = tpu.matmul %0, %66, %cst_58 {dimension_numbers = #tpu.dot_dimension_numbers<[1], [0], [0], [1], [0, 0, 1, 1], [], []>} : vector<128x128xf32>, vector<128x128xf32>, vector<128x128xf32> -> vector<128x128xf32>
    %68 = arith.subf %43, %67 : vector<128x128xf32>
    %c4 = arith.constant 4 : index
    %c0_59 = arith.constant 0 : index
    %c0_60 = arith.constant 0 : index
    %69 = vector.load %arg5[%c4, %c0_59, %c0_60] : memref<6x128x128xf32, #tpu.memory_space<vmem>>, vector<1x128x128xf32>
    %70 = vector.shape_cast %69 : vector<1x128x128xf32> to vector<128x128xf32>
    %71 = vector.shape_cast %68 : vector<128x128xf32> to vector<1x128x128xf32>
    tpu.vector_store %arg5[%c4, %c0_59, %c0_60], %71 {strides = array<i32>} : memref<6x128x128xf32, #tpu.memory_space<vmem>>, vector<1x128x128xf32>,
    %72 = arith.subf %42, %66 : vector<128x128xf32>
    %c4_61 = arith.constant 4 : index
    %c0_62 = arith.constant 0 : index
    %c0_63 = arith.constant 0 : index
    %73 = vector.load %arg6[%c4_61, %c0_62, %c0_63] : memref<6x128x128xf32, #tpu.memory_space<vmem>>, vector<1x128x128xf32>
    %74 = vector.shape_cast %73 : vector<1x128x128xf32> to vector<128x128xf32>
    %75 = vector.shape_cast %72 : vector<128x128xf32> to vector<1x128x128xf32>
    tpu.vector_store %arg6[%c4_61, %c0_62, %c0_63], %75 {strides = array<i32>} : memref<6x128x128xf32, #tpu.memory_space<vmem>>, vector<1x128x128xf32>,
    %c5 = arith.constant 5 : index
    %c0_64 = arith.constant 0 : index
    %c0_65 = arith.constant 0 : index
    %76 = vector.load %arg5[%c5, %c0_64, %c0_65] : memref<6x128x128xf32, #tpu.memory_space<vmem>>, vector<1x128x128xf32>
    %77 = vector.shape_cast %76 : vector<1x128x128xf32> to vector<128x128xf32>
    %78 = vector.shape_cast %67 : vector<128x128xf32> to vector<1x128x128xf32>
    tpu.vector_store %arg5[%c5, %c0_64, %c0_65], %78 {strides = array<i32>} : memref<6x128x128xf32, #tpu.memory_space<vmem>>, vector<1x128x128xf32>,
    %c5_66 = arith.constant 5 : index
    %c0_67 = arith.constant 0 : index
    %c0_68 = arith.constant 0 : index
    %79 = vector.load %arg6[%c5_66, %c0_67, %c0_68] : memref<6x128x128xf32, #tpu.memory_space<vmem>>, vector<1x128x128xf32>
    %80 = vector.shape_cast %79 : vector<1x128x128xf32> to vector<128x128xf32>
    %81 = vector.shape_cast %66 : vector<128x128xf32> to vector<1x128x128xf32>
    tpu.vector_store %arg6[%c5_66, %c0_67, %c0_68], %81 {strides = array<i32>} : memref<6x128x128xf32, #tpu.memory_space<vmem>>, vector<1x128x128xf32>,
    return
  }
  func.func @transform_0(%arg0: i32) -> (i32, i32) {
    %c0_i32 = arith.constant 0 : i32
    %c0_i32_0 = arith.constant 0 : i32
    %c0_i32_1 = arith.constant 0 : i32
    return %c0_i32, %c0_i32_0 : i32, i32
  }
  func.func @transform_1(%arg0: i32) -> (i32, i32) {
    %c0_i32 = arith.constant 0 : i32
    %c0_i32_0 = arith.constant 0 : i32
    %c0_i32_1 = arith.constant 0 : i32
    return %c0_i32, %c0_i32_0 : i32, i32
  }
  func.func @transform_2(%arg0: i32) -> (i32, i32) {
    %c0_i32 = arith.constant 0 : i32
    %c0_i32_0 = arith.constant 0 : i32
    return %c0_i32, %arg0 : i32, i32
  }
  func.func @transform_3(%arg0: i32) -> (i32, i32) {
    %c0_i32 = arith.constant 0 : i32
    %c0_i32_0 = arith.constant 0 : i32
    return %c0_i32, %arg0 : i32, i32
  }
  func.func @transform_4(%arg0: i32) -> (i32, i32, i32) {
    %c0_i32 = arith.constant 0 : i32
    %c0_i32_0 = arith.constant 0 : i32
    %c0_i32_1 = arith.constant 0 : i32
    return %c0_i32, %c0_i32_0, %arg0 : i32, i32, i32
  }
  func.func @transform_5(%arg0: i32) -> (i32, i32, i32) {
    %c0_i32 = arith.constant 0 : i32
    %c0_i32_0 = arith.constant 0 : i32
    %c0_i32_1 = arith.constant 0 : i32
    return %c0_i32, %c0_i32_0, %arg0 : i32, i32, i32
  }
}

</mosaic_0001>

<llo_original>
// kernel: tpu_custom_call.1
$region0: #{tpu_custom_call.1}
  #allocation0 [shape = 'u32[]', space=smem, size = 0x4, offset = 0x4, fixed_abs, tag = 'smem constant byte address 0x4 - core index']
  #allocation1 [shape = 'u32[144,128]{1,0:T(1,128)}', space=vmem, size = 0x12000, scoped, tag = 'internal scratch']
  %s0 = inlined_call_operand.hbm [shape: f32[128,128], index: 0, kind: input, shape index: {}]
  %s1 = inlined_call_operand.hbm [shape: f32[128,128], index: 1, kind: input, shape index: {}]
  %s2 = inlined_call_operand.hbm [shape: f32[128,128], index: 2, kind: input, shape index: {}]
  %s3 = inlined_call_operand.hbm [shape: f32[128,128], index: 3, kind: input, shape index: {}]
  %s4 = inlined_call_operand.hbm [shape: f32[6,128,128], index: 4, kind: output, shape index: {0}]
  %s5 = inlined_call_operand.hbm [shape: f32[6,128,128], index: 5, kind: output, shape index: {1}]
  %6 = xla_tuple %s4, %s5
  %s7 = sld [smem:[#allocation0]]
  $region50: #{tpu_custom_call.1} parent=0
    _
  %s9 = ssub.s32 1, %s7
  %s10 = scalar_select 0, %s9, %s7
  $region1: #{tpu_custom_call.1} parent=0
    #allocation2 [shape = 'u8[65536]{0}', space=vmem, size = 0x10000, scoped, tag = 'input window, operand 0, single buffered']
    #allocation3 [shape = 's32[1]{0}', space=sflag, size = 0x4, scoped, tag = 'scoped memory for tpu_custom_call.1']
    #allocation4 [shape = 's32[1]{0}', space=sflag, size = 0x4, scoped, tag = 'scoped memory for tpu_custom_call.1']
    #allocation5 [shape = 'u8[65536]{0}', space=vmem, size = 0x10000, scoped, tag = 'input window, operand 1, single buffered']
    #allocation6 [shape = 's32[1]{0}', space=sflag, size = 0x4, scoped, tag = 'scoped memory for tpu_custom_call.1']
    #allocation7 [shape = 'u8[65536]{0}', space=vmem, size = 0x10000, scoped, tag = 'input window, operand 2, single buffered']
    #allocation8 [shape = 'u8[65536]{0}', space=vmem, size = 0x10000, scoped, tag = 'input window, operand 3, single buffered']
    #allocation9 [shape = 's32[1]{0}', space=sflag, size = 0x4, scoped, tag = 'scoped memory for tpu_custom_call.1']
    #allocation10 [shape = 'u8[393216]{0}', space=vmem, size = 0x60000, scoped, tag = 'output window, operand 0, single buffered']
    #allocation11 [shape = 'u8[393216]{0}', space=vmem, size = 0x60000, scoped, tag = 'output window, operand 1, single buffered']
    #allocation12 [shape = 's32[1]{0}', space=sflag, size = 0x4, scoped, tag = 'scoped memory for tpu_custom_call.1']
    %11 = vsyncpa [#allocation3], 0
    %12 = vsyncpa [#allocation6], 0
    %13 = vsyncpa [#allocation9], 0
    %14 = vsyncpa [#allocation4], 0
    %15 = vsyncpa [#allocation12], 0
    // Predicated region
    $region2: #{tpu_custom_call.1} parent=1 // pred_check
      _
    $region3: #{tpu_custom_call.1} parent=1 // pred_check_branch
      %17 = sbr.rel (0) target = $region5
    $region4: #{tpu_custom_call.1} parent=1 // pred_region
      %s19 = ssub.s32 2048, 2048
      %20 = vsyncadd [#allocation3], %s19
      %s21 = sshll.u32 [#allocation2], 4
      %s22 = int_to_ptr.vmem [resolvable:$true] %s21
      %27 = dma.hbm_to_vmem [thread:$0]  %s0, 2048, %s22, [#allocation3], 128, 128, 8
    $region5: #{tpu_custom_call.1} parent=1 // pred_fallthru
      _
    // Predicated region
    $region6: #{tpu_custom_call.1} parent=1 // pred_check
      _
    $region7: #{tpu_custom_call.1} parent=1 // pred_check_branch
      %29 = sbr.rel (0) target = $region9
    $region8: #{tpu_custom_call.1} parent=1 // pred_region
      %s31 = ssub.s32 2048, 2048
      %32 = vsyncadd [#allocation6], %s31
      %s33 = sshll.u32 [#allocation5], 4
      %s34 = int_to_ptr.vmem [resolvable:$true] %s33
      %39 = dma.hbm_to_vmem [thread:$0]  %s1, 2048, %s34, [#allocation6], 128, 128, 8
    $region9: #{tpu_custom_call.1} parent=1 // pred_fallthru
      _
    // Predicated region
    $region10: #{tpu_custom_call.1} parent=1 // pred_check
      _
    $region11: #{tpu_custom_call.1} parent=1 // pred_check_branch
      %41 = sbr.rel (0) target = $region13
    $region12: #{tpu_custom_call.1} parent=1 // pred_region
      %s43 = ssub.s32 2048, 2048
      %44 = vsyncadd [#allocation6], %s43
      %s45 = sshll.u32 [#allocation7], 4
      %s46 = int_to_ptr.vmem [resolvable:$true] %s45
      %51 = dma.hbm_to_vmem [thread:$0]  %s2, 2048, %s46, [#allocation6], 128, 128, 8
    $region13: #{tpu_custom_call.1} parent=1 // pred_fallthru
      _
    // Predicated region
    $region14: #{tpu_custom_call.1} parent=1 // pred_check
      _
    $region15: #{tpu_custom_call.1} parent=1 // pred_check_branch
      %53 = sbr.rel (0) target = $region17
    $region16: #{tpu_custom_call.1} parent=1 // pred_region
      %s55 = ssub.s32 2048, 2048
      %56 = vsyncadd [#allocation9], %s55
      %s57 = sshll.u32 [#allocation8], 4
      %s58 = int_to_ptr.vmem [resolvable:$true] %s57
      %63 = dma.hbm_to_vmem [thread:$0]  %s3, 2048, %s58, [#allocation9], 128, 128, 8
    $region17: #{tpu_custom_call.1} parent=1 // pred_fallthru
      _
    // Predicated region
    $region18: #{tpu_custom_call.1} parent=1 // pred_check
      _
    $region19: #{tpu_custom_call.1} parent=1 // pred_check_branch
      %65 = sbr.rel (0) target = $region21
    $region20: #{tpu_custom_call.1} parent=1 // pred_region
      %66 = dma.done [#allocation3], 2048
    $region21: #{tpu_custom_call.1} parent=1 // pred_fallthru
      _
    // Predicated region
    $region22: #{tpu_custom_call.1} parent=1 // pred_check
      _
    $region23: #{tpu_custom_call.1} parent=1 // pred_check_branch
      %68 = sbr.rel (0) target = $region25
    $region24: #{tpu_custom_call.1} parent=1 // pred_region
      %69 = dma.done [#allocation6], 2048
    $region25: #{tpu_custom_call.1} parent=1 // pred_fallthru
      _
    // Predicated region
    $region26: #{tpu_custom_call.1} parent=1 // pred_check
      _
    $region27: #{tpu_custom_call.1} parent=1 // pred_check_branch
      %71 = sbr.rel (0) target = $region29
    $region28: #{tpu_custom_call.1} parent=1 // pred_region
      %72 = dma.done [#allocation6], 2048
    $region29: #{tpu_custom_call.1} parent=1 // pred_fallthru
      _
    // Predicated region
    $region30: #{tpu_custom_call.1} parent=1 // pred_check
      _
    $region31: #{tpu_custom_call.1} parent=1 // pred_check_branch
      %74 = sbr.rel (0) target = $region33
    $region32: #{tpu_custom_call.1} parent=1 // pred_region
      %75 = dma.done [#allocation9], 2048
    $region33: #{tpu_custom_call.1} parent=1 // pred_fallthru
      _
    %v76 = vld [vmem:[#allocation2] sm:$0xff]
    %v77 = vld [vmem:[#allocation2 + $0x8] sm:$0xff]
    %v78 = vld [vmem:[#allocation2 + $0x10] sm:$0xff]
    %v79 = vld [vmem:[#allocation2 + $0x18] sm:$0xff]
    %v80 = vld [vmem:[#allocation2 + $0x20] sm:$0xff]
    %v81 = vld [vmem:[#allocation2 + $0x28] sm:$0xff]
    %v82 = vld [vmem:[#allocation2 + $0x30] sm:$0xff]
    %v83 = vld [vmem:[#allocation2 + $0x38] sm:$0xff]
    %v84 = vld [vmem:[#allocation2 + $0x40] sm:$0xff]
    %v85 = vld [vmem:[#allocation2 + $0x48] sm:$0xff]
    %v86 = vld [vmem:[#allocation2 + $0x50] sm:$0xff]
    %v87 = vld [vmem:[#allocation2 + $0x58] sm:$0xff]
    %v88 = vld [vmem:[#allocation2 + $0x60] sm:$0xff]
    %v89 = vld [vmem:[#allocation2 + $0x68] sm:$0xff]
    %v90 = vld [vmem:[#allocation2 + $0x70] sm:$0xff]
    %v91 = vld [vmem:[#allocation2 + $0x78] sm:$0xff]
    %v92 = vld [vmem:[#allocation5] sm:$0xff]
    %v93 = vld [vmem:[#allocation5 + $0x8] sm:$0xff]
    %v94 = vld [vmem:[#allocation5 + $0x10] sm:$0xff]
    %v95 = vld [vmem:[#allocation5 + $0x18] sm:$0xff]
    %v96 = vld [vmem:[#allocation5 + $0x20] sm:$0xff]
    %v97 = vld [vmem:[#allocation5 + $0x28] sm:$0xff]
    %v98 = vld [vmem:[#allocation5 + $0x30] sm:$0xff]
    %v99 = vld [vmem:[#allocation5 + $0x38] sm:$0xff]
    %v100 = vld [vmem:[#allocation5 + $0x40] sm:$0xff]
    %v101 = vld [vmem:[#allocation5 + $0x48] sm:$0xff]
    %v102 = vld [vmem:[#allocation5 + $0x50] sm:$0xff]
    %v103 = vld [vmem:[#allocation5 + $0x58] sm:$0xff]
    %v104 = vld [vmem:[#allocation5 + $0x60] sm:$0xff]
    %v105 = vld [vmem:[#allocation5 + $0x68] sm:$0xff]
    %v106 = vld [vmem:[#allocation5 + $0x70] sm:$0xff]
    %v107 = vld [vmem:[#allocation5 + $0x78] sm:$0xff]
    %v108 = vld [vmem:[#allocation7] sm:$0xff]
    %v109 = vld [vmem:[#allocation7 + $0x8] sm:$0xff]
    %v110 = vld [vmem:[#allocation7 + $0x10] sm:$0xff]
    %v111 = vld [vmem:[#allocation7 + $0x18] sm:$0xff]
    %v112 = vld [vmem:[#allocation7 + $0x20] sm:$0xff]
    %v113 = vld [vmem:[#allocation7 + $0x28] sm:$0xff]
    %v114 = vld [vmem:[#allocation7 + $0x30] sm:$0xff]
    %v115 = vld [vmem:[#allocation7 + $0x38] sm:$0xff]
    %v116 = vld [vmem:[#allocation7 + $0x40] sm:$0xff]
    %v117 = vld [vmem:[#allocation7 + $0x48] sm:$0xff]
    %v118 = vld [vmem:[#allocation7 + $0x50] sm:$0xff]
    %v119 = vld [vmem:[#allocation7 + $0x58] sm:$0xff]
    %v120 = vld [vmem:[#allocation7 + $0x60] sm:$0xff]
    %v121 = vld [vmem:[#allocation7 + $0x68] sm:$0xff]
    %v122 = vld [vmem:[#allocation7 + $0x70] sm:$0xff]
    %v123 = vld [vmem:[#allocation7 + $0x78] sm:$0xff]
    %v124 = vld [vmem:[#allocation8] sm:$0xff]
    %v125 = vld [vmem:[#allocation8 + $0x8] sm:$0xff]
    %v126 = vld [vmem:[#allocation8 + $0x10] sm:$0xff]
    %v127 = vld [vmem:[#allocation8 + $0x18] sm:$0xff]
    %v128 = vld [vmem:[#allocation8 + $0x20] sm:$0xff]
    %v129 = vld [vmem:[#allocation8 + $0x28] sm:$0xff]
    %v130 = vld [vmem:[#allocation8 + $0x30] sm:$0xff]
    %v131 = vld [vmem:[#allocation8 + $0x38] sm:$0xff]
    %v132 = vld [vmem:[#allocation8 + $0x40] sm:$0xff]
    %v133 = vld [vmem:[#allocation8 + $0x48] sm:$0xff]
    %v134 = vld [vmem:[#allocation8 + $0x50] sm:$0xff]
    %v135 = vld [vmem:[#allocation8 + $0x58] sm:$0xff]
    %v136 = vld [vmem:[#allocation8 + $0x60] sm:$0xff]
    %v137 = vld [vmem:[#allocation8 + $0x68] sm:$0xff]
    %v138 = vld [vmem:[#allocation8 + $0x70] sm:$0xff]
    %v139 = vld [vmem:[#allocation8 + $0x78] sm:$0xff]
    %140 = vmatprep.subr.mxu0 0.0
    %141 = vmatpush1.msra.mxu0 %v123
    %142 = vmatprep.subr.mxu0 0.0
    %143 = vmatpush1.msra.mxu0 %v122
    %144 = vmatprep.subr.mxu0 0.0
    %145 = vmatpush1.msra.mxu0 %v121
    %146 = vmatprep.subr.mxu0 0.0
    %147 = vmatpush1.msra.mxu0 %v120
    %148 = vmatprep.subr.mxu0 0.0
    %149 = vmatpush1.msra.mxu0 %v119
    %150 = vmatprep.subr.mxu0 0.0
    %151 = vmatpush1.msra.mxu0 %v118
    %152 = vmatprep.subr.mxu0 0.0
    %153 = vmatpush1.msra.mxu0 %v117
    %154 = vmatprep.subr.mxu0 0.0
    %155 = vmatpush1.msra.mxu0 %v116
    %156 = vmatprep.subr.mxu0 0.0
    %157 = vmatpush1.msra.mxu0 %v115
    %158 = vmatprep.subr.mxu0 0.0
    %159 = vmatpush1.msra.mxu0 %v114
    %160 = vmatprep.subr.mxu0 0.0
    %161 = vmatpush1.msra.mxu0 %v113
    %162 = vmatprep.subr.mxu0 0.0
    %163 = vmatpush1.msra.mxu0 %v112
    %164 = vmatprep.subr.mxu0 0.0
    %165 = vmatpush1.msra.mxu0 %v111
    %166 = vmatprep.subr.mxu0 0.0
    %167 = vmatpush1.msra.mxu0 %v110
    %168 = vmatprep.subr.mxu0 0.0
    %169 = vmatpush1.msra.mxu0 %v109
    %170 = vmatprep.subr.mxu0 0.0
    %171 = vmatpush1.msra.mxu0 %v108
    %172 = vmatprep.subr.mxu0 0.0
    %173 = vmatpush2.msra.mxu0 0.0
    %174 = vmatprep.subr.mxu0 0.0
    %175 = vmatpush2.msra.mxu0 0.0
    %176 = vmatprep.subr.mxu0 0.0
    %177 = vmatpush2.msra.mxu0 0.0
    %178 = vmatprep.subr.mxu0 0.0
    %179 = vmatpush2.msra.mxu0 0.0
    %180 = vmatprep.subr.mxu0 0.0
    %181 = vmatpush2.msra.mxu0 0.0
    %182 = vmatprep.subr.mxu0 0.0
    %183 = vmatpush2.msra.mxu0 0.0
    %184 = vmatprep.subr.mxu0 0.0
    %185 = vmatpush2.msra.mxu0 0.0
    %186 = vmatprep.subr.mxu0 0.0
    %187 = vmatpush2.msra.mxu0 0.0
    %188 = vmatprep.subr.mxu0 0.0
    %189 = vmatpush2.msra.mxu0 0.0
    %190 = vmatprep.subr.mxu0 0.0
    %191 = vmatpush2.msra.mxu0 0.0
    %192 = vmatprep.subr.mxu0 0.0
    %193 = vmatpush2.msra.mxu0 0.0
    %194 = vmatprep.subr.mxu0 0.0
    %195 = vmatpush2.msra.mxu0 0.0
    %196 = vmatprep.subr.mxu0 0.0
    %197 = vmatpush2.msra.mxu0 0.0
    %198 = vmatprep.subr.mxu0 0.0
    %199 = vmatpush2.msra.mxu0 0.0
    %200 = vmatprep.subr.mxu0 0.0
    %201 = vmatpush2.msra.mxu0 0.0
    %202 = vmatprep.subr.mxu0 0.0
    %203 = vmatpush2.msra.mxu0 0.0
    %204 = vmatprep.mubr.f32.mxu0 0.0
    %205 = vmatmul.mubr.f32.gmra.mxu0 %v92
    %v206 = vpop.f32.mrf.mxu0
    %v207 = vadd.f32 0.0, %v206
    %v208 = vpop.f32.mrf.mxu0
    %209 = vmatprep.mubr.f32.mxu0 0.0
    %210 = vmatmul.mubr.f32.gmra.mxu0 %v93
    %v211 = vpop.f32.mrf.mxu0
    %v212 = vadd.f32 0.0, %v211
    %v213 = vpop.f32.mrf.mxu0
    %214 = vmatprep.mubr.f32.mxu0 0.0
    %215 = vmatmul.mubr.f32.gmra.mxu0 %v94
    %v216 = vpop.f32.mrf.mxu0
    %v217 = vadd.f32 0.0, %v216
    %v218 = vpop.f32.mrf.mxu0
    %219 = vmatprep.mubr.f32.mxu0 0.0
    %220 = vmatmul.mubr.f32.gmra.mxu0 %v95
    %v221 = vpop.f32.mrf.mxu0
    %v222 = vadd.f32 0.0, %v221
    %v223 = vpop.f32.mrf.mxu0
    %224 = vmatprep.mubr.f32.mxu0 0.0
    %225 = vmatmul.mubr.f32.gmra.mxu0 %v96
    %v226 = vpop.f32.mrf.mxu0
    %v227 = vadd.f32 0.0, %v226
    %v228 = vpop.f32.mrf.mxu0
    %229 = vmatprep.mubr.f32.mxu0 0.0
    %230 = vmatmul.mubr.f32.gmra.mxu0 %v97
    %v231 = vpop.f32.mrf.mxu0
    %v232 = vadd.f32 0.0, %v231
    %v233 = vpop.f32.mrf.mxu0
    %234 = vmatprep.mubr.f32.mxu0 0.0
    %235 = vmatmul.mubr.f32.gmra.mxu0 %v98
    %v236 = vpop.f32.mrf.mxu0
    %v237 = vadd.f32 0.0, %v236
    %v238 = vpop.f32.mrf.mxu0
    %239 = vmatprep.mubr.f32.mxu0 0.0
    %240 = vmatmul.mubr.f32.gmra.mxu0 %v99
    %v241 = vpop.f32.mrf.mxu0
    %v242 = vadd.f32 0.0, %v241
    %v243 = vpop.f32.mrf.mxu0
    %244 = vmatprep.mubr.f32.mxu0 0.0
    %245 = vmatmul.mubr.f32.gmra.mxu0 %v100
    %v246 = vpop.f32.mrf.mxu0
    %v247 = vadd.f32 0.0, %v246
    %v248 = vpop.f32.mrf.mxu0
    %249 = vmatprep.mubr.f32.mxu0 0.0
    %250 = vmatmul.mubr.f32.gmra.mxu0 %v101
    %v251 = vpop.f32.mrf.mxu0
    %v252 = vadd.f32 0.0, %v251
    %v253 = vpop.f32.mrf.mxu0
    %254 = vmatprep.mubr.f32.mxu0 0.0
    %255 = vmatmul.mubr.f32.gmra.mxu0 %v102
    %v256 = vpop.f32.mrf.mxu0
    %v257 = vadd.f32 0.0, %v256
    %v258 = vpop.f32.mrf.mxu0
    %259 = vmatprep.mubr.f32.mxu0 0.0
    %260 = vmatmul.mubr.f32.gmra.mxu0 %v103
    %v261 = vpop.f32.mrf.mxu0
    %v262 = vadd.f32 0.0, %v261
    %v263 = vpop.f32.mrf.mxu0
    %264 = vmatprep.mubr.f32.mxu0 0.0
    %265 = vmatmul.mubr.f32.gmra.mxu0 %v104
    %v266 = vpop.f32.mrf.mxu0
    %v267 = vadd.f32 0.0, %v266
    %v268 = vpop.f32.mrf.mxu0
    %269 = vmatprep.mubr.f32.mxu0 0.0
    %270 = vmatmul.mubr.f32.gmra.mxu0 %v105
    %v271 = vpop.f32.mrf.mxu0
    %v272 = vadd.f32 0.0, %v271
    %v273 = vpop.f32.mrf.mxu0
    %274 = vmatprep.mubr.f32.mxu0 0.0
    %275 = vmatmul.mubr.f32.gmra.mxu0 %v106
    %v276 = vpop.f32.mrf.mxu0
    %v277 = vadd.f32 0.0, %v276
    %v278 = vpop.f32.mrf.mxu0
    %279 = vmatprep.mubr.f32.mxu0 0.0
    %280 = vmatmul.mubr.f32.gmra.mxu0 %v107
    %v281 = vpop.f32.mrf.mxu0
    %v282 = vadd.f32 0.0, %v281
    %v283 = vpop.f32.mrf.mxu0
    %284 = vdwg.mxu0
    %285 = vmatprep.subr.mxu0 0.0
    %286 = vmatpush1.msra.mxu0 %v282
    %287 = vmatprep.subr.mxu0 0.0
    %288 = vmatpush1.msra.mxu0 %v277
    %289 = vmatprep.subr.mxu0 0.0
    %290 = vmatpush1.msra.mxu0 %v272
    %291 = vmatprep.subr.mxu0 0.0
    %292 = vmatpush1.msra.mxu0 %v267
    %293 = vmatprep.subr.mxu0 0.0
    %294 = vmatpush1.msra.mxu0 %v262
    %295 = vmatprep.subr.mxu0 0.0
    %296 = vmatpush1.msra.mxu0 %v257
    %297 = vmatprep.subr.mxu0 0.0
    %298 = vmatpush1.msra.mxu0 %v252
    %299 = vmatprep.subr.mxu0 0.0
    %300 = vmatpush1.msra.mxu0 %v247
    %301 = vmatprep.subr.mxu0 0.0
    %302 = vmatpush1.msra.mxu0 %v242
    %303 = vmatprep.subr.mxu0 0.0
    %304 = vmatpush1.msra.mxu0 %v237
    %305 = vmatprep.subr.mxu0 0.0
    %306 = vmatpush1.msra.mxu0 %v232
    %307 = vmatprep.subr.mxu0 0.0
    %308 = vmatpush1.msra.mxu0 %v227
    %309 = vmatprep.subr.mxu0 0.0
    %310 = vmatpush1.msra.mxu0 %v222
    %311 = vmatprep.subr.mxu0 0.0
    %312 = vmatpush1.msra.mxu0 %v217
    %313 = vmatprep.subr.mxu0 0.0
    %314 = vmatpush1.msra.mxu0 %v212
    %315 = vmatprep.subr.mxu0 0.0
    %316 = vmatpush1.msra.mxu0 %v207
    %317 = vmatprep.subr.mxu0 0.0
    %318 = vmatpush2.msra.mxu0 0.0
    %319 = vmatprep.subr.mxu0 0.0
    %320 = vmatpush2.msra.mxu0 0.0
    %321 = vmatprep.subr.mxu0 0.0
    %322 = vmatpush2.msra.mxu0 0.0
    %323 = vmatprep.subr.mxu0 0.0
    %324 = vmatpush2.msra.mxu0 0.0
    %325 = vmatprep.subr.mxu0 0.0
    %326 = vmatpush2.msra.mxu0 0.0
    %327 = vmatprep.subr.mxu0 0.0
    %328 = vmatpush2.msra.mxu0 0.0
    %329 = vmatprep.subr.mxu0 0.0
    %330 = vmatpush2.msra.mxu0 0.0
    %331 = vmatprep.subr.mxu0 0.0
    %332 = vmatpush2.msra.mxu0 0.0
    %333 = vmatprep.subr.mxu0 0.0
    %334 = vmatpush2.msra.mxu0 0.0
    %335 = vmatprep.subr.mxu0 0.0
    %336 = vmatpush2.msra.mxu0 0.0
    %337 = vmatprep.subr.mxu0 0.0
    %338 = vmatpush2.msra.mxu0 0.0
    %339 = vmatprep.subr.mxu0 0.0
    %340 = vmatpush2.msra.mxu0 0.0
    %341 = vmatprep.subr.mxu0 0.0
    %342 = vmatpush2.msra.mxu0 0.0
    %343 = vmatprep.subr.mxu0 0.0
    %344 = vmatpush2.msra.mxu0 0.0
    %345 = vmatprep.subr.mxu0 0.0
    %346 = vmatpush2.msra.mxu0 0.0
    %347 = vmatprep.subr.mxu0 0.0
    %348 = vmatpush2.msra.mxu0 0.0
    %349 = vmatprep.mubr.f32.mxu0 0.0
    %350 = vmatmul.mubr.f32.gmra.mxu0 %v76
    %v351 = vpop.f32.mrf.mxu0
    %v352 = vadd.f32 0.0, %v351
    %v353 = vpop.f32.mrf.mxu0
    %354 = vmatprep.mubr.f32.mxu0 0.0
    %355 = vmatmul.mubr.f32.gmra.mxu0 %v77
    %v356 = vpop.f32.mrf.mxu0
    %v357 = vadd.f32 0.0, %v356
    %v358 = vpop.f32.mrf.mxu0
    %359 = vmatprep.mubr.f32.mxu0 0.0
    %360 = vmatmul.mubr.f32.gmra.mxu0 %v78
    %v361 = vpop.f32.mrf.mxu0
    %v362 = vadd.f32 0.0, %v361
    %v363 = vpop.f32.mrf.mxu0
    %364 = vmatprep.mubr.f32.mxu0 0.0
    %365 = vmatmul.mubr.f32.gmra.mxu0 %v79
    %v366 = vpop.f32.mrf.mxu0
    %v367 = vadd.f32 0.0, %v366
    %v368 = vpop.f32.mrf.mxu0
    %369 = vmatprep.mubr.f32.mxu0 0.0
    %370 = vmatmul.mubr.f32.gmra.mxu0 %v80
    %v371 = vpop.f32.mrf.mxu0
    %v372 = vadd.f32 0.0, %v371
    %v373 = vpop.f32.mrf.mxu0
    %374 = vmatprep.mubr.f32.mxu0 0.0
    %375 = vmatmul.mubr.f32.gmra.mxu0 %v81
    %v376 = vpop.f32.mrf.mxu0
    %v377 = vadd.f32 0.0, %v376
    %v378 = vpop.f32.mrf.mxu0
    %379 = vmatprep.mubr.f32.mxu0 0.0
    %380 = vmatmul.mubr.f32.gmra.mxu0 %v82
    %v381 = vpop.f32.mrf.mxu0
    %v382 = vadd.f32 0.0, %v381
    %v383 = vpop.f32.mrf.mxu0
    %384 = vmatprep.mubr.f32.mxu0 0.0
    %385 = vmatmul.mubr.f32.gmra.mxu0 %v83
    %v386 = vpop.f32.mrf.mxu0
    %v387 = vadd.f32 0.0, %v386
    %v388 = vpop.f32.mrf.mxu0
    %389 = vmatprep.mubr.f32.mxu0 0.0
    %390 = vmatmul.mubr.f32.gmra.mxu0 %v84
    %v391 = vpop.f32.mrf.mxu0
    %v392 = vadd.f32 0.0, %v391
    %v393 = vpop.f32.mrf.mxu0
    %394 = vmatprep.mubr.f32.mxu0 0.0
    %395 = vmatmul.mubr.f32.gmra.mxu0 %v85
    %v396 = vpop.f32.mrf.mxu0
    %v397 = vadd.f32 0.0, %v396
    %v398 = vpop.f32.mrf.mxu0
    %399 = vmatprep.mubr.f32.mxu0 0.0
    %400 = vmatmul.mubr.f32.gmra.mxu0 %v86
    %v401 = vpop.f32.mrf.mxu0
    %v402 = vadd.f32 0.0, %v401
    %v403 = vpop.f32.mrf.mxu0
    %404 = vmatprep.mubr.f32.mxu0 0.0
    %405 = vmatmul.mubr.f32.gmra.mxu0 %v87
    %v406 = vpop.f32.mrf.mxu0
    %v407 = vadd.f32 0.0, %v406
    %v408 = vpop.f32.mrf.mxu0
    %409 = vmatprep.mubr.f32.mxu0 0.0
    %410 = vmatmul.mubr.f32.gmra.mxu0 %v88
    %v411 = vpop.f32.mrf.mxu0
    %v412 = vadd.f32 0.0, %v411
    %v413 = vpop.f32.mrf.mxu0
    %414 = vmatprep.mubr.f32.mxu0 0.0
    %415 = vmatmul.mubr.f32.gmra.mxu0 %v89
    %v416 = vpop.f32.mrf.mxu0
    %v417 = vadd.f32 0.0, %v416
    %v418 = vpop.f32.mrf.mxu0
    %419 = vmatprep.mubr.f32.mxu0 0.0
    %420 = vmatmul.mubr.f32.gmra.mxu0 %v90
    %v421 = vpop.f32.mrf.mxu0
    %v422 = vadd.f32 0.0, %v421
    %v423 = vpop.f32.mrf.mxu0
    %424 = vmatprep.mubr.f32.mxu0 0.0
    %425 = vmatmul.mubr.f32.gmra.mxu0 %v91
    %v426 = vpop.f32.mrf.mxu0
    %v427 = vadd.f32 0.0, %v426
    %v428 = vpop.f32.mrf.mxu0
    %429 = vdwg.mxu0
    %v430 = vsub.f32 %v108, %v352
    %v431 = vsub.f32 %v109, %v357
    %v432 = vsub.f32 %v110, %v362
    %v433 = vsub.f32 %v111, %v367
    %v434 = vsub.f32 %v112, %v372
    %v435 = vsub.f32 %v113, %v377
    %v436 = vsub.f32 %v114, %v382
    %v437 = vsub.f32 %v115, %v387
    %v438 = vsub.f32 %v116, %v392
    %v439 = vsub.f32 %v117, %v397
    %v440 = vsub.f32 %v118, %v402
    %v441 = vsub.f32 %v119, %v407
    %v442 = vsub.f32 %v120, %v412
    %v443 = vsub.f32 %v121, %v417
    %v444 = vsub.f32 %v122, %v422
    %v445 = vsub.f32 %v123, %v427
    %446 = vst [vmem:[#allocation10] sm:$0xff] %v430
    %447 = vst [vmem:[#allocation10 + $0x8] sm:$0xff] %v431
    %448 = vst [vmem:[#allocation10 + $0x10] sm:$0xff] %v432
    %449 = vst [vmem:[#allocation10 + $0x18] sm:$0xff] %v433
    %450 = vst [vmem:[#allocation10 + $0x20] sm:$0xff] %v434
    %451 = vst [vmem:[#allocation10 + $0x28] sm:$0xff] %v435
    %452 = vst [vmem:[#allocation10 + $0x30] sm:$0xff] %v436
    %453 = vst [vmem:[#allocation10 + $0x38] sm:$0xff] %v437
    %454 = vst [vmem:[#allocation10 + $0x40] sm:$0xff] %v438
    %455 = vst [vmem:[#allocation10 + $0x48] sm:$0xff] %v439
    %456 = vst [vmem:[#allocation10 + $0x50] sm:$0xff] %v440
    %457 = vst [vmem:[#allocation10 + $0x58] sm:$0xff] %v441
    %458 = vst [vmem:[#allocation10 + $0x60] sm:$0xff] %v442
    %459 = vst [vmem:[#allocation10 + $0x68] sm:$0xff] %v443
    %460 = vst [vmem:[#allocation10 + $0x70] sm:$0xff] %v444
    %461 = vst [vmem:[#allocation10 + $0x78] sm:$0xff] %v445
    %v462 = vsub.f32 %v124, %v207
    %v463 = vsub.f32 %v125, %v212
    %v464 = vsub.f32 %v126, %v217
    %v465 = vsub.f32 %v127, %v222
    %v466 = vsub.f32 %v128, %v227
    %v467 = vsub.f32 %v129, %v232
    %v468 = vsub.f32 %v130, %v237
    %v469 = vsub.f32 %v131, %v242
    %v470 = vsub.f32 %v132, %v247
    %v471 = vsub.f32 %v133, %v252
    %v472 = vsub.f32 %v134, %v257
    %v473 = vsub.f32 %v135, %v262
    %v474 = vsub.f32 %v136, %v267
    %v475 = vsub.f32 %v137, %v272
    %v476 = vsub.f32 %v138, %v277
    %v477 = vsub.f32 %v139, %v282
    %478 = vst [vmem:[#allocation11] sm:$0xff] %v462
    %479 = vst [vmem:[#allocation11 + $0x8] sm:$0xff] %v463
    %480 = vst [vmem:[#allocation11 + $0x10] sm:$0xff] %v464
    %481 = vst [vmem:[#allocation11 + $0x18] sm:$0xff] %v465
    %482 = vst [vmem:[#allocation11 + $0x20] sm:$0xff] %v466
    %483 = vst [vmem:[#allocation11 + $0x28] sm:$0xff] %v467
    %484 = vst [vmem:[#allocation11 + $0x30] sm:$0xff] %v468
    %485 = vst [vmem:[#allocation11 + $0x38] sm:$0xff] %v469
    %486 = vst [vmem:[#allocation11 + $0x40] sm:$0xff] %v470
    %487 = vst [vmem:[#allocation11 + $0x48] sm:$0xff] %v471
    %488 = vst [vmem:[#allocation11 + $0x50] sm:$0xff] %v472
    %489 = vst [vmem:[#allocation11 + $0x58] sm:$0xff] %v473
    %490 = vst [vmem:[#allocation11 + $0x60] sm:$0xff] %v474
    %491 = vst [vmem:[#allocation11 + $0x68] sm:$0xff] %v475
    %492 = vst [vmem:[#allocation11 + $0x70] sm:$0xff] %v476
    %493 = vst [vmem:[#allocation11 + $0x78] sm:$0xff] %v477
    %494 = vmatprep.subr.mxu0 0.0
    %495 = vmatpush1.msra.mxu0 %v427
    %496 = vmatprep.subr.mxu0 0.0
    %497 = vmatpush1.msra.mxu0 %v422
    %498 = vmatprep.subr.mxu0 0.0
    %499 = vmatpush1.msra.mxu0 %v417
    %500 = vmatprep.subr.mxu0 0.0
    %501 = vmatpush1.msra.mxu0 %v412
    %502 = vmatprep.subr.mxu0 0.0
    %503 = vmatpush1.msra.mxu0 %v407
    %504 = vmatprep.subr.mxu0 0.0
    %505 = vmatpush1.msra.mxu0 %v402
    %506 = vmatprep.subr.mxu0 0.0
    %507 = vmatpush1.msra.mxu0 %v397
    %508 = vmatprep.subr.mxu0 0.0
    %509 = vmatpush1.msra.mxu0 %v392
    %510 = vmatprep.subr.mxu0 0.0
    %511 = vmatpush1.msra.mxu0 %v387
    %512 = vmatprep.subr.mxu0 0.0
    %513 = vmatpush1.msra.mxu0 %v382
    %514 = vmatprep.subr.mxu0 0.0
    %515 = vmatpush1.msra.mxu0 %v377
    %516 = vmatprep.subr.mxu0 0.0
    %517 = vmatpush1.msra.mxu0 %v372
    %518 = vmatprep.subr.mxu0 0.0
    %519 = vmatpush1.msra.mxu0 %v367
    %520 = vmatprep.subr.mxu0 0.0
    %521 = vmatpush1.msra.mxu0 %v362
    %522 = vmatprep.subr.mxu0 0.0
    %523 = vmatpush1.msra.mxu0 %v357
    %524 = vmatprep.subr.mxu0 0.0
    %525 = vmatpush1.msra.mxu0 %v352
    %526 = vmatprep.subr.mxu0 0.0
    %527 = vmatpush2.msra.mxu0 0.0
    %528 = vmatprep.subr.mxu0 0.0
    %529 = vmatpush2.msra.mxu0 0.0
    %530 = vmatprep.subr.mxu0 0.0
    %531 = vmatpush2.msra.mxu0 0.0
    %532 = vmatprep.subr.mxu0 0.0
    %533 = vmatpush2.msra.mxu0 0.0
    %534 = vmatprep.subr.mxu0 0.0
    %535 = vmatpush2.msra.mxu0 0.0
    %536 = vmatprep.subr.mxu0 0.0
    %537 = vmatpush2.msra.mxu0 0.0
    %538 = vmatprep.subr.mxu0 0.0
    %539 = vmatpush2.msra.mxu0 0.0
    %540 = vmatprep.subr.mxu0 0.0
    %541 = vmatpush2.msra.mxu0 0.0
    %542 = vmatprep.subr.mxu0 0.0
    %543 = vmatpush2.msra.mxu0 0.0
    %544 = vmatprep.subr.mxu0 0.0
    %545 = vmatpush2.msra.mxu0 0.0
    %546 = vmatprep.subr.mxu0 0.0
    %547 = vmatpush2.msra.mxu0 0.0
    %548 = vmatprep.subr.mxu0 0.0
    %549 = vmatpush2.msra.mxu0 0.0
    %550 = vmatprep.subr.mxu0 0.0
    %551 = vmatpush2.msra.mxu0 0.0
    %552 = vmatprep.subr.mxu0 0.0
    %553 = vmatpush2.msra.mxu0 0.0
    %554 = vmatprep.subr.mxu0 0.0
    %555 = vmatpush2.msra.mxu0 0.0
    %556 = vmatprep.subr.mxu0 0.0
    %557 = vmatpush2.msra.mxu0 0.0
    %558 = vmatprep.mubr.f32.mxu0 0.0
    %559 = vmatmul.mubr.f32.gmra.mxu0 %v92
    %v560 = vpop.f32.mrf.mxu0
    %v561 = vadd.f32 0.0, %v560
    %v562 = vpop.f32.mrf.mxu0
    %563 = vmatprep.mubr.f32.mxu0 0.0
    %564 = vmatmul.mubr.f32.gmra.mxu0 %v93
    %v565 = vpop.f32.mrf.mxu0
    %v566 = vadd.f32 0.0, %v565
    %v567 = vpop.f32.mrf.mxu0
    %568 = vmatprep.mubr.f32.mxu0 0.0
    %569 = vmatmul.mubr.f32.gmra.mxu0 %v94
    %v570 = vpop.f32.mrf.mxu0
    %v571 = vadd.f32 0.0, %v570
    %v572 = vpop.f32.mrf.mxu0
    %573 = vmatprep.mubr.f32.mxu0 0.0
    %574 = vmatmul.mubr.f32.gmra.mxu0 %v95
    %v575 = vpop.f32.mrf.mxu0
    %v576 = vadd.f32 0.0, %v575
    %v577 = vpop.f32.mrf.mxu0
    %578 = vmatprep.mubr.f32.mxu0 0.0
    %579 = vmatmul.mubr.f32.gmra.mxu0 %v96
    %v580 = vpop.f32.mrf.mxu0
    %v581 = vadd.f32 0.0, %v580
    %v582 = vpop.f32.mrf.mxu0
    %583 = vmatprep.mubr.f32.mxu0 0.0
    %584 = vmatmul.mubr.f32.gmra.mxu0 %v97
    %v585 = vpop.f32.mrf.mxu0
    %v586 = vadd.f32 0.0, %v585
    %v587 = vpop.f32.mrf.mxu0
    %588 = vmatprep.mubr.f32.mxu0 0.0
    %589 = vmatmul.mubr.f32.gmra.mxu0 %v98
    %v590 = vpop.f32.mrf.mxu0
    %v591 = vadd.f32 0.0, %v590
    %v592 = vpop.f32.mrf.mxu0
    %593 = vmatprep.mubr.f32.mxu0 0.0
    %594 = vmatmul.mubr.f32.gmra.mxu0 %v99
    %v595 = vpop.f32.mrf.mxu0
    %v596 = vadd.f32 0.0, %v595
    %v597 = vpop.f32.mrf.mxu0
    %598 = vmatprep.mubr.f32.mxu0 0.0
    %599 = vmatmul.mubr.f32.gmra.mxu0 %v100
    %v600 = vpop.f32.mrf.mxu0
    %v601 = vadd.f32 0.0, %v600
    %v602 = vpop.f32.mrf.mxu0
    %603 = vmatprep.mubr.f32.mxu0 0.0
    %604 = vmatmul.mubr.f32.gmra.mxu0 %v101
    %v605 = vpop.f32.mrf.mxu0
    %v606 = vadd.f32 0.0, %v605
    %v607 = vpop.f32.mrf.mxu0
    %608 = vmatprep.mubr.f32.mxu0 0.0
    %609 = vmatmul.mubr.f32.gmra.mxu0 %v102
    %v610 = vpop.f32.mrf.mxu0
    %v611 = vadd.f32 0.0, %v610
    %v612 = vpop.f32.mrf.mxu0
    %613 = vmatprep.mubr.f32.mxu0 0.0
    %614 = vmatmul.mubr.f32.gmra.mxu0 %v103
    %v615 = vpop.f32.mrf.mxu0
    %v616 = vadd.f32 0.0, %v615
    %v617 = vpop.f32.mrf.mxu0
    %618 = vmatprep.mubr.f32.mxu0 0.0
    %619 = vmatmul.mubr.f32.gmra.mxu0 %v104
    %v620 = vpop.f32.mrf.mxu0
    %v621 = vadd.f32 0.0, %v620
    %v622 = vpop.f32.mrf.mxu0
    %623 = vmatprep.mubr.f32.mxu0 0.0
    %624 = vmatmul.mubr.f32.gmra.mxu0 %v105
    %v625 = vpop.f32.mrf.mxu0
    %v626 = vadd.f32 0.0, %v625
    %v627 = vpop.f32.mrf.mxu0
    %628 = vmatprep.mubr.f32.mxu0 0.0
    %629 = vmatmul.mubr.f32.gmra.mxu0 %v106
    %v630 = vpop.f32.mrf.mxu0
    %v631 = vadd.f32 0.0, %v630
    %v632 = vpop.f32.mrf.mxu0
    %633 = vmatprep.mubr.f32.mxu0 0.0
    %634 = vmatmul.mubr.f32.gmra.mxu0 %v107
    %v635 = vpop.f32.mrf.mxu0
    %v636 = vadd.f32 0.0, %v635
    %v637 = vpop.f32.mrf.mxu0
    %638 = vdwg.mxu0
    %639 = vmatprep.subr.mxu0 0.0
    %640 = vmatpush1.msra.mxu0 %v636
    %641 = vmatprep.subr.mxu0 0.0
    %642 = vmatpush1.msra.mxu0 %v631
    %643 = vmatprep.subr.mxu0 0.0
    %644 = vmatpush1.msra.mxu0 %v626
    %645 = vmatprep.subr.mxu0 0.0
    %646 = vmatpush1.msra.mxu0 %v621
    %647 = vmatprep.subr.mxu0 0.0
    %648 = vmatpush1.msra.mxu0 %v616
    %649 = vmatprep.subr.mxu0 0.0
    %650 = vmatpush1.msra.mxu0 %v611
    %651 = vmatprep.subr.mxu0 0.0
    %652 = vmatpush1.msra.mxu0 %v606
    %653 = vmatprep.subr.mxu0 0.0
    %654 = vmatpush1.msra.mxu0 %v601
    %655 = vmatprep.subr.mxu0 0.0
    %656 = vmatpush1.msra.mxu0 %v596
    %657 = vmatprep.subr.mxu0 0.0
    %658 = vmatpush1.msra.mxu0 %v591
    %659 = vmatprep.subr.mxu0 0.0
    %660 = vmatpush1.msra.mxu0 %v586
    %661 = vmatprep.subr.mxu0 0.0
    %662 = vmatpush1.msra.mxu0 %v581
    %663 = vmatprep.subr.mxu0 0.0
    %664 = vmatpush1.msra.mxu0 %v576
    %665 = vmatprep.subr.mxu0 0.0
    %666 = vmatpush1.msra.mxu0 %v571
    %667 = vmatprep.subr.mxu0 0.0
    %668 = vmatpush1.msra.mxu0 %v566
    %669 = vmatprep.subr.mxu0 0.0
    %670 = vmatpush1.msra.mxu0 %v561
    %671 = vmatprep.subr.mxu0 0.0
    %672 = vmatpush2.msra.mxu0 0.0
    %673 = vmatprep.subr.mxu0 0.0
    %674 = vmatpush2.msra.mxu0 0.0
    %675 = vmatprep.subr.mxu0 0.0
    %676 = vmatpush2.msra.mxu0 0.0
    %677 = vmatprep.subr.mxu0 0.0
    %678 = vmatpush2.msra.mxu0 0.0
    %679 = vmatprep.subr.mxu0 0.0
    %680 = vmatpush2.msra.mxu0 0.0
    %681 = vmatprep.subr.mxu0 0.0
    %682 = vmatpush2.msra.mxu0 0.0
    %683 = vmatprep.subr.mxu0 0.0
    %684 = vmatpush2.msra.mxu0 0.0
    %685 = vmatprep.subr.mxu0 0.0
    %686 = vmatpush2.msra.mxu0 0.0
    %687 = vmatprep.subr.mxu0 0.0
    %688 = vmatpush2.msra.mxu0 0.0
    %689 = vmatprep.subr.mxu0 0.0
    %690 = vmatpush2.msra.mxu0 0.0
    %691 = vmatprep.subr.mxu0 0.0
    %692 = vmatpush2.msra.mxu0 0.0
    %693 = vmatprep.subr.mxu0 0.0
    %694 = vmatpush2.msra.mxu0 0.0
    %695 = vmatprep.subr.mxu0 0.0
    %696 = vmatpush2.msra.mxu0 0.0
    %697 = vmatprep.subr.mxu0 0.0
    %698 = vmatpush2.msra.mxu0 0.0
    %699 = vmatprep.subr.mxu0 0.0
    %700 = vmatpush2.msra.mxu0 0.0
    %701 = vmatprep.subr.mxu0 0.0
    %702 = vmatpush2.msra.mxu0 0.0
    %703 = vmatprep.mubr.f32.mxu0 0.0
    %704 = vmatmul.mubr.f32.gmra.mxu0 %v76
    %v705 = vpop.f32.mrf.mxu0
    %v706 = vadd.f32 0.0, %v705
    %v707 = vpop.f32.mrf.mxu0
    %708 = vmatprep.mubr.f32.mxu0 0.0
    %709 = vmatmul.mubr.f32.gmra.mxu0 %v77
    %v710 = vpop.f32.mrf.mxu0
    %v711 = vadd.f32 0.0, %v710
    %v712 = vpop.f32.mrf.mxu0
    %713 = vmatprep.mubr.f32.mxu0 0.0
    %714 = vmatmul.mubr.f32.gmra.mxu0 %v78
    %v715 = vpop.f32.mrf.mxu0
    %v716 = vadd.f32 0.0, %v715
    %v717 = vpop.f32.mrf.mxu0
    %718 = vmatprep.mubr.f32.mxu0 0.0
    %719 = vmatmul.mubr.f32.gmra.mxu0 %v79
    %v720 = vpop.f32.mrf.mxu0
    %v721 = vadd.f32 0.0, %v720
    %v722 = vpop.f32.mrf.mxu0
    %723 = vmatprep.mubr.f32.mxu0 0.0
    %724 = vmatmul.mubr.f32.gmra.mxu0 %v80
    %v725 = vpop.f32.mrf.mxu0
    %v726 = vadd.f32 0.0, %v725
    %v727 = vpop.f32.mrf.mxu0
    %728 = vmatprep.mubr.f32.mxu0 0.0
    %729 = vmatmul.mubr.f32.gmra.mxu0 %v81
    %v730 = vpop.f32.mrf.mxu0
    %v731 = vadd.f32 0.0, %v730
    %v732 = vpop.f32.mrf.mxu0
    %733 = vmatprep.mubr.f32.mxu0 0.0
    %734 = vmatmul.mubr.f32.gmra.mxu0 %v82
    %v735 = vpop.f32.mrf.mxu0
    %v736 = vadd.f32 0.0, %v735
    %v737 = vpop.f32.mrf.mxu0
    %738 = vmatprep.mubr.f32.mxu0 0.0
    %739 = vmatmul.mubr.f32.gmra.mxu0 %v83
    %v740 = vpop.f32.mrf.mxu0
    %v741 = vadd.f32 0.0, %v740
    %v742 = vpop.f32.mrf.mxu0
    %743 = vmatprep.mubr.f32.mxu0 0.0
    %744 = vmatmul.mubr.f32.gmra.mxu0 %v84
    %v745 = vpop.f32.mrf.mxu0
    %v746 = vadd.f32 0.0, %v745
    %v747 = vpop.f32.mrf.mxu0
    %748 = vmatprep.mubr.f32.mxu0 0.0
    %749 = vmatmul.mubr.f32.gmra.mxu0 %v85
    %v750 = vpop.f32.mrf.mxu0
    %v751 = vadd.f32 0.0, %v750
    %v752 = vpop.f32.mrf.mxu0
    %753 = vmatprep.mubr.f32.mxu0 0.0
    %754 = vmatmul.mubr.f32.gmra.mxu0 %v86
    %v755 = vpop.f32.mrf.mxu0
    %v756 = vadd.f32 0.0, %v755
    %v757 = vpop.f32.mrf.mxu0
    %758 = vmatprep.mubr.f32.mxu0 0.0
    %759 = vmatmul.mubr.f32.gmra.mxu0 %v87
    %v760 = vpop.f32.mrf.mxu0
    %v761 = vadd.f32 0.0, %v760
    %v762 = vpop.f32.mrf.mxu0
    %763 = vmatprep.mubr.f32.mxu0 0.0
    %764 = vmatmul.mubr.f32.gmra.mxu0 %v88
    %v765 = vpop.f32.mrf.mxu0
    %v766 = vadd.f32 0.0, %v765
    %v767 = vpop.f32.mrf.mxu0
    %768 = vmatprep.mubr.f32.mxu0 0.0
    %769 = vmatmul.mubr.f32.gmra.mxu0 %v89
    %v770 = vpop.f32.mrf.mxu0
    %v771 = vadd.f32 0.0, %v770
    %v772 = vpop.f32.mrf.mxu0
    %773 = vmatprep.mubr.f32.mxu0 0.0
    %774 = vmatmul.mubr.f32.gmra.mxu0 %v90
    %v775 = vpop.f32.mrf.mxu0
    %v776 = vadd.f32 0.0, %v775
    %v777 = vpop.f32.mrf.mxu0
    %778 = vmatprep.mubr.f32.mxu0 0.0
    %779 = vmatmul.mubr.f32.gmra.mxu0 %v91
    %v780 = vpop.f32.mrf.mxu0
    %v781 = vadd.f32 0.0, %v780
    %v782 = vpop.f32.mrf.mxu0
    %783 = vdwg.mxu0
    %v784 = vsub.f32 %v352, %v706
    %v785 = vsub.f32 %v357, %v711
    %v786 = vsub.f32 %v362, %v716
    %v787 = vsub.f32 %v367, %v721
    %v788 = vsub.f32 %v372, %v726
    %v789 = vsub.f32 %v377, %v731
    %v790 = vsub.f32 %v382, %v736
    %v791 = vsub.f32 %v387, %v741
    %v792 = vsub.f32 %v392, %v746
    %v793 = vsub.f32 %v397, %v751
    %v794 = vsub.f32 %v402, %v756
    %v795 = vsub.f32 %v407, %v761
    %v796 = vsub.f32 %v412, %v766
    %v797 = vsub.f32 %v417, %v771
    %v798 = vsub.f32 %v422, %v776
    %v799 = vsub.f32 %v427, %v781
    %s800 = scalar_lea.vmem [#allocation10], 128
    %801 = vst [vmem:[%s800] sm:$0xff] %v784
    %802 = vst [vmem:[%s800 + $0x8] sm:$0xff] %v785
    %803 = vst [vmem:[%s800 + $0x10] sm:$0xff] %v786
    %804 = vst [vmem:[%s800 + $0x18] sm:$0xff] %v787
    %805 = vst [vmem:[%s800 + $0x20] sm:$0xff] %v788
    %806 = vst [vmem:[%s800 + $0x28] sm:$0xff] %v789
    %807 = vst [vmem:[%s800 + $0x30] sm:$0xff] %v790
    %808 = vst [vmem:[%s800 + $0x38] sm:$0xff] %v791
    %809 = vst [vmem:[%s800 + $0x40] sm:$0xff] %v792
    %810 = vst [vmem:[%s800 + $0x48] sm:$0xff] %v793
    %811 = vst [vmem:[%s800 + $0x50] sm:$0xff] %v794
    %812 = vst [vmem:[%s800 + $0x58] sm:$0xff] %v795
    %813 = vst [vmem:[%s800 + $0x60] sm:$0xff] %v796
    %814 = vst [vmem:[%s800 + $0x68] sm:$0xff] %v797
    %815 = vst [vmem:[%s800 + $0x70] sm:$0xff] %v798
    %816 = vst [vmem:[%s800 + $0x78] sm:$0xff] %v799
    %v817 = vsub.f32 %v207, %v561
    %v818 = vsub.f32 %v212, %v566
    %v819 = vsub.f32 %v217, %v571
    %v820 = vsub.f32 %v222, %v576
    %v821 = vsub.f32 %v227, %v581
    %v822 = vsub.f32 %v232, %v586
    %v823 = vsub.f32 %v237, %v591
    %v824 = vsub.f32 %v242, %v596
    %v825 = vsub.f32 %v247, %v601
    %v826 = vsub.f32 %v252, %v606
    %v827 = vsub.f32 %v257, %v611
    %v828 = vsub.f32 %v262, %v616
    %v829 = vsub.f32 %v267, %v621
    %v830 = vsub.f32 %v272, %v626
    %v831 = vsub.f32 %v277, %v631
    %v832 = vsub.f32 %v282, %v636
    %s833 = scalar_lea.vmem [#allocation11], 128
    %834 = vst [vmem:[%s833] sm:$0xff] %v817
    %835 = vst [vmem:[%s833 + $0x8] sm:$0xff] %v818
    %836 = vst [vmem:[%s833 + $0x10] sm:$0xff] %v819
    %837 = vst [vmem:[%s833 + $0x18] sm:$0xff] %v820
    %838 = vst [vmem:[%s833 + $0x20] sm:$0xff] %v821
    %839 = vst [vmem:[%s833 + $0x28] sm:$0xff] %v822
    %840 = vst [vmem:[%s833 + $0x30] sm:$0xff] %v823
    %841 = vst [vmem:[%s833 + $0x38] sm:$0xff] %v824
    %842 = vst [vmem:[%s833 + $0x40] sm:$0xff] %v825
    %843 = vst [vmem:[%s833 + $0x48] sm:$0xff] %v826
    %844 = vst [vmem:[%s833 + $0x50] sm:$0xff] %v827
    %845 = vst [vmem:[%s833 + $0x58] sm:$0xff] %v828
    %846 = vst [vmem:[%s833 + $0x60] sm:$0xff] %v829
    %847 = vst [vmem:[%s833 + $0x68] sm:$0xff] %v830
    %848 = vst [vmem:[%s833 + $0x70] sm:$0xff] %v831
    %849 = vst [vmem:[%s833 + $0x78] sm:$0xff] %v832
    %850 = vmatprep.subr.mxu0 0.0
    %851 = vmatpush1.msra.mxu0 %v781
    %852 = vmatprep.subr.mxu0 0.0
    %853 = vmatpush1.msra.mxu0 %v776
    %854 = vmatprep.subr.mxu0 0.0
    %855 = vmatpush1.msra.mxu0 %v771
    %856 = vmatprep.subr.mxu0 0.0
    %857 = vmatpush1.msra.mxu0 %v766
    %858 = vmatprep.subr.mxu0 0.0
    %859 = vmatpush1.msra.mxu0 %v761
    %860 = vmatprep.subr.mxu0 0.0
    %861 = vmatpush1.msra.mxu0 %v756
    %862 = vmatprep.subr.mxu0 0.0
    %863 = vmatpush1.msra.mxu0 %v751
    %864 = vmatprep.subr.mxu0 0.0
    %865 = vmatpush1.msra.mxu0 %v746
    %866 = vmatprep.subr.mxu0 0.0
    %867 = vmatpush1.msra.mxu0 %v741
    %868 = vmatprep.subr.mxu0 0.0
    %869 = vmatpush1.msra.mxu0 %v736
    %870 = vmatprep.subr.mxu0 0.0
    %871 = vmatpush1.msra.mxu0 %v731
    %872 = vmatprep.subr.mxu0 0.0
    %873 = vmatpush1.msra.mxu0 %v726
    %874 = vmatprep.subr.mxu0 0.0
    %875 = vmatpush1.msra.mxu0 %v721
    %876 = vmatprep.subr.mxu0 0.0
    %877 = vmatpush1.msra.mxu0 %v716
    %878 = vmatprep.subr.mxu0 0.0
    %879 = vmatpush1.msra.mxu0 %v711
    %880 = vmatprep.subr.mxu0 0.0
    %881 = vmatpush1.msra.mxu0 %v706
    %882 = vmatprep.subr.mxu0 0.0
    %883 = vmatpush2.msra.mxu0 0.0
    %884 = vmatprep.subr.mxu0 0.0
    %885 = vmatpush2.msra.mxu0 0.0
    %886 = vmatprep.subr.mxu0 0.0
    %887 = vmatpush2.msra.mxu0 0.0
    %888 = vmatprep.subr.mxu0 0.0
    %889 = vmatpush2.msra.mxu0 0.0
    %890 = vmatprep.subr.mxu0 0.0
    %891 = vmatpush2.msra.mxu0 0.0
    %892 = vmatprep.subr.mxu0 0.0
    %893 = vmatpush2.msra.mxu0 0.0
    %894 = vmatprep.subr.mxu0 0.0
    %895 = vmatpush2.msra.mxu0 0.0
    %896 = vmatprep.subr.mxu0 0.0
    %897 = vmatpush2.msra.mxu0 0.0
    %898 = vmatprep.subr.mxu0 0.0
    %899 = vmatpush2.msra.mxu0 0.0
    %900 = vmatprep.subr.mxu0 0.0
    %901 = vmatpush2.msra.mxu0 0.0
    %902 = vmatprep.subr.mxu0 0.0
    %903 = vmatpush2.msra.mxu0 0.0
    %904 = vmatprep.subr.mxu0 0.0
    %905 = vmatpush2.msra.mxu0 0.0
    %906 = vmatprep.subr.mxu0 0.0
    %907 = vmatpush2.msra.mxu0 0.0
    %908 = vmatprep.subr.mxu0 0.0
    %909 = vmatpush2.msra.mxu0 0.0
    %910 = vmatprep.subr.mxu0 0.0
    %911 = vmatpush2.msra.mxu0 0.0
    %912 = vmatprep.subr.mxu0 0.0
    %913 = vmatpush2.msra.mxu0 0.0
    %914 = vmatprep.mubr.f32.mxu0 0.0
    %915 = vmatmul.mubr.f32.gmra.mxu0 %v92
    %v916 = vpop.f32.mrf.mxu0
    %v917 = vadd.f32 0.0, %v916
    %v918 = vpop.f32.mrf.mxu0
    %919 = vmatprep.mubr.f32.mxu0 0.0
    %920 = vmatmul.mubr.f32.gmra.mxu0 %v93
    %v921 = vpop.f32.mrf.mxu0
    %v922 = vadd.f32 0.0, %v921
    %v923 = vpop.f32.mrf.mxu0
    %924 = vmatprep.mubr.f32.mxu0 0.0
    %925 = vmatmul.mubr.f32.gmra.mxu0 %v94
    %v926 = vpop.f32.mrf.mxu0
    %v927 = vadd.f32 0.0, %v926
    %v928 = vpop.f32.mrf.mxu0
    %929 = vmatprep.mubr.f32.mxu0 0.0
    %930 = vmatmul.mubr.f32.gmra.mxu0 %v95
    %v931 = vpop.f32.mrf.mxu0
    %v932 = vadd.f32 0.0, %v931
    %v933 = vpop.f32.mrf.mxu0
    %934 = vmatprep.mubr.f32.mxu0 0.0
    %935 = vmatmul.mubr.f32.gmra.mxu0 %v96
    %v936 = vpop.f32.mrf.mxu0
    %v937 = vadd.f32 0.0, %v936
    %v938 = vpop.f32.mrf.mxu0
    %939 = vmatprep.mubr.f32.mxu0 0.0
    %940 = vmatmul.mubr.f32.gmra.mxu0 %v97
    %v941 = vpop.f32.mrf.mxu0
    %v942 = vadd.f32 0.0, %v941
    %v943 = vpop.f32.mrf.mxu0
    %944 = vmatprep.mubr.f32.mxu0 0.0
    %945 = vmatmul.mubr.f32.gmra.mxu0 %v98
    %v946 = vpop.f32.mrf.mxu0
    %v947 = vadd.f32 0.0, %v946
    %v948 = vpop.f32.mrf.mxu0
    %949 = vmatprep.mubr.f32.mxu0 0.0
    %950 = vmatmul.mubr.f32.gmra.mxu0 %v99
    %v951 = vpop.f32.mrf.mxu0
    %v952 = vadd.f32 0.0, %v951
    %v953 = vpop.f32.mrf.mxu0
    %954 = vmatprep.mubr.f32.mxu0 0.0
    %955 = vmatmul.mubr.f32.gmra.mxu0 %v100
    %v956 = vpop.f32.mrf.mxu0
    %v957 = vadd.f32 0.0, %v956
    %v958 = vpop.f32.mrf.mxu0
    %959 = vmatprep.mubr.f32.mxu0 0.0
    %960 = vmatmul.mubr.f32.gmra.mxu0 %v101
    %v961 = vpop.f32.mrf.mxu0
    %v962 = vadd.f32 0.0, %v961
    %v963 = vpop.f32.mrf.mxu0
    %964 = vmatprep.mubr.f32.mxu0 0.0
    %965 = vmatmul.mubr.f32.gmra.mxu0 %v102
    %v966 = vpop.f32.mrf.mxu0
    %v967 = vadd.f32 0.0, %v966
    %v968 = vpop.f32.mrf.mxu0
    %969 = vmatprep.mubr.f32.mxu0 0.0
    %970 = vmatmul.mubr.f32.gmra.mxu0 %v103
    %v971 = vpop.f32.mrf.mxu0
    %v972 = vadd.f32 0.0, %v971
    %v973 = vpop.f32.mrf.mxu0
    %974 = vmatprep.mubr.f32.mxu0 0.0
    %975 = vmatmul.mubr.f32.gmra.mxu0 %v104
    %v976 = vpop.f32.mrf.mxu0
    %v977 = vadd.f32 0.0, %v976
    %v978 = vpop.f32.mrf.mxu0
    %979 = vmatprep.mubr.f32.mxu0 0.0
    %980 = vmatmul.mubr.f32.gmra.mxu0 %v105
    %v981 = vpop.f32.mrf.mxu0
    %v982 = vadd.f32 0.0, %v981
    %v983 = vpop.f32.mrf.mxu0
    %984 = vmatprep.mubr.f32.mxu0 0.0
    %985 = vmatmul.mubr.f32.gmra.mxu0 %v106
    %v986 = vpop.f32.mrf.mxu0
    %v987 = vadd.f32 0.0, %v986
    %v988 = vpop.f32.mrf.mxu0
    %989 = vmatprep.mubr.f32.mxu0 0.0
    %990 = vmatmul.mubr.f32.gmra.mxu0 %v107
    %v991 = vpop.f32.mrf.mxu0
    %v992 = vadd.f32 0.0, %v991
    %v993 = vpop.f32.mrf.mxu0
    %994 = vdwg.mxu0
    %995 = vmatprep.subr.mxu0 0.0
    %996 = vmatpush1.msra.mxu0 %v992
    %997 = vmatprep.subr.mxu0 0.0
    %998 = vmatpush1.msra.mxu0 %v987
    %999 = vmatprep.subr.mxu0 0.0
    %1000 = vmatpush1.msra.mxu0 %v982
    %1001 = vmatprep.subr.mxu0 0.0
    %1002 = vmatpush1.msra.mxu0 %v977
    %1003 = vmatprep.subr.mxu0 0.0
    %1004 = vmatpush1.msra.mxu0 %v972
    %1005 = vmatprep.subr.mxu0 0.0
    %1006 = vmatpush1.msra.mxu0 %v967
    %1007 = vmatprep.subr.mxu0 0.0
    %1008 = vmatpush1.msra.mxu0 %v962
    %1009 = vmatprep.subr.mxu0 0.0
    %1010 = vmatpush1.msra.mxu0 %v957
    %1011 = vmatprep.subr.mxu0 0.0
    %1012 = vmatpush1.msra.mxu0 %v952
    %1013 = vmatprep.subr.mxu0 0.0
    %1014 = vmatpush1.msra.mxu0 %v947
    %1015 = vmatprep.subr.mxu0 0.0
    %1016 = vmatpush1.msra.mxu0 %v942
    %1017 = vmatprep.subr.mxu0 0.0
    %1018 = vmatpush1.msra.mxu0 %v937
    %1019 = vmatprep.subr.mxu0 0.0
    %1020 = vmatpush1.msra.mxu0 %v932
    %1021 = vmatprep.subr.mxu0 0.0
    %1022 = vmatpush1.msra.mxu0 %v927
    %1023 = vmatprep.subr.mxu0 0.0
    %1024 = vmatpush1.msra.mxu0 %v922
    %1025 = vmatprep.subr.mxu0 0.0
    %1026 = vmatpush1.msra.mxu0 %v917
    %1027 = vmatprep.subr.mxu0 0.0
    %1028 = vmatpush2.msra.mxu0 0.0
    %1029 = vmatprep.subr.mxu0 0.0
    %1030 = vmatpush2.msra.mxu0 0.0
    %1031 = vmatprep.subr.mxu0 0.0
    %1032 = vmatpush2.msra.mxu0 0.0
    %1033 = vmatprep.subr.mxu0 0.0
    %1034 = vmatpush2.msra.mxu0 0.0
    %1035 = vmatprep.subr.mxu0 0.0
    %1036 = vmatpush2.msra.mxu0 0.0
    %1037 = vmatprep.subr.mxu0 0.0
    %1038 = vmatpush2.msra.mxu0 0.0
    %1039 = vmatprep.subr.mxu0 0.0
    %1040 = vmatpush2.msra.mxu0 0.0
    %1041 = vmatprep.subr.mxu0 0.0
    %1042 = vmatpush2.msra.mxu0 0.0
    %1043 = vmatprep.subr.mxu0 0.0
    %1044 = vmatpush2.msra.mxu0 0.0
    %1045 = vmatprep.subr.mxu0 0.0
    %1046 = vmatpush2.msra.mxu0 0.0
    %1047 = vmatprep.subr.mxu0 0.0
    %1048 = vmatpush2.msra.mxu0 0.0
    %1049 = vmatprep.subr.mxu0 0.0
    %1050 = vmatpush2.msra.mxu0 0.0
    %1051 = vmatprep.subr.mxu0 0.0
    %1052 = vmatpush2.msra.mxu0 0.0
    %1053 = vmatprep.subr.mxu0 0.0
    %1054 = vmatpush2.msra.mxu0 0.0
    %1055 = vmatprep.subr.mxu0 0.0
    %1056 = vmatpush2.msra.mxu0 0.0
    %1057 = vmatprep.subr.mxu0 0.0
    %1058 = vmatpush2.msra.mxu0 0.0
    %1059 = vmatprep.mubr.f32.mxu0 0.0
    %1060 = vmatmul.mubr.f32.gmra.mxu0 %v76
    %v1061 = vpop.f32.mrf.mxu0
    %v1062 = vadd.f32 0.0, %v1061
    %v1063 = vpop.f32.mrf.mxu0
    %1064 = vmatprep.mubr.f32.mxu0 0.0
    %1065 = vmatmul.mubr.f32.gmra.mxu0 %v77
    %v1066 = vpop.f32.mrf.mxu0
    %v1067 = vadd.f32 0.0, %v1066
    %v1068 = vpop.f32.mrf.mxu0
    %1069 = vmatprep.mubr.f32.mxu0 0.0
    %1070 = vmatmul.mubr.f32.gmra.mxu0 %v78
    %v1071 = vpop.f32.mrf.mxu0
    %v1072 = vadd.f32 0.0, %v1071
    %v1073 = vpop.f32.mrf.mxu0
    %1074 = vmatprep.mubr.f32.mxu0 0.0
    %1075 = vmatmul.mubr.f32.gmra.mxu0 %v79
    %v1076 = vpop.f32.mrf.mxu0
    %v1077 = vadd.f32 0.0, %v1076
    %v1078 = vpop.f32.mrf.mxu0
    %1079 = vmatprep.mubr.f32.mxu0 0.0
    %1080 = vmatmul.mubr.f32.gmra.mxu0 %v80
    %v1081 = vpop.f32.mrf.mxu0
    %v1082 = vadd.f32 0.0, %v1081
    %v1083 = vpop.f32.mrf.mxu0
    %1084 = vmatprep.mubr.f32.mxu0 0.0
    %1085 = vmatmul.mubr.f32.gmra.mxu0 %v81
    %v1086 = vpop.f32.mrf.mxu0
    %v1087 = vadd.f32 0.0, %v1086
    %v1088 = vpop.f32.mrf.mxu0
    %1089 = vmatprep.mubr.f32.mxu0 0.0
    %1090 = vmatmul.mubr.f32.gmra.mxu0 %v82
    %v1091 = vpop.f32.mrf.mxu0
    %v1092 = vadd.f32 0.0, %v1091
    %v1093 = vpop.f32.mrf.mxu0
    %1094 = vmatprep.mubr.f32.mxu0 0.0
    %1095 = vmatmul.mubr.f32.gmra.mxu0 %v83
    %v1096 = vpop.f32.mrf.mxu0
    %v1097 = vadd.f32 0.0, %v1096
    %v1098 = vpop.f32.mrf.mxu0
    %1099 = vmatprep.mubr.f32.mxu0 0.0
    %1100 = vmatmul.mubr.f32.gmra.mxu0 %v84
    %v1101 = vpop.f32.mrf.mxu0
    %v1102 = vadd.f32 0.0, %v1101
    %v1103 = vpop.f32.mrf.mxu0
    %1104 = vmatprep.mubr.f32.mxu0 0.0
    %1105 = vmatmul.mubr.f32.gmra.mxu0 %v85
    %v1106 = vpop.f32.mrf.mxu0
    %v1107 = vadd.f32 0.0, %v1106
    %v1108 = vpop.f32.mrf.mxu0
    %1109 = vmatprep.mubr.f32.mxu0 0.0
    %1110 = vmatmul.mubr.f32.gmra.mxu0 %v86
    %v1111 = vpop.f32.mrf.mxu0
    %v1112 = vadd.f32 0.0, %v1111
    %v1113 = vpop.f32.mrf.mxu0
    %1114 = vmatprep.mubr.f32.mxu0 0.0
    %1115 = vmatmul.mubr.f32.gmra.mxu0 %v87
    %v1116 = vpop.f32.mrf.mxu0
    %v1117 = vadd.f32 0.0, %v1116
    %v1118 = vpop.f32.mrf.mxu0
    %1119 = vmatprep.mubr.f32.mxu0 0.0
    %1120 = vmatmul.mubr.f32.gmra.mxu0 %v88
    %v1121 = vpop.f32.mrf.mxu0
    %v1122 = vadd.f32 0.0, %v1121
    %v1123 = vpop.f32.mrf.mxu0
    %1124 = vmatprep.mubr.f32.mxu0 0.0
    %1125 = vmatmul.mubr.f32.gmra.mxu0 %v89
    %v1126 = vpop.f32.mrf.mxu0
    %v1127 = vadd.f32 0.0, %v1126
    %v1128 = vpop.f32.mrf.mxu0
    %1129 = vmatprep.mubr.f32.mxu0 0.0
    %1130 = vmatmul.mubr.f32.gmra.mxu0 %v90
    %v1131 = vpop.f32.mrf.mxu0
    %v1132 = vadd.f32 0.0, %v1131
    %v1133 = vpop.f32.mrf.mxu0
    %1134 = vmatprep.mubr.f32.mxu0 0.0
    %1135 = vmatmul.mubr.f32.gmra.mxu0 %v91
    %v1136 = vpop.f32.mrf.mxu0
    %v1137 = vadd.f32 0.0, %v1136
    %v1138 = vpop.f32.mrf.mxu0
    %1139 = vdwg.mxu0
    %1140 = vmatprep.subr.mxu0 0.0
    %1141 = vmatpush1.msra.mxu0 %v1137
    %1142 = vmatprep.subr.mxu0 0.0
    %1143 = vmatpush1.msra.mxu0 %v1132
    %1144 = vmatprep.subr.mxu0 0.0
    %1145 = vmatpush1.msra.mxu0 %v1127
    %1146 = vmatprep.subr.mxu0 0.0
    %1147 = vmatpush1.msra.mxu0 %v1122
    %1148 = vmatprep.subr.mxu0 0.0
    %1149 = vmatpush1.msra.mxu0 %v1117
    %1150 = vmatprep.subr.mxu0 0.0
    %1151 = vmatpush1.msra.mxu0 %v1112
    %1152 = vmatprep.subr.mxu0 0.0
    %1153 = vmatpush1.msra.mxu0 %v1107
    %1154 = vmatprep.subr.mxu0 0.0
    %1155 = vmatpush1.msra.mxu0 %v1102
    %1156 = vmatprep.subr.mxu0 0.0
    %1157 = vmatpush1.msra.mxu0 %v1097
    %1158 = vmatprep.subr.mxu0 0.0
    %1159 = vmatpush1.msra.mxu0 %v1092
    %1160 = vmatprep.subr.mxu0 0.0
    %1161 = vmatpush1.msra.mxu0 %v1087
    %1162 = vmatprep.subr.mxu0 0.0
    %1163 = vmatpush1.msra.mxu0 %v1082
    %1164 = vmatprep.subr.mxu0 0.0
    %1165 = vmatpush1.msra.mxu0 %v1077
    %1166 = vmatprep.subr.mxu0 0.0
    %1167 = vmatpush1.msra.mxu0 %v1072
    %1168 = vmatprep.subr.mxu0 0.0
    %1169 = vmatpush1.msra.mxu0 %v1067
    %1170 = vmatprep.subr.mxu0 0.0
    %1171 = vmatpush1.msra.mxu0 %v1062
    %1172 = vmatprep.subr.mxu0 0.0
    %1173 = vmatpush2.msra.mxu0 0.0
    %1174 = vmatprep.subr.mxu0 0.0
    %1175 = vmatpush2.msra.mxu0 0.0
    %1176 = vmatprep.subr.mxu0 0.0
    %1177 = vmatpush2.msra.mxu0 0.0
    %1178 = vmatprep.subr.mxu0 0.0
    %1179 = vmatpush2.msra.mxu0 0.0
    %1180 = vmatprep.subr.mxu0 0.0
    %1181 = vmatpush2.msra.mxu0 0.0
    %1182 = vmatprep.subr.mxu0 0.0
    %1183 = vmatpush2.msra.mxu0 0.0
    %1184 = vmatprep.subr.mxu0 0.0
    %1185 = vmatpush2.msra.mxu0 0.0
    %1186 = vmatprep.subr.mxu0 0.0
    %1187 = vmatpush2.msra.mxu0 0.0
    %1188 = vmatprep.subr.mxu0 0.0
    %1189 = vmatpush2.msra.mxu0 0.0
    %1190 = vmatprep.subr.mxu0 0.0
    %1191 = vmatpush2.msra.mxu0 0.0
    %1192 = vmatprep.subr.mxu0 0.0
    %1193 = vmatpush2.msra.mxu0 0.0
    %1194 = vmatprep.subr.mxu0 0.0
    %1195 = vmatpush2.msra.mxu0 0.0
    %1196 = vmatprep.subr.mxu0 0.0
    %1197 = vmatpush2.msra.mxu0 0.0
    %1198 = vmatprep.subr.mxu0 0.0
    %1199 = vmatpush2.msra.mxu0 0.0
    %1200 = vmatprep.subr.mxu0 0.0
    %1201 = vmatpush2.msra.mxu0 0.0
    %1202 = vmatprep.subr.mxu0 0.0
    %1203 = vmatpush2.msra.mxu0 0.0
    %1204 = vmatprep.mubr.f32.mxu0 0.0
    %1205 = vmatmul.mubr.f32.gmra.mxu0 %v92
    %v1206 = vpop.f32.mrf.mxu0
    %v1207 = vadd.f32 0.0, %v1206
    %v1208 = vpop.f32.mrf.mxu0
    %1209 = vmatprep.mubr.f32.mxu0 0.0
    %1210 = vmatmul.mubr.f32.gmra.mxu0 %v93
    %v1211 = vpop.f32.mrf.mxu0
    %v1212 = vadd.f32 0.0, %v1211
    %v1213 = vpop.f32.mrf.mxu0
    %1214 = vmatprep.mubr.f32.mxu0 0.0
    %1215 = vmatmul.mubr.f32.gmra.mxu0 %v94
    %v1216 = vpop.f32.mrf.mxu0
    %v1217 = vadd.f32 0.0, %v1216
    %v1218 = vpop.f32.mrf.mxu0
    %1219 = vmatprep.mubr.f32.mxu0 0.0
    %1220 = vmatmul.mubr.f32.gmra.mxu0 %v95
    %v1221 = vpop.f32.mrf.mxu0
    %v1222 = vadd.f32 0.0, %v1221
    %v1223 = vpop.f32.mrf.mxu0
    %1224 = vmatprep.mubr.f32.mxu0 0.0
    %1225 = vmatmul.mubr.f32.gmra.mxu0 %v96
    %v1226 = vpop.f32.mrf.mxu0
    %v1227 = vadd.f32 0.0, %v1226
    %v1228 = vpop.f32.mrf.mxu0
    %1229 = vmatprep.mubr.f32.mxu0 0.0
    %1230 = vmatmul.mubr.f32.gmra.mxu0 %v97
    %v1231 = vpop.f32.mrf.mxu0
    %v1232 = vadd.f32 0.0, %v1231
    %v1233 = vpop.f32.mrf.mxu0
    %1234 = vmatprep.mubr.f32.mxu0 0.0
    %1235 = vmatmul.mubr.f32.gmra.mxu0 %v98
    %v1236 = vpop.f32.mrf.mxu0
    %v1237 = vadd.f32 0.0, %v1236
    %v1238 = vpop.f32.mrf.mxu0
    %1239 = vmatprep.mubr.f32.mxu0 0.0
    %1240 = vmatmul.mubr.f32.gmra.mxu0 %v99
    %v1241 = vpop.f32.mrf.mxu0
    %v1242 = vadd.f32 0.0, %v1241
    %v1243 = vpop.f32.mrf.mxu0
    %1244 = vmatprep.mubr.f32.mxu0 0.0
    %1245 = vmatmul.mubr.f32.gmra.mxu0 %v100
    %v1246 = vpop.f32.mrf.mxu0
    %v1247 = vadd.f32 0.0, %v1246
    %v1248 = vpop.f32.mrf.mxu0
    %1249 = vmatprep.mubr.f32.mxu0 0.0
    %1250 = vmatmul.mubr.f32.gmra.mxu0 %v101
    %v1251 = vpop.f32.mrf.mxu0
    %v1252 = vadd.f32 0.0, %v1251
    %v1253 = vpop.f32.mrf.mxu0
    %1254 = vmatprep.mubr.f32.mxu0 0.0
    %1255 = vmatmul.mubr.f32.gmra.mxu0 %v102
    %v1256 = vpop.f32.mrf.mxu0
    %v1257 = vadd.f32 0.0, %v1256
    %v1258 = vpop.f32.mrf.mxu0
    %1259 = vmatprep.mubr.f32.mxu0 0.0
    %1260 = vmatmul.mubr.f32.gmra.mxu0 %v103
    %v1261 = vpop.f32.mrf.mxu0
    %v1262 = vadd.f32 0.0, %v1261
    %v1263 = vpop.f32.mrf.mxu0
    %1264 = vmatprep.mubr.f32.mxu0 0.0
    %1265 = vmatmul.mubr.f32.gmra.mxu0 %v104
    %v1266 = vpop.f32.mrf.mxu0
    %v1267 = vadd.f32 0.0, %v1266
    %v1268 = vpop.f32.mrf.mxu0
    %1269 = vmatprep.mubr.f32.mxu0 0.0
    %1270 = vmatmul.mubr.f32.gmra.mxu0 %v105
    %v1271 = vpop.f32.mrf.mxu0
    %v1272 = vadd.f32 0.0, %v1271
    %v1273 = vpop.f32.mrf.mxu0
    %1274 = vmatprep.mubr.f32.mxu0 0.0
    %1275 = vmatmul.mubr.f32.gmra.mxu0 %v106
    %v1276 = vpop.f32.mrf.mxu0
    %v1277 = vadd.f32 0.0, %v1276
    %v1278 = vpop.f32.mrf.mxu0
    %1279 = vmatprep.mubr.f32.mxu0 0.0
    %1280 = vmatmul.mubr.f32.gmra.mxu0 %v107
    %v1281 = vpop.f32.mrf.mxu0
    %v1282 = vadd.f32 0.0, %v1281
    %v1283 = vpop.f32.mrf.mxu0
    %1284 = vdwg.mxu0
    %1285 = vmatprep.subr.mxu0 0.0
    %1286 = vmatpush1.msra.mxu0 %v1282
    %1287 = vmatprep.subr.mxu0 0.0
    %1288 = vmatpush1.msra.mxu0 %v1277
    %1289 = vmatprep.subr.mxu0 0.0
    %1290 = vmatpush1.msra.mxu0 %v1272
    %1291 = vmatprep.subr.mxu0 0.0
    %1292 = vmatpush1.msra.mxu0 %v1267
    %1293 = vmatprep.subr.mxu0 0.0
    %1294 = vmatpush1.msra.mxu0 %v1262
    %1295 = vmatprep.subr.mxu0 0.0
    %1296 = vmatpush1.msra.mxu0 %v1257
    %1297 = vmatprep.subr.mxu0 0.0
    %1298 = vmatpush1.msra.mxu0 %v1252
    %1299 = vmatprep.subr.mxu0 0.0
    %1300 = vmatpush1.msra.mxu0 %v1247
    %1301 = vmatprep.subr.mxu0 0.0
    %1302 = vmatpush1.msra.mxu0 %v1242
    %1303 = vmatprep.subr.mxu0 0.0
    %1304 = vmatpush1.msra.mxu0 %v1237
    %1305 = vmatprep.subr.mxu0 0.0
    %1306 = vmatpush1.msra.mxu0 %v1232
    %1307 = vmatprep.subr.mxu0 0.0
    %1308 = vmatpush1.msra.mxu0 %v1227
    %1309 = vmatprep.subr.mxu0 0.0
    %1310 = vmatpush1.msra.mxu0 %v1222
    %1311 = vmatprep.subr.mxu0 0.0
    %1312 = vmatpush1.msra.mxu0 %v1217
    %1313 = vmatprep.subr.mxu0 0.0
    %1314 = vmatpush1.msra.mxu0 %v1212
    %1315 = vmatprep.subr.mxu0 0.0
    %1316 = vmatpush1.msra.mxu0 %v1207
    %1317 = vmatprep.subr.mxu0 0.0
    %1318 = vmatpush2.msra.mxu0 0.0
    %1319 = vmatprep.subr.mxu0 0.0
    %1320 = vmatpush2.msra.mxu0 0.0
    %1321 = vmatprep.subr.mxu0 0.0
    %1322 = vmatpush2.msra.mxu0 0.0
    %1323 = vmatprep.subr.mxu0 0.0
    %1324 = vmatpush2.msra.mxu0 0.0
    %1325 = vmatprep.subr.mxu0 0.0
    %1326 = vmatpush2.msra.mxu0 0.0
    %1327 = vmatprep.subr.mxu0 0.0
    %1328 = vmatpush2.msra.mxu0 0.0
    %1329 = vmatprep.subr.mxu0 0.0
    %1330 = vmatpush2.msra.mxu0 0.0
    %1331 = vmatprep.subr.mxu0 0.0
    %1332 = vmatpush2.msra.mxu0 0.0
    %1333 = vmatprep.subr.mxu0 0.0
    %1334 = vmatpush2.msra.mxu0 0.0
    %1335 = vmatprep.subr.mxu0 0.0
    %1336 = vmatpush2.msra.mxu0 0.0
    %1337 = vmatprep.subr.mxu0 0.0
    %1338 = vmatpush2.msra.mxu0 0.0
    %1339 = vmatprep.subr.mxu0 0.0
    %1340 = vmatpush2.msra.mxu0 0.0
    %1341 = vmatprep.subr.mxu0 0.0
    %1342 = vmatpush2.msra.mxu0 0.0
    %1343 = vmatprep.subr.mxu0 0.0
    %1344 = vmatpush2.msra.mxu0 0.0
    %1345 = vmatprep.subr.mxu0 0.0
    %1346 = vmatpush2.msra.mxu0 0.0
    %1347 = vmatprep.subr.mxu0 0.0
    %1348 = vmatpush2.msra.mxu0 0.0
    %1349 = vmatprep.mubr.f32.mxu0 0.0
    %1350 = vmatmul.mubr.f32.gmra.mxu0 %v76
    %v1351 = vpop.f32.mrf.mxu0
    %v1352 = vadd.f32 0.0, %v1351
    %v1353 = vpop.f32.mrf.mxu0
    %1354 = vmatprep.mubr.f32.mxu0 0.0
    %1355 = vmatmul.mubr.f32.gmra.mxu0 %v77
    %v1356 = vpop.f32.mrf.mxu0
    %v1357 = vadd.f32 0.0, %v1356
    %v1358 = vpop.f32.mrf.mxu0
    %1359 = vmatprep.mubr.f32.mxu0 0.0
    %1360 = vmatmul.mubr.f32.gmra.mxu0 %v78
    %v1361 = vpop.f32.mrf.mxu0
    %v1362 = vadd.f32 0.0, %v1361
    %v1363 = vpop.f32.mrf.mxu0
    %1364 = vmatprep.mubr.f32.mxu0 0.0
    %1365 = vmatmul.mubr.f32.gmra.mxu0 %v79
    %v1366 = vpop.f32.mrf.mxu0
    %v1367 = vadd.f32 0.0, %v1366
    %v1368 = vpop.f32.mrf.mxu0
    %1369 = vmatprep.mubr.f32.mxu0 0.0
    %1370 = vmatmul.mubr.f32.gmra.mxu0 %v80
    %v1371 = vpop.f32.mrf.mxu0
    %v1372 = vadd.f32 0.0, %v1371
    %v1373 = vpop.f32.mrf.mxu0
    %1374 = vmatprep.mubr.f32.mxu0 0.0
    %1375 = vmatmul.mubr.f32.gmra.mxu0 %v81
    %v1376 = vpop.f32.mrf.mxu0
    %v1377 = vadd.f32 0.0, %v1376
    %v1378 = vpop.f32.mrf.mxu0
    %1379 = vmatprep.mubr.f32.mxu0 0.0
    %1380 = vmatmul.mubr.f32.gmra.mxu0 %v82
    %v1381 = vpop.f32.mrf.mxu0
    %v1382 = vadd.f32 0.0, %v1381
    %v1383 = vpop.f32.mrf.mxu0
    %1384 = vmatprep.mubr.f32.mxu0 0.0
    %1385 = vmatmul.mubr.f32.gmra.mxu0 %v83
    %v1386 = vpop.f32.mrf.mxu0
    %v1387 = vadd.f32 0.0, %v1386
    %v1388 = vpop.f32.mrf.mxu0
    %1389 = vmatprep.mubr.f32.mxu0 0.0
    %1390 = vmatmul.mubr.f32.gmra.mxu0 %v84
    %v1391 = vpop.f32.mrf.mxu0
    %v1392 = vadd.f32 0.0, %v1391
    %v1393 = vpop.f32.mrf.mxu0
    %1394 = vmatprep.mubr.f32.mxu0 0.0
    %1395 = vmatmul.mubr.f32.gmra.mxu0 %v85
    %v1396 = vpop.f32.mrf.mxu0
    %v1397 = vadd.f32 0.0, %v1396
    %v1398 = vpop.f32.mrf.mxu0
    %1399 = vmatprep.mubr.f32.mxu0 0.0
    %1400 = vmatmul.mubr.f32.gmra.mxu0 %v86
    %v1401 = vpop.f32.mrf.mxu0
    %v1402 = vadd.f32 0.0, %v1401
    %v1403 = vpop.f32.mrf.mxu0
    %1404 = vmatprep.mubr.f32.mxu0 0.0
    %1405 = vmatmul.mubr.f32.gmra.mxu0 %v87
    %v1406 = vpop.f32.mrf.mxu0
    %v1407 = vadd.f32 0.0, %v1406
    %v1408 = vpop.f32.mrf.mxu0
    %1409 = vmatprep.mubr.f32.mxu0 0.0
    %1410 = vmatmul.mubr.f32.gmra.mxu0 %v88
    %v1411 = vpop.f32.mrf.mxu0
    %v1412 = vadd.f32 0.0, %v1411
    %v1413 = vpop.f32.mrf.mxu0
    %1414 = vmatprep.mubr.f32.mxu0 0.0
    %1415 = vmatmul.mubr.f32.gmra.mxu0 %v89
    %v1416 = vpop.f32.mrf.mxu0
    %v1417 = vadd.f32 0.0, %v1416
    %v1418 = vpop.f32.mrf.mxu0
    %1419 = vmatprep.mubr.f32.mxu0 0.0
    %1420 = vmatmul.mubr.f32.gmra.mxu0 %v90
    %v1421 = vpop.f32.mrf.mxu0
    %v1422 = vadd.f32 0.0, %v1421
    %v1423 = vpop.f32.mrf.mxu0
    %1424 = vmatprep.mubr.f32.mxu0 0.0
    %1425 = vmatmul.mubr.f32.gmra.mxu0 %v91
    %v1426 = vpop.f32.mrf.mxu0
    %v1427 = vadd.f32 0.0, %v1426
    %v1428 = vpop.f32.mrf.mxu0
    %1429 = vdwg.mxu0
    %v1430 = vsub.f32 %v706, %v1352
    %v1431 = vsub.f32 %v711, %v1357
    %v1432 = vsub.f32 %v716, %v1362
    %v1433 = vsub.f32 %v721, %v1367
    %v1434 = vsub.f32 %v726, %v1372
    %v1435 = vsub.f32 %v731, %v1377
    %v1436 = vsub.f32 %v736, %v1382
    %v1437 = vsub.f32 %v741, %v1387
    %v1438 = vsub.f32 %v746, %v1392
    %v1439 = vsub.f32 %v751, %v1397
    %v1440 = vsub.f32 %v756, %v1402
    %v1441 = vsub.f32 %v761, %v1407
    %v1442 = vsub.f32 %v766, %v1412
    %v1443 = vsub.f32 %v771, %v1417
    %v1444 = vsub.f32 %v776, %v1422
    %v1445 = vsub.f32 %v781, %v1427
    %s1446 = scalar_lea.vmem [#allocation10], 256
    %1447 = vst [vmem:[%s1446] sm:$0xff] %v1430
    %1448 = vst [vmem:[%s1446 + $0x8] sm:$0xff] %v1431
    %1449 = vst [vmem:[%s1446 + $0x10] sm:$0xff] %v1432
    %1450 = vst [vmem:[%s1446 + $0x18] sm:$0xff] %v1433
    %1451 = vst [vmem:[%s1446 + $0x20] sm:$0xff] %v1434
    %1452 = vst [vmem:[%s1446 + $0x28] sm:$0xff] %v1435
    %1453 = vst [vmem:[%s1446 + $0x30] sm:$0xff] %v1436
    %1454 = vst [vmem:[%s1446 + $0x38] sm:$0xff] %v1437
    %1455 = vst [vmem:[%s1446 + $0x40] sm:$0xff] %v1438
    %1456 = vst [vmem:[%s1446 + $0x48] sm:$0xff] %v1439
    %1457 = vst [vmem:[%s1446 + $0x50] sm:$0xff] %v1440
    %1458 = vst [vmem:[%s1446 + $0x58] sm:$0xff] %v1441
    %1459 = vst [vmem:[%s1446 + $0x60] sm:$0xff] %v1442
    %1460 = vst [vmem:[%s1446 + $0x68] sm:$0xff] %v1443
    %1461 = vst [vmem:[%s1446 + $0x70] sm:$0xff] %v1444
    %1462 = vst [vmem:[%s1446 + $0x78] sm:$0xff] %v1445
    %v1463 = vsub.f32 %v561, %v1207
    %v1464 = vsub.f32 %v566, %v1212
    %v1465 = vsub.f32 %v571, %v1217
    %v1466 = vsub.f32 %v576, %v1222
    %v1467 = vsub.f32 %v581, %v1227
    %v1468 = vsub.f32 %v586, %v1232
    %v1469 = vsub.f32 %v591, %v1237
    %v1470 = vsub.f32 %v596, %v1242
    %v1471 = vsub.f32 %v601, %v1247
    %v1472 = vsub.f32 %v606, %v1252
    %v1473 = vsub.f32 %v611, %v1257
    %v1474 = vsub.f32 %v616, %v1262
    %v1475 = vsub.f32 %v621, %v1267
    %v1476 = vsub.f32 %v626, %v1272
    %v1477 = vsub.f32 %v631, %v1277
    %v1478 = vsub.f32 %v636, %v1282
    %s1479 = scalar_lea.vmem [#allocation11], 256
    %1480 = vst [vmem:[%s1479] sm:$0xff] %v1463
    %1481 = vst [vmem:[%s1479 + $0x8] sm:$0xff] %v1464
    %1482 = vst [vmem:[%s1479 + $0x10] sm:$0xff] %v1465
    %1483 = vst [vmem:[%s1479 + $0x18] sm:$0xff] %v1466
    %1484 = vst [vmem:[%s1479 + $0x20] sm:$0xff] %v1467
    %1485 = vst [vmem:[%s1479 + $0x28] sm:$0xff] %v1468
    %1486 = vst [vmem:[%s1479 + $0x30] sm:$0xff] %v1469
    %1487 = vst [vmem:[%s1479 + $0x38] sm:$0xff] %v1470
    %1488 = vst [vmem:[%s1479 + $0x40] sm:$0xff] %v1471
    %1489 = vst [vmem:[%s1479 + $0x48] sm:$0xff] %v1472
    %1490 = vst [vmem:[%s1479 + $0x50] sm:$0xff] %v1473
    %1491 = vst [vmem:[%s1479 + $0x58] sm:$0xff] %v1474
    %1492 = vst [vmem:[%s1479 + $0x60] sm:$0xff] %v1475
    %1493 = vst [vmem:[%s1479 + $0x68] sm:$0xff] %v1476
    %1494 = vst [vmem:[%s1479 + $0x70] sm:$0xff] %v1477
    %1495 = vst [vmem:[%s1479 + $0x78] sm:$0xff] %v1478
    %1496 = vmatprep.subr.mxu0 0.0
    %1497 = vmatpush1.msra.mxu0 %v1427
    %1498 = vmatprep.subr.mxu0 0.0
    %1499 = vmatpush1.msra.mxu0 %v1422
    %1500 = vmatprep.subr.mxu0 0.0
    %1501 = vmatpush1.msra.mxu0 %v1417
    %1502 = vmatprep.subr.mxu0 0.0
    %1503 = vmatpush1.msra.mxu0 %v1412
    %1504 = vmatprep.subr.mxu0 0.0
    %1505 = vmatpush1.msra.mxu0 %v1407
    %1506 = vmatprep.subr.mxu0 0.0
    %1507 = vmatpush1.msra.mxu0 %v1402
    %1508 = vmatprep.subr.mxu0 0.0
    %1509 = vmatpush1.msra.mxu0 %v1397
    %1510 = vmatprep.subr.mxu0 0.0
    %1511 = vmatpush1.msra.mxu0 %v1392
    %1512 = vmatprep.subr.mxu0 0.0
    %1513 = vmatpush1.msra.mxu0 %v1387
    %1514 = vmatprep.subr.mxu0 0.0
    %1515 = vmatpush1.msra.mxu0 %v1382
    %1516 = vmatprep.subr.mxu0 0.0
    %1517 = vmatpush1.msra.mxu0 %v1377
    %1518 = vmatprep.subr.mxu0 0.0
    %1519 = vmatpush1.msra.mxu0 %v1372
    %1520 = vmatprep.subr.mxu0 0.0
    %1521 = vmatpush1.msra.mxu0 %v1367
    %1522 = vmatprep.subr.mxu0 0.0
    %1523 = vmatpush1.msra.mxu0 %v1362
    %1524 = vmatprep.subr.mxu0 0.0
    %1525 = vmatpush1.msra.mxu0 %v1357
    %1526 = vmatprep.subr.mxu0 0.0
    %1527 = vmatpush1.msra.mxu0 %v1352
    %1528 = vmatprep.subr.mxu0 0.0
    %1529 = vmatpush2.msra.mxu0 0.0
    %1530 = vmatprep.subr.mxu0 0.0
    %1531 = vmatpush2.msra.mxu0 0.0
    %1532 = vmatprep.subr.mxu0 0.0
    %1533 = vmatpush2.msra.mxu0 0.0
    %1534 = vmatprep.subr.mxu0 0.0
    %1535 = vmatpush2.msra.mxu0 0.0
    %1536 = vmatprep.subr.mxu0 0.0
    %1537 = vmatpush2.msra.mxu0 0.0
    %1538 = vmatprep.subr.mxu0 0.0
    %1539 = vmatpush2.msra.mxu0 0.0
    %1540 = vmatprep.subr.mxu0 0.0
    %1541 = vmatpush2.msra.mxu0 0.0
    %1542 = vmatprep.subr.mxu0 0.0
    %1543 = vmatpush2.msra.mxu0 0.0
    %1544 = vmatprep.subr.mxu0 0.0
    %1545 = vmatpush2.msra.mxu0 0.0
    %1546 = vmatprep.subr.mxu0 0.0
    %1547 = vmatpush2.msra.mxu0 0.0
    %1548 = vmatprep.subr.mxu0 0.0
    %1549 = vmatpush2.msra.mxu0 0.0
    %1550 = vmatprep.subr.mxu0 0.0
    %1551 = vmatpush2.msra.mxu0 0.0
    %1552 = vmatprep.subr.mxu0 0.0
    %1553 = vmatpush2.msra.mxu0 0.0
    %1554 = vmatprep.subr.mxu0 0.0
    %1555 = vmatpush2.msra.mxu0 0.0
    %1556 = vmatprep.subr.mxu0 0.0
    %1557 = vmatpush2.msra.mxu0 0.0
    %1558 = vmatprep.subr.mxu0 0.0
    %1559 = vmatpush2.msra.mxu0 0.0
    %1560 = vmatprep.mubr.f32.mxu0 0.0
    %1561 = vmatmul.mubr.f32.gmra.mxu0 %v92
    %v1562 = vpop.f32.mrf.mxu0
    %v1563 = vadd.f32 0.0, %v1562
    %v1564 = vpop.f32.mrf.mxu0
    %1565 = vmatprep.mubr.f32.mxu0 0.0
    %1566 = vmatmul.mubr.f32.gmra.mxu0 %v93
    %v1567 = vpop.f32.mrf.mxu0
    %v1568 = vadd.f32 0.0, %v1567
    %v1569 = vpop.f32.mrf.mxu0
    %1570 = vmatprep.mubr.f32.mxu0 0.0
    %1571 = vmatmul.mubr.f32.gmra.mxu0 %v94
    %v1572 = vpop.f32.mrf.mxu0
    %v1573 = vadd.f32 0.0, %v1572
    %v1574 = vpop.f32.mrf.mxu0
    %1575 = vmatprep.mubr.f32.mxu0 0.0
    %1576 = vmatmul.mubr.f32.gmra.mxu0 %v95
    %v1577 = vpop.f32.mrf.mxu0
    %v1578 = vadd.f32 0.0, %v1577
    %v1579 = vpop.f32.mrf.mxu0
    %1580 = vmatprep.mubr.f32.mxu0 0.0
    %1581 = vmatmul.mubr.f32.gmra.mxu0 %v96
    %v1582 = vpop.f32.mrf.mxu0
    %v1583 = vadd.f32 0.0, %v1582
    %v1584 = vpop.f32.mrf.mxu0
    %1585 = vmatprep.mubr.f32.mxu0 0.0
    %1586 = vmatmul.mubr.f32.gmra.mxu0 %v97
    %v1587 = vpop.f32.mrf.mxu0
    %v1588 = vadd.f32 0.0, %v1587
    %v1589 = vpop.f32.mrf.mxu0
    %1590 = vmatprep.mubr.f32.mxu0 0.0
    %1591 = vmatmul.mubr.f32.gmra.mxu0 %v98
    %v1592 = vpop.f32.mrf.mxu0
    %v1593 = vadd.f32 0.0, %v1592
    %v1594 = vpop.f32.mrf.mxu0
    %1595 = vmatprep.mubr.f32.mxu0 0.0
    %1596 = vmatmul.mubr.f32.gmra.mxu0 %v99
    %v1597 = vpop.f32.mrf.mxu0
    %v1598 = vadd.f32 0.0, %v1597
    %v1599 = vpop.f32.mrf.mxu0
    %1600 = vmatprep.mubr.f32.mxu0 0.0
    %1601 = vmatmul.mubr.f32.gmra.mxu0 %v100
    %v1602 = vpop.f32.mrf.mxu0
    %v1603 = vadd.f32 0.0, %v1602
    %v1604 = vpop.f32.mrf.mxu0
    %1605 = vmatprep.mubr.f32.mxu0 0.0
    %1606 = vmatmul.mubr.f32.gmra.mxu0 %v101
    %v1607 = vpop.f32.mrf.mxu0
    %v1608 = vadd.f32 0.0, %v1607
    %v1609 = vpop.f32.mrf.mxu0
    %1610 = vmatprep.mubr.f32.mxu0 0.0
    %1611 = vmatmul.mubr.f32.gmra.mxu0 %v102
    %v1612 = vpop.f32.mrf.mxu0
    %v1613 = vadd.f32 0.0, %v1612
    %v1614 = vpop.f32.mrf.mxu0
    %1615 = vmatprep.mubr.f32.mxu0 0.0
    %1616 = vmatmul.mubr.f32.gmra.mxu0 %v103
    %v1617 = vpop.f32.mrf.mxu0
    %v1618 = vadd.f32 0.0, %v1617
    %v1619 = vpop.f32.mrf.mxu0
    %1620 = vmatprep.mubr.f32.mxu0 0.0
    %1621 = vmatmul.mubr.f32.gmra.mxu0 %v104
    %v1622 = vpop.f32.mrf.mxu0
    %v1623 = vadd.f32 0.0, %v1622
    %v1624 = vpop.f32.mrf.mxu0
    %1625 = vmatprep.mubr.f32.mxu0 0.0
    %1626 = vmatmul.mubr.f32.gmra.mxu0 %v105
    %v1627 = vpop.f32.mrf.mxu0
    %v1628 = vadd.f32 0.0, %v1627
    %v1629 = vpop.f32.mrf.mxu0
    %1630 = vmatprep.mubr.f32.mxu0 0.0
    %1631 = vmatmul.mubr.f32.gmra.mxu0 %v106
    %v1632 = vpop.f32.mrf.mxu0
    %v1633 = vadd.f32 0.0, %v1632
    %v1634 = vpop.f32.mrf.mxu0
    %1635 = vmatprep.mubr.f32.mxu0 0.0
    %1636 = vmatmul.mubr.f32.gmra.mxu0 %v107
    %v1637 = vpop.f32.mrf.mxu0
    %v1638 = vadd.f32 0.0, %v1637
    %v1639 = vpop.f32.mrf.mxu0
    %1640 = vdwg.mxu0
    %1641 = vmatprep.subr.mxu0 0.0
    %1642 = vmatpush1.msra.mxu0 %v1638
    %1643 = vmatprep.subr.mxu0 0.0
    %1644 = vmatpush1.msra.mxu0 %v1633
    %1645 = vmatprep.subr.mxu0 0.0
    %1646 = vmatpush1.msra.mxu0 %v1628
    %1647 = vmatprep.subr.mxu0 0.0
    %1648 = vmatpush1.msra.mxu0 %v1623
    %1649 = vmatprep.subr.mxu0 0.0
    %1650 = vmatpush1.msra.mxu0 %v1618
    %1651 = vmatprep.subr.mxu0 0.0
    %1652 = vmatpush1.msra.mxu0 %v1613
    %1653 = vmatprep.subr.mxu0 0.0
    %1654 = vmatpush1.msra.mxu0 %v1608
    %1655 = vmatprep.subr.mxu0 0.0
    %1656 = vmatpush1.msra.mxu0 %v1603
    %1657 = vmatprep.subr.mxu0 0.0
    %1658 = vmatpush1.msra.mxu0 %v1598
    %1659 = vmatprep.subr.mxu0 0.0
    %1660 = vmatpush1.msra.mxu0 %v1593
    %1661 = vmatprep.subr.mxu0 0.0
    %1662 = vmatpush1.msra.mxu0 %v1588
    %1663 = vmatprep.subr.mxu0 0.0
    %1664 = vmatpush1.msra.mxu0 %v1583
    %1665 = vmatprep.subr.mxu0 0.0
    %1666 = vmatpush1.msra.mxu0 %v1578
    %1667 = vmatprep.subr.mxu0 0.0
    %1668 = vmatpush1.msra.mxu0 %v1573
    %1669 = vmatprep.subr.mxu0 0.0
    %1670 = vmatpush1.msra.mxu0 %v1568
    %1671 = vmatprep.subr.mxu0 0.0
    %1672 = vmatpush1.msra.mxu0 %v1563
    %1673 = vmatprep.subr.mxu0 0.0
    %1674 = vmatpush2.msra.mxu0 0.0
    %1675 = vmatprep.subr.mxu0 0.0
    %1676 = vmatpush2.msra.mxu0 0.0
    %1677 = vmatprep.subr.mxu0 0.0
    %1678 = vmatpush2.msra.mxu0 0.0
    %1679 = vmatprep.subr.mxu0 0.0
    %1680 = vmatpush2.msra.mxu0 0.0
    %1681 = vmatprep.subr.mxu0 0.0
    %1682 = vmatpush2.msra.mxu0 0.0
    %1683 = vmatprep.subr.mxu0 0.0
    %1684 = vmatpush2.msra.mxu0 0.0
    %1685 = vmatprep.subr.mxu0 0.0
    %1686 = vmatpush2.msra.mxu0 0.0
    %1687 = vmatprep.subr.mxu0 0.0
    %1688 = vmatpush2.msra.mxu0 0.0
    %1689 = vmatprep.subr.mxu0 0.0
    %1690 = vmatpush2.msra.mxu0 0.0
    %1691 = vmatprep.subr.mxu0 0.0
    %1692 = vmatpush2.msra.mxu0 0.0
    %1693 = vmatprep.subr.mxu0 0.0
    %1694 = vmatpush2.msra.mxu0 0.0
    %1695 = vmatprep.subr.mxu0 0.0
    %1696 = vmatpush2.msra.mxu0 0.0
    %1697 = vmatprep.subr.mxu0 0.0
    %1698 = vmatpush2.msra.mxu0 0.0
    %1699 = vmatprep.subr.mxu0 0.0
    %1700 = vmatpush2.msra.mxu0 0.0
    %1701 = vmatprep.subr.mxu0 0.0
    %1702 = vmatpush2.msra.mxu0 0.0
    %1703 = vmatprep.subr.mxu0 0.0
    %1704 = vmatpush2.msra.mxu0 0.0
    %1705 = vmatprep.mubr.f32.mxu0 0.0
    %1706 = vmatmul.mubr.f32.gmra.mxu0 %v76
    %v1707 = vpop.f32.mrf.mxu0
    %v1708 = vadd.f32 0.0, %v1707
    %v1709 = vpop.f32.mrf.mxu0
    %1710 = vmatprep.mubr.f32.mxu0 0.0
    %1711 = vmatmul.mubr.f32.gmra.mxu0 %v77
    %v1712 = vpop.f32.mrf.mxu0
    %v1713 = vadd.f32 0.0, %v1712
    %v1714 = vpop.f32.mrf.mxu0
    %1715 = vmatprep.mubr.f32.mxu0 0.0
    %1716 = vmatmul.mubr.f32.gmra.mxu0 %v78
    %v1717 = vpop.f32.mrf.mxu0
    %v1718 = vadd.f32 0.0, %v1717
    %v1719 = vpop.f32.mrf.mxu0
    %1720 = vmatprep.mubr.f32.mxu0 0.0
    %1721 = vmatmul.mubr.f32.gmra.mxu0 %v79
    %v1722 = vpop.f32.mrf.mxu0
    %v1723 = vadd.f32 0.0, %v1722
    %v1724 = vpop.f32.mrf.mxu0
    %1725 = vmatprep.mubr.f32.mxu0 0.0
    %1726 = vmatmul.mubr.f32.gmra.mxu0 %v80
    %v1727 = vpop.f32.mrf.mxu0
    %v1728 = vadd.f32 0.0, %v1727
    %v1729 = vpop.f32.mrf.mxu0
    %1730 = vmatprep.mubr.f32.mxu0 0.0
    %1731 = vmatmul.mubr.f32.gmra.mxu0 %v81
    %v1732 = vpop.f32.mrf.mxu0
    %v1733 = vadd.f32 0.0, %v1732
    %v1734 = vpop.f32.mrf.mxu0
    %1735 = vmatprep.mubr.f32.mxu0 0.0
    %1736 = vmatmul.mubr.f32.gmra.mxu0 %v82
    %v1737 = vpop.f32.mrf.mxu0
    %v1738 = vadd.f32 0.0, %v1737
    %v1739 = vpop.f32.mrf.mxu0
    %1740 = vmatprep.mubr.f32.mxu0 0.0
    %1741 = vmatmul.mubr.f32.gmra.mxu0 %v83
    %v1742 = vpop.f32.mrf.mxu0
    %v1743 = vadd.f32 0.0, %v1742
    %v1744 = vpop.f32.mrf.mxu0
    %1745 = vmatprep.mubr.f32.mxu0 0.0
    %1746 = vmatmul.mubr.f32.gmra.mxu0 %v84
    %v1747 = vpop.f32.mrf.mxu0
    %v1748 = vadd.f32 0.0, %v1747
    %v1749 = vpop.f32.mrf.mxu0
    %1750 = vmatprep.mubr.f32.mxu0 0.0
    %1751 = vmatmul.mubr.f32.gmra.mxu0 %v85
    %v1752 = vpop.f32.mrf.mxu0
    %v1753 = vadd.f32 0.0, %v1752
    %v1754 = vpop.f32.mrf.mxu0
    %1755 = vmatprep.mubr.f32.mxu0 0.0
    %1756 = vmatmul.mubr.f32.gmra.mxu0 %v86
    %v1757 = vpop.f32.mrf.mxu0
    %v1758 = vadd.f32 0.0, %v1757
    %v1759 = vpop.f32.mrf.mxu0
    %1760 = vmatprep.mubr.f32.mxu0 0.0
    %1761 = vmatmul.mubr.f32.gmra.mxu0 %v87
    %v1762 = vpop.f32.mrf.mxu0
    %v1763 = vadd.f32 0.0, %v1762
    %v1764 = vpop.f32.mrf.mxu0
    %1765 = vmatprep.mubr.f32.mxu0 0.0
    %1766 = vmatmul.mubr.f32.gmra.mxu0 %v88
    %v1767 = vpop.f32.mrf.mxu0
    %v1768 = vadd.f32 0.0, %v1767
    %v1769 = vpop.f32.mrf.mxu0
    %1770 = vmatprep.mubr.f32.mxu0 0.0
    %1771 = vmatmul.mubr.f32.gmra.mxu0 %v89
    %v1772 = vpop.f32.mrf.mxu0
    %v1773 = vadd.f32 0.0, %v1772
    %v1774 = vpop.f32.mrf.mxu0
    %1775 = vmatprep.mubr.f32.mxu0 0.0
    %1776 = vmatmul.mubr.f32.gmra.mxu0 %v90
    %v1777 = vpop.f32.mrf.mxu0
    %v1778 = vadd.f32 0.0, %v1777
    %v1779 = vpop.f32.mrf.mxu0
    %1780 = vmatprep.mubr.f32.mxu0 0.0
    %1781 = vmatmul.mubr.f32.gmra.mxu0 %v91
    %v1782 = vpop.f32.mrf.mxu0
    %v1783 = vadd.f32 0.0, %v1782
    %v1784 = vpop.f32.mrf.mxu0
    %1785 = vdwg.mxu0
    %1786 = vmatprep.subr.mxu0 0.0
    %1787 = vmatpush1.msra.mxu0 %v1783
    %1788 = vmatprep.subr.mxu0 0.0
    %1789 = vmatpush1.msra.mxu0 %v1778
    %1790 = vmatprep.subr.mxu0 0.0
    %1791 = vmatpush1.msra.mxu0 %v1773
    %1792 = vmatprep.subr.mxu0 0.0
    %1793 = vmatpush1.msra.mxu0 %v1768
    %1794 = vmatprep.subr.mxu0 0.0
    %1795 = vmatpush1.msra.mxu0 %v1763
    %1796 = vmatprep.subr.mxu0 0.0
    %1797 = vmatpush1.msra.mxu0 %v1758
    %1798 = vmatprep.subr.mxu0 0.0
    %1799 = vmatpush1.msra.mxu0 %v1753
    %1800 = vmatprep.subr.mxu0 0.0
    %1801 = vmatpush1.msra.mxu0 %v1748
    %1802 = vmatprep.subr.mxu0 0.0
    %1803 = vmatpush1.msra.mxu0 %v1743
    %1804 = vmatprep.subr.mxu0 0.0
    %1805 = vmatpush1.msra.mxu0 %v1738
    %1806 = vmatprep.subr.mxu0 0.0
    %1807 = vmatpush1.msra.mxu0 %v1733
    %1808 = vmatprep.subr.mxu0 0.0
    %1809 = vmatpush1.msra.mxu0 %v1728
    %1810 = vmatprep.subr.mxu0 0.0
    %1811 = vmatpush1.msra.mxu0 %v1723
    %1812 = vmatprep.subr.mxu0 0.0
    %1813 = vmatpush1.msra.mxu0 %v1718
    %1814 = vmatprep.subr.mxu0 0.0
    %1815 = vmatpush1.msra.mxu0 %v1713
    %1816 = vmatprep.subr.mxu0 0.0
    %1817 = vmatpush1.msra.mxu0 %v1708
    %1818 = vmatprep.subr.mxu0 0.0
    %1819 = vmatpush2.msra.mxu0 0.0
    %1820 = vmatprep.subr.mxu0 0.0
    %1821 = vmatpush2.msra.mxu0 0.0
    %1822 = vmatprep.subr.mxu0 0.0
    %1823 = vmatpush2.msra.mxu0 0.0
    %1824 = vmatprep.subr.mxu0 0.0
    %1825 = vmatpush2.msra.mxu0 0.0
    %1826 = vmatprep.subr.mxu0 0.0
    %1827 = vmatpush2.msra.mxu0 0.0
    %1828 = vmatprep.subr.mxu0 0.0
    %1829 = vmatpush2.msra.mxu0 0.0
    %1830 = vmatprep.subr.mxu0 0.0
    %1831 = vmatpush2.msra.mxu0 0.0
    %1832 = vmatprep.subr.mxu0 0.0
    %1833 = vmatpush2.msra.mxu0 0.0
    %1834 = vmatprep.subr.mxu0 0.0
    %1835 = vmatpush2.msra.mxu0 0.0
    %1836 = vmatprep.subr.mxu0 0.0
    %1837 = vmatpush2.msra.mxu0 0.0
    %1838 = vmatprep.subr.mxu0 0.0
    %1839 = vmatpush2.msra.mxu0 0.0
    %1840 = vmatprep.subr.mxu0 0.0
    %1841 = vmatpush2.msra.mxu0 0.0
    %1842 = vmatprep.subr.mxu0 0.0
    %1843 = vmatpush2.msra.mxu0 0.0
    %1844 = vmatprep.subr.mxu0 0.0
    %1845 = vmatpush2.msra.mxu0 0.0
    %1846 = vmatprep.subr.mxu0 0.0
    %1847 = vmatpush2.msra.mxu0 0.0
    %1848 = vmatprep.subr.mxu0 0.0
    %1849 = vmatpush2.msra.mxu0 0.0
    %1850 = vmatprep.mubr.f32.mxu0 0.0
    %1851 = vmatmul.mubr.f32.gmra.mxu0 %v92
    %v1852 = vpop.f32.mrf.mxu0
    %v1853 = vadd.f32 0.0, %v1852
    %v1854 = vpop.f32.mrf.mxu0
    %1855 = vmatprep.mubr.f32.mxu0 0.0
    %1856 = vmatmul.mubr.f32.gmra.mxu0 %v93
    %v1857 = vpop.f32.mrf.mxu0
    %v1858 = vadd.f32 0.0, %v1857
    %v1859 = vpop.f32.mrf.mxu0
    %1860 = vmatprep.mubr.f32.mxu0 0.0
    %1861 = vmatmul.mubr.f32.gmra.mxu0 %v94
    %v1862 = vpop.f32.mrf.mxu0
    %v1863 = vadd.f32 0.0, %v1862
    %v1864 = vpop.f32.mrf.mxu0
    %1865 = vmatprep.mubr.f32.mxu0 0.0
    %1866 = vmatmul.mubr.f32.gmra.mxu0 %v95
    %v1867 = vpop.f32.mrf.mxu0
    %v1868 = vadd.f32 0.0, %v1867
    %v1869 = vpop.f32.mrf.mxu0
    %1870 = vmatprep.mubr.f32.mxu0 0.0
    %1871 = vmatmul.mubr.f32.gmra.mxu0 %v96
    %v1872 = vpop.f32.mrf.mxu0
    %v1873 = vadd.f32 0.0, %v1872
    %v1874 = vpop.f32.mrf.mxu0
    %1875 = vmatprep.mubr.f32.mxu0 0.0
    %1876 = vmatmul.mubr.f32.gmra.mxu0 %v97
    %v1877 = vpop.f32.mrf.mxu0
    %v1878 = vadd.f32 0.0, %v1877
    %v1879 = vpop.f32.mrf.mxu0
    %1880 = vmatprep.mubr.f32.mxu0 0.0
    %1881 = vmatmul.mubr.f32.gmra.mxu0 %v98
    %v1882 = vpop.f32.mrf.mxu0
    %v1883 = vadd.f32 0.0, %v1882
    %v1884 = vpop.f32.mrf.mxu0
    %1885 = vmatprep.mubr.f32.mxu0 0.0
    %1886 = vmatmul.mubr.f32.gmra.mxu0 %v99
    %v1887 = vpop.f32.mrf.mxu0
    %v1888 = vadd.f32 0.0, %v1887
    %v1889 = vpop.f32.mrf.mxu0
    %1890 = vmatprep.mubr.f32.mxu0 0.0
    %1891 = vmatmul.mubr.f32.gmra.mxu0 %v100
    %v1892 = vpop.f32.mrf.mxu0
    %v1893 = vadd.f32 0.0, %v1892
    %v1894 = vpop.f32.mrf.mxu0
    %1895 = vmatprep.mubr.f32.mxu0 0.0
    %1896 = vmatmul.mubr.f32.gmra.mxu0 %v101
    %v1897 = vpop.f32.mrf.mxu0
    %v1898 = vadd.f32 0.0, %v1897
    %v1899 = vpop.f32.mrf.mxu0
    %1900 = vmatprep.mubr.f32.mxu0 0.0
    %1901 = vmatmul.mubr.f32.gmra.mxu0 %v102
    %v1902 = vpop.f32.mrf.mxu0
    %v1903 = vadd.f32 0.0, %v1902
    %v1904 = vpop.f32.mrf.mxu0
    %1905 = vmatprep.mubr.f32.mxu0 0.0
    %1906 = vmatmul.mubr.f32.gmra.mxu0 %v103
    %v1907 = vpop.f32.mrf.mxu0
    %v1908 = vadd.f32 0.0, %v1907
    %v1909 = vpop.f32.mrf.mxu0
    %1910 = vmatprep.mubr.f32.mxu0 0.0
    %1911 = vmatmul.mubr.f32.gmra.mxu0 %v104
    %v1912 = vpop.f32.mrf.mxu0
    %v1913 = vadd.f32 0.0, %v1912
    %v1914 = vpop.f32.mrf.mxu0
    %1915 = vmatprep.mubr.f32.mxu0 0.0
    %1916 = vmatmul.mubr.f32.gmra.mxu0 %v105
    %v1917 = vpop.f32.mrf.mxu0
    %v1918 = vadd.f32 0.0, %v1917
    %v1919 = vpop.f32.mrf.mxu0
    %1920 = vmatprep.mubr.f32.mxu0 0.0
    %1921 = vmatmul.mubr.f32.gmra.mxu0 %v106
    %v1922 = vpop.f32.mrf.mxu0
    %v1923 = vadd.f32 0.0, %v1922
    %v1924 = vpop.f32.mrf.mxu0
    %1925 = vmatprep.mubr.f32.mxu0 0.0
    %1926 = vmatmul.mubr.f32.gmra.mxu0 %v107
    %v1927 = vpop.f32.mrf.mxu0
    %v1928 = vadd.f32 0.0, %v1927
    %v1929 = vpop.f32.mrf.mxu0
    %1930 = vdwg.mxu0
    %1931 = vmatprep.subr.mxu0 0.0
    %1932 = vmatpush1.msra.mxu0 %v1928
    %1933 = vmatprep.subr.mxu0 0.0
    %1934 = vmatpush1.msra.mxu0 %v1923
    %1935 = vmatprep.subr.mxu0 0.0
    %1936 = vmatpush1.msra.mxu0 %v1918
    %1937 = vmatprep.subr.mxu0 0.0
    %1938 = vmatpush1.msra.mxu0 %v1913
    %1939 = vmatprep.subr.mxu0 0.0
    %1940 = vmatpush1.msra.mxu0 %v1908
    %1941 = vmatprep.subr.mxu0 0.0
    %1942 = vmatpush1.msra.mxu0 %v1903
    %1943 = vmatprep.subr.mxu0 0.0
    %1944 = vmatpush1.msra.mxu0 %v1898
    %1945 = vmatprep.subr.mxu0 0.0
    %1946 = vmatpush1.msra.mxu0 %v1893
    %1947 = vmatprep.subr.mxu0 0.0
    %1948 = vmatpush1.msra.mxu0 %v1888
    %1949 = vmatprep.subr.mxu0 0.0
    %1950 = vmatpush1.msra.mxu0 %v1883
    %1951 = vmatprep.subr.mxu0 0.0
    %1952 = vmatpush1.msra.mxu0 %v1878
    %1953 = vmatprep.subr.mxu0 0.0
    %1954 = vmatpush1.msra.mxu0 %v1873
    %1955 = vmatprep.subr.mxu0 0.0
    %1956 = vmatpush1.msra.mxu0 %v1868
    %1957 = vmatprep.subr.mxu0 0.0
    %1958 = vmatpush1.msra.mxu0 %v1863
    %1959 = vmatprep.subr.mxu0 0.0
    %1960 = vmatpush1.msra.mxu0 %v1858
    %1961 = vmatprep.subr.mxu0 0.0
    %1962 = vmatpush1.msra.mxu0 %v1853
    %1963 = vmatprep.subr.mxu0 0.0
    %1964 = vmatpush2.msra.mxu0 0.0
    %1965 = vmatprep.subr.mxu0 0.0
    %1966 = vmatpush2.msra.mxu0 0.0
    %1967 = vmatprep.subr.mxu0 0.0
    %1968 = vmatpush2.msra.mxu0 0.0
    %1969 = vmatprep.subr.mxu0 0.0
    %1970 = vmatpush2.msra.mxu0 0.0
    %1971 = vmatprep.subr.mxu0 0.0
    %1972 = vmatpush2.msra.mxu0 0.0
    %1973 = vmatprep.subr.mxu0 0.0
    %1974 = vmatpush2.msra.mxu0 0.0
    %1975 = vmatprep.subr.mxu0 0.0
    %1976 = vmatpush2.msra.mxu0 0.0
    %1977 = vmatprep.subr.mxu0 0.0
    %1978 = vmatpush2.msra.mxu0 0.0
    %1979 = vmatprep.subr.mxu0 0.0
    %1980 = vmatpush2.msra.mxu0 0.0
    %1981 = vmatprep.subr.mxu0 0.0
    %1982 = vmatpush2.msra.mxu0 0.0
    %1983 = vmatprep.subr.mxu0 0.0
    %1984 = vmatpush2.msra.mxu0 0.0
    %1985 = vmatprep.subr.mxu0 0.0
    %1986 = vmatpush2.msra.mxu0 0.0
    %1987 = vmatprep.subr.mxu0 0.0
    %1988 = vmatpush2.msra.mxu0 0.0
    %1989 = vmatprep.subr.mxu0 0.0
    %1990 = vmatpush2.msra.mxu0 0.0
    %1991 = vmatprep.subr.mxu0 0.0
    %1992 = vmatpush2.msra.mxu0 0.0
    %1993 = vmatprep.subr.mxu0 0.0
    %1994 = vmatpush2.msra.mxu0 0.0
    %1995 = vmatprep.mubr.f32.mxu0 0.0
    %1996 = vmatmul.mubr.f32.gmra.mxu0 %v76
    %v1997 = vpop.f32.mrf.mxu0
    %v1998 = vadd.f32 0.0, %v1997
    %v1999 = vpop.f32.mrf.mxu0
    %2000 = vmatprep.mubr.f32.mxu0 0.0
    %2001 = vmatmul.mubr.f32.gmra.mxu0 %v77
    %v2002 = vpop.f32.mrf.mxu0
    %v2003 = vadd.f32 0.0, %v2002
    %v2004 = vpop.f32.mrf.mxu0
    %2005 = vmatprep.mubr.f32.mxu0 0.0
    %2006 = vmatmul.mubr.f32.gmra.mxu0 %v78
    %v2007 = vpop.f32.mrf.mxu0
    %v2008 = vadd.f32 0.0, %v2007
    %v2009 = vpop.f32.mrf.mxu0
    %2010 = vmatprep.mubr.f32.mxu0 0.0
    %2011 = vmatmul.mubr.f32.gmra.mxu0 %v79
    %v2012 = vpop.f32.mrf.mxu0
    %v2013 = vadd.f32 0.0, %v2012
    %v2014 = vpop.f32.mrf.mxu0
    %2015 = vmatprep.mubr.f32.mxu0 0.0
    %2016 = vmatmul.mubr.f32.gmra.mxu0 %v80
    %v2017 = vpop.f32.mrf.mxu0
    %v2018 = vadd.f32 0.0, %v2017
    %v2019 = vpop.f32.mrf.mxu0
    %2020 = vmatprep.mubr.f32.mxu0 0.0
    %2021 = vmatmul.mubr.f32.gmra.mxu0 %v81
    %v2022 = vpop.f32.mrf.mxu0
    %v2023 = vadd.f32 0.0, %v2022
    %v2024 = vpop.f32.mrf.mxu0
    %2025 = vmatprep.mubr.f32.mxu0 0.0
    %2026 = vmatmul.mubr.f32.gmra.mxu0 %v82
    %v2027 = vpop.f32.mrf.mxu0
    %v2028 = vadd.f32 0.0, %v2027
    %v2029 = vpop.f32.mrf.mxu0
    %2030 = vmatprep.mubr.f32.mxu0 0.0
    %2031 = vmatmul.mubr.f32.gmra.mxu0 %v83
    %v2032 = vpop.f32.mrf.mxu0
    %v2033 = vadd.f32 0.0, %v2032
    %v2034 = vpop.f32.mrf.mxu0
    %2035 = vmatprep.mubr.f32.mxu0 0.0
    %2036 = vmatmul.mubr.f32.gmra.mxu0 %v84
    %v2037 = vpop.f32.mrf.mxu0
    %v2038 = vadd.f32 0.0, %v2037
    %v2039 = vpop.f32.mrf.mxu0
    %2040 = vmatprep.mubr.f32.mxu0 0.0
    %2041 = vmatmul.mubr.f32.gmra.mxu0 %v85
    %v2042 = vpop.f32.mrf.mxu0
    %v2043 = vadd.f32 0.0, %v2042
    %v2044 = vpop.f32.mrf.mxu0
    %2045 = vmatprep.mubr.f32.mxu0 0.0
    %2046 = vmatmul.mubr.f32.gmra.mxu0 %v86
    %v2047 = vpop.f32.mrf.mxu0
    %v2048 = vadd.f32 0.0, %v2047
    %v2049 = vpop.f32.mrf.mxu0
    %2050 = vmatprep.mubr.f32.mxu0 0.0
    %2051 = vmatmul.mubr.f32.gmra.mxu0 %v87
    %v2052 = vpop.f32.mrf.mxu0
    %v2053 = vadd.f32 0.0, %v2052
    %v2054 = vpop.f32.mrf.mxu0
    %2055 = vmatprep.mubr.f32.mxu0 0.0
    %2056 = vmatmul.mubr.f32.gmra.mxu0 %v88
    %v2057 = vpop.f32.mrf.mxu0
    %v2058 = vadd.f32 0.0, %v2057
    %v2059 = vpop.f32.mrf.mxu0
    %2060 = vmatprep.mubr.f32.mxu0 0.0
    %2061 = vmatmul.mubr.f32.gmra.mxu0 %v89
    %v2062 = vpop.f32.mrf.mxu0
    %v2063 = vadd.f32 0.0, %v2062
    %v2064 = vpop.f32.mrf.mxu0
    %2065 = vmatprep.mubr.f32.mxu0 0.0
    %2066 = vmatmul.mubr.f32.gmra.mxu0 %v90
    %v2067 = vpop.f32.mrf.mxu0
    %v2068 = vadd.f32 0.0, %v2067
    %v2069 = vpop.f32.mrf.mxu0
    %2070 = vmatprep.mubr.f32.mxu0 0.0
    %2071 = vmatmul.mubr.f32.gmra.mxu0 %v91
    %v2072 = vpop.f32.mrf.mxu0
    %v2073 = vadd.f32 0.0, %v2072
    %v2074 = vpop.f32.mrf.mxu0
    %2075 = vdwg.mxu0
    %2076 = vmatprep.subr.mxu0 0.0
    %2077 = vmatpush1.msra.mxu0 %v2073
    %2078 = vmatprep.subr.mxu0 0.0
    %2079 = vmatpush1.msra.mxu0 %v2068
    %2080 = vmatprep.subr.mxu0 0.0
    %2081 = vmatpush1.msra.mxu0 %v2063
    %2082 = vmatprep.subr.mxu0 0.0
    %2083 = vmatpush1.msra.mxu0 %v2058
    %2084 = vmatprep.subr.mxu0 0.0
    %2085 = vmatpush1.msra.mxu0 %v2053
    %2086 = vmatprep.subr.mxu0 0.0
    %2087 = vmatpush1.msra.mxu0 %v2048
    %2088 = vmatprep.subr.mxu0 0.0
    %2089 = vmatpush1.msra.mxu0 %v2043
    %2090 = vmatprep.subr.mxu0 0.0
    %2091 = vmatpush1.msra.mxu0 %v2038
    %2092 = vmatprep.subr.mxu0 0.0
    %2093 = vmatpush1.msra.mxu0 %v2033
    %2094 = vmatprep.subr.mxu0 0.0
    %2095 = vmatpush1.msra.mxu0 %v2028
    %2096 = vmatprep.subr.mxu0 0.0
    %2097 = vmatpush1.msra.mxu0 %v2023
    %2098 = vmatprep.subr.mxu0 0.0
    %2099 = vmatpush1.msra.mxu0 %v2018
    %2100 = vmatprep.subr.mxu0 0.0
    %2101 = vmatpush1.msra.mxu0 %v2013
    %2102 = vmatprep.subr.mxu0 0.0
    %2103 = vmatpush1.msra.mxu0 %v2008
    %2104 = vmatprep.subr.mxu0 0.0
    %2105 = vmatpush1.msra.mxu0 %v2003
    %2106 = vmatprep.subr.mxu0 0.0
    %2107 = vmatpush1.msra.mxu0 %v1998
    %2108 = vmatprep.subr.mxu0 0.0
    %2109 = vmatpush2.msra.mxu0 0.0
    %2110 = vmatprep.subr.mxu0 0.0
    %2111 = vmatpush2.msra.mxu0 0.0
    %2112 = vmatprep.subr.mxu0 0.0
    %2113 = vmatpush2.msra.mxu0 0.0
    %2114 = vmatprep.subr.mxu0 0.0
    %2115 = vmatpush2.msra.mxu0 0.0
    %2116 = vmatprep.subr.mxu0 0.0
    %2117 = vmatpush2.msra.mxu0 0.0
    %2118 = vmatprep.subr.mxu0 0.0
    %2119 = vmatpush2.msra.mxu0 0.0
    %2120 = vmatprep.subr.mxu0 0.0
    %2121 = vmatpush2.msra.mxu0 0.0
    %2122 = vmatprep.subr.mxu0 0.0
    %2123 = vmatpush2.msra.mxu0 0.0
    %2124 = vmatprep.subr.mxu0 0.0
    %2125 = vmatpush2.msra.mxu0 0.0
    %2126 = vmatprep.subr.mxu0 0.0
    %2127 = vmatpush2.msra.mxu0 0.0
    %2128 = vmatprep.subr.mxu0 0.0
    %2129 = vmatpush2.msra.mxu0 0.0
    %2130 = vmatprep.subr.mxu0 0.0
    %2131 = vmatpush2.msra.mxu0 0.0
    %2132 = vmatprep.subr.mxu0 0.0
    %2133 = vmatpush2.msra.mxu0 0.0
    %2134 = vmatprep.subr.mxu0 0.0
    %2135 = vmatpush2.msra.mxu0 0.0
    %2136 = vmatprep.subr.mxu0 0.0
    %2137 = vmatpush2.msra.mxu0 0.0
    %2138 = vmatprep.subr.mxu0 0.0
    %2139 = vmatpush2.msra.mxu0 0.0
    %2140 = vmatprep.mubr.f32.mxu0 0.0
    %2141 = vmatmul.mubr.f32.gmra.mxu0 %v92
    %v2142 = vpop.f32.mrf.mxu0
    %v2143 = vadd.f32 0.0, %v2142
    %v2144 = vpop.f32.mrf.mxu0
    %2145 = vmatprep.mubr.f32.mxu0 0.0
    %2146 = vmatmul.mubr.f32.gmra.mxu0 %v93
    %v2147 = vpop.f32.mrf.mxu0
    %v2148 = vadd.f32 0.0, %v2147
    %v2149 = vpop.f32.mrf.mxu0
    %2150 = vmatprep.mubr.f32.mxu0 0.0
    %2151 = vmatmul.mubr.f32.gmra.mxu0 %v94
    %v2152 = vpop.f32.mrf.mxu0
    %v2153 = vadd.f32 0.0, %v2152
    %v2154 = vpop.f32.mrf.mxu0
    %2155 = vmatprep.mubr.f32.mxu0 0.0
    %2156 = vmatmul.mubr.f32.gmra.mxu0 %v95
    %v2157 = vpop.f32.mrf.mxu0
    %v2158 = vadd.f32 0.0, %v2157
    %v2159 = vpop.f32.mrf.mxu0
    %2160 = vmatprep.mubr.f32.mxu0 0.0
    %2161 = vmatmul.mubr.f32.gmra.mxu0 %v96
    %v2162 = vpop.f32.mrf.mxu0
    %v2163 = vadd.f32 0.0, %v2162
    %v2164 = vpop.f32.mrf.mxu0
    %2165 = vmatprep.mubr.f32.mxu0 0.0
    %2166 = vmatmul.mubr.f32.gmra.mxu0 %v97
    %v2167 = vpop.f32.mrf.mxu0
    %v2168 = vadd.f32 0.0, %v2167
    %v2169 = vpop.f32.mrf.mxu0
    %2170 = vmatprep.mubr.f32.mxu0 0.0
    %2171 = vmatmul.mubr.f32.gmra.mxu0 %v98
    %v2172 = vpop.f32.mrf.mxu0
    %v2173 = vadd.f32 0.0, %v2172
    %v2174 = vpop.f32.mrf.mxu0
    %2175 = vmatprep.mubr.f32.mxu0 0.0
    %2176 = vmatmul.mubr.f32.gmra.mxu0 %v99
    %v2177 = vpop.f32.mrf.mxu0
    %v2178 = vadd.f32 0.0, %v2177
    %v2179 = vpop.f32.mrf.mxu0
    %2180 = vmatprep.mubr.f32.mxu0 0.0
    %2181 = vmatmul.mubr.f32.gmra.mxu0 %v100
    %v2182 = vpop.f32.mrf.mxu0
    %v2183 = vadd.f32 0.0, %v2182
    %v2184 = vpop.f32.mrf.mxu0
    %2185 = vmatprep.mubr.f32.mxu0 0.0
    %2186 = vmatmul.mubr.f32.gmra.mxu0 %v101
    %v2187 = vpop.f32.mrf.mxu0
    %v2188 = vadd.f32 0.0, %v2187
    %v2189 = vpop.f32.mrf.mxu0
    %2190 = vmatprep.mubr.f32.mxu0 0.0
    %2191 = vmatmul.mubr.f32.gmra.mxu0 %v102
    %v2192 = vpop.f32.mrf.mxu0
    %v2193 = vadd.f32 0.0, %v2192
    %v2194 = vpop.f32.mrf.mxu0
    %2195 = vmatprep.mubr.f32.mxu0 0.0
    %2196 = vmatmul.mubr.f32.gmra.mxu0 %v103
    %v2197 = vpop.f32.mrf.mxu0
    %v2198 = vadd.f32 0.0, %v2197
    %v2199 = vpop.f32.mrf.mxu0
    %2200 = vmatprep.mubr.f32.mxu0 0.0
    %2201 = vmatmul.mubr.f32.gmra.mxu0 %v104
    %v2202 = vpop.f32.mrf.mxu0
    %v2203 = vadd.f32 0.0, %v2202
    %v2204 = vpop.f32.mrf.mxu0
    %2205 = vmatprep.mubr.f32.mxu0 0.0
    %2206 = vmatmul.mubr.f32.gmra.mxu0 %v105
    %v2207 = vpop.f32.mrf.mxu0
    %v2208 = vadd.f32 0.0, %v2207
    %v2209 = vpop.f32.mrf.mxu0
    %2210 = vmatprep.mubr.f32.mxu0 0.0
    %2211 = vmatmul.mubr.f32.gmra.mxu0 %v106
    %v2212 = vpop.f32.mrf.mxu0
    %v2213 = vadd.f32 0.0, %v2212
    %v2214 = vpop.f32.mrf.mxu0
    %2215 = vmatprep.mubr.f32.mxu0 0.0
    %2216 = vmatmul.mubr.f32.gmra.mxu0 %v107
    %v2217 = vpop.f32.mrf.mxu0
    %v2218 = vadd.f32 0.0, %v2217
    %v2219 = vpop.f32.mrf.mxu0
    %2220 = vdwg.mxu0
    %2221 = vmatprep.subr.mxu0 0.0
    %2222 = vmatpush1.msra.mxu0 %v2218
    %2223 = vmatprep.subr.mxu0 0.0
    %2224 = vmatpush1.msra.mxu0 %v2213
    %2225 = vmatprep.subr.mxu0 0.0
    %2226 = vmatpush1.msra.mxu0 %v2208
    %2227 = vmatprep.subr.mxu0 0.0
    %2228 = vmatpush1.msra.mxu0 %v2203
    %2229 = vmatprep.subr.mxu0 0.0
    %2230 = vmatpush1.msra.mxu0 %v2198
    %2231 = vmatprep.subr.mxu0 0.0
    %2232 = vmatpush1.msra.mxu0 %v2193
    %2233 = vmatprep.subr.mxu0 0.0
    %2234 = vmatpush1.msra.mxu0 %v2188
    %2235 = vmatprep.subr.mxu0 0.0
    %2236 = vmatpush1.msra.mxu0 %v2183
    %2237 = vmatprep.subr.mxu0 0.0
    %2238 = vmatpush1.msra.mxu0 %v2178
    %2239 = vmatprep.subr.mxu0 0.0
    %2240 = vmatpush1.msra.mxu0 %v2173
    %2241 = vmatprep.subr.mxu0 0.0
    %2242 = vmatpush1.msra.mxu0 %v2168
    %2243 = vmatprep.subr.mxu0 0.0
    %2244 = vmatpush1.msra.mxu0 %v2163
    %2245 = vmatprep.subr.mxu0 0.0
    %2246 = vmatpush1.msra.mxu0 %v2158
    %2247 = vmatprep.subr.mxu0 0.0
    %2248 = vmatpush1.msra.mxu0 %v2153
    %2249 = vmatprep.subr.mxu0 0.0
    %2250 = vmatpush1.msra.mxu0 %v2148
    %2251 = vmatprep.subr.mxu0 0.0
    %2252 = vmatpush1.msra.mxu0 %v2143
    %2253 = vmatprep.subr.mxu0 0.0
    %2254 = vmatpush2.msra.mxu0 0.0
    %2255 = vmatprep.subr.mxu0 0.0
    %2256 = vmatpush2.msra.mxu0 0.0
    %2257 = vmatprep.subr.mxu0 0.0
    %2258 = vmatpush2.msra.mxu0 0.0
    %2259 = vmatprep.subr.mxu0 0.0
    %2260 = vmatpush2.msra.mxu0 0.0
    %2261 = vmatprep.subr.mxu0 0.0
    %2262 = vmatpush2.msra.mxu0 0.0
    %2263 = vmatprep.subr.mxu0 0.0
    %2264 = vmatpush2.msra.mxu0 0.0
    %2265 = vmatprep.subr.mxu0 0.0
    %2266 = vmatpush2.msra.mxu0 0.0
    %2267 = vmatprep.subr.mxu0 0.0
    %2268 = vmatpush2.msra.mxu0 0.0
    %2269 = vmatprep.subr.mxu0 0.0
    %2270 = vmatpush2.msra.mxu0 0.0
    %2271 = vmatprep.subr.mxu0 0.0
    %2272 = vmatpush2.msra.mxu0 0.0
    %2273 = vmatprep.subr.mxu0 0.0
    %2274 = vmatpush2.msra.mxu0 0.0
    %2275 = vmatprep.subr.mxu0 0.0
    %2276 = vmatpush2.msra.mxu0 0.0
    %2277 = vmatprep.subr.mxu0 0.0
    %2278 = vmatpush2.msra.mxu0 0.0
    %2279 = vmatprep.subr.mxu0 0.0
    %2280 = vmatpush2.msra.mxu0 0.0
    %2281 = vmatprep.subr.mxu0 0.0
    %2282 = vmatpush2.msra.mxu0 0.0
    %2283 = vmatprep.subr.mxu0 0.0
    %2284 = vmatpush2.msra.mxu0 0.0
    %2285 = vmatprep.mubr.f32.mxu0 0.0
    %2286 = vmatmul.mubr.f32.gmra.mxu0 %v76
    %v2287 = vpop.f32.mrf.mxu0
    %v2288 = vadd.f32 0.0, %v2287
    %v2289 = vpop.f32.mrf.mxu0
    %2290 = vmatprep.mubr.f32.mxu0 0.0
    %2291 = vmatmul.mubr.f32.gmra.mxu0 %v77
    %v2292 = vpop.f32.mrf.mxu0
    %v2293 = vadd.f32 0.0, %v2292
    %v2294 = vpop.f32.mrf.mxu0
    %2295 = vmatprep.mubr.f32.mxu0 0.0
    %2296 = vmatmul.mubr.f32.gmra.mxu0 %v78
    %v2297 = vpop.f32.mrf.mxu0
    %v2298 = vadd.f32 0.0, %v2297
    %v2299 = vpop.f32.mrf.mxu0
    %2300 = vmatprep.mubr.f32.mxu0 0.0
    %2301 = vmatmul.mubr.f32.gmra.mxu0 %v79
    %v2302 = vpop.f32.mrf.mxu0
    %v2303 = vadd.f32 0.0, %v2302
    %v2304 = vpop.f32.mrf.mxu0
    %2305 = vmatprep.mubr.f32.mxu0 0.0
    %2306 = vmatmul.mubr.f32.gmra.mxu0 %v80
    %v2307 = vpop.f32.mrf.mxu0
    %v2308 = vadd.f32 0.0, %v2307
    %v2309 = vpop.f32.mrf.mxu0
    %2310 = vmatprep.mubr.f32.mxu0 0.0
    %2311 = vmatmul.mubr.f32.gmra.mxu0 %v81
    %v2312 = vpop.f32.mrf.mxu0
    %v2313 = vadd.f32 0.0, %v2312
    %v2314 = vpop.f32.mrf.mxu0
    %2315 = vmatprep.mubr.f32.mxu0 0.0
    %2316 = vmatmul.mubr.f32.gmra.mxu0 %v82
    %v2317 = vpop.f32.mrf.mxu0
    %v2318 = vadd.f32 0.0, %v2317
    %v2319 = vpop.f32.mrf.mxu0
    %2320 = vmatprep.mubr.f32.mxu0 0.0
    %2321 = vmatmul.mubr.f32.gmra.mxu0 %v83
    %v2322 = vpop.f32.mrf.mxu0
    %v2323 = vadd.f32 0.0, %v2322
    %v2324 = vpop.f32.mrf.mxu0
    %2325 = vmatprep.mubr.f32.mxu0 0.0
    %2326 = vmatmul.mubr.f32.gmra.mxu0 %v84
    %v2327 = vpop.f32.mrf.mxu0
    %v2328 = vadd.f32 0.0, %v2327
    %v2329 = vpop.f32.mrf.mxu0
    %2330 = vmatprep.mubr.f32.mxu0 0.0
    %2331 = vmatmul.mubr.f32.gmra.mxu0 %v85
    %v2332 = vpop.f32.mrf.mxu0
    %v2333 = vadd.f32 0.0, %v2332
    %v2334 = vpop.f32.mrf.mxu0
    %2335 = vmatprep.mubr.f32.mxu0 0.0
    %2336 = vmatmul.mubr.f32.gmra.mxu0 %v86
    %v2337 = vpop.f32.mrf.mxu0
    %v2338 = vadd.f32 0.0, %v2337
    %v2339 = vpop.f32.mrf.mxu0
    %2340 = vmatprep.mubr.f32.mxu0 0.0
    %2341 = vmatmul.mubr.f32.gmra.mxu0 %v87
    %v2342 = vpop.f32.mrf.mxu0
    %v2343 = vadd.f32 0.0, %v2342
    %v2344 = vpop.f32.mrf.mxu0
    %2345 = vmatprep.mubr.f32.mxu0 0.0
    %2346 = vmatmul.mubr.f32.gmra.mxu0 %v88
    %v2347 = vpop.f32.mrf.mxu0
    %v2348 = vadd.f32 0.0, %v2347
    %v2349 = vpop.f32.mrf.mxu0
    %2350 = vmatprep.mubr.f32.mxu0 0.0
    %2351 = vmatmul.mubr.f32.gmra.mxu0 %v89
    %v2352 = vpop.f32.mrf.mxu0
    %v2353 = vadd.f32 0.0, %v2352
    %v2354 = vpop.f32.mrf.mxu0
    %2355 = vmatprep.mubr.f32.mxu0 0.0
    %2356 = vmatmul.mubr.f32.gmra.mxu0 %v90
    %v2357 = vpop.f32.mrf.mxu0
    %v2358 = vadd.f32 0.0, %v2357
    %v2359 = vpop.f32.mrf.mxu0
    %2360 = vmatprep.mubr.f32.mxu0 0.0
    %2361 = vmatmul.mubr.f32.gmra.mxu0 %v91
    %v2362 = vpop.f32.mrf.mxu0
    %v2363 = vadd.f32 0.0, %v2362
    %v2364 = vpop.f32.mrf.mxu0
    %2365 = vdwg.mxu0
    %2366 = vmatprep.subr.mxu0 0.0
    %2367 = vmatpush1.msra.mxu0 %v2363
    %2368 = vmatprep.subr.mxu0 0.0
    %2369 = vmatpush1.msra.mxu0 %v2358
    %2370 = vmatprep.subr.mxu0 0.0
    %2371 = vmatpush1.msra.mxu0 %v2353
    %2372 = vmatprep.subr.mxu0 0.0
    %2373 = vmatpush1.msra.mxu0 %v2348
    %2374 = vmatprep.subr.mxu0 0.0
    %2375 = vmatpush1.msra.mxu0 %v2343
    %2376 = vmatprep.subr.mxu0 0.0
    %2377 = vmatpush1.msra.mxu0 %v2338
    %2378 = vmatprep.subr.mxu0 0.0
    %2379 = vmatpush1.msra.mxu0 %v2333
    %2380 = vmatprep.subr.mxu0 0.0
    %2381 = vmatpush1.msra.mxu0 %v2328
    %2382 = vmatprep.subr.mxu0 0.0
    %2383 = vmatpush1.msra.mxu0 %v2323
    %2384 = vmatprep.subr.mxu0 0.0
    %2385 = vmatpush1.msra.mxu0 %v2318
    %2386 = vmatprep.subr.mxu0 0.0
    %2387 = vmatpush1.msra.mxu0 %v2313
    %2388 = vmatprep.subr.mxu0 0.0
    %2389 = vmatpush1.msra.mxu0 %v2308
    %2390 = vmatprep.subr.mxu0 0.0
    %2391 = vmatpush1.msra.mxu0 %v2303
    %2392 = vmatprep.subr.mxu0 0.0
    %2393 = vmatpush1.msra.mxu0 %v2298
    %2394 = vmatprep.subr.mxu0 0.0
    %2395 = vmatpush1.msra.mxu0 %v2293
    %2396 = vmatprep.subr.mxu0 0.0
    %2397 = vmatpush1.msra.mxu0 %v2288
    %2398 = vmatprep.subr.mxu0 0.0
    %2399 = vmatpush2.msra.mxu0 0.0
    %2400 = vmatprep.subr.mxu0 0.0
    %2401 = vmatpush2.msra.mxu0 0.0
    %2402 = vmatprep.subr.mxu0 0.0
    %2403 = vmatpush2.msra.mxu0 0.0
    %2404 = vmatprep.subr.mxu0 0.0
    %2405 = vmatpush2.msra.mxu0 0.0
    %2406 = vmatprep.subr.mxu0 0.0
    %2407 = vmatpush2.msra.mxu0 0.0
    %2408 = vmatprep.subr.mxu0 0.0
    %2409 = vmatpush2.msra.mxu0 0.0
    %2410 = vmatprep.subr.mxu0 0.0
    %2411 = vmatpush2.msra.mxu0 0.0
    %2412 = vmatprep.subr.mxu0 0.0
    %2413 = vmatpush2.msra.mxu0 0.0
    %2414 = vmatprep.subr.mxu0 0.0
    %2415 = vmatpush2.msra.mxu0 0.0
    %2416 = vmatprep.subr.mxu0 0.0
    %2417 = vmatpush2.msra.mxu0 0.0
    %2418 = vmatprep.subr.mxu0 0.0
    %2419 = vmatpush2.msra.mxu0 0.0
    %2420 = vmatprep.subr.mxu0 0.0
    %2421 = vmatpush2.msra.mxu0 0.0
    %2422 = vmatprep.subr.mxu0 0.0
    %2423 = vmatpush2.msra.mxu0 0.0
    %2424 = vmatprep.subr.mxu0 0.0
    %2425 = vmatpush2.msra.mxu0 0.0
    %2426 = vmatprep.subr.mxu0 0.0
    %2427 = vmatpush2.msra.mxu0 0.0
    %2428 = vmatprep.subr.mxu0 0.0
    %2429 = vmatpush2.msra.mxu0 0.0
    %2430 = vmatprep.mubr.f32.mxu0 0.0
    %2431 = vmatmul.mubr.f32.gmra.mxu0 %v92
    %v2432 = vpop.f32.mrf.mxu0
    %v2433 = vadd.f32 0.0, %v2432
    %v2434 = vpop.f32.mrf.mxu0
    %2435 = vmatprep.mubr.f32.mxu0 0.0
    %2436 = vmatmul.mubr.f32.gmra.mxu0 %v93
    %v2437 = vpop.f32.mrf.mxu0
    %v2438 = vadd.f32 0.0, %v2437
    %v2439 = vpop.f32.mrf.mxu0
    %2440 = vmatprep.mubr.f32.mxu0 0.0
    %2441 = vmatmul.mubr.f32.gmra.mxu0 %v94
    %v2442 = vpop.f32.mrf.mxu0
    %v2443 = vadd.f32 0.0, %v2442
    %v2444 = vpop.f32.mrf.mxu0
    %2445 = vmatprep.mubr.f32.mxu0 0.0
    %2446 = vmatmul.mubr.f32.gmra.mxu0 %v95
    %v2447 = vpop.f32.mrf.mxu0
    %v2448 = vadd.f32 0.0, %v2447
    %v2449 = vpop.f32.mrf.mxu0
    %2450 = vmatprep.mubr.f32.mxu0 0.0
    %2451 = vmatmul.mubr.f32.gmra.mxu0 %v96
    %v2452 = vpop.f32.mrf.mxu0
    %v2453 = vadd.f32 0.0, %v2452
    %v2454 = vpop.f32.mrf.mxu0
    %2455 = vmatprep.mubr.f32.mxu0 0.0
    %2456 = vmatmul.mubr.f32.gmra.mxu0 %v97
    %v2457 = vpop.f32.mrf.mxu0
    %v2458 = vadd.f32 0.0, %v2457
    %v2459 = vpop.f32.mrf.mxu0
    %2460 = vmatprep.mubr.f32.mxu0 0.0
    %2461 = vmatmul.mubr.f32.gmra.mxu0 %v98
    %v2462 = vpop.f32.mrf.mxu0
    %v2463 = vadd.f32 0.0, %v2462
    %v2464 = vpop.f32.mrf.mxu0
    %2465 = vmatprep.mubr.f32.mxu0 0.0
    %2466 = vmatmul.mubr.f32.gmra.mxu0 %v99
    %v2467 = vpop.f32.mrf.mxu0
    %v2468 = vadd.f32 0.0, %v2467
    %v2469 = vpop.f32.mrf.mxu0
    %2470 = vmatprep.mubr.f32.mxu0 0.0
    %2471 = vmatmul.mubr.f32.gmra.mxu0 %v100
    %v2472 = vpop.f32.mrf.mxu0
    %v2473 = vadd.f32 0.0, %v2472
    %v2474 = vpop.f32.mrf.mxu0
    %2475 = vmatprep.mubr.f32.mxu0 0.0
    %2476 = vmatmul.mubr.f32.gmra.mxu0 %v101
    %v2477 = vpop.f32.mrf.mxu0
    %v2478 = vadd.f32 0.0, %v2477
    %v2479 = vpop.f32.mrf.mxu0
    %2480 = vmatprep.mubr.f32.mxu0 0.0
    %2481 = vmatmul.mubr.f32.gmra.mxu0 %v102
    %v2482 = vpop.f32.mrf.mxu0
    %v2483 = vadd.f32 0.0, %v2482
    %v2484 = vpop.f32.mrf.mxu0
    %2485 = vmatprep.mubr.f32.mxu0 0.0
    %2486 = vmatmul.mubr.f32.gmra.mxu0 %v103
    %v2487 = vpop.f32.mrf.mxu0
    %v2488 = vadd.f32 0.0, %v2487
    %v2489 = vpop.f32.mrf.mxu0
    %2490 = vmatprep.mubr.f32.mxu0 0.0
    %2491 = vmatmul.mubr.f32.gmra.mxu0 %v104
    %v2492 = vpop.f32.mrf.mxu0
    %v2493 = vadd.f32 0.0, %v2492
    %v2494 = vpop.f32.mrf.mxu0
    %2495 = vmatprep.mubr.f32.mxu0 0.0
    %2496 = vmatmul.mubr.f32.gmra.mxu0 %v105
    %v2497 = vpop.f32.mrf.mxu0
    %v2498 = vadd.f32 0.0, %v2497
    %v2499 = vpop.f32.mrf.mxu0
    %2500 = vmatprep.mubr.f32.mxu0 0.0
    %2501 = vmatmul.mubr.f32.gmra.mxu0 %v106
    %v2502 = vpop.f32.mrf.mxu0
    %v2503 = vadd.f32 0.0, %v2502
    %v2504 = vpop.f32.mrf.mxu0
    %2505 = vmatprep.mubr.f32.mxu0 0.0
    %2506 = vmatmul.mubr.f32.gmra.mxu0 %v107
    %v2507 = vpop.f32.mrf.mxu0
    %v2508 = vadd.f32 0.0, %v2507
    %v2509 = vpop.f32.mrf.mxu0
    %2510 = vdwg.mxu0
    %2511 = vmatprep.subr.mxu0 0.0
    %2512 = vmatpush1.msra.mxu0 %v2508
    %2513 = vmatprep.subr.mxu0 0.0
    %2514 = vmatpush1.msra.mxu0 %v2503
    %2515 = vmatprep.subr.mxu0 0.0
    %2516 = vmatpush1.msra.mxu0 %v2498
    %2517 = vmatprep.subr.mxu0 0.0
    %2518 = vmatpush1.msra.mxu0 %v2493
    %2519 = vmatprep.subr.mxu0 0.0
    %2520 = vmatpush1.msra.mxu0 %v2488
    %2521 = vmatprep.subr.mxu0 0.0
    %2522 = vmatpush1.msra.mxu0 %v2483
    %2523 = vmatprep.subr.mxu0 0.0
    %2524 = vmatpush1.msra.mxu0 %v2478
    %2525 = vmatprep.subr.mxu0 0.0
    %2526 = vmatpush1.msra.mxu0 %v2473
    %2527 = vmatprep.subr.mxu0 0.0
    %2528 = vmatpush1.msra.mxu0 %v2468
    %2529 = vmatprep.subr.mxu0 0.0
    %2530 = vmatpush1.msra.mxu0 %v2463
    %2531 = vmatprep.subr.mxu0 0.0
    %2532 = vmatpush1.msra.mxu0 %v2458
    %2533 = vmatprep.subr.mxu0 0.0
    %2534 = vmatpush1.msra.mxu0 %v2453
    %2535 = vmatprep.subr.mxu0 0.0
    %2536 = vmatpush1.msra.mxu0 %v2448
    %2537 = vmatprep.subr.mxu0 0.0
    %2538 = vmatpush1.msra.mxu0 %v2443
    %2539 = vmatprep.subr.mxu0 0.0
    %2540 = vmatpush1.msra.mxu0 %v2438
    %2541 = vmatprep.subr.mxu0 0.0
    %2542 = vmatpush1.msra.mxu0 %v2433
    %2543 = vmatprep.subr.mxu0 0.0
    %2544 = vmatpush2.msra.mxu0 0.0
    %2545 = vmatprep.subr.mxu0 0.0
    %2546 = vmatpush2.msra.mxu0 0.0
    %2547 = vmatprep.subr.mxu0 0.0
    %2548 = vmatpush2.msra.mxu0 0.0
    %2549 = vmatprep.subr.mxu0 0.0
    %2550 = vmatpush2.msra.mxu0 0.0
    %2551 = vmatprep.subr.mxu0 0.0
    %2552 = vmatpush2.msra.mxu0 0.0
    %2553 = vmatprep.subr.mxu0 0.0
    %2554 = vmatpush2.msra.mxu0 0.0
    %2555 = vmatprep.subr.mxu0 0.0
    %2556 = vmatpush2.msra.mxu0 0.0
    %2557 = vmatprep.subr.mxu0 0.0
    %2558 = vmatpush2.msra.mxu0 0.0
    %2559 = vmatprep.subr.mxu0 0.0
    %2560 = vmatpush2.msra.mxu0 0.0
    %2561 = vmatprep.subr.mxu0 0.0
    %2562 = vmatpush2.msra.mxu0 0.0
    %2563 = vmatprep.subr.mxu0 0.0
    %2564 = vmatpush2.msra.mxu0 0.0
    %2565 = vmatprep.subr.mxu0 0.0
    %2566 = vmatpush2.msra.mxu0 0.0
    %2567 = vmatprep.subr.mxu0 0.0
    %2568 = vmatpush2.msra.mxu0 0.0
    %2569 = vmatprep.subr.mxu0 0.0
    %2570 = vmatpush2.msra.mxu0 0.0
    %2571 = vmatprep.subr.mxu0 0.0
    %2572 = vmatpush2.msra.mxu0 0.0
    %2573 = vmatprep.subr.mxu0 0.0
    %2574 = vmatpush2.msra.mxu0 0.0
    %2575 = vmatprep.mubr.f32.mxu0 0.0
    %2576 = vmatmul.mubr.f32.gmra.mxu0 %v76
    %v2577 = vpop.f32.mrf.mxu0
    %v2578 = vadd.f32 0.0, %v2577
    %v2579 = vpop.f32.mrf.mxu0
    %2580 = vmatprep.mubr.f32.mxu0 0.0
    %2581 = vmatmul.mubr.f32.gmra.mxu0 %v77
    %v2582 = vpop.f32.mrf.mxu0
    %v2583 = vadd.f32 0.0, %v2582
    %v2584 = vpop.f32.mrf.mxu0
    %2585 = vmatprep.mubr.f32.mxu0 0.0
    %2586 = vmatmul.mubr.f32.gmra.mxu0 %v78
    %v2587 = vpop.f32.mrf.mxu0
    %v2588 = vadd.f32 0.0, %v2587
    %v2589 = vpop.f32.mrf.mxu0
    %2590 = vmatprep.mubr.f32.mxu0 0.0
    %2591 = vmatmul.mubr.f32.gmra.mxu0 %v79
    %v2592 = vpop.f32.mrf.mxu0
    %v2593 = vadd.f32 0.0, %v2592
    %v2594 = vpop.f32.mrf.mxu0
    %2595 = vmatprep.mubr.f32.mxu0 0.0
    %2596 = vmatmul.mubr.f32.gmra.mxu0 %v80
    %v2597 = vpop.f32.mrf.mxu0
    %v2598 = vadd.f32 0.0, %v2597
    %v2599 = vpop.f32.mrf.mxu0
    %2600 = vmatprep.mubr.f32.mxu0 0.0
    %2601 = vmatmul.mubr.f32.gmra.mxu0 %v81
    %v2602 = vpop.f32.mrf.mxu0
    %v2603 = vadd.f32 0.0, %v2602
    %v2604 = vpop.f32.mrf.mxu0
    %2605 = vmatprep.mubr.f32.mxu0 0.0
    %2606 = vmatmul.mubr.f32.gmra.mxu0 %v82
    %v2607 = vpop.f32.mrf.mxu0
    %v2608 = vadd.f32 0.0, %v2607
    %v2609 = vpop.f32.mrf.mxu0
    %2610 = vmatprep.mubr.f32.mxu0 0.0
    %2611 = vmatmul.mubr.f32.gmra.mxu0 %v83
    %v2612 = vpop.f32.mrf.mxu0
    %v2613 = vadd.f32 0.0, %v2612
    %v2614 = vpop.f32.mrf.mxu0
    %2615 = vmatprep.mubr.f32.mxu0 0.0
    %2616 = vmatmul.mubr.f32.gmra.mxu0 %v84
    %v2617 = vpop.f32.mrf.mxu0
    %v2618 = vadd.f32 0.0, %v2617
    %v2619 = vpop.f32.mrf.mxu0
    %2620 = vmatprep.mubr.f32.mxu0 0.0
    %2621 = vmatmul.mubr.f32.gmra.mxu0 %v85
    %v2622 = vpop.f32.mrf.mxu0
    %v2623 = vadd.f32 0.0, %v2622
    %v2624 = vpop.f32.mrf.mxu0
    %2625 = vmatprep.mubr.f32.mxu0 0.0
    %2626 = vmatmul.mubr.f32.gmra.mxu0 %v86
    %v2627 = vpop.f32.mrf.mxu0
    %v2628 = vadd.f32 0.0, %v2627
    %v2629 = vpop.f32.mrf.mxu0
    %2630 = vmatprep.mubr.f32.mxu0 0.0
    %2631 = vmatmul.mubr.f32.gmra.mxu0 %v87
    %v2632 = vpop.f32.mrf.mxu0
    %v2633 = vadd.f32 0.0, %v2632
    %v2634 = vpop.f32.mrf.mxu0
    %2635 = vmatprep.mubr.f32.mxu0 0.0
    %2636 = vmatmul.mubr.f32.gmra.mxu0 %v88
    %v2637 = vpop.f32.mrf.mxu0
    %v2638 = vadd.f32 0.0, %v2637
    %v2639 = vpop.f32.mrf.mxu0
    %2640 = vmatprep.mubr.f32.mxu0 0.0
    %2641 = vmatmul.mubr.f32.gmra.mxu0 %v89
    %v2642 = vpop.f32.mrf.mxu0
    %v2643 = vadd.f32 0.0, %v2642
    %v2644 = vpop.f32.mrf.mxu0
    %2645 = vmatprep.mubr.f32.mxu0 0.0
    %2646 = vmatmul.mubr.f32.gmra.mxu0 %v90
    %v2647 = vpop.f32.mrf.mxu0
    %v2648 = vadd.f32 0.0, %v2647
    %v2649 = vpop.f32.mrf.mxu0
    %2650 = vmatprep.mubr.f32.mxu0 0.0
    %2651 = vmatmul.mubr.f32.gmra.mxu0 %v91
    %v2652 = vpop.f32.mrf.mxu0
    %v2653 = vadd.f32 0.0, %v2652
    %v2654 = vpop.f32.mrf.mxu0
    %2655 = vdwg.mxu0
    %v2656 = vsub.f32 %v1352, %v2578
    %v2657 = vsub.f32 %v1357, %v2583
    %v2658 = vsub.f32 %v1362, %v2588
    %v2659 = vsub.f32 %v1367, %v2593
    %v2660 = vsub.f32 %v1372, %v2598
    %v2661 = vsub.f32 %v1377, %v2603
    %v2662 = vsub.f32 %v1382, %v2608
    %v2663 = vsub.f32 %v1387, %v2613
    %v2664 = vsub.f32 %v1392, %v2618
    %v2665 = vsub.f32 %v1397, %v2623
    %v2666 = vsub.f32 %v1402, %v2628
    %v2667 = vsub.f32 %v1407, %v2633
    %v2668 = vsub.f32 %v1412, %v2638
    %v2669 = vsub.f32 %v1417, %v2643
    %v2670 = vsub.f32 %v1422, %v2648
    %v2671 = vsub.f32 %v1427, %v2653
    %s2672 = scalar_lea.vmem [#allocation10], 384
    %2673 = vst [vmem:[%s2672] sm:$0xff] %v2656
    %2674 = vst [vmem:[%s2672 + $0x8] sm:$0xff] %v2657
    %2675 = vst [vmem:[%s2672 + $0x10] sm:$0xff] %v2658
    %2676 = vst [vmem:[%s2672 + $0x18] sm:$0xff] %v2659
    %2677 = vst [vmem:[%s2672 + $0x20] sm:$0xff] %v2660
    %2678 = vst [vmem:[%s2672 + $0x28] sm:$0xff] %v2661
    %2679 = vst [vmem:[%s2672 + $0x30] sm:$0xff] %v2662
    %2680 = vst [vmem:[%s2672 + $0x38] sm:$0xff] %v2663
    %2681 = vst [vmem:[%s2672 + $0x40] sm:$0xff] %v2664
    %2682 = vst [vmem:[%s2672 + $0x48] sm:$0xff] %v2665
    %2683 = vst [vmem:[%s2672 + $0x50] sm:$0xff] %v2666
    %2684 = vst [vmem:[%s2672 + $0x58] sm:$0xff] %v2667
    %2685 = vst [vmem:[%s2672 + $0x60] sm:$0xff] %v2668
    %2686 = vst [vmem:[%s2672 + $0x68] sm:$0xff] %v2669
    %2687 = vst [vmem:[%s2672 + $0x70] sm:$0xff] %v2670
    %2688 = vst [vmem:[%s2672 + $0x78] sm:$0xff] %v2671
    %v2689 = vsub.f32 %v1207, %v2433
    %v2690 = vsub.f32 %v1212, %v2438
    %v2691 = vsub.f32 %v1217, %v2443
    %v2692 = vsub.f32 %v1222, %v2448
    %v2693 = vsub.f32 %v1227, %v2453
    %v2694 = vsub.f32 %v1232, %v2458
    %v2695 = vsub.f32 %v1237, %v2463
    %v2696 = vsub.f32 %v1242, %v2468
    %v2697 = vsub.f32 %v1247, %v2473
    %v2698 = vsub.f32 %v1252, %v2478
    %v2699 = vsub.f32 %v1257, %v2483
    %v2700 = vsub.f32 %v1262, %v2488
    %v2701 = vsub.f32 %v1267, %v2493
    %v2702 = vsub.f32 %v1272, %v2498
    %v2703 = vsub.f32 %v1277, %v2503
    %v2704 = vsub.f32 %v1282, %v2508
    %s2705 = scalar_lea.vmem [#allocation11], 384
    %2706 = vst [vmem:[%s2705] sm:$0xff] %v2689
    %2707 = vst [vmem:[%s2705 + $0x8] sm:$0xff] %v2690
    %2708 = vst [vmem:[%s2705 + $0x10] sm:$0xff] %v2691
    %2709 = vst [vmem:[%s2705 + $0x18] sm:$0xff] %v2692
    %2710 = vst [vmem:[%s2705 + $0x20] sm:$0xff] %v2693
    %2711 = vst [vmem:[%s2705 + $0x28] sm:$0xff] %v2694
    %2712 = vst [vmem:[%s2705 + $0x30] sm:$0xff] %v2695
    %2713 = vst [vmem:[%s2705 + $0x38] sm:$0xff] %v2696
    %2714 = vst [vmem:[%s2705 + $0x40] sm:$0xff] %v2697
    %2715 = vst [vmem:[%s2705 + $0x48] sm:$0xff] %v2698
    %2716 = vst [vmem:[%s2705 + $0x50] sm:$0xff] %v2699
    %2717 = vst [vmem:[%s2705 + $0x58] sm:$0xff] %v2700
    %2718 = vst [vmem:[%s2705 + $0x60] sm:$0xff] %v2701
    %2719 = vst [vmem:[%s2705 + $0x68] sm:$0xff] %v2702
    %2720 = vst [vmem:[%s2705 + $0x70] sm:$0xff] %v2703
    %2721 = vst [vmem:[%s2705 + $0x78] sm:$0xff] %v2704
    %2722 = vmatprep.subr.mxu0 0.0
    %2723 = vmatpush1.msra.mxu0 %v2653
    %2724 = vmatprep.subr.mxu0 0.0
    %2725 = vmatpush1.msra.mxu0 %v2648
    %2726 = vmatprep.subr.mxu0 0.0
    %2727 = vmatpush1.msra.mxu0 %v2643
    %2728 = vmatprep.subr.mxu0 0.0
    %2729 = vmatpush1.msra.mxu0 %v2638
    %2730 = vmatprep.subr.mxu0 0.0
    %2731 = vmatpush1.msra.mxu0 %v2633
    %2732 = vmatprep.subr.mxu0 0.0
    %2733 = vmatpush1.msra.mxu0 %v2628
    %2734 = vmatprep.subr.mxu0 0.0
    %2735 = vmatpush1.msra.mxu0 %v2623
    %2736 = vmatprep.subr.mxu0 0.0
    %2737 = vmatpush1.msra.mxu0 %v2618
    %2738 = vmatprep.subr.mxu0 0.0
    %2739 = vmatpush1.msra.mxu0 %v2613
    %2740 = vmatprep.subr.mxu0 0.0
    %2741 = vmatpush1.msra.mxu0 %v2608
    %2742 = vmatprep.subr.mxu0 0.0
    %2743 = vmatpush1.msra.mxu0 %v2603
    %2744 = vmatprep.subr.mxu0 0.0
    %2745 = vmatpush1.msra.mxu0 %v2598
    %2746 = vmatprep.subr.mxu0 0.0
    %2747 = vmatpush1.msra.mxu0 %v2593
    %2748 = vmatprep.subr.mxu0 0.0
    %2749 = vmatpush1.msra.mxu0 %v2588
    %2750 = vmatprep.subr.mxu0 0.0
    %2751 = vmatpush1.msra.mxu0 %v2583
    %2752 = vmatprep.subr.mxu0 0.0
    %2753 = vmatpush1.msra.mxu0 %v2578
    %2754 = vmatprep.subr.mxu0 0.0
    %2755 = vmatpush2.msra.mxu0 0.0
    %2756 = vmatprep.subr.mxu0 0.0
    %2757 = vmatpush2.msra.mxu0 0.0
    %2758 = vmatprep.subr.mxu0 0.0
    %2759 = vmatpush2.msra.mxu0 0.0
    %2760 = vmatprep.subr.mxu0 0.0
    %2761 = vmatpush2.msra.mxu0 0.0
    %2762 = vmatprep.subr.mxu0 0.0
    %2763 = vmatpush2.msra.mxu0 0.0
    %2764 = vmatprep.subr.mxu0 0.0
    %2765 = vmatpush2.msra.mxu0 0.0
    %2766 = vmatprep.subr.mxu0 0.0
    %2767 = vmatpush2.msra.mxu0 0.0
    %2768 = vmatprep.subr.mxu0 0.0
    %2769 = vmatpush2.msra.mxu0 0.0
    %2770 = vmatprep.subr.mxu0 0.0
    %2771 = vmatpush2.msra.mxu0 0.0
    %2772 = vmatprep.subr.mxu0 0.0
    %2773 = vmatpush2.msra.mxu0 0.0
    %2774 = vmatprep.subr.mxu0 0.0
    %2775 = vmatpush2.msra.mxu0 0.0
    %2776 = vmatprep.subr.mxu0 0.0
    %2777 = vmatpush2.msra.mxu0 0.0
    %2778 = vmatprep.subr.mxu0 0.0
    %2779 = vmatpush2.msra.mxu0 0.0
    %2780 = vmatprep.subr.mxu0 0.0
    %2781 = vmatpush2.msra.mxu0 0.0
    %2782 = vmatprep.subr.mxu0 0.0
    %2783 = vmatpush2.msra.mxu0 0.0
    %2784 = vmatprep.subr.mxu0 0.0
    %2785 = vmatpush2.msra.mxu0 0.0
    %2786 = vmatprep.mubr.f32.mxu0 0.0
    %2787 = vmatmul.mubr.f32.gmra.mxu0 %v92
    %v2788 = vpop.f32.mrf.mxu0
    %v2789 = vadd.f32 0.0, %v2788
    %v2790 = vpop.f32.mrf.mxu0
    %2791 = vmatprep.mubr.f32.mxu0 0.0
    %2792 = vmatmul.mubr.f32.gmra.mxu0 %v93
    %v2793 = vpop.f32.mrf.mxu0
    %v2794 = vadd.f32 0.0, %v2793
    %v2795 = vpop.f32.mrf.mxu0
    %2796 = vmatprep.mubr.f32.mxu0 0.0
    %2797 = vmatmul.mubr.f32.gmra.mxu0 %v94
    %v2798 = vpop.f32.mrf.mxu0
    %v2799 = vadd.f32 0.0, %v2798
    %v2800 = vpop.f32.mrf.mxu0
    %2801 = vmatprep.mubr.f32.mxu0 0.0
    %2802 = vmatmul.mubr.f32.gmra.mxu0 %v95
    %v2803 = vpop.f32.mrf.mxu0
    %v2804 = vadd.f32 0.0, %v2803
    %v2805 = vpop.f32.mrf.mxu0
    %2806 = vmatprep.mubr.f32.mxu0 0.0
    %2807 = vmatmul.mubr.f32.gmra.mxu0 %v96
    %v2808 = vpop.f32.mrf.mxu0
    %v2809 = vadd.f32 0.0, %v2808
    %v2810 = vpop.f32.mrf.mxu0
    %2811 = vmatprep.mubr.f32.mxu0 0.0
    %2812 = vmatmul.mubr.f32.gmra.mxu0 %v97
    %v2813 = vpop.f32.mrf.mxu0
    %v2814 = vadd.f32 0.0, %v2813
    %v2815 = vpop.f32.mrf.mxu0
    %2816 = vmatprep.mubr.f32.mxu0 0.0
    %2817 = vmatmul.mubr.f32.gmra.mxu0 %v98
    %v2818 = vpop.f32.mrf.mxu0
    %v2819 = vadd.f32 0.0, %v2818
    %v2820 = vpop.f32.mrf.mxu0
    %2821 = vmatprep.mubr.f32.mxu0 0.0
    %2822 = vmatmul.mubr.f32.gmra.mxu0 %v99
    %v2823 = vpop.f32.mrf.mxu0
    %v2824 = vadd.f32 0.0, %v2823
    %v2825 = vpop.f32.mrf.mxu0
    %2826 = vmatprep.mubr.f32.mxu0 0.0
    %2827 = vmatmul.mubr.f32.gmra.mxu0 %v100
    %v2828 = vpop.f32.mrf.mxu0
    %v2829 = vadd.f32 0.0, %v2828
    %v2830 = vpop.f32.mrf.mxu0
    %2831 = vmatprep.mubr.f32.mxu0 0.0
    %2832 = vmatmul.mubr.f32.gmra.mxu0 %v101
    %v2833 = vpop.f32.mrf.mxu0
    %v2834 = vadd.f32 0.0, %v2833
    %v2835 = vpop.f32.mrf.mxu0
    %2836 = vmatprep.mubr.f32.mxu0 0.0
    %2837 = vmatmul.mubr.f32.gmra.mxu0 %v102
    %v2838 = vpop.f32.mrf.mxu0
    %v2839 = vadd.f32 0.0, %v2838
    %v2840 = vpop.f32.mrf.mxu0
    %2841 = vmatprep.mubr.f32.mxu0 0.0
    %2842 = vmatmul.mubr.f32.gmra.mxu0 %v103
    %v2843 = vpop.f32.mrf.mxu0
    %v2844 = vadd.f32 0.0, %v2843
    %v2845 = vpop.f32.mrf.mxu0
    %2846 = vmatprep.mubr.f32.mxu0 0.0
    %2847 = vmatmul.mubr.f32.gmra.mxu0 %v104
    %v2848 = vpop.f32.mrf.mxu0
    %v2849 = vadd.f32 0.0, %v2848
    %v2850 = vpop.f32.mrf.mxu0
    %2851 = vmatprep.mubr.f32.mxu0 0.0
    %2852 = vmatmul.mubr.f32.gmra.mxu0 %v105
    %v2853 = vpop.f32.mrf.mxu0
    %v2854 = vadd.f32 0.0, %v2853
    %v2855 = vpop.f32.mrf.mxu0
    %2856 = vmatprep.mubr.f32.mxu0 0.0
    %2857 = vmatmul.mubr.f32.gmra.mxu0 %v106
    %v2858 = vpop.f32.mrf.mxu0
    %v2859 = vadd.f32 0.0, %v2858
    %v2860 = vpop.f32.mrf.mxu0
    %2861 = vmatprep.mubr.f32.mxu0 0.0
    %2862 = vmatmul.mubr.f32.gmra.mxu0 %v107
    %v2863 = vpop.f32.mrf.mxu0
    %v2864 = vadd.f32 0.0, %v2863
    %v2865 = vpop.f32.mrf.mxu0
    %2866 = vdwg.mxu0
    %2867 = vmatprep.subr.mxu0 0.0
    %2868 = vmatpush1.msra.mxu0 %v2864
    %2869 = vmatprep.subr.mxu0 0.0
    %2870 = vmatpush1.msra.mxu0 %v2859
    %2871 = vmatprep.subr.mxu0 0.0
    %2872 = vmatpush1.msra.mxu0 %v2854
    %2873 = vmatprep.subr.mxu0 0.0
    %2874 = vmatpush1.msra.mxu0 %v2849
    %2875 = vmatprep.subr.mxu0 0.0
    %2876 = vmatpush1.msra.mxu0 %v2844
    %2877 = vmatprep.subr.mxu0 0.0
    %2878 = vmatpush1.msra.mxu0 %v2839
    %2879 = vmatprep.subr.mxu0 0.0
    %2880 = vmatpush1.msra.mxu0 %v2834
    %2881 = vmatprep.subr.mxu0 0.0
    %2882 = vmatpush1.msra.mxu0 %v2829
    %2883 = vmatprep.subr.mxu0 0.0
    %2884 = vmatpush1.msra.mxu0 %v2824
    %2885 = vmatprep.subr.mxu0 0.0
    %2886 = vmatpush1.msra.mxu0 %v2819
    %2887 = vmatprep.subr.mxu0 0.0
    %2888 = vmatpush1.msra.mxu0 %v2814
    %2889 = vmatprep.subr.mxu0 0.0
    %2890 = vmatpush1.msra.mxu0 %v2809
    %2891 = vmatprep.subr.mxu0 0.0
    %2892 = vmatpush1.msra.mxu0 %v2804
    %2893 = vmatprep.subr.mxu0 0.0
    %2894 = vmatpush1.msra.mxu0 %v2799
    %2895 = vmatprep.subr.mxu0 0.0
    %2896 = vmatpush1.msra.mxu0 %v2794
    %2897 = vmatprep.subr.mxu0 0.0
    %2898 = vmatpush1.msra.mxu0 %v2789
    %2899 = vmatprep.subr.mxu0 0.0
    %2900 = vmatpush2.msra.mxu0 0.0
    %2901 = vmatprep.subr.mxu0 0.0
    %2902 = vmatpush2.msra.mxu0 0.0
    %2903 = vmatprep.subr.mxu0 0.0
    %2904 = vmatpush2.msra.mxu0 0.0
    %2905 = vmatprep.subr.mxu0 0.0
    %2906 = vmatpush2.msra.mxu0 0.0
    %2907 = vmatprep.subr.mxu0 0.0
    %2908 = vmatpush2.msra.mxu0 0.0
    %2909 = vmatprep.subr.mxu0 0.0
    %2910 = vmatpush2.msra.mxu0 0.0
    %2911 = vmatprep.subr.mxu0 0.0
    %2912 = vmatpush2.msra.mxu0 0.0
    %2913 = vmatprep.subr.mxu0 0.0
    %2914 = vmatpush2.msra.mxu0 0.0
    %2915 = vmatprep.subr.mxu0 0.0
    %2916 = vmatpush2.msra.mxu0 0.0
    %2917 = vmatprep.subr.mxu0 0.0
    %2918 = vmatpush2.msra.mxu0 0.0
    %2919 = vmatprep.subr.mxu0 0.0
    %2920 = vmatpush2.msra.mxu0 0.0
    %2921 = vmatprep.subr.mxu0 0.0
    %2922 = vmatpush2.msra.mxu0 0.0
    %2923 = vmatprep.subr.mxu0 0.0
    %2924 = vmatpush2.msra.mxu0 0.0
    %2925 = vmatprep.subr.mxu0 0.0
    %2926 = vmatpush2.msra.mxu0 0.0
    %2927 = vmatprep.subr.mxu0 0.0
    %2928 = vmatpush2.msra.mxu0 0.0
    %2929 = vmatprep.subr.mxu0 0.0
    %2930 = vmatpush2.msra.mxu0 0.0
    %2931 = vmatprep.mubr.f32.mxu0 0.0
    %2932 = vmatmul.mubr.f32.gmra.mxu0 %v76
    %v2933 = vpop.f32.mrf.mxu0
    %v2934 = vadd.f32 0.0, %v2933
    %v2935 = vpop.f32.mrf.mxu0
    %2936 = vmatprep.mubr.f32.mxu0 0.0
    %2937 = vmatmul.mubr.f32.gmra.mxu0 %v77
    %v2938 = vpop.f32.mrf.mxu0
    %v2939 = vadd.f32 0.0, %v2938
    %v2940 = vpop.f32.mrf.mxu0
    %2941 = vmatprep.mubr.f32.mxu0 0.0
    %2942 = vmatmul.mubr.f32.gmra.mxu0 %v78
    %v2943 = vpop.f32.mrf.mxu0
    %v2944 = vadd.f32 0.0, %v2943
    %v2945 = vpop.f32.mrf.mxu0
    %2946 = vmatprep.mubr.f32.mxu0 0.0
    %2947 = vmatmul.mubr.f32.gmra.mxu0 %v79
    %v2948 = vpop.f32.mrf.mxu0
    %v2949 = vadd.f32 0.0, %v2948
    %v2950 = vpop.f32.mrf.mxu0
    %2951 = vmatprep.mubr.f32.mxu0 0.0
    %2952 = vmatmul.mubr.f32.gmra.mxu0 %v80
    %v2953 = vpop.f32.mrf.mxu0
    %v2954 = vadd.f32 0.0, %v2953
    %v2955 = vpop.f32.mrf.mxu0
    %2956 = vmatprep.mubr.f32.mxu0 0.0
    %2957 = vmatmul.mubr.f32.gmra.mxu0 %v81
    %v2958 = vpop.f32.mrf.mxu0
    %v2959 = vadd.f32 0.0, %v2958
    %v2960 = vpop.f32.mrf.mxu0
    %2961 = vmatprep.mubr.f32.mxu0 0.0
    %2962 = vmatmul.mubr.f32.gmra.mxu0 %v82
    %v2963 = vpop.f32.mrf.mxu0
    %v2964 = vadd.f32 0.0, %v2963
    %v2965 = vpop.f32.mrf.mxu0
    %2966 = vmatprep.mubr.f32.mxu0 0.0
    %2967 = vmatmul.mubr.f32.gmra.mxu0 %v83
    %v2968 = vpop.f32.mrf.mxu0
    %v2969 = vadd.f32 0.0, %v2968
    %v2970 = vpop.f32.mrf.mxu0
    %2971 = vmatprep.mubr.f32.mxu0 0.0
    %2972 = vmatmul.mubr.f32.gmra.mxu0 %v84
    %v2973 = vpop.f32.mrf.mxu0
    %v2974 = vadd.f32 0.0, %v2973
    %v2975 = vpop.f32.mrf.mxu0
    %2976 = vmatprep.mubr.f32.mxu0 0.0
    %2977 = vmatmul.mubr.f32.gmra.mxu0 %v85
    %v2978 = vpop.f32.mrf.mxu0
    %v2979 = vadd.f32 0.0, %v2978
    %v2980 = vpop.f32.mrf.mxu0
    %2981 = vmatprep.mubr.f32.mxu0 0.0
    %2982 = vmatmul.mubr.f32.gmra.mxu0 %v86
    %v2983 = vpop.f32.mrf.mxu0
    %v2984 = vadd.f32 0.0, %v2983
    %v2985 = vpop.f32.mrf.mxu0
    %2986 = vmatprep.mubr.f32.mxu0 0.0
    %2987 = vmatmul.mubr.f32.gmra.mxu0 %v87
    %v2988 = vpop.f32.mrf.mxu0
    %v2989 = vadd.f32 0.0, %v2988
    %v2990 = vpop.f32.mrf.mxu0
    %2991 = vmatprep.mubr.f32.mxu0 0.0
    %2992 = vmatmul.mubr.f32.gmra.mxu0 %v88
    %v2993 = vpop.f32.mrf.mxu0
    %v2994 = vadd.f32 0.0, %v2993
    %v2995 = vpop.f32.mrf.mxu0
    %2996 = vmatprep.mubr.f32.mxu0 0.0
    %2997 = vmatmul.mubr.f32.gmra.mxu0 %v89
    %v2998 = vpop.f32.mrf.mxu0
    %v2999 = vadd.f32 0.0, %v2998
    %v3000 = vpop.f32.mrf.mxu0
    %3001 = vmatprep.mubr.f32.mxu0 0.0
    %3002 = vmatmul.mubr.f32.gmra.mxu0 %v90
    %v3003 = vpop.f32.mrf.mxu0
    %v3004 = vadd.f32 0.0, %v3003
    %v3005 = vpop.f32.mrf.mxu0
    %3006 = vmatprep.mubr.f32.mxu0 0.0
    %3007 = vmatmul.mubr.f32.gmra.mxu0 %v91
    %v3008 = vpop.f32.mrf.mxu0
    %v3009 = vadd.f32 0.0, %v3008
    %v3010 = vpop.f32.mrf.mxu0
    %3011 = vdwg.mxu0
    %3012 = vmatprep.subr.mxu0 0.0
    %3013 = vmatpush1.msra.mxu0 %v3009
    %3014 = vmatprep.subr.mxu0 0.0
    %3015 = vmatpush1.msra.mxu0 %v3004
    %3016 = vmatprep.subr.mxu0 0.0
    %3017 = vmatpush1.msra.mxu0 %v2999
    %3018 = vmatprep.subr.mxu0 0.0
    %3019 = vmatpush1.msra.mxu0 %v2994
    %3020 = vmatprep.subr.mxu0 0.0
    %3021 = vmatpush1.msra.mxu0 %v2989
    %3022 = vmatprep.subr.mxu0 0.0
    %3023 = vmatpush1.msra.mxu0 %v2984
    %3024 = vmatprep.subr.mxu0 0.0
    %3025 = vmatpush1.msra.mxu0 %v2979
    %3026 = vmatprep.subr.mxu0 0.0
    %3027 = vmatpush1.msra.mxu0 %v2974
    %3028 = vmatprep.subr.mxu0 0.0
    %3029 = vmatpush1.msra.mxu0 %v2969
    %3030 = vmatprep.subr.mxu0 0.0
    %3031 = vmatpush1.msra.mxu0 %v2964
    %3032 = vmatprep.subr.mxu0 0.0
    %3033 = vmatpush1.msra.mxu0 %v2959
    %3034 = vmatprep.subr.mxu0 0.0
    %3035 = vmatpush1.msra.mxu0 %v2954
    %3036 = vmatprep.subr.mxu0 0.0
    %3037 = vmatpush1.msra.mxu0 %v2949
    %3038 = vmatprep.subr.mxu0 0.0
    %3039 = vmatpush1.msra.mxu0 %v2944
    %3040 = vmatprep.subr.mxu0 0.0
    %3041 = vmatpush1.msra.mxu0 %v2939
    %3042 = vmatprep.subr.mxu0 0.0
    %3043 = vmatpush1.msra.mxu0 %v2934
    %3044 = vmatprep.subr.mxu0 0.0
    %3045 = vmatpush2.msra.mxu0 0.0
    %3046 = vmatprep.subr.mxu0 0.0
    %3047 = vmatpush2.msra.mxu0 0.0
    %3048 = vmatprep.subr.mxu0 0.0
    %3049 = vmatpush2.msra.mxu0 0.0
    %3050 = vmatprep.subr.mxu0 0.0
    %3051 = vmatpush2.msra.mxu0 0.0
    %3052 = vmatprep.subr.mxu0 0.0
    %3053 = vmatpush2.msra.mxu0 0.0
    %3054 = vmatprep.subr.mxu0 0.0
    %3055 = vmatpush2.msra.mxu0 0.0
    %3056 = vmatprep.subr.mxu0 0.0
    %3057 = vmatpush2.msra.mxu0 0.0
    %3058 = vmatprep.subr.mxu0 0.0
    %3059 = vmatpush2.msra.mxu0 0.0
    %3060 = vmatprep.subr.mxu0 0.0
    %3061 = vmatpush2.msra.mxu0 0.0
    %3062 = vmatprep.subr.mxu0 0.0
    %3063 = vmatpush2.msra.mxu0 0.0
    %3064 = vmatprep.subr.mxu0 0.0
    %3065 = vmatpush2.msra.mxu0 0.0
    %3066 = vmatprep.subr.mxu0 0.0
    %3067 = vmatpush2.msra.mxu0 0.0
    %3068 = vmatprep.subr.mxu0 0.0
    %3069 = vmatpush2.msra.mxu0 0.0
    %3070 = vmatprep.subr.mxu0 0.0
    %3071 = vmatpush2.msra.mxu0 0.0
    %3072 = vmatprep.subr.mxu0 0.0
    %3073 = vmatpush2.msra.mxu0 0.0
    %3074 = vmatprep.subr.mxu0 0.0
    %3075 = vmatpush2.msra.mxu0 0.0
    %3076 = vmatprep.mubr.f32.mxu0 0.0
    %3077 = vmatmul.mubr.f32.gmra.mxu0 %v92
    %v3078 = vpop.f32.mrf.mxu0
    %v3079 = vadd.f32 0.0, %v3078
    %v3080 = vpop.f32.mrf.mxu0
    %3081 = vmatprep.mubr.f32.mxu0 0.0
    %3082 = vmatmul.mubr.f32.gmra.mxu0 %v93
    %v3083 = vpop.f32.mrf.mxu0
    %v3084 = vadd.f32 0.0, %v3083
    %v3085 = vpop.f32.mrf.mxu0
    %3086 = vmatprep.mubr.f32.mxu0 0.0
    %3087 = vmatmul.mubr.f32.gmra.mxu0 %v94
    %v3088 = vpop.f32.mrf.mxu0
    %v3089 = vadd.f32 0.0, %v3088
    %v3090 = vpop.f32.mrf.mxu0
    %3091 = vmatprep.mubr.f32.mxu0 0.0
    %3092 = vmatmul.mubr.f32.gmra.mxu0 %v95
    %v3093 = vpop.f32.mrf.mxu0
    %v3094 = vadd.f32 0.0, %v3093
    %v3095 = vpop.f32.mrf.mxu0
    %3096 = vmatprep.mubr.f32.mxu0 0.0
    %3097 = vmatmul.mubr.f32.gmra.mxu0 %v96
    %v3098 = vpop.f32.mrf.mxu0
    %v3099 = vadd.f32 0.0, %v3098
    %v3100 = vpop.f32.mrf.mxu0
    %3101 = vmatprep.mubr.f32.mxu0 0.0
    %3102 = vmatmul.mubr.f32.gmra.mxu0 %v97
    %v3103 = vpop.f32.mrf.mxu0
    %v3104 = vadd.f32 0.0, %v3103
    %v3105 = vpop.f32.mrf.mxu0
    %3106 = vmatprep.mubr.f32.mxu0 0.0
    %3107 = vmatmul.mubr.f32.gmra.mxu0 %v98
    %v3108 = vpop.f32.mrf.mxu0
    %v3109 = vadd.f32 0.0, %v3108
    %v3110 = vpop.f32.mrf.mxu0
    %3111 = vmatprep.mubr.f32.mxu0 0.0
    %3112 = vmatmul.mubr.f32.gmra.mxu0 %v99
    %v3113 = vpop.f32.mrf.mxu0
    %v3114 = vadd.f32 0.0, %v3113
    %v3115 = vpop.f32.mrf.mxu0
    %3116 = vmatprep.mubr.f32.mxu0 0.0
    %3117 = vmatmul.mubr.f32.gmra.mxu0 %v100
    %v3118 = vpop.f32.mrf.mxu0
    %v3119 = vadd.f32 0.0, %v3118
    %v3120 = vpop.f32.mrf.mxu0
    %3121 = vmatprep.mubr.f32.mxu0 0.0
    %3122 = vmatmul.mubr.f32.gmra.mxu0 %v101
    %v3123 = vpop.f32.mrf.mxu0
    %v3124 = vadd.f32 0.0, %v3123
    %v3125 = vpop.f32.mrf.mxu0
    %3126 = vmatprep.mubr.f32.mxu0 0.0
    %3127 = vmatmul.mubr.f32.gmra.mxu0 %v102
    %v3128 = vpop.f32.mrf.mxu0
    %v3129 = vadd.f32 0.0, %v3128
    %v3130 = vpop.f32.mrf.mxu0
    %3131 = vmatprep.mubr.f32.mxu0 0.0
    %3132 = vmatmul.mubr.f32.gmra.mxu0 %v103
    %v3133 = vpop.f32.mrf.mxu0
    %v3134 = vadd.f32 0.0, %v3133
    %v3135 = vpop.f32.mrf.mxu0
    %3136 = vmatprep.mubr.f32.mxu0 0.0
    %3137 = vmatmul.mubr.f32.gmra.mxu0 %v104
    %v3138 = vpop.f32.mrf.mxu0
    %v3139 = vadd.f32 0.0, %v3138
    %v3140 = vpop.f32.mrf.mxu0
    %3141 = vmatprep.mubr.f32.mxu0 0.0
    %3142 = vmatmul.mubr.f32.gmra.mxu0 %v105
    %v3143 = vpop.f32.mrf.mxu0
    %v3144 = vadd.f32 0.0, %v3143
    %v3145 = vpop.f32.mrf.mxu0
    %3146 = vmatprep.mubr.f32.mxu0 0.0
    %3147 = vmatmul.mubr.f32.gmra.mxu0 %v106
    %v3148 = vpop.f32.mrf.mxu0
    %v3149 = vadd.f32 0.0, %v3148
    %v3150 = vpop.f32.mrf.mxu0
    %3151 = vmatprep.mubr.f32.mxu0 0.0
    %3152 = vmatmul.mubr.f32.gmra.mxu0 %v107
    %v3153 = vpop.f32.mrf.mxu0
    %v3154 = vadd.f32 0.0, %v3153
    %v3155 = vpop.f32.mrf.mxu0
    %3156 = vdwg.mxu0
    %3157 = vmatprep.subr.mxu0 0.0
    %3158 = vmatpush1.msra.mxu0 %v3154
    %3159 = vmatprep.subr.mxu0 0.0
    %3160 = vmatpush1.msra.mxu0 %v3149
    %3161 = vmatprep.subr.mxu0 0.0
    %3162 = vmatpush1.msra.mxu0 %v3144
    %3163 = vmatprep.subr.mxu0 0.0
    %3164 = vmatpush1.msra.mxu0 %v3139
    %3165 = vmatprep.subr.mxu0 0.0
    %3166 = vmatpush1.msra.mxu0 %v3134
    %3167 = vmatprep.subr.mxu0 0.0
    %3168 = vmatpush1.msra.mxu0 %v3129
    %3169 = vmatprep.subr.mxu0 0.0
    %3170 = vmatpush1.msra.mxu0 %v3124
    %3171 = vmatprep.subr.mxu0 0.0
    %3172 = vmatpush1.msra.mxu0 %v3119
    %3173 = vmatprep.subr.mxu0 0.0
    %3174 = vmatpush1.msra.mxu0 %v3114
    %3175 = vmatprep.subr.mxu0 0.0
    %3176 = vmatpush1.msra.mxu0 %v3109
    %3177 = vmatprep.subr.mxu0 0.0
    %3178 = vmatpush1.msra.mxu0 %v3104
    %3179 = vmatprep.subr.mxu0 0.0
    %3180 = vmatpush1.msra.mxu0 %v3099
    %3181 = vmatprep.subr.mxu0 0.0
    %3182 = vmatpush1.msra.mxu0 %v3094
    %3183 = vmatprep.subr.mxu0 0.0
    %3184 = vmatpush1.msra.mxu0 %v3089
    %3185 = vmatprep.subr.mxu0 0.0
    %3186 = vmatpush1.msra.mxu0 %v3084
    %3187 = vmatprep.subr.mxu0 0.0
    %3188 = vmatpush1.msra.mxu0 %v3079
    %3189 = vmatprep.subr.mxu0 0.0
    %3190 = vmatpush2.msra.mxu0 0.0
    %3191 = vmatprep.subr.mxu0 0.0
    %3192 = vmatpush2.msra.mxu0 0.0
    %3193 = vmatprep.subr.mxu0 0.0
    %3194 = vmatpush2.msra.mxu0 0.0
    %3195 = vmatprep.subr.mxu0 0.0
    %3196 = vmatpush2.msra.mxu0 0.0
    %3197 = vmatprep.subr.mxu0 0.0
    %3198 = vmatpush2.msra.mxu0 0.0
    %3199 = vmatprep.subr.mxu0 0.0
    %3200 = vmatpush2.msra.mxu0 0.0
    %3201 = vmatprep.subr.mxu0 0.0
    %3202 = vmatpush2.msra.mxu0 0.0
    %3203 = vmatprep.subr.mxu0 0.0
    %3204 = vmatpush2.msra.mxu0 0.0
    %3205 = vmatprep.subr.mxu0 0.0
    %3206 = vmatpush2.msra.mxu0 0.0
    %3207 = vmatprep.subr.mxu0 0.0
    %3208 = vmatpush2.msra.mxu0 0.0
    %3209 = vmatprep.subr.mxu0 0.0
    %3210 = vmatpush2.msra.mxu0 0.0
    %3211 = vmatprep.subr.mxu0 0.0
    %3212 = vmatpush2.msra.mxu0 0.0
    %3213 = vmatprep.subr.mxu0 0.0
    %3214 = vmatpush2.msra.mxu0 0.0
    %3215 = vmatprep.subr.mxu0 0.0
    %3216 = vmatpush2.msra.mxu0 0.0
    %3217 = vmatprep.subr.mxu0 0.0
    %3218 = vmatpush2.msra.mxu0 0.0
    %3219 = vmatprep.subr.mxu0 0.0
    %3220 = vmatpush2.msra.mxu0 0.0
    %3221 = vmatprep.mubr.f32.mxu0 0.0
    %3222 = vmatmul.mubr.f32.gmra.mxu0 %v76
    %v3223 = vpop.f32.mrf.mxu0
    %v3224 = vadd.f32 0.0, %v3223
    %v3225 = vpop.f32.mrf.mxu0
    %3226 = vmatprep.mubr.f32.mxu0 0.0
    %3227 = vmatmul.mubr.f32.gmra.mxu0 %v77
    %v3228 = vpop.f32.mrf.mxu0
    %v3229 = vadd.f32 0.0, %v3228
    %v3230 = vpop.f32.mrf.mxu0
    %3231 = vmatprep.mubr.f32.mxu0 0.0
    %3232 = vmatmul.mubr.f32.gmra.mxu0 %v78
    %v3233 = vpop.f32.mrf.mxu0
    %v3234 = vadd.f32 0.0, %v3233
    %v3235 = vpop.f32.mrf.mxu0
    %3236 = vmatprep.mubr.f32.mxu0 0.0
    %3237 = vmatmul.mubr.f32.gmra.mxu0 %v79
    %v3238 = vpop.f32.mrf.mxu0
    %v3239 = vadd.f32 0.0, %v3238
    %v3240 = vpop.f32.mrf.mxu0
    %3241 = vmatprep.mubr.f32.mxu0 0.0
    %3242 = vmatmul.mubr.f32.gmra.mxu0 %v80
    %v3243 = vpop.f32.mrf.mxu0
    %v3244 = vadd.f32 0.0, %v3243
    %v3245 = vpop.f32.mrf.mxu0
    %3246 = vmatprep.mubr.f32.mxu0 0.0
    %3247 = vmatmul.mubr.f32.gmra.mxu0 %v81
    %v3248 = vpop.f32.mrf.mxu0
    %v3249 = vadd.f32 0.0, %v3248
    %v3250 = vpop.f32.mrf.mxu0
    %3251 = vmatprep.mubr.f32.mxu0 0.0
    %3252 = vmatmul.mubr.f32.gmra.mxu0 %v82
    %v3253 = vpop.f32.mrf.mxu0
    %v3254 = vadd.f32 0.0, %v3253
    %v3255 = vpop.f32.mrf.mxu0
    %3256 = vmatprep.mubr.f32.mxu0 0.0
    %3257 = vmatmul.mubr.f32.gmra.mxu0 %v83
    %v3258 = vpop.f32.mrf.mxu0
    %v3259 = vadd.f32 0.0, %v3258
    %v3260 = vpop.f32.mrf.mxu0
    %3261 = vmatprep.mubr.f32.mxu0 0.0
    %3262 = vmatmul.mubr.f32.gmra.mxu0 %v84
    %v3263 = vpop.f32.mrf.mxu0
    %v3264 = vadd.f32 0.0, %v3263
    %v3265 = vpop.f32.mrf.mxu0
    %3266 = vmatprep.mubr.f32.mxu0 0.0
    %3267 = vmatmul.mubr.f32.gmra.mxu0 %v85
    %v3268 = vpop.f32.mrf.mxu0
    %v3269 = vadd.f32 0.0, %v3268
    %v3270 = vpop.f32.mrf.mxu0
    %3271 = vmatprep.mubr.f32.mxu0 0.0
    %3272 = vmatmul.mubr.f32.gmra.mxu0 %v86
    %v3273 = vpop.f32.mrf.mxu0
    %v3274 = vadd.f32 0.0, %v3273
    %v3275 = vpop.f32.mrf.mxu0
    %3276 = vmatprep.mubr.f32.mxu0 0.0
    %3277 = vmatmul.mubr.f32.gmra.mxu0 %v87
    %v3278 = vpop.f32.mrf.mxu0
    %v3279 = vadd.f32 0.0, %v3278
    %v3280 = vpop.f32.mrf.mxu0
    %3281 = vmatprep.mubr.f32.mxu0 0.0
    %3282 = vmatmul.mubr.f32.gmra.mxu0 %v88
    %v3283 = vpop.f32.mrf.mxu0
    %v3284 = vadd.f32 0.0, %v3283
    %v3285 = vpop.f32.mrf.mxu0
    %3286 = vmatprep.mubr.f32.mxu0 0.0
    %3287 = vmatmul.mubr.f32.gmra.mxu0 %v89
    %v3288 = vpop.f32.mrf.mxu0
    %v3289 = vadd.f32 0.0, %v3288
    %v3290 = vpop.f32.mrf.mxu0
    %3291 = vmatprep.mubr.f32.mxu0 0.0
    %3292 = vmatmul.mubr.f32.gmra.mxu0 %v90
    %v3293 = vpop.f32.mrf.mxu0
    %v3294 = vadd.f32 0.0, %v3293
    %v3295 = vpop.f32.mrf.mxu0
    %3296 = vmatprep.mubr.f32.mxu0 0.0
    %3297 = vmatmul.mubr.f32.gmra.mxu0 %v91
    %v3298 = vpop.f32.mrf.mxu0
    %v3299 = vadd.f32 0.0, %v3298
    %v3300 = vpop.f32.mrf.mxu0
    %3301 = vdwg.mxu0
    %3302 = vmatprep.subr.mxu0 0.0
    %3303 = vmatpush1.msra.mxu0 %v3299
    %3304 = vmatprep.subr.mxu0 0.0
    %3305 = vmatpush1.msra.mxu0 %v3294
    %3306 = vmatprep.subr.mxu0 0.0
    %3307 = vmatpush1.msra.mxu0 %v3289
    %3308 = vmatprep.subr.mxu0 0.0
    %3309 = vmatpush1.msra.mxu0 %v3284
    %3310 = vmatprep.subr.mxu0 0.0
    %3311 = vmatpush1.msra.mxu0 %v3279
    %3312 = vmatprep.subr.mxu0 0.0
    %3313 = vmatpush1.msra.mxu0 %v3274
    %3314 = vmatprep.subr.mxu0 0.0
    %3315 = vmatpush1.msra.mxu0 %v3269
    %3316 = vmatprep.subr.mxu0 0.0
    %3317 = vmatpush1.msra.mxu0 %v3264
    %3318 = vmatprep.subr.mxu0 0.0
    %3319 = vmatpush1.msra.mxu0 %v3259
    %3320 = vmatprep.subr.mxu0 0.0
    %3321 = vmatpush1.msra.mxu0 %v3254
    %3322 = vmatprep.subr.mxu0 0.0
    %3323 = vmatpush1.msra.mxu0 %v3249
    %3324 = vmatprep.subr.mxu0 0.0
    %3325 = vmatpush1.msra.mxu0 %v3244
    %3326 = vmatprep.subr.mxu0 0.0
    %3327 = vmatpush1.msra.mxu0 %v3239
    %3328 = vmatprep.subr.mxu0 0.0
    %3329 = vmatpush1.msra.mxu0 %v3234
    %3330 = vmatprep.subr.mxu0 0.0
    %3331 = vmatpush1.msra.mxu0 %v3229
    %3332 = vmatprep.subr.mxu0 0.0
    %3333 = vmatpush1.msra.mxu0 %v3224
    %3334 = vmatprep.subr.mxu0 0.0
    %3335 = vmatpush2.msra.mxu0 0.0
    %3336 = vmatprep.subr.mxu0 0.0
    %3337 = vmatpush2.msra.mxu0 0.0
    %3338 = vmatprep.subr.mxu0 0.0
    %3339 = vmatpush2.msra.mxu0 0.0
    %3340 = vmatprep.subr.mxu0 0.0
    %3341 = vmatpush2.msra.mxu0 0.0
    %3342 = vmatprep.subr.mxu0 0.0
    %3343 = vmatpush2.msra.mxu0 0.0
    %3344 = vmatprep.subr.mxu0 0.0
    %3345 = vmatpush2.msra.mxu0 0.0
    %3346 = vmatprep.subr.mxu0 0.0
    %3347 = vmatpush2.msra.mxu0 0.0
    %3348 = vmatprep.subr.mxu0 0.0
    %3349 = vmatpush2.msra.mxu0 0.0
    %3350 = vmatprep.subr.mxu0 0.0
    %3351 = vmatpush2.msra.mxu0 0.0
    %3352 = vmatprep.subr.mxu0 0.0
    %3353 = vmatpush2.msra.mxu0 0.0
    %3354 = vmatprep.subr.mxu0 0.0
    %3355 = vmatpush2.msra.mxu0 0.0
    %3356 = vmatprep.subr.mxu0 0.0
    %3357 = vmatpush2.msra.mxu0 0.0
    %3358 = vmatprep.subr.mxu0 0.0
    %3359 = vmatpush2.msra.mxu0 0.0
    %3360 = vmatprep.subr.mxu0 0.0
    %3361 = vmatpush2.msra.mxu0 0.0
    %3362 = vmatprep.subr.mxu0 0.0
    %3363 = vmatpush2.msra.mxu0 0.0
    %3364 = vmatprep.subr.mxu0 0.0
    %3365 = vmatpush2.msra.mxu0 0.0
    %3366 = vmatprep.mubr.f32.mxu0 0.0
    %3367 = vmatmul.mubr.f32.gmra.mxu0 %v92
    %v3368 = vpop.f32.mrf.mxu0
    %v3369 = vadd.f32 0.0, %v3368
    %v3370 = vpop.f32.mrf.mxu0
    %3371 = vmatprep.mubr.f32.mxu0 0.0
    %3372 = vmatmul.mubr.f32.gmra.mxu0 %v93
    %v3373 = vpop.f32.mrf.mxu0
    %v3374 = vadd.f32 0.0, %v3373
    %v3375 = vpop.f32.mrf.mxu0
    %3376 = vmatprep.mubr.f32.mxu0 0.0
    %3377 = vmatmul.mubr.f32.gmra.mxu0 %v94
    %v3378 = vpop.f32.mrf.mxu0
    %v3379 = vadd.f32 0.0, %v3378
    %v3380 = vpop.f32.mrf.mxu0
    %3381 = vmatprep.mubr.f32.mxu0 0.0
    %3382 = vmatmul.mubr.f32.gmra.mxu0 %v95
    %v3383 = vpop.f32.mrf.mxu0
    %v3384 = vadd.f32 0.0, %v3383
    %v3385 = vpop.f32.mrf.mxu0
    %3386 = vmatprep.mubr.f32.mxu0 0.0
    %3387 = vmatmul.mubr.f32.gmra.mxu0 %v96
    %v3388 = vpop.f32.mrf.mxu0
    %v3389 = vadd.f32 0.0, %v3388
    %v3390 = vpop.f32.mrf.mxu0
    %3391 = vmatprep.mubr.f32.mxu0 0.0
    %3392 = vmatmul.mubr.f32.gmra.mxu0 %v97
    %v3393 = vpop.f32.mrf.mxu0
    %v3394 = vadd.f32 0.0, %v3393
    %v3395 = vpop.f32.mrf.mxu0
    %3396 = vmatprep.mubr.f32.mxu0 0.0
    %3397 = vmatmul.mubr.f32.gmra.mxu0 %v98
    %v3398 = vpop.f32.mrf.mxu0
    %v3399 = vadd.f32 0.0, %v3398
    %v3400 = vpop.f32.mrf.mxu0
    %3401 = vmatprep.mubr.f32.mxu0 0.0
    %3402 = vmatmul.mubr.f32.gmra.mxu0 %v99
    %v3403 = vpop.f32.mrf.mxu0
    %v3404 = vadd.f32 0.0, %v3403
    %v3405 = vpop.f32.mrf.mxu0
    %3406 = vmatprep.mubr.f32.mxu0 0.0
    %3407 = vmatmul.mubr.f32.gmra.mxu0 %v100
    %v3408 = vpop.f32.mrf.mxu0
    %v3409 = vadd.f32 0.0, %v3408
    %v3410 = vpop.f32.mrf.mxu0
    %3411 = vmatprep.mubr.f32.mxu0 0.0
    %3412 = vmatmul.mubr.f32.gmra.mxu0 %v101
    %v3413 = vpop.f32.mrf.mxu0
    %v3414 = vadd.f32 0.0, %v3413
    %v3415 = vpop.f32.mrf.mxu0
    %3416 = vmatprep.mubr.f32.mxu0 0.0
    %3417 = vmatmul.mubr.f32.gmra.mxu0 %v102
    %v3418 = vpop.f32.mrf.mxu0
    %v3419 = vadd.f32 0.0, %v3418
    %v3420 = vpop.f32.mrf.mxu0
    %3421 = vmatprep.mubr.f32.mxu0 0.0
    %3422 = vmatmul.mubr.f32.gmra.mxu0 %v103
    %v3423 = vpop.f32.mrf.mxu0
    %v3424 = vadd.f32 0.0, %v3423
    %v3425 = vpop.f32.mrf.mxu0
    %3426 = vmatprep.mubr.f32.mxu0 0.0
    %3427 = vmatmul.mubr.f32.gmra.mxu0 %v104
    %v3428 = vpop.f32.mrf.mxu0
    %v3429 = vadd.f32 0.0, %v3428
    %v3430 = vpop.f32.mrf.mxu0
    %3431 = vmatprep.mubr.f32.mxu0 0.0
    %3432 = vmatmul.mubr.f32.gmra.mxu0 %v105
    %v3433 = vpop.f32.mrf.mxu0
    %v3434 = vadd.f32 0.0, %v3433
    %v3435 = vpop.f32.mrf.mxu0
    %3436 = vmatprep.mubr.f32.mxu0 0.0
    %3437 = vmatmul.mubr.f32.gmra.mxu0 %v106
    %v3438 = vpop.f32.mrf.mxu0
    %v3439 = vadd.f32 0.0, %v3438
    %v3440 = vpop.f32.mrf.mxu0
    %3441 = vmatprep.mubr.f32.mxu0 0.0
    %3442 = vmatmul.mubr.f32.gmra.mxu0 %v107
    %v3443 = vpop.f32.mrf.mxu0
    %v3444 = vadd.f32 0.0, %v3443
    %v3445 = vpop.f32.mrf.mxu0
    %3446 = vdwg.mxu0
    %3447 = vmatprep.subr.mxu0 0.0
    %3448 = vmatpush1.msra.mxu0 %v3444
    %3449 = vmatprep.subr.mxu0 0.0
    %3450 = vmatpush1.msra.mxu0 %v3439
    %3451 = vmatprep.subr.mxu0 0.0
    %3452 = vmatpush1.msra.mxu0 %v3434
    %3453 = vmatprep.subr.mxu0 0.0
    %3454 = vmatpush1.msra.mxu0 %v3429
    %3455 = vmatprep.subr.mxu0 0.0
    %3456 = vmatpush1.msra.mxu0 %v3424
    %3457 = vmatprep.subr.mxu0 0.0
    %3458 = vmatpush1.msra.mxu0 %v3419
    %3459 = vmatprep.subr.mxu0 0.0
    %3460 = vmatpush1.msra.mxu0 %v3414
    %3461 = vmatprep.subr.mxu0 0.0
    %3462 = vmatpush1.msra.mxu0 %v3409
    %3463 = vmatprep.subr.mxu0 0.0
    %3464 = vmatpush1.msra.mxu0 %v3404
    %3465 = vmatprep.subr.mxu0 0.0
    %3466 = vmatpush1.msra.mxu0 %v3399
    %3467 = vmatprep.subr.mxu0 0.0
    %3468 = vmatpush1.msra.mxu0 %v3394
    %3469 = vmatprep.subr.mxu0 0.0
    %3470 = vmatpush1.msra.mxu0 %v3389
    %3471 = vmatprep.subr.mxu0 0.0
    %3472 = vmatpush1.msra.mxu0 %v3384
    %3473 = vmatprep.subr.mxu0 0.0
    %3474 = vmatpush1.msra.mxu0 %v3379
    %3475 = vmatprep.subr.mxu0 0.0
    %3476 = vmatpush1.msra.mxu0 %v3374
    %3477 = vmatprep.subr.mxu0 0.0
    %3478 = vmatpush1.msra.mxu0 %v3369
    %3479 = vmatprep.subr.mxu0 0.0
    %3480 = vmatpush2.msra.mxu0 0.0
    %3481 = vmatprep.subr.mxu0 0.0
    %3482 = vmatpush2.msra.mxu0 0.0
    %3483 = vmatprep.subr.mxu0 0.0
    %3484 = vmatpush2.msra.mxu0 0.0
    %3485 = vmatprep.subr.mxu0 0.0
    %3486 = vmatpush2.msra.mxu0 0.0
    %3487 = vmatprep.subr.mxu0 0.0
    %3488 = vmatpush2.msra.mxu0 0.0
    %3489 = vmatprep.subr.mxu0 0.0
    %3490 = vmatpush2.msra.mxu0 0.0
    %3491 = vmatprep.subr.mxu0 0.0
    %3492 = vmatpush2.msra.mxu0 0.0
    %3493 = vmatprep.subr.mxu0 0.0
    %3494 = vmatpush2.msra.mxu0 0.0
    %3495 = vmatprep.subr.mxu0 0.0
    %3496 = vmatpush2.msra.mxu0 0.0
    %3497 = vmatprep.subr.mxu0 0.0
    %3498 = vmatpush2.msra.mxu0 0.0
    %3499 = vmatprep.subr.mxu0 0.0
    %3500 = vmatpush2.msra.mxu0 0.0
    %3501 = vmatprep.subr.mxu0 0.0
    %3502 = vmatpush2.msra.mxu0 0.0
    %3503 = vmatprep.subr.mxu0 0.0
    %3504 = vmatpush2.msra.mxu0 0.0
    %3505 = vmatprep.subr.mxu0 0.0
    %3506 = vmatpush2.msra.mxu0 0.0
    %3507 = vmatprep.subr.mxu0 0.0
    %3508 = vmatpush2.msra.mxu0 0.0
    %3509 = vmatprep.subr.mxu0 0.0
    %3510 = vmatpush2.msra.mxu0 0.0
    %3511 = vmatprep.mubr.f32.mxu0 0.0
    %3512 = vmatmul.mubr.f32.gmra.mxu0 %v76
    %v3513 = vpop.f32.mrf.mxu0
    %v3514 = vadd.f32 0.0, %v3513
    %v3515 = vpop.f32.mrf.mxu0
    %3516 = vmatprep.mubr.f32.mxu0 0.0
    %3517 = vmatmul.mubr.f32.gmra.mxu0 %v77
    %v3518 = vpop.f32.mrf.mxu0
    %v3519 = vadd.f32 0.0, %v3518
    %v3520 = vpop.f32.mrf.mxu0
    %3521 = vmatprep.mubr.f32.mxu0 0.0
    %3522 = vmatmul.mubr.f32.gmra.mxu0 %v78
    %v3523 = vpop.f32.mrf.mxu0
    %v3524 = vadd.f32 0.0, %v3523
    %v3525 = vpop.f32.mrf.mxu0
    %3526 = vmatprep.mubr.f32.mxu0 0.0
    %3527 = vmatmul.mubr.f32.gmra.mxu0 %v79
    %v3528 = vpop.f32.mrf.mxu0
    %v3529 = vadd.f32 0.0, %v3528
    %v3530 = vpop.f32.mrf.mxu0
    %3531 = vmatprep.mubr.f32.mxu0 0.0
    %3532 = vmatmul.mubr.f32.gmra.mxu0 %v80
    %v3533 = vpop.f32.mrf.mxu0
    %v3534 = vadd.f32 0.0, %v3533
    %v3535 = vpop.f32.mrf.mxu0
    %3536 = vmatprep.mubr.f32.mxu0 0.0
    %3537 = vmatmul.mubr.f32.gmra.mxu0 %v81
    %v3538 = vpop.f32.mrf.mxu0
    %v3539 = vadd.f32 0.0, %v3538
    %v3540 = vpop.f32.mrf.mxu0
    %3541 = vmatprep.mubr.f32.mxu0 0.0
    %3542 = vmatmul.mubr.f32.gmra.mxu0 %v82
    %v3543 = vpop.f32.mrf.mxu0
    %v3544 = vadd.f32 0.0, %v3543
    %v3545 = vpop.f32.mrf.mxu0
    %3546 = vmatprep.mubr.f32.mxu0 0.0
    %3547 = vmatmul.mubr.f32.gmra.mxu0 %v83
    %v3548 = vpop.f32.mrf.mxu0
    %v3549 = vadd.f32 0.0, %v3548
    %v3550 = vpop.f32.mrf.mxu0
    %3551 = vmatprep.mubr.f32.mxu0 0.0
    %3552 = vmatmul.mubr.f32.gmra.mxu0 %v84
    %v3553 = vpop.f32.mrf.mxu0
    %v3554 = vadd.f32 0.0, %v3553
    %v3555 = vpop.f32.mrf.mxu0
    %3556 = vmatprep.mubr.f32.mxu0 0.0
    %3557 = vmatmul.mubr.f32.gmra.mxu0 %v85
    %v3558 = vpop.f32.mrf.mxu0
    %v3559 = vadd.f32 0.0, %v3558
    %v3560 = vpop.f32.mrf.mxu0
    %3561 = vmatprep.mubr.f32.mxu0 0.0
    %3562 = vmatmul.mubr.f32.gmra.mxu0 %v86
    %v3563 = vpop.f32.mrf.mxu0
    %v3564 = vadd.f32 0.0, %v3563
    %v3565 = vpop.f32.mrf.mxu0
    %3566 = vmatprep.mubr.f32.mxu0 0.0
    %3567 = vmatmul.mubr.f32.gmra.mxu0 %v87
    %v3568 = vpop.f32.mrf.mxu0
    %v3569 = vadd.f32 0.0, %v3568
    %v3570 = vpop.f32.mrf.mxu0
    %3571 = vmatprep.mubr.f32.mxu0 0.0
    %3572 = vmatmul.mubr.f32.gmra.mxu0 %v88
    %v3573 = vpop.f32.mrf.mxu0
    %v3574 = vadd.f32 0.0, %v3573
    %v3575 = vpop.f32.mrf.mxu0
    %3576 = vmatprep.mubr.f32.mxu0 0.0
    %3577 = vmatmul.mubr.f32.gmra.mxu0 %v89
    %v3578 = vpop.f32.mrf.mxu0
    %v3579 = vadd.f32 0.0, %v3578
    %v3580 = vpop.f32.mrf.mxu0
    %3581 = vmatprep.mubr.f32.mxu0 0.0
    %3582 = vmatmul.mubr.f32.gmra.mxu0 %v90
    %v3583 = vpop.f32.mrf.mxu0
    %v3584 = vadd.f32 0.0, %v3583
    %v3585 = vpop.f32.mrf.mxu0
    %3586 = vmatprep.mubr.f32.mxu0 0.0
    %3587 = vmatmul.mubr.f32.gmra.mxu0 %v91
    %v3588 = vpop.f32.mrf.mxu0
    %v3589 = vadd.f32 0.0, %v3588
    %v3590 = vpop.f32.mrf.mxu0
    %3591 = vdwg.mxu0
    %3592 = vmatprep.subr.mxu0 0.0
    %3593 = vmatpush1.msra.mxu0 %v3589
    %3594 = vmatprep.subr.mxu0 0.0
    %3595 = vmatpush1.msra.mxu0 %v3584
    %3596 = vmatprep.subr.mxu0 0.0
    %3597 = vmatpush1.msra.mxu0 %v3579
    %3598 = vmatprep.subr.mxu0 0.0
    %3599 = vmatpush1.msra.mxu0 %v3574
    %3600 = vmatprep.subr.mxu0 0.0
    %3601 = vmatpush1.msra.mxu0 %v3569
    %3602 = vmatprep.subr.mxu0 0.0
    %3603 = vmatpush1.msra.mxu0 %v3564
    %3604 = vmatprep.subr.mxu0 0.0
    %3605 = vmatpush1.msra.mxu0 %v3559
    %3606 = vmatprep.subr.mxu0 0.0
    %3607 = vmatpush1.msra.mxu0 %v3554
    %3608 = vmatprep.subr.mxu0 0.0
    %3609 = vmatpush1.msra.mxu0 %v3549
    %3610 = vmatprep.subr.mxu0 0.0
    %3611 = vmatpush1.msra.mxu0 %v3544
    %3612 = vmatprep.subr.mxu0 0.0
    %3613 = vmatpush1.msra.mxu0 %v3539
    %3614 = vmatprep.subr.mxu0 0.0
    %3615 = vmatpush1.msra.mxu0 %v3534
    %3616 = vmatprep.subr.mxu0 0.0
    %3617 = vmatpush1.msra.mxu0 %v3529
    %3618 = vmatprep.subr.mxu0 0.0
    %3619 = vmatpush1.msra.mxu0 %v3524
    %3620 = vmatprep.subr.mxu0 0.0
    %3621 = vmatpush1.msra.mxu0 %v3519
    %3622 = vmatprep.subr.mxu0 0.0
    %3623 = vmatpush1.msra.mxu0 %v3514
    %3624 = vmatprep.subr.mxu0 0.0
    %3625 = vmatpush2.msra.mxu0 0.0
    %3626 = vmatprep.subr.mxu0 0.0
    %3627 = vmatpush2.msra.mxu0 0.0
    %3628 = vmatprep.subr.mxu0 0.0
    %3629 = vmatpush2.msra.mxu0 0.0
    %3630 = vmatprep.subr.mxu0 0.0
    %3631 = vmatpush2.msra.mxu0 0.0
    %3632 = vmatprep.subr.mxu0 0.0
    %3633 = vmatpush2.msra.mxu0 0.0
    %3634 = vmatprep.subr.mxu0 0.0
    %3635 = vmatpush2.msra.mxu0 0.0
    %3636 = vmatprep.subr.mxu0 0.0
    %3637 = vmatpush2.msra.mxu0 0.0
    %3638 = vmatprep.subr.mxu0 0.0
    %3639 = vmatpush2.msra.mxu0 0.0
    %3640 = vmatprep.subr.mxu0 0.0
    %3641 = vmatpush2.msra.mxu0 0.0
    %3642 = vmatprep.subr.mxu0 0.0
    %3643 = vmatpush2.msra.mxu0 0.0
    %3644 = vmatprep.subr.mxu0 0.0
    %3645 = vmatpush2.msra.mxu0 0.0
    %3646 = vmatprep.subr.mxu0 0.0
    %3647 = vmatpush2.msra.mxu0 0.0
    %3648 = vmatprep.subr.mxu0 0.0
    %3649 = vmatpush2.msra.mxu0 0.0
    %3650 = vmatprep.subr.mxu0 0.0
    %3651 = vmatpush2.msra.mxu0 0.0
    %3652 = vmatprep.subr.mxu0 0.0
    %3653 = vmatpush2.msra.mxu0 0.0
    %3654 = vmatprep.subr.mxu0 0.0
    %3655 = vmatpush2.msra.mxu0 0.0
    %3656 = vmatprep.mubr.f32.mxu0 0.0
    %3657 = vmatmul.mubr.f32.gmra.mxu0 %v92
    %v3658 = vpop.f32.mrf.mxu0
    %v3659 = vadd.f32 0.0, %v3658
    %v3660 = vpop.f32.mrf.mxu0
    %3661 = vmatprep.mubr.f32.mxu0 0.0
    %3662 = vmatmul.mubr.f32.gmra.mxu0 %v93
    %v3663 = vpop.f32.mrf.mxu0
    %v3664 = vadd.f32 0.0, %v3663
    %v3665 = vpop.f32.mrf.mxu0
    %3666 = vmatprep.mubr.f32.mxu0 0.0
    %3667 = vmatmul.mubr.f32.gmra.mxu0 %v94
    %v3668 = vpop.f32.mrf.mxu0
    %v3669 = vadd.f32 0.0, %v3668
    %v3670 = vpop.f32.mrf.mxu0
    %3671 = vmatprep.mubr.f32.mxu0 0.0
    %3672 = vmatmul.mubr.f32.gmra.mxu0 %v95
    %v3673 = vpop.f32.mrf.mxu0
    %v3674 = vadd.f32 0.0, %v3673
    %v3675 = vpop.f32.mrf.mxu0
    %3676 = vmatprep.mubr.f32.mxu0 0.0
    %3677 = vmatmul.mubr.f32.gmra.mxu0 %v96
    %v3678 = vpop.f32.mrf.mxu0
    %v3679 = vadd.f32 0.0, %v3678
    %v3680 = vpop.f32.mrf.mxu0
    %3681 = vmatprep.mubr.f32.mxu0 0.0
    %3682 = vmatmul.mubr.f32.gmra.mxu0 %v97
    %v3683 = vpop.f32.mrf.mxu0
    %v3684 = vadd.f32 0.0, %v3683
    %v3685 = vpop.f32.mrf.mxu0
    %3686 = vmatprep.mubr.f32.mxu0 0.0
    %3687 = vmatmul.mubr.f32.gmra.mxu0 %v98
    %v3688 = vpop.f32.mrf.mxu0
    %v3689 = vadd.f32 0.0, %v3688
    %v3690 = vpop.f32.mrf.mxu0
    %3691 = vmatprep.mubr.f32.mxu0 0.0
    %3692 = vmatmul.mubr.f32.gmra.mxu0 %v99
    %v3693 = vpop.f32.mrf.mxu0
    %v3694 = vadd.f32 0.0, %v3693
    %v3695 = vpop.f32.mrf.mxu0
    %3696 = vmatprep.mubr.f32.mxu0 0.0
    %3697 = vmatmul.mubr.f32.gmra.mxu0 %v100
    %v3698 = vpop.f32.mrf.mxu0
    %v3699 = vadd.f32 0.0, %v3698
    %v3700 = vpop.f32.mrf.mxu0
    %3701 = vmatprep.mubr.f32.mxu0 0.0
    %3702 = vmatmul.mubr.f32.gmra.mxu0 %v101
    %v3703 = vpop.f32.mrf.mxu0
    %v3704 = vadd.f32 0.0, %v3703
    %v3705 = vpop.f32.mrf.mxu0
    %3706 = vmatprep.mubr.f32.mxu0 0.0
    %3707 = vmatmul.mubr.f32.gmra.mxu0 %v102
    %v3708 = vpop.f32.mrf.mxu0
    %v3709 = vadd.f32 0.0, %v3708
    %v3710 = vpop.f32.mrf.mxu0
    %3711 = vmatprep.mubr.f32.mxu0 0.0
    %3712 = vmatmul.mubr.f32.gmra.mxu0 %v103
    %v3713 = vpop.f32.mrf.mxu0
    %v3714 = vadd.f32 0.0, %v3713
    %v3715 = vpop.f32.mrf.mxu0
    %3716 = vmatprep.mubr.f32.mxu0 0.0
    %3717 = vmatmul.mubr.f32.gmra.mxu0 %v104
    %v3718 = vpop.f32.mrf.mxu0
    %v3719 = vadd.f32 0.0, %v3718
    %v3720 = vpop.f32.mrf.mxu0
    %3721 = vmatprep.mubr.f32.mxu0 0.0
    %3722 = vmatmul.mubr.f32.gmra.mxu0 %v105
    %v3723 = vpop.f32.mrf.mxu0
    %v3724 = vadd.f32 0.0, %v3723
    %v3725 = vpop.f32.mrf.mxu0
    %3726 = vmatprep.mubr.f32.mxu0 0.0
    %3727 = vmatmul.mubr.f32.gmra.mxu0 %v106
    %v3728 = vpop.f32.mrf.mxu0
    %v3729 = vadd.f32 0.0, %v3728
    %v3730 = vpop.f32.mrf.mxu0
    %3731 = vmatprep.mubr.f32.mxu0 0.0
    %3732 = vmatmul.mubr.f32.gmra.mxu0 %v107
    %v3733 = vpop.f32.mrf.mxu0
    %v3734 = vadd.f32 0.0, %v3733
    %v3735 = vpop.f32.mrf.mxu0
    %3736 = vdwg.mxu0
    %3737 = vmatprep.subr.mxu0 0.0
    %3738 = vmatpush1.msra.mxu0 %v3734
    %3739 = vmatprep.subr.mxu0 0.0
    %3740 = vmatpush1.msra.mxu0 %v3729
    %3741 = vmatprep.subr.mxu0 0.0
    %3742 = vmatpush1.msra.mxu0 %v3724
    %3743 = vmatprep.subr.mxu0 0.0
    %3744 = vmatpush1.msra.mxu0 %v3719
    %3745 = vmatprep.subr.mxu0 0.0
    %3746 = vmatpush1.msra.mxu0 %v3714
    %3747 = vmatprep.subr.mxu0 0.0
    %3748 = vmatpush1.msra.mxu0 %v3709
    %3749 = vmatprep.subr.mxu0 0.0
    %3750 = vmatpush1.msra.mxu0 %v3704
    %3751 = vmatprep.subr.mxu0 0.0
    %3752 = vmatpush1.msra.mxu0 %v3699
    %3753 = vmatprep.subr.mxu0 0.0
    %3754 = vmatpush1.msra.mxu0 %v3694
    %3755 = vmatprep.subr.mxu0 0.0
    %3756 = vmatpush1.msra.mxu0 %v3689
    %3757 = vmatprep.subr.mxu0 0.0
    %3758 = vmatpush1.msra.mxu0 %v3684
    %3759 = vmatprep.subr.mxu0 0.0
    %3760 = vmatpush1.msra.mxu0 %v3679
    %3761 = vmatprep.subr.mxu0 0.0
    %3762 = vmatpush1.msra.mxu0 %v3674
    %3763 = vmatprep.subr.mxu0 0.0
    %3764 = vmatpush1.msra.mxu0 %v3669
    %3765 = vmatprep.subr.mxu0 0.0
    %3766 = vmatpush1.msra.mxu0 %v3664
    %3767 = vmatprep.subr.mxu0 0.0
    %3768 = vmatpush1.msra.mxu0 %v3659
    %3769 = vmatprep.subr.mxu0 0.0
    %3770 = vmatpush2.msra.mxu0 0.0
    %3771 = vmatprep.subr.mxu0 0.0
    %3772 = vmatpush2.msra.mxu0 0.0
    %3773 = vmatprep.subr.mxu0 0.0
    %3774 = vmatpush2.msra.mxu0 0.0
    %3775 = vmatprep.subr.mxu0 0.0
    %3776 = vmatpush2.msra.mxu0 0.0
    %3777 = vmatprep.subr.mxu0 0.0
    %3778 = vmatpush2.msra.mxu0 0.0
    %3779 = vmatprep.subr.mxu0 0.0
    %3780 = vmatpush2.msra.mxu0 0.0
    %3781 = vmatprep.subr.mxu0 0.0
    %3782 = vmatpush2.msra.mxu0 0.0
    %3783 = vmatprep.subr.mxu0 0.0
    %3784 = vmatpush2.msra.mxu0 0.0
    %3785 = vmatprep.subr.mxu0 0.0
    %3786 = vmatpush2.msra.mxu0 0.0
    %3787 = vmatprep.subr.mxu0 0.0
    %3788 = vmatpush2.msra.mxu0 0.0
    %3789 = vmatprep.subr.mxu0 0.0
    %3790 = vmatpush2.msra.mxu0 0.0
    %3791 = vmatprep.subr.mxu0 0.0
    %3792 = vmatpush2.msra.mxu0 0.0
    %3793 = vmatprep.subr.mxu0 0.0
    %3794 = vmatpush2.msra.mxu0 0.0
    %3795 = vmatprep.subr.mxu0 0.0
    %3796 = vmatpush2.msra.mxu0 0.0
    %3797 = vmatprep.subr.mxu0 0.0
    %3798 = vmatpush2.msra.mxu0 0.0
    %3799 = vmatprep.subr.mxu0 0.0
    %3800 = vmatpush2.msra.mxu0 0.0
    %3801 = vmatprep.mubr.f32.mxu0 0.0
    %3802 = vmatmul.mubr.f32.gmra.mxu0 %v76
    %v3803 = vpop.f32.mrf.mxu0
    %v3804 = vadd.f32 0.0, %v3803
    %v3805 = vpop.f32.mrf.mxu0
    %3806 = vmatprep.mubr.f32.mxu0 0.0
    %3807 = vmatmul.mubr.f32.gmra.mxu0 %v77
    %v3808 = vpop.f32.mrf.mxu0
    %v3809 = vadd.f32 0.0, %v3808
    %v3810 = vpop.f32.mrf.mxu0
    %3811 = vmatprep.mubr.f32.mxu0 0.0
    %3812 = vmatmul.mubr.f32.gmra.mxu0 %v78
    %v3813 = vpop.f32.mrf.mxu0
    %v3814 = vadd.f32 0.0, %v3813
    %v3815 = vpop.f32.mrf.mxu0
    %3816 = vmatprep.mubr.f32.mxu0 0.0
    %3817 = vmatmul.mubr.f32.gmra.mxu0 %v79
    %v3818 = vpop.f32.mrf.mxu0
    %v3819 = vadd.f32 0.0, %v3818
    %v3820 = vpop.f32.mrf.mxu0
    %3821 = vmatprep.mubr.f32.mxu0 0.0
    %3822 = vmatmul.mubr.f32.gmra.mxu0 %v80
    %v3823 = vpop.f32.mrf.mxu0
    %v3824 = vadd.f32 0.0, %v3823
    %v3825 = vpop.f32.mrf.mxu0
    %3826 = vmatprep.mubr.f32.mxu0 0.0
    %3827 = vmatmul.mubr.f32.gmra.mxu0 %v81
    %v3828 = vpop.f32.mrf.mxu0
    %v3829 = vadd.f32 0.0, %v3828
    %v3830 = vpop.f32.mrf.mxu0
    %3831 = vmatprep.mubr.f32.mxu0 0.0
    %3832 = vmatmul.mubr.f32.gmra.mxu0 %v82
    %v3833 = vpop.f32.mrf.mxu0
    %v3834 = vadd.f32 0.0, %v3833
    %v3835 = vpop.f32.mrf.mxu0
    %3836 = vmatprep.mubr.f32.mxu0 0.0
    %3837 = vmatmul.mubr.f32.gmra.mxu0 %v83
    %v3838 = vpop.f32.mrf.mxu0
    %v3839 = vadd.f32 0.0, %v3838
    %v3840 = vpop.f32.mrf.mxu0
    %3841 = vmatprep.mubr.f32.mxu0 0.0
    %3842 = vmatmul.mubr.f32.gmra.mxu0 %v84
    %v3843 = vpop.f32.mrf.mxu0
    %v3844 = vadd.f32 0.0, %v3843
    %v3845 = vpop.f32.mrf.mxu0
    %3846 = vmatprep.mubr.f32.mxu0 0.0
    %3847 = vmatmul.mubr.f32.gmra.mxu0 %v85
    %v3848 = vpop.f32.mrf.mxu0
    %v3849 = vadd.f32 0.0, %v3848
    %v3850 = vpop.f32.mrf.mxu0
    %3851 = vmatprep.mubr.f32.mxu0 0.0
    %3852 = vmatmul.mubr.f32.gmra.mxu0 %v86
    %v3853 = vpop.f32.mrf.mxu0
    %v3854 = vadd.f32 0.0, %v3853
    %v3855 = vpop.f32.mrf.mxu0
    %3856 = vmatprep.mubr.f32.mxu0 0.0
    %3857 = vmatmul.mubr.f32.gmra.mxu0 %v87
    %v3858 = vpop.f32.mrf.mxu0
    %v3859 = vadd.f32 0.0, %v3858
    %v3860 = vpop.f32.mrf.mxu0
    %3861 = vmatprep.mubr.f32.mxu0 0.0
    %3862 = vmatmul.mubr.f32.gmra.mxu0 %v88
    %v3863 = vpop.f32.mrf.mxu0
    %v3864 = vadd.f32 0.0, %v3863
    %v3865 = vpop.f32.mrf.mxu0
    %3866 = vmatprep.mubr.f32.mxu0 0.0
    %3867 = vmatmul.mubr.f32.gmra.mxu0 %v89
    %v3868 = vpop.f32.mrf.mxu0
    %v3869 = vadd.f32 0.0, %v3868
    %v3870 = vpop.f32.mrf.mxu0
    %3871 = vmatprep.mubr.f32.mxu0 0.0
    %3872 = vmatmul.mubr.f32.gmra.mxu0 %v90
    %v3873 = vpop.f32.mrf.mxu0
    %v3874 = vadd.f32 0.0, %v3873
    %v3875 = vpop.f32.mrf.mxu0
    %3876 = vmatprep.mubr.f32.mxu0 0.0
    %3877 = vmatmul.mubr.f32.gmra.mxu0 %v91
    %v3878 = vpop.f32.mrf.mxu0
    %v3879 = vadd.f32 0.0, %v3878
    %v3880 = vpop.f32.mrf.mxu0
    %3881 = vdwg.mxu0
    %3882 = vmatprep.subr.mxu0 0.0
    %3883 = vmatpush1.msra.mxu0 %v3879
    %3884 = vmatprep.subr.mxu0 0.0
    %3885 = vmatpush1.msra.mxu0 %v3874
    %3886 = vmatprep.subr.mxu0 0.0
    %3887 = vmatpush1.msra.mxu0 %v3869
    %3888 = vmatprep.subr.mxu0 0.0
    %3889 = vmatpush1.msra.mxu0 %v3864
    %3890 = vmatprep.subr.mxu0 0.0
    %3891 = vmatpush1.msra.mxu0 %v3859
    %3892 = vmatprep.subr.mxu0 0.0
    %3893 = vmatpush1.msra.mxu0 %v3854
    %3894 = vmatprep.subr.mxu0 0.0
    %3895 = vmatpush1.msra.mxu0 %v3849
    %3896 = vmatprep.subr.mxu0 0.0
    %3897 = vmatpush1.msra.mxu0 %v3844
    %3898 = vmatprep.subr.mxu0 0.0
    %3899 = vmatpush1.msra.mxu0 %v3839
    %3900 = vmatprep.subr.mxu0 0.0
    %3901 = vmatpush1.msra.mxu0 %v3834
    %3902 = vmatprep.subr.mxu0 0.0
    %3903 = vmatpush1.msra.mxu0 %v3829
    %3904 = vmatprep.subr.mxu0 0.0
    %3905 = vmatpush1.msra.mxu0 %v3824
    %3906 = vmatprep.subr.mxu0 0.0
    %3907 = vmatpush1.msra.mxu0 %v3819
    %3908 = vmatprep.subr.mxu0 0.0
    %3909 = vmatpush1.msra.mxu0 %v3814
    %3910 = vmatprep.subr.mxu0 0.0
    %3911 = vmatpush1.msra.mxu0 %v3809
    %3912 = vmatprep.subr.mxu0 0.0
    %3913 = vmatpush1.msra.mxu0 %v3804
    %3914 = vmatprep.subr.mxu0 0.0
    %3915 = vmatpush2.msra.mxu0 0.0
    %3916 = vmatprep.subr.mxu0 0.0
    %3917 = vmatpush2.msra.mxu0 0.0
    %3918 = vmatprep.subr.mxu0 0.0
    %3919 = vmatpush2.msra.mxu0 0.0
    %3920 = vmatprep.subr.mxu0 0.0
    %3921 = vmatpush2.msra.mxu0 0.0
    %3922 = vmatprep.subr.mxu0 0.0
    %3923 = vmatpush2.msra.mxu0 0.0
    %3924 = vmatprep.subr.mxu0 0.0
    %3925 = vmatpush2.msra.mxu0 0.0
    %3926 = vmatprep.subr.mxu0 0.0
    %3927 = vmatpush2.msra.mxu0 0.0
    %3928 = vmatprep.subr.mxu0 0.0
    %3929 = vmatpush2.msra.mxu0 0.0
    %3930 = vmatprep.subr.mxu0 0.0
    %3931 = vmatpush2.msra.mxu0 0.0
    %3932 = vmatprep.subr.mxu0 0.0
    %3933 = vmatpush2.msra.mxu0 0.0
    %3934 = vmatprep.subr.mxu0 0.0
    %3935 = vmatpush2.msra.mxu0 0.0
    %3936 = vmatprep.subr.mxu0 0.0
    %3937 = vmatpush2.msra.mxu0 0.0
    %3938 = vmatprep.subr.mxu0 0.0
    %3939 = vmatpush2.msra.mxu0 0.0
    %3940 = vmatprep.subr.mxu0 0.0
    %3941 = vmatpush2.msra.mxu0 0.0
    %3942 = vmatprep.subr.mxu0 0.0
    %3943 = vmatpush2.msra.mxu0 0.0
    %3944 = vmatprep.subr.mxu0 0.0
    %3945 = vmatpush2.msra.mxu0 0.0
    %3946 = vmatprep.mubr.f32.mxu0 0.0
    %3947 = vmatmul.mubr.f32.gmra.mxu0 %v92
    %v3948 = vpop.f32.mrf.mxu0
    %v3949 = vadd.f32 0.0, %v3948
    %v3950 = vpop.f32.mrf.mxu0
    %3951 = vmatprep.mubr.f32.mxu0 0.0
    %3952 = vmatmul.mubr.f32.gmra.mxu0 %v93
    %v3953 = vpop.f32.mrf.mxu0
    %v3954 = vadd.f32 0.0, %v3953
    %v3955 = vpop.f32.mrf.mxu0
    %3956 = vmatprep.mubr.f32.mxu0 0.0
    %3957 = vmatmul.mubr.f32.gmra.mxu0 %v94
    %v3958 = vpop.f32.mrf.mxu0
    %v3959 = vadd.f32 0.0, %v3958
    %v3960 = vpop.f32.mrf.mxu0
    %3961 = vmatprep.mubr.f32.mxu0 0.0
    %3962 = vmatmul.mubr.f32.gmra.mxu0 %v95
    %v3963 = vpop.f32.mrf.mxu0
    %v3964 = vadd.f32 0.0, %v3963
    %v3965 = vpop.f32.mrf.mxu0
    %3966 = vmatprep.mubr.f32.mxu0 0.0
    %3967 = vmatmul.mubr.f32.gmra.mxu0 %v96
    %v3968 = vpop.f32.mrf.mxu0
    %v3969 = vadd.f32 0.0, %v3968
    %v3970 = vpop.f32.mrf.mxu0
    %3971 = vmatprep.mubr.f32.mxu0 0.0
    %3972 = vmatmul.mubr.f32.gmra.mxu0 %v97
    %v3973 = vpop.f32.mrf.mxu0
    %v3974 = vadd.f32 0.0, %v3973
    %v3975 = vpop.f32.mrf.mxu0
    %3976 = vmatprep.mubr.f32.mxu0 0.0
    %3977 = vmatmul.mubr.f32.gmra.mxu0 %v98
    %v3978 = vpop.f32.mrf.mxu0
    %v3979 = vadd.f32 0.0, %v3978
    %v3980 = vpop.f32.mrf.mxu0
    %3981 = vmatprep.mubr.f32.mxu0 0.0
    %3982 = vmatmul.mubr.f32.gmra.mxu0 %v99
    %v3983 = vpop.f32.mrf.mxu0
    %v3984 = vadd.f32 0.0, %v3983
    %v3985 = vpop.f32.mrf.mxu0
    %3986 = vmatprep.mubr.f32.mxu0 0.0
    %3987 = vmatmul.mubr.f32.gmra.mxu0 %v100
    %v3988 = vpop.f32.mrf.mxu0
    %v3989 = vadd.f32 0.0, %v3988
    %v3990 = vpop.f32.mrf.mxu0
    %3991 = vmatprep.mubr.f32.mxu0 0.0
    %3992 = vmatmul.mubr.f32.gmra.mxu0 %v101
    %v3993 = vpop.f32.mrf.mxu0
    %v3994 = vadd.f32 0.0, %v3993
    %v3995 = vpop.f32.mrf.mxu0
    %3996 = vmatprep.mubr.f32.mxu0 0.0
    %3997 = vmatmul.mubr.f32.gmra.mxu0 %v102
    %v3998 = vpop.f32.mrf.mxu0
    %v3999 = vadd.f32 0.0, %v3998
    %v4000 = vpop.f32.mrf.mxu0
    %4001 = vmatprep.mubr.f32.mxu0 0.0
    %4002 = vmatmul.mubr.f32.gmra.mxu0 %v103
    %v4003 = vpop.f32.mrf.mxu0
    %v4004 = vadd.f32 0.0, %v4003
    %v4005 = vpop.f32.mrf.mxu0
    %4006 = vmatprep.mubr.f32.mxu0 0.0
    %4007 = vmatmul.mubr.f32.gmra.mxu0 %v104
    %v4008 = vpop.f32.mrf.mxu0
    %v4009 = vadd.f32 0.0, %v4008
    %v4010 = vpop.f32.mrf.mxu0
    %4011 = vmatprep.mubr.f32.mxu0 0.0
    %4012 = vmatmul.mubr.f32.gmra.mxu0 %v105
    %v4013 = vpop.f32.mrf.mxu0
    %v4014 = vadd.f32 0.0, %v4013
    %v4015 = vpop.f32.mrf.mxu0
    %4016 = vmatprep.mubr.f32.mxu0 0.0
    %4017 = vmatmul.mubr.f32.gmra.mxu0 %v106
    %v4018 = vpop.f32.mrf.mxu0
    %v4019 = vadd.f32 0.0, %v4018
    %v4020 = vpop.f32.mrf.mxu0
    %4021 = vmatprep.mubr.f32.mxu0 0.0
    %4022 = vmatmul.mubr.f32.gmra.mxu0 %v107
    %v4023 = vpop.f32.mrf.mxu0
    %v4024 = vadd.f32 0.0, %v4023
    %v4025 = vpop.f32.mrf.mxu0
    %4026 = vdwg.mxu0
    %4027 = vmatprep.subr.mxu0 0.0
    %4028 = vmatpush1.msra.mxu0 %v4024
    %4029 = vmatprep.subr.mxu0 0.0
    %4030 = vmatpush1.msra.mxu0 %v4019
    %4031 = vmatprep.subr.mxu0 0.0
    %4032 = vmatpush1.msra.mxu0 %v4014
    %4033 = vmatprep.subr.mxu0 0.0
    %4034 = vmatpush1.msra.mxu0 %v4009
    %4035 = vmatprep.subr.mxu0 0.0
    %4036 = vmatpush1.msra.mxu0 %v4004
    %4037 = vmatprep.subr.mxu0 0.0
    %4038 = vmatpush1.msra.mxu0 %v3999
    %4039 = vmatprep.subr.mxu0 0.0
    %4040 = vmatpush1.msra.mxu0 %v3994
    %4041 = vmatprep.subr.mxu0 0.0
    %4042 = vmatpush1.msra.mxu0 %v3989
    %4043 = vmatprep.subr.mxu0 0.0
    %4044 = vmatpush1.msra.mxu0 %v3984
    %4045 = vmatprep.subr.mxu0 0.0
    %4046 = vmatpush1.msra.mxu0 %v3979
    %4047 = vmatprep.subr.mxu0 0.0
    %4048 = vmatpush1.msra.mxu0 %v3974
    %4049 = vmatprep.subr.mxu0 0.0
    %4050 = vmatpush1.msra.mxu0 %v3969
    %4051 = vmatprep.subr.mxu0 0.0
    %4052 = vmatpush1.msra.mxu0 %v3964
    %4053 = vmatprep.subr.mxu0 0.0
    %4054 = vmatpush1.msra.mxu0 %v3959
    %4055 = vmatprep.subr.mxu0 0.0
    %4056 = vmatpush1.msra.mxu0 %v3954
    %4057 = vmatprep.subr.mxu0 0.0
    %4058 = vmatpush1.msra.mxu0 %v3949
    %4059 = vmatprep.subr.mxu0 0.0
    %4060 = vmatpush2.msra.mxu0 0.0
    %4061 = vmatprep.subr.mxu0 0.0
    %4062 = vmatpush2.msra.mxu0 0.0
    %4063 = vmatprep.subr.mxu0 0.0
    %4064 = vmatpush2.msra.mxu0 0.0
    %4065 = vmatprep.subr.mxu0 0.0
    %4066 = vmatpush2.msra.mxu0 0.0
    %4067 = vmatprep.subr.mxu0 0.0
    %4068 = vmatpush2.msra.mxu0 0.0
    %4069 = vmatprep.subr.mxu0 0.0
    %4070 = vmatpush2.msra.mxu0 0.0
    %4071 = vmatprep.subr.mxu0 0.0
    %4072 = vmatpush2.msra.mxu0 0.0
    %4073 = vmatprep.subr.mxu0 0.0
    %4074 = vmatpush2.msra.mxu0 0.0
    %4075 = vmatprep.subr.mxu0 0.0
    %4076 = vmatpush2.msra.mxu0 0.0
    %4077 = vmatprep.subr.mxu0 0.0
    %4078 = vmatpush2.msra.mxu0 0.0
    %4079 = vmatprep.subr.mxu0 0.0
    %4080 = vmatpush2.msra.mxu0 0.0
    %4081 = vmatprep.subr.mxu0 0.0
    %4082 = vmatpush2.msra.mxu0 0.0
    %4083 = vmatprep.subr.mxu0 0.0
    %4084 = vmatpush2.msra.mxu0 0.0
    %4085 = vmatprep.subr.mxu0 0.0
    %4086 = vmatpush2.msra.mxu0 0.0
    %4087 = vmatprep.subr.mxu0 0.0
    %4088 = vmatpush2.msra.mxu0 0.0
    %4089 = vmatprep.subr.mxu0 0.0
    %4090 = vmatpush2.msra.mxu0 0.0
    %4091 = vmatprep.mubr.f32.mxu0 0.0
    %4092 = vmatmul.mubr.f32.gmra.mxu0 %v76
    %v4093 = vpop.f32.mrf.mxu0
    %v4094 = vadd.f32 0.0, %v4093
    %v4095 = vpop.f32.mrf.mxu0
    %4096 = vmatprep.mubr.f32.mxu0 0.0
    %4097 = vmatmul.mubr.f32.gmra.mxu0 %v77
    %v4098 = vpop.f32.mrf.mxu0
    %v4099 = vadd.f32 0.0, %v4098
    %v4100 = vpop.f32.mrf.mxu0
    %4101 = vmatprep.mubr.f32.mxu0 0.0
    %4102 = vmatmul.mubr.f32.gmra.mxu0 %v78
    %v4103 = vpop.f32.mrf.mxu0
    %v4104 = vadd.f32 0.0, %v4103
    %v4105 = vpop.f32.mrf.mxu0
    %4106 = vmatprep.mubr.f32.mxu0 0.0
    %4107 = vmatmul.mubr.f32.gmra.mxu0 %v79
    %v4108 = vpop.f32.mrf.mxu0
    %v4109 = vadd.f32 0.0, %v4108
    %v4110 = vpop.f32.mrf.mxu0
    %4111 = vmatprep.mubr.f32.mxu0 0.0
    %4112 = vmatmul.mubr.f32.gmra.mxu0 %v80
    %v4113 = vpop.f32.mrf.mxu0
    %v4114 = vadd.f32 0.0, %v4113
    %v4115 = vpop.f32.mrf.mxu0
    %4116 = vmatprep.mubr.f32.mxu0 0.0
    %4117 = vmatmul.mubr.f32.gmra.mxu0 %v81
    %v4118 = vpop.f32.mrf.mxu0
    %v4119 = vadd.f32 0.0, %v4118
    %v4120 = vpop.f32.mrf.mxu0
    %4121 = vmatprep.mubr.f32.mxu0 0.0
    %4122 = vmatmul.mubr.f32.gmra.mxu0 %v82
    %v4123 = vpop.f32.mrf.mxu0
    %v4124 = vadd.f32 0.0, %v4123
    %v4125 = vpop.f32.mrf.mxu0
    %4126 = vmatprep.mubr.f32.mxu0 0.0
    %4127 = vmatmul.mubr.f32.gmra.mxu0 %v83
    %v4128 = vpop.f32.mrf.mxu0
    %v4129 = vadd.f32 0.0, %v4128
    %v4130 = vpop.f32.mrf.mxu0
    %4131 = vmatprep.mubr.f32.mxu0 0.0
    %4132 = vmatmul.mubr.f32.gmra.mxu0 %v84
    %v4133 = vpop.f32.mrf.mxu0
    %v4134 = vadd.f32 0.0, %v4133
    %v4135 = vpop.f32.mrf.mxu0
    %4136 = vmatprep.mubr.f32.mxu0 0.0
    %4137 = vmatmul.mubr.f32.gmra.mxu0 %v85
    %v4138 = vpop.f32.mrf.mxu0
    %v4139 = vadd.f32 0.0, %v4138
    %v4140 = vpop.f32.mrf.mxu0
    %4141 = vmatprep.mubr.f32.mxu0 0.0
    %4142 = vmatmul.mubr.f32.gmra.mxu0 %v86
    %v4143 = vpop.f32.mrf.mxu0
    %v4144 = vadd.f32 0.0, %v4143
    %v4145 = vpop.f32.mrf.mxu0
    %4146 = vmatprep.mubr.f32.mxu0 0.0
    %4147 = vmatmul.mubr.f32.gmra.mxu0 %v87
    %v4148 = vpop.f32.mrf.mxu0
    %v4149 = vadd.f32 0.0, %v4148
    %v4150 = vpop.f32.mrf.mxu0
    %4151 = vmatprep.mubr.f32.mxu0 0.0
    %4152 = vmatmul.mubr.f32.gmra.mxu0 %v88
    %v4153 = vpop.f32.mrf.mxu0
    %v4154 = vadd.f32 0.0, %v4153
    %v4155 = vpop.f32.mrf.mxu0
    %4156 = vmatprep.mubr.f32.mxu0 0.0
    %4157 = vmatmul.mubr.f32.gmra.mxu0 %v89
    %v4158 = vpop.f32.mrf.mxu0
    %v4159 = vadd.f32 0.0, %v4158
    %v4160 = vpop.f32.mrf.mxu0
    %4161 = vmatprep.mubr.f32.mxu0 0.0
    %4162 = vmatmul.mubr.f32.gmra.mxu0 %v90
    %v4163 = vpop.f32.mrf.mxu0
    %v4164 = vadd.f32 0.0, %v4163
    %v4165 = vpop.f32.mrf.mxu0
    %4166 = vmatprep.mubr.f32.mxu0 0.0
    %4167 = vmatmul.mubr.f32.gmra.mxu0 %v91
    %v4168 = vpop.f32.mrf.mxu0
    %v4169 = vadd.f32 0.0, %v4168
    %v4170 = vpop.f32.mrf.mxu0
    %4171 = vdwg.mxu0
    %4172 = vmatprep.subr.mxu0 0.0
    %4173 = vmatpush1.msra.mxu0 %v4169
    %4174 = vmatprep.subr.mxu0 0.0
    %4175 = vmatpush1.msra.mxu0 %v4164
    %4176 = vmatprep.subr.mxu0 0.0
    %4177 = vmatpush1.msra.mxu0 %v4159
    %4178 = vmatprep.subr.mxu0 0.0
    %4179 = vmatpush1.msra.mxu0 %v4154
    %4180 = vmatprep.subr.mxu0 0.0
    %4181 = vmatpush1.msra.mxu0 %v4149
    %4182 = vmatprep.subr.mxu0 0.0
    %4183 = vmatpush1.msra.mxu0 %v4144
    %4184 = vmatprep.subr.mxu0 0.0
    %4185 = vmatpush1.msra.mxu0 %v4139
    %4186 = vmatprep.subr.mxu0 0.0
    %4187 = vmatpush1.msra.mxu0 %v4134
    %4188 = vmatprep.subr.mxu0 0.0
    %4189 = vmatpush1.msra.mxu0 %v4129
    %4190 = vmatprep.subr.mxu0 0.0
    %4191 = vmatpush1.msra.mxu0 %v4124
    %4192 = vmatprep.subr.mxu0 0.0
    %4193 = vmatpush1.msra.mxu0 %v4119
    %4194 = vmatprep.subr.mxu0 0.0
    %4195 = vmatpush1.msra.mxu0 %v4114
    %4196 = vmatprep.subr.mxu0 0.0
    %4197 = vmatpush1.msra.mxu0 %v4109
    %4198 = vmatprep.subr.mxu0 0.0
    %4199 = vmatpush1.msra.mxu0 %v4104
    %4200 = vmatprep.subr.mxu0 0.0
    %4201 = vmatpush1.msra.mxu0 %v4099
    %4202 = vmatprep.subr.mxu0 0.0
    %4203 = vmatpush1.msra.mxu0 %v4094
    %4204 = vmatprep.subr.mxu0 0.0
    %4205 = vmatpush2.msra.mxu0 0.0
    %4206 = vmatprep.subr.mxu0 0.0
    %4207 = vmatpush2.msra.mxu0 0.0
    %4208 = vmatprep.subr.mxu0 0.0
    %4209 = vmatpush2.msra.mxu0 0.0
    %4210 = vmatprep.subr.mxu0 0.0
    %4211 = vmatpush2.msra.mxu0 0.0
    %4212 = vmatprep.subr.mxu0 0.0
    %4213 = vmatpush2.msra.mxu0 0.0
    %4214 = vmatprep.subr.mxu0 0.0
    %4215 = vmatpush2.msra.mxu0 0.0
    %4216 = vmatprep.subr.mxu0 0.0
    %4217 = vmatpush2.msra.mxu0 0.0
    %4218 = vmatprep.subr.mxu0 0.0
    %4219 = vmatpush2.msra.mxu0 0.0
    %4220 = vmatprep.subr.mxu0 0.0
    %4221 = vmatpush2.msra.mxu0 0.0
    %4222 = vmatprep.subr.mxu0 0.0
    %4223 = vmatpush2.msra.mxu0 0.0
    %4224 = vmatprep.subr.mxu0 0.0
    %4225 = vmatpush2.msra.mxu0 0.0
    %4226 = vmatprep.subr.mxu0 0.0
    %4227 = vmatpush2.msra.mxu0 0.0
    %4228 = vmatprep.subr.mxu0 0.0
    %4229 = vmatpush2.msra.mxu0 0.0
    %4230 = vmatprep.subr.mxu0 0.0
    %4231 = vmatpush2.msra.mxu0 0.0
    %4232 = vmatprep.subr.mxu0 0.0
    %4233 = vmatpush2.msra.mxu0 0.0
    %4234 = vmatprep.subr.mxu0 0.0
    %4235 = vmatpush2.msra.mxu0 0.0
    %4236 = vmatprep.mubr.f32.mxu0 0.0
    %4237 = vmatmul.mubr.f32.gmra.mxu0 %v92
    %v4238 = vpop.f32.mrf.mxu0
    %v4239 = vadd.f32 0.0, %v4238
    %v4240 = vpop.f32.mrf.mxu0
    %4241 = vmatprep.mubr.f32.mxu0 0.0
    %4242 = vmatmul.mubr.f32.gmra.mxu0 %v93
    %v4243 = vpop.f32.mrf.mxu0
    %v4244 = vadd.f32 0.0, %v4243
    %v4245 = vpop.f32.mrf.mxu0
    %4246 = vmatprep.mubr.f32.mxu0 0.0
    %4247 = vmatmul.mubr.f32.gmra.mxu0 %v94
    %v4248 = vpop.f32.mrf.mxu0
    %v4249 = vadd.f32 0.0, %v4248
    %v4250 = vpop.f32.mrf.mxu0
    %4251 = vmatprep.mubr.f32.mxu0 0.0
    %4252 = vmatmul.mubr.f32.gmra.mxu0 %v95
    %v4253 = vpop.f32.mrf.mxu0
    %v4254 = vadd.f32 0.0, %v4253
    %v4255 = vpop.f32.mrf.mxu0
    %4256 = vmatprep.mubr.f32.mxu0 0.0
    %4257 = vmatmul.mubr.f32.gmra.mxu0 %v96
    %v4258 = vpop.f32.mrf.mxu0
    %v4259 = vadd.f32 0.0, %v4258
    %v4260 = vpop.f32.mrf.mxu0
    %4261 = vmatprep.mubr.f32.mxu0 0.0
    %4262 = vmatmul.mubr.f32.gmra.mxu0 %v97
    %v4263 = vpop.f32.mrf.mxu0
    %v4264 = vadd.f32 0.0, %v4263
    %v4265 = vpop.f32.mrf.mxu0
    %4266 = vmatprep.mubr.f32.mxu0 0.0
    %4267 = vmatmul.mubr.f32.gmra.mxu0 %v98
    %v4268 = vpop.f32.mrf.mxu0
    %v4269 = vadd.f32 0.0, %v4268
    %v4270 = vpop.f32.mrf.mxu0
    %4271 = vmatprep.mubr.f32.mxu0 0.0
    %4272 = vmatmul.mubr.f32.gmra.mxu0 %v99
    %v4273 = vpop.f32.mrf.mxu0
    %v4274 = vadd.f32 0.0, %v4273
    %v4275 = vpop.f32.mrf.mxu0
    %4276 = vmatprep.mubr.f32.mxu0 0.0
    %4277 = vmatmul.mubr.f32.gmra.mxu0 %v100
    %v4278 = vpop.f32.mrf.mxu0
    %v4279 = vadd.f32 0.0, %v4278
    %v4280 = vpop.f32.mrf.mxu0
    %4281 = vmatprep.mubr.f32.mxu0 0.0
    %4282 = vmatmul.mubr.f32.gmra.mxu0 %v101
    %v4283 = vpop.f32.mrf.mxu0
    %v4284 = vadd.f32 0.0, %v4283
    %v4285 = vpop.f32.mrf.mxu0
    %4286 = vmatprep.mubr.f32.mxu0 0.0
    %4287 = vmatmul.mubr.f32.gmra.mxu0 %v102
    %v4288 = vpop.f32.mrf.mxu0
    %v4289 = vadd.f32 0.0, %v4288
    %v4290 = vpop.f32.mrf.mxu0
    %4291 = vmatprep.mubr.f32.mxu0 0.0
    %4292 = vmatmul.mubr.f32.gmra.mxu0 %v103
    %v4293 = vpop.f32.mrf.mxu0
    %v4294 = vadd.f32 0.0, %v4293
    %v4295 = vpop.f32.mrf.mxu0
    %4296 = vmatprep.mubr.f32.mxu0 0.0
    %4297 = vmatmul.mubr.f32.gmra.mxu0 %v104
    %v4298 = vpop.f32.mrf.mxu0
    %v4299 = vadd.f32 0.0, %v4298
    %v4300 = vpop.f32.mrf.mxu0
    %4301 = vmatprep.mubr.f32.mxu0 0.0
    %4302 = vmatmul.mubr.f32.gmra.mxu0 %v105
    %v4303 = vpop.f32.mrf.mxu0
    %v4304 = vadd.f32 0.0, %v4303
    %v4305 = vpop.f32.mrf.mxu0
    %4306 = vmatprep.mubr.f32.mxu0 0.0
    %4307 = vmatmul.mubr.f32.gmra.mxu0 %v106
    %v4308 = vpop.f32.mrf.mxu0
    %v4309 = vadd.f32 0.0, %v4308
    %v4310 = vpop.f32.mrf.mxu0
    %4311 = vmatprep.mubr.f32.mxu0 0.0
    %4312 = vmatmul.mubr.f32.gmra.mxu0 %v107
    %v4313 = vpop.f32.mrf.mxu0
    %v4314 = vadd.f32 0.0, %v4313
    %v4315 = vpop.f32.mrf.mxu0
    %4316 = vdwg.mxu0
    %4317 = vmatprep.subr.mxu0 0.0
    %4318 = vmatpush1.msra.mxu0 %v4314
    %4319 = vmatprep.subr.mxu0 0.0
    %4320 = vmatpush1.msra.mxu0 %v4309
    %4321 = vmatprep.subr.mxu0 0.0
    %4322 = vmatpush1.msra.mxu0 %v4304
    %4323 = vmatprep.subr.mxu0 0.0
    %4324 = vmatpush1.msra.mxu0 %v4299
    %4325 = vmatprep.subr.mxu0 0.0
    %4326 = vmatpush1.msra.mxu0 %v4294
    %4327 = vmatprep.subr.mxu0 0.0
    %4328 = vmatpush1.msra.mxu0 %v4289
    %4329 = vmatprep.subr.mxu0 0.0
    %4330 = vmatpush1.msra.mxu0 %v4284
    %4331 = vmatprep.subr.mxu0 0.0
    %4332 = vmatpush1.msra.mxu0 %v4279
    %4333 = vmatprep.subr.mxu0 0.0
    %4334 = vmatpush1.msra.mxu0 %v4274
    %4335 = vmatprep.subr.mxu0 0.0
    %4336 = vmatpush1.msra.mxu0 %v4269
    %4337 = vmatprep.subr.mxu0 0.0
    %4338 = vmatpush1.msra.mxu0 %v4264
    %4339 = vmatprep.subr.mxu0 0.0
    %4340 = vmatpush1.msra.mxu0 %v4259
    %4341 = vmatprep.subr.mxu0 0.0
    %4342 = vmatpush1.msra.mxu0 %v4254
    %4343 = vmatprep.subr.mxu0 0.0
    %4344 = vmatpush1.msra.mxu0 %v4249
    %4345 = vmatprep.subr.mxu0 0.0
    %4346 = vmatpush1.msra.mxu0 %v4244
    %4347 = vmatprep.subr.mxu0 0.0
    %4348 = vmatpush1.msra.mxu0 %v4239
    %4349 = vmatprep.subr.mxu0 0.0
    %4350 = vmatpush2.msra.mxu0 0.0
    %4351 = vmatprep.subr.mxu0 0.0
    %4352 = vmatpush2.msra.mxu0 0.0
    %4353 = vmatprep.subr.mxu0 0.0
    %4354 = vmatpush2.msra.mxu0 0.0
    %4355 = vmatprep.subr.mxu0 0.0
    %4356 = vmatpush2.msra.mxu0 0.0
    %4357 = vmatprep.subr.mxu0 0.0
    %4358 = vmatpush2.msra.mxu0 0.0
    %4359 = vmatprep.subr.mxu0 0.0
    %4360 = vmatpush2.msra.mxu0 0.0
    %4361 = vmatprep.subr.mxu0 0.0
    %4362 = vmatpush2.msra.mxu0 0.0
    %4363 = vmatprep.subr.mxu0 0.0
    %4364 = vmatpush2.msra.mxu0 0.0
    %4365 = vmatprep.subr.mxu0 0.0
    %4366 = vmatpush2.msra.mxu0 0.0
    %4367 = vmatprep.subr.mxu0 0.0
    %4368 = vmatpush2.msra.mxu0 0.0
    %4369 = vmatprep.subr.mxu0 0.0
    %4370 = vmatpush2.msra.mxu0 0.0
    %4371 = vmatprep.subr.mxu0 0.0
    %4372 = vmatpush2.msra.mxu0 0.0
    %4373 = vmatprep.subr.mxu0 0.0
    %4374 = vmatpush2.msra.mxu0 0.0
    %4375 = vmatprep.subr.mxu0 0.0
    %4376 = vmatpush2.msra.mxu0 0.0
    %4377 = vmatprep.subr.mxu0 0.0
    %4378 = vmatpush2.msra.mxu0 0.0
    %4379 = vmatprep.subr.mxu0 0.0
    %4380 = vmatpush2.msra.mxu0 0.0
    %4381 = vmatprep.mubr.f32.mxu0 0.0
    %4382 = vmatmul.mubr.f32.gmra.mxu0 %v76
    %v4383 = vpop.f32.mrf.mxu0
    %v4384 = vadd.f32 0.0, %v4383
    %v4385 = vpop.f32.mrf.mxu0
    %4386 = vmatprep.mubr.f32.mxu0 0.0
    %4387 = vmatmul.mubr.f32.gmra.mxu0 %v77
    %v4388 = vpop.f32.mrf.mxu0
    %v4389 = vadd.f32 0.0, %v4388
    %v4390 = vpop.f32.mrf.mxu0
    %4391 = vmatprep.mubr.f32.mxu0 0.0
    %4392 = vmatmul.mubr.f32.gmra.mxu0 %v78
    %v4393 = vpop.f32.mrf.mxu0
    %v4394 = vadd.f32 0.0, %v4393
    %v4395 = vpop.f32.mrf.mxu0
    %4396 = vmatprep.mubr.f32.mxu0 0.0
    %4397 = vmatmul.mubr.f32.gmra.mxu0 %v79
    %v4398 = vpop.f32.mrf.mxu0
    %v4399 = vadd.f32 0.0, %v4398
    %v4400 = vpop.f32.mrf.mxu0
    %4401 = vmatprep.mubr.f32.mxu0 0.0
    %4402 = vmatmul.mubr.f32.gmra.mxu0 %v80
    %v4403 = vpop.f32.mrf.mxu0
    %v4404 = vadd.f32 0.0, %v4403
    %v4405 = vpop.f32.mrf.mxu0
    %4406 = vmatprep.mubr.f32.mxu0 0.0
    %4407 = vmatmul.mubr.f32.gmra.mxu0 %v81
    %v4408 = vpop.f32.mrf.mxu0
    %v4409 = vadd.f32 0.0, %v4408
    %v4410 = vpop.f32.mrf.mxu0
    %4411 = vmatprep.mubr.f32.mxu0 0.0
    %4412 = vmatmul.mubr.f32.gmra.mxu0 %v82
    %v4413 = vpop.f32.mrf.mxu0
    %v4414 = vadd.f32 0.0, %v4413
    %v4415 = vpop.f32.mrf.mxu0
    %4416 = vmatprep.mubr.f32.mxu0 0.0
    %4417 = vmatmul.mubr.f32.gmra.mxu0 %v83
    %v4418 = vpop.f32.mrf.mxu0
    %v4419 = vadd.f32 0.0, %v4418
    %v4420 = vpop.f32.mrf.mxu0
    %4421 = vmatprep.mubr.f32.mxu0 0.0
    %4422 = vmatmul.mubr.f32.gmra.mxu0 %v84
    %v4423 = vpop.f32.mrf.mxu0
    %v4424 = vadd.f32 0.0, %v4423
    %v4425 = vpop.f32.mrf.mxu0
    %4426 = vmatprep.mubr.f32.mxu0 0.0
    %4427 = vmatmul.mubr.f32.gmra.mxu0 %v85
    %v4428 = vpop.f32.mrf.mxu0
    %v4429 = vadd.f32 0.0, %v4428
    %v4430 = vpop.f32.mrf.mxu0
    %4431 = vmatprep.mubr.f32.mxu0 0.0
    %4432 = vmatmul.mubr.f32.gmra.mxu0 %v86
    %v4433 = vpop.f32.mrf.mxu0
    %v4434 = vadd.f32 0.0, %v4433
    %v4435 = vpop.f32.mrf.mxu0
    %4436 = vmatprep.mubr.f32.mxu0 0.0
    %4437 = vmatmul.mubr.f32.gmra.mxu0 %v87
    %v4438 = vpop.f32.mrf.mxu0
    %v4439 = vadd.f32 0.0, %v4438
    %v4440 = vpop.f32.mrf.mxu0
    %4441 = vmatprep.mubr.f32.mxu0 0.0
    %4442 = vmatmul.mubr.f32.gmra.mxu0 %v88
    %v4443 = vpop.f32.mrf.mxu0
    %v4444 = vadd.f32 0.0, %v4443
    %v4445 = vpop.f32.mrf.mxu0
    %4446 = vmatprep.mubr.f32.mxu0 0.0
    %4447 = vmatmul.mubr.f32.gmra.mxu0 %v89
    %v4448 = vpop.f32.mrf.mxu0
    %v4449 = vadd.f32 0.0, %v4448
    %v4450 = vpop.f32.mrf.mxu0
    %4451 = vmatprep.mubr.f32.mxu0 0.0
    %4452 = vmatmul.mubr.f32.gmra.mxu0 %v90
    %v4453 = vpop.f32.mrf.mxu0
    %v4454 = vadd.f32 0.0, %v4453
    %v4455 = vpop.f32.mrf.mxu0
    %4456 = vmatprep.mubr.f32.mxu0 0.0
    %4457 = vmatmul.mubr.f32.gmra.mxu0 %v91
    %v4458 = vpop.f32.mrf.mxu0
    %v4459 = vadd.f32 0.0, %v4458
    %v4460 = vpop.f32.mrf.mxu0
    %4461 = vdwg.mxu0
    %4462 = vmatprep.subr.mxu0 0.0
    %4463 = vmatpush1.msra.mxu0 %v4459
    %4464 = vmatprep.subr.mxu0 0.0
    %4465 = vmatpush1.msra.mxu0 %v4454
    %4466 = vmatprep.subr.mxu0 0.0
    %4467 = vmatpush1.msra.mxu0 %v4449
    %4468 = vmatprep.subr.mxu0 0.0
    %4469 = vmatpush1.msra.mxu0 %v4444
    %4470 = vmatprep.subr.mxu0 0.0
    %4471 = vmatpush1.msra.mxu0 %v4439
    %4472 = vmatprep.subr.mxu0 0.0
    %4473 = vmatpush1.msra.mxu0 %v4434
    %4474 = vmatprep.subr.mxu0 0.0
    %4475 = vmatpush1.msra.mxu0 %v4429
    %4476 = vmatprep.subr.mxu0 0.0
    %4477 = vmatpush1.msra.mxu0 %v4424
    %4478 = vmatprep.subr.mxu0 0.0
    %4479 = vmatpush1.msra.mxu0 %v4419
    %4480 = vmatprep.subr.mxu0 0.0
    %4481 = vmatpush1.msra.mxu0 %v4414
    %4482 = vmatprep.subr.mxu0 0.0
    %4483 = vmatpush1.msra.mxu0 %v4409
    %4484 = vmatprep.subr.mxu0 0.0
    %4485 = vmatpush1.msra.mxu0 %v4404
    %4486 = vmatprep.subr.mxu0 0.0
    %4487 = vmatpush1.msra.mxu0 %v4399
    %4488 = vmatprep.subr.mxu0 0.0
    %4489 = vmatpush1.msra.mxu0 %v4394
    %4490 = vmatprep.subr.mxu0 0.0
    %4491 = vmatpush1.msra.mxu0 %v4389
    %4492 = vmatprep.subr.mxu0 0.0
    %4493 = vmatpush1.msra.mxu0 %v4384
    %4494 = vmatprep.subr.mxu0 0.0
    %4495 = vmatpush2.msra.mxu0 0.0
    %4496 = vmatprep.subr.mxu0 0.0
    %4497 = vmatpush2.msra.mxu0 0.0
    %4498 = vmatprep.subr.mxu0 0.0
    %4499 = vmatpush2.msra.mxu0 0.0
    %4500 = vmatprep.subr.mxu0 0.0
    %4501 = vmatpush2.msra.mxu0 0.0
    %4502 = vmatprep.subr.mxu0 0.0
    %4503 = vmatpush2.msra.mxu0 0.0
    %4504 = vmatprep.subr.mxu0 0.0
    %4505 = vmatpush2.msra.mxu0 0.0
    %4506 = vmatprep.subr.mxu0 0.0
    %4507 = vmatpush2.msra.mxu0 0.0
    %4508 = vmatprep.subr.mxu0 0.0
    %4509 = vmatpush2.msra.mxu0 0.0
    %4510 = vmatprep.subr.mxu0 0.0
    %4511 = vmatpush2.msra.mxu0 0.0
    %4512 = vmatprep.subr.mxu0 0.0
    %4513 = vmatpush2.msra.mxu0 0.0
    %4514 = vmatprep.subr.mxu0 0.0
    %4515 = vmatpush2.msra.mxu0 0.0
    %4516 = vmatprep.subr.mxu0 0.0
    %4517 = vmatpush2.msra.mxu0 0.0
    %4518 = vmatprep.subr.mxu0 0.0
    %4519 = vmatpush2.msra.mxu0 0.0
    %4520 = vmatprep.subr.mxu0 0.0
    %4521 = vmatpush2.msra.mxu0 0.0
    %4522 = vmatprep.subr.mxu0 0.0
    %4523 = vmatpush2.msra.mxu0 0.0
    %4524 = vmatprep.subr.mxu0 0.0
    %4525 = vmatpush2.msra.mxu0 0.0
    %4526 = vmatprep.mubr.f32.mxu0 0.0
    %4527 = vmatmul.mubr.f32.gmra.mxu0 %v92
    %v4528 = vpop.f32.mrf.mxu0
    %v4529 = vadd.f32 0.0, %v4528
    %v4530 = vpop.f32.mrf.mxu0
    %4531 = vmatprep.mubr.f32.mxu0 0.0
    %4532 = vmatmul.mubr.f32.gmra.mxu0 %v93
    %v4533 = vpop.f32.mrf.mxu0
    %v4534 = vadd.f32 0.0, %v4533
    %v4535 = vpop.f32.mrf.mxu0
    %4536 = vmatprep.mubr.f32.mxu0 0.0
    %4537 = vmatmul.mubr.f32.gmra.mxu0 %v94
    %v4538 = vpop.f32.mrf.mxu0
    %v4539 = vadd.f32 0.0, %v4538
    %v4540 = vpop.f32.mrf.mxu0
    %4541 = vmatprep.mubr.f32.mxu0 0.0
    %4542 = vmatmul.mubr.f32.gmra.mxu0 %v95
    %v4543 = vpop.f32.mrf.mxu0
    %v4544 = vadd.f32 0.0, %v4543
    %v4545 = vpop.f32.mrf.mxu0
    %4546 = vmatprep.mubr.f32.mxu0 0.0
    %4547 = vmatmul.mubr.f32.gmra.mxu0 %v96
    %v4548 = vpop.f32.mrf.mxu0
    %v4549 = vadd.f32 0.0, %v4548
    %v4550 = vpop.f32.mrf.mxu0
    %4551 = vmatprep.mubr.f32.mxu0 0.0
    %4552 = vmatmul.mubr.f32.gmra.mxu0 %v97
    %v4553 = vpop.f32.mrf.mxu0
    %v4554 = vadd.f32 0.0, %v4553
    %v4555 = vpop.f32.mrf.mxu0
    %4556 = vmatprep.mubr.f32.mxu0 0.0
    %4557 = vmatmul.mubr.f32.gmra.mxu0 %v98
    %v4558 = vpop.f32.mrf.mxu0
    %v4559 = vadd.f32 0.0, %v4558
    %v4560 = vpop.f32.mrf.mxu0
    %4561 = vmatprep.mubr.f32.mxu0 0.0
    %4562 = vmatmul.mubr.f32.gmra.mxu0 %v99
    %v4563 = vpop.f32.mrf.mxu0
    %v4564 = vadd.f32 0.0, %v4563
    %v4565 = vpop.f32.mrf.mxu0
    %4566 = vmatprep.mubr.f32.mxu0 0.0
    %4567 = vmatmul.mubr.f32.gmra.mxu0 %v100
    %v4568 = vpop.f32.mrf.mxu0
    %v4569 = vadd.f32 0.0, %v4568
    %v4570 = vpop.f32.mrf.mxu0
    %4571 = vmatprep.mubr.f32.mxu0 0.0
    %4572 = vmatmul.mubr.f32.gmra.mxu0 %v101
    %v4573 = vpop.f32.mrf.mxu0
    %v4574 = vadd.f32 0.0, %v4573
    %v4575 = vpop.f32.mrf.mxu0
    %4576 = vmatprep.mubr.f32.mxu0 0.0
    %4577 = vmatmul.mubr.f32.gmra.mxu0 %v102
    %v4578 = vpop.f32.mrf.mxu0
    %v4579 = vadd.f32 0.0, %v4578
    %v4580 = vpop.f32.mrf.mxu0
    %4581 = vmatprep.mubr.f32.mxu0 0.0
    %4582 = vmatmul.mubr.f32.gmra.mxu0 %v103
    %v4583 = vpop.f32.mrf.mxu0
    %v4584 = vadd.f32 0.0, %v4583
    %v4585 = vpop.f32.mrf.mxu0
    %4586 = vmatprep.mubr.f32.mxu0 0.0
    %4587 = vmatmul.mubr.f32.gmra.mxu0 %v104
    %v4588 = vpop.f32.mrf.mxu0
    %v4589 = vadd.f32 0.0, %v4588
    %v4590 = vpop.f32.mrf.mxu0
    %4591 = vmatprep.mubr.f32.mxu0 0.0
    %4592 = vmatmul.mubr.f32.gmra.mxu0 %v105
    %v4593 = vpop.f32.mrf.mxu0
    %v4594 = vadd.f32 0.0, %v4593
    %v4595 = vpop.f32.mrf.mxu0
    %4596 = vmatprep.mubr.f32.mxu0 0.0
    %4597 = vmatmul.mubr.f32.gmra.mxu0 %v106
    %v4598 = vpop.f32.mrf.mxu0
    %v4599 = vadd.f32 0.0, %v4598
    %v4600 = vpop.f32.mrf.mxu0
    %4601 = vmatprep.mubr.f32.mxu0 0.0
    %4602 = vmatmul.mubr.f32.gmra.mxu0 %v107
    %v4603 = vpop.f32.mrf.mxu0
    %v4604 = vadd.f32 0.0, %v4603
    %v4605 = vpop.f32.mrf.mxu0
    %4606 = vdwg.mxu0
    %4607 = vmatprep.subr.mxu0 0.0
    %4608 = vmatpush1.msra.mxu0 %v4604
    %4609 = vmatprep.subr.mxu0 0.0
    %4610 = vmatpush1.msra.mxu0 %v4599
    %4611 = vmatprep.subr.mxu0 0.0
    %4612 = vmatpush1.msra.mxu0 %v4594
    %4613 = vmatprep.subr.mxu0 0.0
    %4614 = vmatpush1.msra.mxu0 %v4589
    %4615 = vmatprep.subr.mxu0 0.0
    %4616 = vmatpush1.msra.mxu0 %v4584
    %4617 = vmatprep.subr.mxu0 0.0
    %4618 = vmatpush1.msra.mxu0 %v4579
    %4619 = vmatprep.subr.mxu0 0.0
    %4620 = vmatpush1.msra.mxu0 %v4574
    %4621 = vmatprep.subr.mxu0 0.0
    %4622 = vmatpush1.msra.mxu0 %v4569
    %4623 = vmatprep.subr.mxu0 0.0
    %4624 = vmatpush1.msra.mxu0 %v4564
    %4625 = vmatprep.subr.mxu0 0.0
    %4626 = vmatpush1.msra.mxu0 %v4559
    %4627 = vmatprep.subr.mxu0 0.0
    %4628 = vmatpush1.msra.mxu0 %v4554
    %4629 = vmatprep.subr.mxu0 0.0
    %4630 = vmatpush1.msra.mxu0 %v4549
    %4631 = vmatprep.subr.mxu0 0.0
    %4632 = vmatpush1.msra.mxu0 %v4544
    %4633 = vmatprep.subr.mxu0 0.0
    %4634 = vmatpush1.msra.mxu0 %v4539
    %4635 = vmatprep.subr.mxu0 0.0
    %4636 = vmatpush1.msra.mxu0 %v4534
    %4637 = vmatprep.subr.mxu0 0.0
    %4638 = vmatpush1.msra.mxu0 %v4529
    %4639 = vmatprep.subr.mxu0 0.0
    %4640 = vmatpush2.msra.mxu0 0.0
    %4641 = vmatprep.subr.mxu0 0.0
    %4642 = vmatpush2.msra.mxu0 0.0
    %4643 = vmatprep.subr.mxu0 0.0
    %4644 = vmatpush2.msra.mxu0 0.0
    %4645 = vmatprep.subr.mxu0 0.0
    %4646 = vmatpush2.msra.mxu0 0.0
    %4647 = vmatprep.subr.mxu0 0.0
    %4648 = vmatpush2.msra.mxu0 0.0
    %4649 = vmatprep.subr.mxu0 0.0
    %4650 = vmatpush2.msra.mxu0 0.0
    %4651 = vmatprep.subr.mxu0 0.0
    %4652 = vmatpush2.msra.mxu0 0.0
    %4653 = vmatprep.subr.mxu0 0.0
    %4654 = vmatpush2.msra.mxu0 0.0
    %4655 = vmatprep.subr.mxu0 0.0
    %4656 = vmatpush2.msra.mxu0 0.0
    %4657 = vmatprep.subr.mxu0 0.0
    %4658 = vmatpush2.msra.mxu0 0.0
    %4659 = vmatprep.subr.mxu0 0.0
    %4660 = vmatpush2.msra.mxu0 0.0
    %4661 = vmatprep.subr.mxu0 0.0
    %4662 = vmatpush2.msra.mxu0 0.0
    %4663 = vmatprep.subr.mxu0 0.0
    %4664 = vmatpush2.msra.mxu0 0.0
    %4665 = vmatprep.subr.mxu0 0.0
    %4666 = vmatpush2.msra.mxu0 0.0
    %4667 = vmatprep.subr.mxu0 0.0
    %4668 = vmatpush2.msra.mxu0 0.0
    %4669 = vmatprep.subr.mxu0 0.0
    %4670 = vmatpush2.msra.mxu0 0.0
    %4671 = vmatprep.mubr.f32.mxu0 0.0
    %4672 = vmatmul.mubr.f32.gmra.mxu0 %v76
    %v4673 = vpop.f32.mrf.mxu0
    %v4674 = vadd.f32 0.0, %v4673
    %v4675 = vpop.f32.mrf.mxu0
    %4676 = vmatprep.mubr.f32.mxu0 0.0
    %4677 = vmatmul.mubr.f32.gmra.mxu0 %v77
    %v4678 = vpop.f32.mrf.mxu0
    %v4679 = vadd.f32 0.0, %v4678
    %v4680 = vpop.f32.mrf.mxu0
    %4681 = vmatprep.mubr.f32.mxu0 0.0
    %4682 = vmatmul.mubr.f32.gmra.mxu0 %v78
    %v4683 = vpop.f32.mrf.mxu0
    %v4684 = vadd.f32 0.0, %v4683
    %v4685 = vpop.f32.mrf.mxu0
    %4686 = vmatprep.mubr.f32.mxu0 0.0
    %4687 = vmatmul.mubr.f32.gmra.mxu0 %v79
    %v4688 = vpop.f32.mrf.mxu0
    %v4689 = vadd.f32 0.0, %v4688
    %v4690 = vpop.f32.mrf.mxu0
    %4691 = vmatprep.mubr.f32.mxu0 0.0
    %4692 = vmatmul.mubr.f32.gmra.mxu0 %v80
    %v4693 = vpop.f32.mrf.mxu0
    %v4694 = vadd.f32 0.0, %v4693
    %v4695 = vpop.f32.mrf.mxu0
    %4696 = vmatprep.mubr.f32.mxu0 0.0
    %4697 = vmatmul.mubr.f32.gmra.mxu0 %v81
    %v4698 = vpop.f32.mrf.mxu0
    %v4699 = vadd.f32 0.0, %v4698
    %v4700 = vpop.f32.mrf.mxu0
    %4701 = vmatprep.mubr.f32.mxu0 0.0
    %4702 = vmatmul.mubr.f32.gmra.mxu0 %v82
    %v4703 = vpop.f32.mrf.mxu0
    %v4704 = vadd.f32 0.0, %v4703
    %v4705 = vpop.f32.mrf.mxu0
    %4706 = vmatprep.mubr.f32.mxu0 0.0
    %4707 = vmatmul.mubr.f32.gmra.mxu0 %v83
    %v4708 = vpop.f32.mrf.mxu0
    %v4709 = vadd.f32 0.0, %v4708
    %v4710 = vpop.f32.mrf.mxu0
    %4711 = vmatprep.mubr.f32.mxu0 0.0
    %4712 = vmatmul.mubr.f32.gmra.mxu0 %v84
    %v4713 = vpop.f32.mrf.mxu0
    %v4714 = vadd.f32 0.0, %v4713
    %v4715 = vpop.f32.mrf.mxu0
    %4716 = vmatprep.mubr.f32.mxu0 0.0
    %4717 = vmatmul.mubr.f32.gmra.mxu0 %v85
    %v4718 = vpop.f32.mrf.mxu0
    %v4719 = vadd.f32 0.0, %v4718
    %v4720 = vpop.f32.mrf.mxu0
    %4721 = vmatprep.mubr.f32.mxu0 0.0
    %4722 = vmatmul.mubr.f32.gmra.mxu0 %v86
    %v4723 = vpop.f32.mrf.mxu0
    %v4724 = vadd.f32 0.0, %v4723
    %v4725 = vpop.f32.mrf.mxu0
    %4726 = vmatprep.mubr.f32.mxu0 0.0
    %4727 = vmatmul.mubr.f32.gmra.mxu0 %v87
    %v4728 = vpop.f32.mrf.mxu0
    %v4729 = vadd.f32 0.0, %v4728
    %v4730 = vpop.f32.mrf.mxu0
    %4731 = vmatprep.mubr.f32.mxu0 0.0
    %4732 = vmatmul.mubr.f32.gmra.mxu0 %v88
    %v4733 = vpop.f32.mrf.mxu0
    %v4734 = vadd.f32 0.0, %v4733
    %v4735 = vpop.f32.mrf.mxu0
    %4736 = vmatprep.mubr.f32.mxu0 0.0
    %4737 = vmatmul.mubr.f32.gmra.mxu0 %v89
    %v4738 = vpop.f32.mrf.mxu0
    %v4739 = vadd.f32 0.0, %v4738
    %v4740 = vpop.f32.mrf.mxu0
    %4741 = vmatprep.mubr.f32.mxu0 0.0
    %4742 = vmatmul.mubr.f32.gmra.mxu0 %v90
    %v4743 = vpop.f32.mrf.mxu0
    %v4744 = vadd.f32 0.0, %v4743
    %v4745 = vpop.f32.mrf.mxu0
    %4746 = vmatprep.mubr.f32.mxu0 0.0
    %4747 = vmatmul.mubr.f32.gmra.mxu0 %v91
    %v4748 = vpop.f32.mrf.mxu0
    %v4749 = vadd.f32 0.0, %v4748
    %v4750 = vpop.f32.mrf.mxu0
    %4751 = vdwg.mxu0
    %4752 = vmatprep.subr.mxu0 0.0
    %4753 = vmatpush1.msra.mxu0 %v4749
    %4754 = vmatprep.subr.mxu0 0.0
    %4755 = vmatpush1.msra.mxu0 %v4744
    %4756 = vmatprep.subr.mxu0 0.0
    %4757 = vmatpush1.msra.mxu0 %v4739
    %4758 = vmatprep.subr.mxu0 0.0
    %4759 = vmatpush1.msra.mxu0 %v4734
    %4760 = vmatprep.subr.mxu0 0.0
    %4761 = vmatpush1.msra.mxu0 %v4729
    %4762 = vmatprep.subr.mxu0 0.0
    %4763 = vmatpush1.msra.mxu0 %v4724
    %4764 = vmatprep.subr.mxu0 0.0
    %4765 = vmatpush1.msra.mxu0 %v4719
    %4766 = vmatprep.subr.mxu0 0.0
    %4767 = vmatpush1.msra.mxu0 %v4714
    %4768 = vmatprep.subr.mxu0 0.0
    %4769 = vmatpush1.msra.mxu0 %v4709
    %4770 = vmatprep.subr.mxu0 0.0
    %4771 = vmatpush1.msra.mxu0 %v4704
    %4772 = vmatprep.subr.mxu0 0.0
    %4773 = vmatpush1.msra.mxu0 %v4699
    %4774 = vmatprep.subr.mxu0 0.0
    %4775 = vmatpush1.msra.mxu0 %v4694
    %4776 = vmatprep.subr.mxu0 0.0
    %4777 = vmatpush1.msra.mxu0 %v4689
    %4778 = vmatprep.subr.mxu0 0.0
    %4779 = vmatpush1.msra.mxu0 %v4684
    %4780 = vmatprep.subr.mxu0 0.0
    %4781 = vmatpush1.msra.mxu0 %v4679
    %4782 = vmatprep.subr.mxu0 0.0
    %4783 = vmatpush1.msra.mxu0 %v4674
    %4784 = vmatprep.subr.mxu0 0.0
    %4785 = vmatpush2.msra.mxu0 0.0
    %4786 = vmatprep.subr.mxu0 0.0
    %4787 = vmatpush2.msra.mxu0 0.0
    %4788 = vmatprep.subr.mxu0 0.0
    %4789 = vmatpush2.msra.mxu0 0.0
    %4790 = vmatprep.subr.mxu0 0.0
    %4791 = vmatpush2.msra.mxu0 0.0
    %4792 = vmatprep.subr.mxu0 0.0
    %4793 = vmatpush2.msra.mxu0 0.0
    %4794 = vmatprep.subr.mxu0 0.0
    %4795 = vmatpush2.msra.mxu0 0.0
    %4796 = vmatprep.subr.mxu0 0.0
    %4797 = vmatpush2.msra.mxu0 0.0
    %4798 = vmatprep.subr.mxu0 0.0
    %4799 = vmatpush2.msra.mxu0 0.0
    %4800 = vmatprep.subr.mxu0 0.0
    %4801 = vmatpush2.msra.mxu0 0.0
    %4802 = vmatprep.subr.mxu0 0.0
    %4803 = vmatpush2.msra.mxu0 0.0
    %4804 = vmatprep.subr.mxu0 0.0
    %4805 = vmatpush2.msra.mxu0 0.0
    %4806 = vmatprep.subr.mxu0 0.0
    %4807 = vmatpush2.msra.mxu0 0.0
    %4808 = vmatprep.subr.mxu0 0.0
    %4809 = vmatpush2.msra.mxu0 0.0
    %4810 = vmatprep.subr.mxu0 0.0
    %4811 = vmatpush2.msra.mxu0 0.0
    %4812 = vmatprep.subr.mxu0 0.0
    %4813 = vmatpush2.msra.mxu0 0.0
    %4814 = vmatprep.subr.mxu0 0.0
    %4815 = vmatpush2.msra.mxu0 0.0
    %4816 = vmatprep.mubr.f32.mxu0 0.0
    %4817 = vmatmul.mubr.f32.gmra.mxu0 %v92
    %v4818 = vpop.f32.mrf.mxu0
    %v4819 = vadd.f32 0.0, %v4818
    %v4820 = vpop.f32.mrf.mxu0
    %4821 = vmatprep.mubr.f32.mxu0 0.0
    %4822 = vmatmul.mubr.f32.gmra.mxu0 %v93
    %v4823 = vpop.f32.mrf.mxu0
    %v4824 = vadd.f32 0.0, %v4823
    %v4825 = vpop.f32.mrf.mxu0
    %4826 = vmatprep.mubr.f32.mxu0 0.0
    %4827 = vmatmul.mubr.f32.gmra.mxu0 %v94
    %v4828 = vpop.f32.mrf.mxu0
    %v4829 = vadd.f32 0.0, %v4828
    %v4830 = vpop.f32.mrf.mxu0
    %4831 = vmatprep.mubr.f32.mxu0 0.0
    %4832 = vmatmul.mubr.f32.gmra.mxu0 %v95
    %v4833 = vpop.f32.mrf.mxu0
    %v4834 = vadd.f32 0.0, %v4833
    %v4835 = vpop.f32.mrf.mxu0
    %4836 = vmatprep.mubr.f32.mxu0 0.0
    %4837 = vmatmul.mubr.f32.gmra.mxu0 %v96
    %v4838 = vpop.f32.mrf.mxu0
    %v4839 = vadd.f32 0.0, %v4838
    %v4840 = vpop.f32.mrf.mxu0
    %4841 = vmatprep.mubr.f32.mxu0 0.0
    %4842 = vmatmul.mubr.f32.gmra.mxu0 %v97
    %v4843 = vpop.f32.mrf.mxu0
    %v4844 = vadd.f32 0.0, %v4843
    %v4845 = vpop.f32.mrf.mxu0
    %4846 = vmatprep.mubr.f32.mxu0 0.0
    %4847 = vmatmul.mubr.f32.gmra.mxu0 %v98
    %v4848 = vpop.f32.mrf.mxu0
    %v4849 = vadd.f32 0.0, %v4848
    %v4850 = vpop.f32.mrf.mxu0
    %4851 = vmatprep.mubr.f32.mxu0 0.0
    %4852 = vmatmul.mubr.f32.gmra.mxu0 %v99
    %v4853 = vpop.f32.mrf.mxu0
    %v4854 = vadd.f32 0.0, %v4853
    %v4855 = vpop.f32.mrf.mxu0
    %4856 = vmatprep.mubr.f32.mxu0 0.0
    %4857 = vmatmul.mubr.f32.gmra.mxu0 %v100
    %v4858 = vpop.f32.mrf.mxu0
    %v4859 = vadd.f32 0.0, %v4858
    %v4860 = vpop.f32.mrf.mxu0
    %4861 = vmatprep.mubr.f32.mxu0 0.0
    %4862 = vmatmul.mubr.f32.gmra.mxu0 %v101
    %v4863 = vpop.f32.mrf.mxu0
    %v4864 = vadd.f32 0.0, %v4863
    %v4865 = vpop.f32.mrf.mxu0
    %4866 = vmatprep.mubr.f32.mxu0 0.0
    %4867 = vmatmul.mubr.f32.gmra.mxu0 %v102
    %v4868 = vpop.f32.mrf.mxu0
    %v4869 = vadd.f32 0.0, %v4868
    %v4870 = vpop.f32.mrf.mxu0
    %4871 = vmatprep.mubr.f32.mxu0 0.0
    %4872 = vmatmul.mubr.f32.gmra.mxu0 %v103
    %v4873 = vpop.f32.mrf.mxu0
    %v4874 = vadd.f32 0.0, %v4873
    %v4875 = vpop.f32.mrf.mxu0
    %4876 = vmatprep.mubr.f32.mxu0 0.0
    %4877 = vmatmul.mubr.f32.gmra.mxu0 %v104
    %v4878 = vpop.f32.mrf.mxu0
    %v4879 = vadd.f32 0.0, %v4878
    %v4880 = vpop.f32.mrf.mxu0
    %4881 = vmatprep.mubr.f32.mxu0 0.0
    %4882 = vmatmul.mubr.f32.gmra.mxu0 %v105
    %v4883 = vpop.f32.mrf.mxu0
    %v4884 = vadd.f32 0.0, %v4883
    %v4885 = vpop.f32.mrf.mxu0
    %4886 = vmatprep.mubr.f32.mxu0 0.0
    %4887 = vmatmul.mubr.f32.gmra.mxu0 %v106
    %v4888 = vpop.f32.mrf.mxu0
    %v4889 = vadd.f32 0.0, %v4888
    %v4890 = vpop.f32.mrf.mxu0
    %4891 = vmatprep.mubr.f32.mxu0 0.0
    %4892 = vmatmul.mubr.f32.gmra.mxu0 %v107
    %v4893 = vpop.f32.mrf.mxu0
    %v4894 = vadd.f32 0.0, %v4893
    %v4895 = vpop.f32.mrf.mxu0
    %4896 = vdwg.mxu0
    %4897 = vmatprep.subr.mxu0 0.0
    %4898 = vmatpush1.msra.mxu0 %v4894
    %4899 = vmatprep.subr.mxu0 0.0
    %4900 = vmatpush1.msra.mxu0 %v4889
    %4901 = vmatprep.subr.mxu0 0.0
    %4902 = vmatpush1.msra.mxu0 %v4884
    %4903 = vmatprep.subr.mxu0 0.0
    %4904 = vmatpush1.msra.mxu0 %v4879
    %4905 = vmatprep.subr.mxu0 0.0
    %4906 = vmatpush1.msra.mxu0 %v4874
    %4907 = vmatprep.subr.mxu0 0.0
    %4908 = vmatpush1.msra.mxu0 %v4869
    %4909 = vmatprep.subr.mxu0 0.0
    %4910 = vmatpush1.msra.mxu0 %v4864
    %4911 = vmatprep.subr.mxu0 0.0
    %4912 = vmatpush1.msra.mxu0 %v4859
    %4913 = vmatprep.subr.mxu0 0.0
    %4914 = vmatpush1.msra.mxu0 %v4854
    %4915 = vmatprep.subr.mxu0 0.0
    %4916 = vmatpush1.msra.mxu0 %v4849
    %4917 = vmatprep.subr.mxu0 0.0
    %4918 = vmatpush1.msra.mxu0 %v4844
    %4919 = vmatprep.subr.mxu0 0.0
    %4920 = vmatpush1.msra.mxu0 %v4839
    %4921 = vmatprep.subr.mxu0 0.0
    %4922 = vmatpush1.msra.mxu0 %v4834
    %4923 = vmatprep.subr.mxu0 0.0
    %4924 = vmatpush1.msra.mxu0 %v4829
    %4925 = vmatprep.subr.mxu0 0.0
    %4926 = vmatpush1.msra.mxu0 %v4824
    %4927 = vmatprep.subr.mxu0 0.0
    %4928 = vmatpush1.msra.mxu0 %v4819
    %4929 = vmatprep.subr.mxu0 0.0
    %4930 = vmatpush2.msra.mxu0 0.0
    %4931 = vmatprep.subr.mxu0 0.0
    %4932 = vmatpush2.msra.mxu0 0.0
    %4933 = vmatprep.subr.mxu0 0.0
    %4934 = vmatpush2.msra.mxu0 0.0
    %4935 = vmatprep.subr.mxu0 0.0
    %4936 = vmatpush2.msra.mxu0 0.0
    %4937 = vmatprep.subr.mxu0 0.0
    %4938 = vmatpush2.msra.mxu0 0.0
    %4939 = vmatprep.subr.mxu0 0.0
    %4940 = vmatpush2.msra.mxu0 0.0
    %4941 = vmatprep.subr.mxu0 0.0
    %4942 = vmatpush2.msra.mxu0 0.0
    %4943 = vmatprep.subr.mxu0 0.0
    %4944 = vmatpush2.msra.mxu0 0.0
    %4945 = vmatprep.subr.mxu0 0.0
    %4946 = vmatpush2.msra.mxu0 0.0
    %4947 = vmatprep.subr.mxu0 0.0
    %4948 = vmatpush2.msra.mxu0 0.0
    %4949 = vmatprep.subr.mxu0 0.0
    %4950 = vmatpush2.msra.mxu0 0.0
    %4951 = vmatprep.subr.mxu0 0.0
    %4952 = vmatpush2.msra.mxu0 0.0
    %4953 = vmatprep.subr.mxu0 0.0
    %4954 = vmatpush2.msra.mxu0 0.0
    %4955 = vmatprep.subr.mxu0 0.0
    %4956 = vmatpush2.msra.mxu0 0.0
    %4957 = vmatprep.subr.mxu0 0.0
    %4958 = vmatpush2.msra.mxu0 0.0
    %4959 = vmatprep.subr.mxu0 0.0
    %4960 = vmatpush2.msra.mxu0 0.0
    %4961 = vmatprep.mubr.f32.mxu0 0.0
    %4962 = vmatmul.mubr.f32.gmra.mxu0 %v76
    %v4963 = vpop.f32.mrf.mxu0
    %v4964 = vadd.f32 0.0, %v4963
    %v4965 = vpop.f32.mrf.mxu0
    %4966 = vmatprep.mubr.f32.mxu0 0.0
    %4967 = vmatmul.mubr.f32.gmra.mxu0 %v77
    %v4968 = vpop.f32.mrf.mxu0
    %v4969 = vadd.f32 0.0, %v4968
    %v4970 = vpop.f32.mrf.mxu0
    %4971 = vmatprep.mubr.f32.mxu0 0.0
    %4972 = vmatmul.mubr.f32.gmra.mxu0 %v78
    %v4973 = vpop.f32.mrf.mxu0
    %v4974 = vadd.f32 0.0, %v4973
    %v4975 = vpop.f32.mrf.mxu0
    %4976 = vmatprep.mubr.f32.mxu0 0.0
    %4977 = vmatmul.mubr.f32.gmra.mxu0 %v79
    %v4978 = vpop.f32.mrf.mxu0
    %v4979 = vadd.f32 0.0, %v4978
    %v4980 = vpop.f32.mrf.mxu0
    %4981 = vmatprep.mubr.f32.mxu0 0.0
    %4982 = vmatmul.mubr.f32.gmra.mxu0 %v80
    %v4983 = vpop.f32.mrf.mxu0
    %v4984 = vadd.f32 0.0, %v4983
    %v4985 = vpop.f32.mrf.mxu0
    %4986 = vmatprep.mubr.f32.mxu0 0.0
    %4987 = vmatmul.mubr.f32.gmra.mxu0 %v81
    %v4988 = vpop.f32.mrf.mxu0
    %v4989 = vadd.f32 0.0, %v4988
    %v4990 = vpop.f32.mrf.mxu0
    %4991 = vmatprep.mubr.f32.mxu0 0.0
    %4992 = vmatmul.mubr.f32.gmra.mxu0 %v82
    %v4993 = vpop.f32.mrf.mxu0
    %v4994 = vadd.f32 0.0, %v4993
    %v4995 = vpop.f32.mrf.mxu0
    %4996 = vmatprep.mubr.f32.mxu0 0.0
    %4997 = vmatmul.mubr.f32.gmra.mxu0 %v83
    %v4998 = vpop.f32.mrf.mxu0
    %v4999 = vadd.f32 0.0, %v4998
    %v5000 = vpop.f32.mrf.mxu0
    %5001 = vmatprep.mubr.f32.mxu0 0.0
    %5002 = vmatmul.mubr.f32.gmra.mxu0 %v84
    %v5003 = vpop.f32.mrf.mxu0
    %v5004 = vadd.f32 0.0, %v5003
    %v5005 = vpop.f32.mrf.mxu0
    %5006 = vmatprep.mubr.f32.mxu0 0.0
    %5007 = vmatmul.mubr.f32.gmra.mxu0 %v85
    %v5008 = vpop.f32.mrf.mxu0
    %v5009 = vadd.f32 0.0, %v5008
    %v5010 = vpop.f32.mrf.mxu0
    %5011 = vmatprep.mubr.f32.mxu0 0.0
    %5012 = vmatmul.mubr.f32.gmra.mxu0 %v86
    %v5013 = vpop.f32.mrf.mxu0
    %v5014 = vadd.f32 0.0, %v5013
    %v5015 = vpop.f32.mrf.mxu0
    %5016 = vmatprep.mubr.f32.mxu0 0.0
    %5017 = vmatmul.mubr.f32.gmra.mxu0 %v87
    %v5018 = vpop.f32.mrf.mxu0
    %v5019 = vadd.f32 0.0, %v5018
    %v5020 = vpop.f32.mrf.mxu0
    %5021 = vmatprep.mubr.f32.mxu0 0.0
    %5022 = vmatmul.mubr.f32.gmra.mxu0 %v88
    %v5023 = vpop.f32.mrf.mxu0
    %v5024 = vadd.f32 0.0, %v5023
    %v5025 = vpop.f32.mrf.mxu0
    %5026 = vmatprep.mubr.f32.mxu0 0.0
    %5027 = vmatmul.mubr.f32.gmra.mxu0 %v89
    %v5028 = vpop.f32.mrf.mxu0
    %v5029 = vadd.f32 0.0, %v5028
    %v5030 = vpop.f32.mrf.mxu0
    %5031 = vmatprep.mubr.f32.mxu0 0.0
    %5032 = vmatmul.mubr.f32.gmra.mxu0 %v90
    %v5033 = vpop.f32.mrf.mxu0
    %v5034 = vadd.f32 0.0, %v5033
    %v5035 = vpop.f32.mrf.mxu0
    %5036 = vmatprep.mubr.f32.mxu0 0.0
    %5037 = vmatmul.mubr.f32.gmra.mxu0 %v91
    %v5038 = vpop.f32.mrf.mxu0
    %v5039 = vadd.f32 0.0, %v5038
    %v5040 = vpop.f32.mrf.mxu0
    %5041 = vdwg.mxu0
    %v5042 = vsub.f32 %v2578, %v4964
    %v5043 = vsub.f32 %v2583, %v4969
    %v5044 = vsub.f32 %v2588, %v4974
    %v5045 = vsub.f32 %v2593, %v4979
    %v5046 = vsub.f32 %v2598, %v4984
    %v5047 = vsub.f32 %v2603, %v4989
    %v5048 = vsub.f32 %v2608, %v4994
    %v5049 = vsub.f32 %v2613, %v4999
    %v5050 = vsub.f32 %v2618, %v5004
    %v5051 = vsub.f32 %v2623, %v5009
    %v5052 = vsub.f32 %v2628, %v5014
    %v5053 = vsub.f32 %v2633, %v5019
    %v5054 = vsub.f32 %v2638, %v5024
    %v5055 = vsub.f32 %v2643, %v5029
    %v5056 = vsub.f32 %v2648, %v5034
    %v5057 = vsub.f32 %v2653, %v5039
    %s5058 = scalar_lea.vmem [#allocation10], 512
    %5059 = vst [vmem:[%s5058] sm:$0xff] %v5042
    %5060 = vst [vmem:[%s5058 + $0x8] sm:$0xff] %v5043
    %5061 = vst [vmem:[%s5058 + $0x10] sm:$0xff] %v5044
    %5062 = vst [vmem:[%s5058 + $0x18] sm:$0xff] %v5045
    %5063 = vst [vmem:[%s5058 + $0x20] sm:$0xff] %v5046
    %5064 = vst [vmem:[%s5058 + $0x28] sm:$0xff] %v5047
    %5065 = vst [vmem:[%s5058 + $0x30] sm:$0xff] %v5048
    %5066 = vst [vmem:[%s5058 + $0x38] sm:$0xff] %v5049
    %5067 = vst [vmem:[%s5058 + $0x40] sm:$0xff] %v5050
    %5068 = vst [vmem:[%s5058 + $0x48] sm:$0xff] %v5051
    %5069 = vst [vmem:[%s5058 + $0x50] sm:$0xff] %v5052
    %5070 = vst [vmem:[%s5058 + $0x58] sm:$0xff] %v5053
    %5071 = vst [vmem:[%s5058 + $0x60] sm:$0xff] %v5054
    %5072 = vst [vmem:[%s5058 + $0x68] sm:$0xff] %v5055
    %5073 = vst [vmem:[%s5058 + $0x70] sm:$0xff] %v5056
    %5074 = vst [vmem:[%s5058 + $0x78] sm:$0xff] %v5057
    %v5075 = vsub.f32 %v2433, %v4819
    %v5076 = vsub.f32 %v2438, %v4824
    %v5077 = vsub.f32 %v2443, %v4829
    %v5078 = vsub.f32 %v2448, %v4834
    %v5079 = vsub.f32 %v2453, %v4839
    %v5080 = vsub.f32 %v2458, %v4844
    %v5081 = vsub.f32 %v2463, %v4849
    %v5082 = vsub.f32 %v2468, %v4854
    %v5083 = vsub.f32 %v2473, %v4859
    %v5084 = vsub.f32 %v2478, %v4864
    %v5085 = vsub.f32 %v2483, %v4869
    %v5086 = vsub.f32 %v2488, %v4874
    %v5087 = vsub.f32 %v2493, %v4879
    %v5088 = vsub.f32 %v2498, %v4884
    %v5089 = vsub.f32 %v2503, %v4889
    %v5090 = vsub.f32 %v2508, %v4894
    %s5091 = scalar_lea.vmem [#allocation11], 512
    %5092 = vst [vmem:[%s5091] sm:$0xff] %v5075
    %5093 = vst [vmem:[%s5091 + $0x8] sm:$0xff] %v5076
    %5094 = vst [vmem:[%s5091 + $0x10] sm:$0xff] %v5077
    %5095 = vst [vmem:[%s5091 + $0x18] sm:$0xff] %v5078
    %5096 = vst [vmem:[%s5091 + $0x20] sm:$0xff] %v5079
    %5097 = vst [vmem:[%s5091 + $0x28] sm:$0xff] %v5080
    %5098 = vst [vmem:[%s5091 + $0x30] sm:$0xff] %v5081
    %5099 = vst [vmem:[%s5091 + $0x38] sm:$0xff] %v5082
    %5100 = vst [vmem:[%s5091 + $0x40] sm:$0xff] %v5083
    %5101 = vst [vmem:[%s5091 + $0x48] sm:$0xff] %v5084
    %5102 = vst [vmem:[%s5091 + $0x50] sm:$0xff] %v5085
    %5103 = vst [vmem:[%s5091 + $0x58] sm:$0xff] %v5086
    %5104 = vst [vmem:[%s5091 + $0x60] sm:$0xff] %v5087
    %5105 = vst [vmem:[%s5091 + $0x68] sm:$0xff] %v5088
    %5106 = vst [vmem:[%s5091 + $0x70] sm:$0xff] %v5089
    %5107 = vst [vmem:[%s5091 + $0x78] sm:$0xff] %v5090
    %s5108 = scalar_lea.vmem [#allocation10], 640
    %5109 = vst [vmem:[%s5108] sm:$0xff] %v4964
    %5110 = vst [vmem:[%s5108 + $0x8] sm:$0xff] %v4969
    %5111 = vst [vmem:[%s5108 + $0x10] sm:$0xff] %v4974
    %5112 = vst [vmem:[%s5108 + $0x18] sm:$0xff] %v4979
    %5113 = vst [vmem:[%s5108 + $0x20] sm:$0xff] %v4984
    %5114 = vst [vmem:[%s5108 + $0x28] sm:$0xff] %v4989
    %5115 = vst [vmem:[%s5108 + $0x30] sm:$0xff] %v4994
    %5116 = vst [vmem:[%s5108 + $0x38] sm:$0xff] %v4999
    %5117 = vst [vmem:[%s5108 + $0x40] sm:$0xff] %v5004
    %5118 = vst [vmem:[%s5108 + $0x48] sm:$0xff] %v5009
    %5119 = vst [vmem:[%s5108 + $0x50] sm:$0xff] %v5014
    %5120 = vst [vmem:[%s5108 + $0x58] sm:$0xff] %v5019
    %5121 = vst [vmem:[%s5108 + $0x60] sm:$0xff] %v5024
    %5122 = vst [vmem:[%s5108 + $0x68] sm:$0xff] %v5029
    %5123 = vst [vmem:[%s5108 + $0x70] sm:$0xff] %v5034
    %5124 = vst [vmem:[%s5108 + $0x78] sm:$0xff] %v5039
    %s5125 = scalar_lea.vmem [#allocation11], 640
    %5126 = vst [vmem:[%s5125] sm:$0xff] %v4819
    %5127 = vst [vmem:[%s5125 + $0x8] sm:$0xff] %v4824
    %5128 = vst [vmem:[%s5125 + $0x10] sm:$0xff] %v4829
    %5129 = vst [vmem:[%s5125 + $0x18] sm:$0xff] %v4834
    %5130 = vst [vmem:[%s5125 + $0x20] sm:$0xff] %v4839
    %5131 = vst [vmem:[%s5125 + $0x28] sm:$0xff] %v4844
    %5132 = vst [vmem:[%s5125 + $0x30] sm:$0xff] %v4849
    %5133 = vst [vmem:[%s5125 + $0x38] sm:$0xff] %v4854
    %5134 = vst [vmem:[%s5125 + $0x40] sm:$0xff] %v4859
    %5135 = vst [vmem:[%s5125 + $0x48] sm:$0xff] %v4864
    %5136 = vst [vmem:[%s5125 + $0x50] sm:$0xff] %v4869
    %5137 = vst [vmem:[%s5125 + $0x58] sm:$0xff] %v4874
    %5138 = vst [vmem:[%s5125 + $0x60] sm:$0xff] %v4879
    %5139 = vst [vmem:[%s5125 + $0x68] sm:$0xff] %v4884
    %5140 = vst [vmem:[%s5125 + $0x70] sm:$0xff] %v4889
    %5141 = vst [vmem:[%s5125 + $0x78] sm:$0xff] %v4894
    // Predicated region
    $region34: #{tpu_custom_call.1} parent=1 // pred_check
      _
    $region35: #{tpu_custom_call.1} parent=1 // pred_check_branch
      %5143 = sbr.rel (0) target = $region37
    $region36: #{tpu_custom_call.1} parent=1 // pred_region
      %s5145 = ssub.s32 12288, 12288
      %5146 = vsyncadd [#allocation4], %s5145
      %s5147 = sshll.u32 [#allocation10], 4
      %s5148 = int_to_ptr.vmem [resolvable:$true] %s5147
      %5153 = dma.vmem_to_hbm [thread:$0]  %s5148, 12288, %s4, [#allocation4], 128, 128, 8
    $region37: #{tpu_custom_call.1} parent=1 // pred_fallthru
      _
    // Predicated region
    $region38: #{tpu_custom_call.1} parent=1 // pred_check
      _
    $region39: #{tpu_custom_call.1} parent=1 // pred_check_branch
      %5155 = sbr.rel (0) target = $region41
    $region40: #{tpu_custom_call.1} parent=1 // pred_region
      %s5157 = ssub.s32 12288, 12288
      %5158 = vsyncadd [#allocation12], %s5157
      %s5159 = sshll.u32 [#allocation11], 4
      %s5160 = int_to_ptr.vmem [resolvable:$true] %s5159
      %5165 = dma.vmem_to_hbm [thread:$0]  %s5160, 12288, %s5, [#allocation12], 128, 128, 8
    $region41: #{tpu_custom_call.1} parent=1 // pred_fallthru
      _
    // Predicated region
    $region42: #{tpu_custom_call.1} parent=1 // pred_check
      _
    $region43: #{tpu_custom_call.1} parent=1 // pred_check_branch
      %5167 = sbr.rel (0) target = $region45
    $region44: #{tpu_custom_call.1} parent=1 // pred_region
      %5168 = dma.done [#allocation4], 12288
    $region45: #{tpu_custom_call.1} parent=1 // pred_fallthru
      _
    // Predicated region
    $region46: #{tpu_custom_call.1} parent=1 // pred_check
      _
    $region47: #{tpu_custom_call.1} parent=1 // pred_check_branch
      %5170 = sbr.rel (0) target = $region49
    $region48: #{tpu_custom_call.1} parent=1 // pred_region
      %5171 = dma.done [#allocation12], 12288
    $region49: #{tpu_custom_call.1} parent=1 // pred_fallthru
      _
    %5172 = vsyncpa [#allocation3], 1
    %5173 = vsyncpa [#allocation6], 1
    %5174 = vsyncpa [#allocation9], 1
    %5175 = vsyncpa [#allocation4], 1
    %5176 = vsyncpa [#allocation12], 1

// kernel: tpu_custom_call.1
$region0: #{tpu_custom_call.1}
  #allocation0 [shape = 'u32[]', space=smem, size = 0x4, offset = 0x4, fixed_abs, tag = 'smem constant byte address 0x4 - core index']
  #allocation1 [shape = 'u32[144,128]{1,0:T(1,128)}', space=vmem, size = 0x12000, scoped, tag = 'internal scratch']
  %s0 = inlined_call_operand.hbm [shape: f32[128,128], index: 0, kind: input, shape index: {}]
  %s1 = inlined_call_operand.hbm [shape: f32[128,128], index: 1, kind: input, shape index: {}]
  %s2 = inlined_call_operand.hbm [shape: f32[128,128], index: 2, kind: input, shape index: {}]
  %s3 = inlined_call_operand.hbm [shape: f32[128,128], index: 3, kind: input, shape index: {}]
  %s4 = inlined_call_operand.hbm [shape: f32[6,128,128], index: 4, kind: output, shape index: {0}]
  %s5 = inlined_call_operand.hbm [shape: f32[6,128,128], index: 5, kind: output, shape index: {1}]
  %6 = xla_tuple %s4, %s5
  %s7 = sld [smem:[#allocation0]]
  $region50: #{tpu_custom_call.1} parent=0
    _
  %s9 = ssub.s32 1, %s7
  %s10 = scalar_select 0, %s9, %s7
  $region1: #{tpu_custom_call.1} parent=0
    #allocation2 [shape = 'u8[65536]{0}', space=vmem, size = 0x10000, scoped, tag = 'input window, operand 0, single buffered']
    #allocation3 [shape = 's32[1]{0}', space=sflag, size = 0x4, scoped, tag = 'scoped memory for tpu_custom_call.1']
    #allocation4 [shape = 's32[1]{0}', space=sflag, size = 0x4, scoped, tag = 'scoped memory for tpu_custom_call.1']
    #allocation5 [shape = 'u8[65536]{0}', space=vmem, size = 0x10000, scoped, tag = 'input window, operand 1, single buffered']
    #allocation6 [shape = 's32[1]{0}', space=sflag, size = 0x4, scoped, tag = 'scoped memory for tpu_custom_call.1']
    #allocation7 [shape = 'u8[65536]{0}', space=vmem, size = 0x10000, scoped, tag = 'input window, operand 2, single buffered']
    #allocation8 [shape = 'u8[65536]{0}', space=vmem, size = 0x10000, scoped, tag = 'input window, operand 3, single buffered']
    #allocation9 [shape = 's32[1]{0}', space=sflag, size = 0x4, scoped, tag = 'scoped memory for tpu_custom_call.1']
    #allocation10 [shape = 'u8[393216]{0}', space=vmem, size = 0x60000, scoped, tag = 'output window, operand 0, single buffered']
    #allocation11 [shape = 'u8[393216]{0}', space=vmem, size = 0x60000, scoped, tag = 'output window, operand 1, single buffered']
    #allocation12 [shape = 's32[1]{0}', space=sflag, size = 0x4, scoped, tag = 'scoped memory for tpu_custom_call.1']
    %11 = vsyncpa [#allocation3], 0
    %12 = vsyncpa [#allocation6], 0
    %13 = vsyncpa [#allocation9], 0
    %14 = vsyncpa [#allocation4], 0
    %15 = vsyncpa [#allocation12], 0
    // Predicated region
    $region2: #{tpu_custom_call.1} parent=1 // pred_check
      _
    $region3: #{tpu_custom_call.1} parent=1 // pred_check_branch
      %17 = sbr.rel (0) target = $region5
    $region4: #{tpu_custom_call.1} parent=1 // pred_region
      %s19 = ssub.s32 2048, 2048
      %20 = vsyncadd [#allocation3], %s19
      %s21 = sshll.u32 [#allocation2], 4
      %s22 = int_to_ptr.vmem [resolvable:$true] %s21
      %27 = dma.hbm_to_vmem [thread:$0]  %s0, 2048, %s22, [#allocation3], 128, 128, 8
    $region5: #{tpu_custom_call.1} parent=1 // pred_fallthru
      _
    // Predicated region
    $region6: #{tpu_custom_call.1} parent=1 // pred_check
      _
    $region7: #{tpu_custom_call.1} parent=1 // pred_check_branch
      %29 = sbr.rel (0) target = $region9
    $region8: #{tpu_custom_call.1} parent=1 // pred_region
      %s31 = ssub.s32 2048, 2048
      %32 = vsyncadd [#allocation6], %s31
      %s33 = sshll.u32 [#allocation5], 4
      %s34 = int_to_ptr.vmem [resolvable:$true] %s33
      %39 = dma.hbm_to_vmem [thread:$0]  %s1, 2048, %s34, [#allocation6], 128, 128, 8
    $region9: #{tpu_custom_call.1} parent=1 // pred_fallthru
      _
    // Predicated region
    $region10: #{tpu_custom_call.1} parent=1 // pred_check
      _
    $region11: #{tpu_custom_call.1} parent=1 // pred_check_branch
      %41 = sbr.rel (0) target = $region13
    $region12: #{tpu_custom_call.1} parent=1 // pred_region
      %s43 = ssub.s32 2048, 2048
      %44 = vsyncadd [#allocation6], %s43
      %s45 = sshll.u32 [#allocation7], 4
      %s46 = int_to_ptr.vmem [resolvable:$true] %s45
      %51 = dma.hbm_to_vmem [thread:$0]  %s2, 2048, %s46, [#allocation6], 128, 128, 8
    $region13: #{tpu_custom_call.1} parent=1 // pred_fallthru
      _
    // Predicated region
    $region14: #{tpu_custom_call.1} parent=1 // pred_check
      _
    $region15: #{tpu_custom_call.1} parent=1 // pred_check_branch
      %53 = sbr.rel (0) target = $region17
    $region16: #{tpu_custom_call.1} parent=1 // pred_region
      %s55 = ssub.s32 2048, 2048
      %56 = vsyncadd [#allocation9], %s55
      %s57 = sshll.u32 [#allocation8], 4
      %s58 = int_to_ptr.vmem [resolvable:$true] %s57
      %63 = dma.hbm_to_vmem [thread:$0]  %s3, 2048, %s58, [#allocation9], 128, 128, 8
    $region17: #{tpu_custom_call.1} parent=1 // pred_fallthru
      _
    // Predicated region
    $region18: #{tpu_custom_call.1} parent=1 // pred_check
      _
    $region19: #{tpu_custom_call.1} parent=1 // pred_check_branch
      %65 = sbr.rel (0) target = $region21
    $region20: #{tpu_custom_call.1} parent=1 // pred_region
      %66 = dma.done [#allocation3], 2048
    $region21: #{tpu_custom_call.1} parent=1 // pred_fallthru
      _
    // Predicated region
    $region22: #{tpu_custom_call.1} parent=1 // pred_check
      _
    $region23: #{tpu_custom_call.1} parent=1 // pred_check_branch
      %68 = sbr.rel (0) target = $region25
    $region24: #{tpu_custom_call.1} parent=1 // pred_region
      %69 = dma.done [#allocation6], 2048
    $region25: #{tpu_custom_call.1} parent=1 // pred_fallthru
      _
    // Predicated region
    $region26: #{tpu_custom_call.1} parent=1 // pred_check
      _
    $region27: #{tpu_custom_call.1} parent=1 // pred_check_branch
      %71 = sbr.rel (0) target = $region29
    $region28: #{tpu_custom_call.1} parent=1 // pred_region
      %72 = dma.done [#allocation6], 2048
    $region29: #{tpu_custom_call.1} parent=1 // pred_fallthru
      _
    // Predicated region
    $region30: #{tpu_custom_call.1} parent=1 // pred_check
      _
    $region31: #{tpu_custom_call.1} parent=1 // pred_check_branch
      %74 = sbr.rel (0) target = $region33
    $region32: #{tpu_custom_call.1} parent=1 // pred_region
      %75 = dma.done [#allocation9], 2048
    $region33: #{tpu_custom_call.1} parent=1 // pred_fallthru
      _
    %v76 = vld [vmem:[#allocation2] sm:$0xff]
    %v77 = vld [vmem:[#allocation2 + $0x8] sm:$0xff]
    %v78 = vld [vmem:[#allocation2 + $0x10] sm:$0xff]
    %v79 = vld [vmem:[#allocation2 + $0x18] sm:$0xff]
    %v80 = vld [vmem:[#allocation2 + $0x20] sm:$0xff]
    %v81 = vld [vmem:[#allocation2 + $0x28] sm:$0xff]
    %v82 = vld [vmem:[#allocation2 + $0x30] sm:$0xff]
    %v83 = vld [vmem:[#allocation2 + $0x38] sm:$0xff]
    %v84 = vld [vmem:[#allocation2 + $0x40] sm:$0xff]
    %v85 = vld [vmem:[#allocation2 + $0x48] sm:$0xff]
    %v86 = vld [vmem:[#allocation2 + $0x50] sm:$0xff]
    %v87 = vld [vmem:[#allocation2 + $0x58] sm:$0xff]
    %v88 = vld [vmem:[#allocation2 + $0x60] sm:$0xff]
    %v89 = vld [vmem:[#allocation2 + $0x68] sm:$0xff]
    %v90 = vld [vmem:[#allocation2 + $0x70] sm:$0xff]
    %v91 = vld [vmem:[#allocation2 + $0x78] sm:$0xff]
    %v92 = vld [vmem:[#allocation5] sm:$0xff]
    %v93 = vld [vmem:[#allocation5 + $0x8] sm:$0xff]
    %v94 = vld [vmem:[#allocation5 + $0x10] sm:$0xff]
    %v95 = vld [vmem:[#allocation5 + $0x18] sm:$0xff]
    %v96 = vld [vmem:[#allocation5 + $0x20] sm:$0xff]
    %v97 = vld [vmem:[#allocation5 + $0x28] sm:$0xff]
    %v98 = vld [vmem:[#allocation5 + $0x30] sm:$0xff]
    %v99 = vld [vmem:[#allocation5 + $0x38] sm:$0xff]
    %v100 = vld [vmem:[#allocation5 + $0x40] sm:$0xff]
    %v101 = vld [vmem:[#allocation5 + $0x48] sm:$0xff]
    %v102 = vld [vmem:[#allocation5 + $0x50] sm:$0xff]
    %v103 = vld [vmem:[#allocation5 + $0x58] sm:$0xff]
    %v104 = vld [vmem:[#allocation5 + $0x60] sm:$0xff]
    %v105 = vld [vmem:[#allocation5 + $0x68] sm:$0xff]
    %v106 = vld [vmem:[#allocation5 + $0x70] sm:$0xff]
    %v107 = vld [vmem:[#allocation5 + $0x78] sm:$0xff]
    %v108 = vld [vmem:[#allocation7] sm:$0xff]
    %v109 = vld [vmem:[#allocation7 + $0x8] sm:$0xff]
    %v110 = vld [vmem:[#allocation7 + $0x10] sm:$0xff]
    %v111 = vld [vmem:[#allocation7 + $0x18] sm:$0xff]
    %v112 = vld [vmem:[#allocation7 + $0x20] sm:$0xff]
    %v113 = vld [vmem:[#allocation7 + $0x28] sm:$0xff]
    %v114 = vld [vmem:[#allocation7 + $0x30] sm:$0xff]
    %v115 = vld [vmem:[#allocation7 + $0x38] sm:$0xff]
    %v116 = vld [vmem:[#allocation7 + $0x40] sm:$0xff]
    %v117 = vld [vmem:[#allocation7 + $0x48] sm:$0xff]
    %v118 = vld [vmem:[#allocation7 + $0x50] sm:$0xff]
    %v119 = vld [vmem:[#allocation7 + $0x58] sm:$0xff]
    %v120 = vld [vmem:[#allocation7 + $0x60] sm:$0xff]
    %v121 = vld [vmem:[#allocation7 + $0x68] sm:$0xff]
    %v122 = vld [vmem:[#allocation7 + $0x70] sm:$0xff]
    %v123 = vld [vmem:[#allocation7 + $0x78] sm:$0xff]
    %v124 = vld [vmem:[#allocation8] sm:$0xff]
    %v125 = vld [vmem:[#allocation8 + $0x8] sm:$0xff]
    %v126 = vld [vmem:[#allocation8 + $0x10] sm:$0xff]
    %v127 = vld [vmem:[#allocation8 + $0x18] sm:$0xff]
    %v128 = vld [vmem:[#allocation8 + $0x20] sm:$0xff]
    %v129 = vld [vmem:[#allocation8 + $0x28] sm:$0xff]
    %v130 = vld [vmem:[#allocation8 + $0x30] sm:$0xff]
    %v131 = vld [vmem:[#allocation8 + $0x38] sm:$0xff]
    %v132 = vld [vmem:[#allocation8 + $0x40] sm:$0xff]
    %v133 = vld [vmem:[#allocation8 + $0x48] sm:$0xff]
    %v134 = vld [vmem:[#allocation8 + $0x50] sm:$0xff]
    %v135 = vld [vmem:[#allocation8 + $0x58] sm:$0xff]
    %v136 = vld [vmem:[#allocation8 + $0x60] sm:$0xff]
    %v137 = vld [vmem:[#allocation8 + $0x68] sm:$0xff]
    %v138 = vld [vmem:[#allocation8 + $0x70] sm:$0xff]
    %v139 = vld [vmem:[#allocation8 + $0x78] sm:$0xff]
    %140 = vmatprep.subr.mxu0 0.0
    %141 = vmatpush1.msra.mxu0 %v123
    %142 = vmatprep.subr.mxu0 0.0
    %143 = vmatpush1.msra.mxu0 %v122
    %144 = vmatprep.subr.mxu0 0.0
    %145 = vmatpush1.msra.mxu0 %v121
    %146 = vmatprep.subr.mxu0 0.0
    %147 = vmatpush1.msra.mxu0 %v120
    %148 = vmatprep.subr.mxu0 0.0
    %149 = vmatpush1.msra.mxu0 %v119
    %150 = vmatprep.subr.mxu0 0.0
    %151 = vmatpush1.msra.mxu0 %v118
    %152 = vmatprep.subr.mxu0 0.0
    %153 = vmatpush1.msra.mxu0 %v117
    %154 = vmatprep.subr.mxu0 0.0
    %155 = vmatpush1.msra.mxu0 %v116
    %156 = vmatprep.subr.mxu0 0.0
    %157 = vmatpush1.msra.mxu0 %v115
    %158 = vmatprep.subr.mxu0 0.0
    %159 = vmatpush1.msra.mxu0 %v114
    %160 = vmatprep.subr.mxu0 0.0
    %161 = vmatpush1.msra.mxu0 %v113
    %162 = vmatprep.subr.mxu0 0.0
    %163 = vmatpush1.msra.mxu0 %v112
    %164 = vmatprep.subr.mxu0 0.0
    %165 = vmatpush1.msra.mxu0 %v111
    %166 = vmatprep.subr.mxu0 0.0
    %167 = vmatpush1.msra.mxu0 %v110
    %168 = vmatprep.subr.mxu0 0.0
    %169 = vmatpush1.msra.mxu0 %v109
    %170 = vmatprep.subr.mxu0 0.0
    %171 = vmatpush1.msra.mxu0 %v108
    %172 = vmatprep.subr.mxu0 0.0
    %173 = vmatpush2.msra.mxu0 0.0
    %174 = vmatprep.subr.mxu0 0.0
    %175 = vmatpush2.msra.mxu0 0.0
    %176 = vmatprep.subr.mxu0 0.0
    %177 = vmatpush2.msra.mxu0 0.0
    %178 = vmatprep.subr.mxu0 0.0
    %179 = vmatpush2.msra.mxu0 0.0
    %180 = vmatprep.subr.mxu0 0.0
    %181 = vmatpush2.msra.mxu0 0.0
    %182 = vmatprep.subr.mxu0 0.0
    %183 = vmatpush2.msra.mxu0 0.0
    %184 = vmatprep.subr.mxu0 0.0
    %185 = vmatpush2.msra.mxu0 0.0
    %186 = vmatprep.subr.mxu0 0.0
    %187 = vmatpush2.msra.mxu0 0.0
    %188 = vmatprep.subr.mxu0 0.0
    %189 = vmatpush2.msra.mxu0 0.0
    %190 = vmatprep.subr.mxu0 0.0
    %191 = vmatpush2.msra.mxu0 0.0
    %192 = vmatprep.subr.mxu0 0.0
    %193 = vmatpush2.msra.mxu0 0.0
    %194 = vmatprep.subr.mxu0 0.0
    %195 = vmatpush2.msra.mxu0 0.0
    %196 = vmatprep.subr.mxu0 0.0
    %197 = vmatpush2.msra.mxu0 0.0
    %198 = vmatprep.subr.mxu0 0.0
    %199 = vmatpush2.msra.mxu0 0.0
    %200 = vmatprep.subr.mxu0 0.0
    %201 = vmatpush2.msra.mxu0 0.0
    %202 = vmatprep.subr.mxu0 0.0
    %203 = vmatpush2.msra.mxu0 0.0
    %204 = vmatprep.mubr.f32.mxu0 0.0
    %205 = vmatmul.mubr.f32.gmra.mxu0 %v92
    %v206 = vpop.f32.mrf.mxu0
    %v207 = vadd.f32 0.0, %v206
    %v208 = vpop.f32.mrf.mxu0
    %209 = vmatprep.mubr.f32.mxu0 0.0
    %210 = vmatmul.mubr.f32.gmra.mxu0 %v93
    %v211 = vpop.f32.mrf.mxu0
    %v212 = vadd.f32 0.0, %v211
    %v213 = vpop.f32.mrf.mxu0
    %214 = vmatprep.mubr.f32.mxu0 0.0
    %215 = vmatmul.mubr.f32.gmra.mxu0 %v94
    %v216 = vpop.f32.mrf.mxu0
    %v217 = vadd.f32 0.0, %v216
    %v218 = vpop.f32.mrf.mxu0
    %219 = vmatprep.mubr.f32.mxu0 0.0
    %220 = vmatmul.mubr.f32.gmra.mxu0 %v95
    %v221 = vpop.f32.mrf.mxu0
    %v222 = vadd.f32 0.0, %v221
    %v223 = vpop.f32.mrf.mxu0
    %224 = vmatprep.mubr.f32.mxu0 0.0
    %225 = vmatmul.mubr.f32.gmra.mxu0 %v96
    %v226 = vpop.f32.mrf.mxu0
    %v227 = vadd.f32 0.0, %v226
    %v228 = vpop.f32.mrf.mxu0
    %229 = vmatprep.mubr.f32.mxu0 0.0
    %230 = vmatmul.mubr.f32.gmra.mxu0 %v97
    %v231 = vpop.f32.mrf.mxu0
    %v232 = vadd.f32 0.0, %v231
    %v233 = vpop.f32.mrf.mxu0
    %234 = vmatprep.mubr.f32.mxu0 0.0
    %235 = vmatmul.mubr.f32.gmra.mxu0 %v98
    %v236 = vpop.f32.mrf.mxu0
    %v237 = vadd.f32 0.0, %v236
    %v238 = vpop.f32.mrf.mxu0
    %239 = vmatprep.mubr.f32.mxu0 0.0
    %240 = vmatmul.mubr.f32.gmra.mxu0 %v99
    %v241 = vpop.f32.mrf.mxu0
    %v242 = vadd.f32 0.0, %v241
    %v243 = vpop.f32.mrf.mxu0
    %244 = vmatprep.mubr.f32.mxu0 0.0
    %245 = vmatmul.mubr.f32.gmra.mxu0 %v100
    %v246 = vpop.f32.mrf.mxu0
    %v247 = vadd.f32 0.0, %v246
    %v248 = vpop.f32.mrf.mxu0
    %249 = vmatprep.mubr.f32.mxu0 0.0
    %250 = vmatmul.mubr.f32.gmra.mxu0 %v101
    %v251 = vpop.f32.mrf.mxu0
    %v252 = vadd.f32 0.0, %v251
    %v253 = vpop.f32.mrf.mxu0
    %254 = vmatprep.mubr.f32.mxu0 0.0
    %255 = vmatmul.mubr.f32.gmra.mxu0 %v102
    %v256 = vpop.f32.mrf.mxu0
    %v257 = vadd.f32 0.0, %v256
    %v258 = vpop.f32.mrf.mxu0
    %259 = vmatprep.mubr.f32.mxu0 0.0
    %260 = vmatmul.mubr.f32.gmra.mxu0 %v103
    %v261 = vpop.f32.mrf.mxu0
    %v262 = vadd.f32 0.0, %v261
    %v263 = vpop.f32.mrf.mxu0
    %264 = vmatprep.mubr.f32.mxu0 0.0
    %265 = vmatmul.mubr.f32.gmra.mxu0 %v104
    %v266 = vpop.f32.mrf.mxu0
    %v267 = vadd.f32 0.0, %v266
    %v268 = vpop.f32.mrf.mxu0
    %269 = vmatprep.mubr.f32.mxu0 0.0
    %270 = vmatmul.mubr.f32.gmra.mxu0 %v105
    %v271 = vpop.f32.mrf.mxu0
    %v272 = vadd.f32 0.0, %v271
    %v273 = vpop.f32.mrf.mxu0
    %274 = vmatprep.mubr.f32.mxu0 0.0
    %275 = vmatmul.mubr.f32.gmra.mxu0 %v106
    %v276 = vpop.f32.mrf.mxu0
    %v277 = vadd.f32 0.0, %v276
    %v278 = vpop.f32.mrf.mxu0
    %279 = vmatprep.mubr.f32.mxu0 0.0
    %280 = vmatmul.mubr.f32.gmra.mxu0 %v107
    %v281 = vpop.f32.mrf.mxu0
    %v282 = vadd.f32 0.0, %v281
    %v283 = vpop.f32.mrf.mxu0
    %284 = vdwg.mxu0
    %285 = vmatprep.subr.mxu0 0.0
    %286 = vmatpush1.msra.mxu0 %v282
    %287 = vmatprep.subr.mxu0 0.0
    %288 = vmatpush1.msra.mxu0 %v277
    %289 = vmatprep.subr.mxu0 0.0
    %290 = vmatpush1.msra.mxu0 %v272
    %291 = vmatprep.subr.mxu0 0.0
    %292 = vmatpush1.msra.mxu0 %v267
    %293 = vmatprep.subr.mxu0 0.0
    %294 = vmatpush1.msra.mxu0 %v262
    %295 = vmatprep.subr.mxu0 0.0
    %296 = vmatpush1.msra.mxu0 %v257
    %297 = vmatprep.subr.mxu0 0.0
    %298 = vmatpush1.msra.mxu0 %v252
    %299 = vmatprep.subr.mxu0 0.0
    %300 = vmatpush1.msra.mxu0 %v247
    %301 = vmatprep.subr.mxu0 0.0
    %302 = vmatpush1.msra.mxu0 %v242
    %303 = vmatprep.subr.mxu0 0.0
    %304 = vmatpush1.msra.mxu0 %v237
    %305 = vmatprep.subr.mxu0 0.0
    %306 = vmatpush1.msra.mxu0 %v232
    %307 = vmatprep.subr.mxu0 0.0
    %308 = vmatpush1.msra.mxu0 %v227
    %309 = vmatprep.subr.mxu0 0.0
    %310 = vmatpush1.msra.mxu0 %v222
    %311 = vmatprep.subr.mxu0 0.0
    %312 = vmatpush1.msra.mxu0 %v217
    %313 = vmatprep.subr.mxu0 0.0
    %314 = vmatpush1.msra.mxu0 %v212
    %315 = vmatprep.subr.mxu0 0.0
    %316 = vmatpush1.msra.mxu0 %v207
    %317 = vmatprep.subr.mxu0 0.0
    %318 = vmatpush2.msra.mxu0 0.0
    %319 = vmatprep.subr.mxu0 0.0
    %320 = vmatpush2.msra.mxu0 0.0
    %321 = vmatprep.subr.mxu0 0.0
    %322 = vmatpush2.msra.mxu0 0.0
    %323 = vmatprep.subr.mxu0 0.0
    %324 = vmatpush2.msra.mxu0 0.0
    %325 = vmatprep.subr.mxu0 0.0
    %326 = vmatpush2.msra.mxu0 0.0
    %327 = vmatprep.subr.mxu0 0.0
    %328 = vmatpush2.msra.mxu0 0.0
    %329 = vmatprep.subr.mxu0 0.0
    %330 = vmatpush2.msra.mxu0 0.0
    %331 = vmatprep.subr.mxu0 0.0
    %332 = vmatpush2.msra.mxu0 0.0
    %333 = vmatprep.subr.mxu0 0.0
    %334 = vmatpush2.msra.mxu0 0.0
    %335 = vmatprep.subr.mxu0 0.0
    %336 = vmatpush2.msra.mxu0 0.0
    %337 = vmatprep.subr.mxu0 0.0
    %338 = vmatpush2.msra.mxu0 0.0
    %339 = vmatprep.subr.mxu0 0.0
    %340 = vmatpush2.msra.mxu0 0.0
    %341 = vmatprep.subr.mxu0 0.0
    %342 = vmatpush2.msra.mxu0 0.0
    %343 = vmatprep.subr.mxu0 0.0
    %344 = vmatpush2.msra.mxu0 0.0
    %345 = vmatprep.subr.mxu0 0.0
    %346 = vmatpush2.msra.mxu0 0.0
    %347 = vmatprep.subr.mxu0 0.0
    %348 = vmatpush2.msra.mxu0 0.0
    %349 = vmatprep.mubr.f32.mxu0 0.0
    %350 = vmatmul.mubr.f32.gmra.mxu0 %v76
    %v351 = vpop.f32.mrf.mxu0
    %v352 = vadd.f32 0.0, %v351
    %v353 = vpop.f32.mrf.mxu0
    %354 = vmatprep.mubr.f32.mxu0 0.0
    %355 = vmatmul.mubr.f32.gmra.mxu0 %v77
    %v356 = vpop.f32.mrf.mxu0
    %v357 = vadd.f32 0.0, %v356
    %v358 = vpop.f32.mrf.mxu0
    %359 = vmatprep.mubr.f32.mxu0 0.0
    %360 = vmatmul.mubr.f32.gmra.mxu0 %v78
    %v361 = vpop.f32.mrf.mxu0
    %v362 = vadd.f32 0.0, %v361
    %v363 = vpop.f32.mrf.mxu0
    %364 = vmatprep.mubr.f32.mxu0 0.0
    %365 = vmatmul.mubr.f32.gmra.mxu0 %v79
    %v366 = vpop.f32.mrf.mxu0
    %v367 = vadd.f32 0.0, %v366
    %v368 = vpop.f32.mrf.mxu0
    %369 = vmatprep.mubr.f32.mxu0 0.0
    %370 = vmatmul.mubr.f32.gmra.mxu0 %v80
    %v371 = vpop.f32.mrf.mxu0
    %v372 = vadd.f32 0.0, %v371
    %v373 = vpop.f32.mrf.mxu0
    %374 = vmatprep.mubr.f32.mxu0 0.0
    %375 = vmatmul.mubr.f32.gmra.mxu0 %v81
    %v376 = vpop.f32.mrf.mxu0
    %v377 = vadd.f32 0.0, %v376
    %v378 = vpop.f32.mrf.mxu0
    %379 = vmatprep.mubr.f32.mxu0 0.0
    %380 = vmatmul.mubr.f32.gmra.mxu0 %v82
    %v381 = vpop.f32.mrf.mxu0
    %v382 = vadd.f32 0.0, %v381
    %v383 = vpop.f32.mrf.mxu0
    %384 = vmatprep.mubr.f32.mxu0 0.0
    %385 = vmatmul.mubr.f32.gmra.mxu0 %v83
    %v386 = vpop.f32.mrf.mxu0
    %v387 = vadd.f32 0.0, %v386
    %v388 = vpop.f32.mrf.mxu0
    %389 = vmatprep.mubr.f32.mxu0 0.0
    %390 = vmatmul.mubr.f32.gmra.mxu0 %v84
    %v391 = vpop.f32.mrf.mxu0
    %v392 = vadd.f32 0.0, %v391
    %v393 = vpop.f32.mrf.mxu0
    %394 = vmatprep.mubr.f32.mxu0 0.0
    %395 = vmatmul.mubr.f32.gmra.mxu0 %v85
    %v396 = vpop.f32.mrf.mxu0
    %v397 = vadd.f32 0.0, %v396
    %v398 = vpop.f32.mrf.mxu0
    %399 = vmatprep.mubr.f32.mxu0 0.0
    %400 = vmatmul.mubr.f32.gmra.mxu0 %v86
    %v401 = vpop.f32.mrf.mxu0
    %v402 = vadd.f32 0.0, %v401
    %v403 = vpop.f32.mrf.mxu0
    %404 = vmatprep.mubr.f32.mxu0 0.0
    %405 = vmatmul.mubr.f32.gmra.mxu0 %v87
    %v406 = vpop.f32.mrf.mxu0
    %v407 = vadd.f32 0.0, %v406
    %v408 = vpop.f32.mrf.mxu0
    %409 = vmatprep.mubr.f32.mxu0 0.0
    %410 = vmatmul.mubr.f32.gmra.mxu0 %v88
    %v411 = vpop.f32.mrf.mxu0
    %v412 = vadd.f32 0.0, %v411
    %v413 = vpop.f32.mrf.mxu0
    %414 = vmatprep.mubr.f32.mxu0 0.0
    %415 = vmatmul.mubr.f32.gmra.mxu0 %v89
    %v416 = vpop.f32.mrf.mxu0
    %v417 = vadd.f32 0.0, %v416
    %v418 = vpop.f32.mrf.mxu0
    %419 = vmatprep.mubr.f32.mxu0 0.0
    %420 = vmatmul.mubr.f32.gmra.mxu0 %v90
    %v421 = vpop.f32.mrf.mxu0
    %v422 = vadd.f32 0.0, %v421
    %v423 = vpop.f32.mrf.mxu0
    %424 = vmatprep.mubr.f32.mxu0 0.0
    %425 = vmatmul.mubr.f32.gmra.mxu0 %v91
    %v426 = vpop.f32.mrf.mxu0
    %v427 = vadd.f32 0.0, %v426
    %v428 = vpop.f32.mrf.mxu0
    %429 = vdwg.mxu0
    %v430 = vsub.f32 %v108, %v352
    %v431 = vsub.f32 %v109, %v357
    %v432 = vsub.f32 %v110, %v362
    %v433 = vsub.f32 %v111, %v367
    %v434 = vsub.f32 %v112, %v372
    %v435 = vsub.f32 %v113, %v377
    %v436 = vsub.f32 %v114, %v382
    %v437 = vsub.f32 %v115, %v387
    %v438 = vsub.f32 %v116, %v392
    %v439 = vsub.f32 %v117, %v397
    %v440 = vsub.f32 %v118, %v402
    %v441 = vsub.f32 %v119, %v407
    %v442 = vsub.f32 %v120, %v412
    %v443 = vsub.f32 %v121, %v417
    %v444 = vsub.f32 %v122, %v422
    %v445 = vsub.f32 %v123, %v427
    %446 = vst [vmem:[#allocation10] sm:$0xff] %v430
    %447 = vst [vmem:[#allocation10 + $0x8] sm:$0xff] %v431
    %448 = vst [vmem:[#allocation10 + $0x10] sm:$0xff] %v432
    %449 = vst [vmem:[#allocation10 + $0x18] sm:$0xff] %v433
    %450 = vst [vmem:[#allocation10 + $0x20] sm:$0xff] %v434
    %451 = vst [vmem:[#allocation10 + $0x28] sm:$0xff] %v435
    %452 = vst [vmem:[#allocation10 + $0x30] sm:$0xff] %v436
    %453 = vst [vmem:[#allocation10 + $0x38] sm:$0xff] %v437
    %454 = vst [vmem:[#allocation10 + $0x40] sm:$0xff] %v438
    %455 = vst [vmem:[#allocation10 + $0x48] sm:$0xff] %v439
    %456 = vst [vmem:[#allocation10 + $0x50] sm:$0xff] %v440
    %457 = vst [vmem:[#allocation10 + $0x58] sm:$0xff] %v441
    %458 = vst [vmem:[#allocation10 + $0x60] sm:$0xff] %v442
    %459 = vst [vmem:[#allocation10 + $0x68] sm:$0xff] %v443
    %460 = vst [vmem:[#allocation10 + $0x70] sm:$0xff] %v444
    %461 = vst [vmem:[#allocation10 + $0x78] sm:$0xff] %v445
    %v462 = vsub.f32 %v124, %v207
    %v463 = vsub.f32 %v125, %v212
    %v464 = vsub.f32 %v126, %v217
    %v465 = vsub.f32 %v127, %v222
    %v466 = vsub.f32 %v128, %v227
    %v467 = vsub.f32 %v129, %v232
    %v468 = vsub.f32 %v130, %v237
    %v469 = vsub.f32 %v131, %v242
    %v470 = vsub.f32 %v132, %v247
    %v471 = vsub.f32 %v133, %v252
    %v472 = vsub.f32 %v134, %v257
    %v473 = vsub.f32 %v135, %v262
    %v474 = vsub.f32 %v136, %v267
    %v475 = vsub.f32 %v137, %v272
    %v476 = vsub.f32 %v138, %v277
    %v477 = vsub.f32 %v139, %v282
    %478 = vst [vmem:[#allocation11] sm:$0xff] %v462
    %479 = vst [vmem:[#allocation11 + $0x8] sm:$0xff] %v463
    %480 = vst [vmem:[#allocation11 + $0x10] sm:$0xff] %v464
    %481 = vst [vmem:[#allocation11 + $0x18] sm:$0xff] %v465
    %482 = vst [vmem:[#allocation11 + $0x20] sm:$0xff] %v466
    %483 = vst [vmem:[#allocation11 + $0x28] sm:$0xff] %v467
    %484 = vst [vmem:[#allocation11 + $0x30] sm:$0xff] %v468
    %485 = vst [vmem:[#allocation11 + $0x38] sm:$0xff] %v469
    %486 = vst [vmem:[#allocation11 + $0x40] sm:$0xff] %v470
    %487 = vst [vmem:[#allocation11 + $0x48] sm:$0xff] %v471
    %488 = vst [vmem:[#allocation11 + $0x50] sm:$0xff] %v472
    %489 = vst [vmem:[#allocation11 + $0x58] sm:$0xff] %v473
    %490 = vst [vmem:[#allocation11 + $0x60] sm:$0xff] %v474
    %491 = vst [vmem:[#allocation11 + $0x68] sm:$0xff] %v475
    %492 = vst [vmem:[#allocation11 + $0x70] sm:$0xff] %v476
    %493 = vst [vmem:[#allocation11 + $0x78] sm:$0xff] %v477
    %494 = vmatprep.subr.mxu0 0.0
    %495 = vmatpush1.msra.mxu0 %v427
    %496 = vmatprep.subr.mxu0 0.0
    %497 = vmatpush1.msra.mxu0 %v422
    %498 = vmatprep.subr.mxu0 0.0
    %499 = vmatpush1.msra.mxu0 %v417
    %500 = vmatprep.subr.mxu0 0.0
    %501 = vmatpush1.msra.mxu0 %v412
    %502 = vmatprep.subr.mxu0 0.0
    %503 = vmatpush1.msra.mxu0 %v407
    %504 = vmatprep.subr.mxu0 0.0
    %505 = vmatpush1.msra.mxu0 %v402
    %506 = vmatprep.subr.mxu0 0.0
    %507 = vmatpush1.msra.mxu0 %v397
    %508 = vmatprep.subr.mxu0 0.0
    %509 = vmatpush1.msra.mxu0 %v392
    %510 = vmatprep.subr.mxu0 0.0
    %511 = vmatpush1.msra.mxu0 %v387
    %512 = vmatprep.subr.mxu0 0.0
    %513 = vmatpush1.msra.mxu0 %v382
    %514 = vmatprep.subr.mxu0 0.0
    %515 = vmatpush1.msra.mxu0 %v377
    %516 = vmatprep.subr.mxu0 0.0
    %517 = vmatpush1.msra.mxu0 %v372
    %518 = vmatprep.subr.mxu0 0.0
    %519 = vmatpush1.msra.mxu0 %v367
    %520 = vmatprep.subr.mxu0 0.0
    %521 = vmatpush1.msra.mxu0 %v362
    %522 = vmatprep.subr.mxu0 0.0
    %523 = vmatpush1.msra.mxu0 %v357
    %524 = vmatprep.subr.mxu0 0.0
    %525 = vmatpush1.msra.mxu0 %v352
    %526 = vmatprep.subr.mxu0 0.0
    %527 = vmatpush2.msra.mxu0 0.0
    %528 = vmatprep.subr.mxu0 0.0
    %529 = vmatpush2.msra.mxu0 0.0
    %530 = vmatprep.subr.mxu0 0.0
    %531 = vmatpush2.msra.mxu0 0.0
    %532 = vmatprep.subr.mxu0 0.0
    %533 = vmatpush2.msra.mxu0 0.0
    %534 = vmatprep.subr.mxu0 0.0
    %535 = vmatpush2.msra.mxu0 0.0
    %536 = vmatprep.subr.mxu0 0.0
    %537 = vmatpush2.msra.mxu0 0.0
    %538 = vmatprep.subr.mxu0 0.0
    %539 = vmatpush2.msra.mxu0 0.0
    %540 = vmatprep.subr.mxu0 0.0
    %541 = vmatpush2.msra.mxu0 0.0
    %542 = vmatprep.subr.mxu0 0.0
    %543 = vmatpush2.msra.mxu0 0.0
    %544 = vmatprep.subr.mxu0 0.0
    %545 = vmatpush2.msra.mxu0 0.0
    %546 = vmatprep.subr.mxu0 0.0
    %547 = vmatpush2.msra.mxu0 0.0
    %548 = vmatprep.subr.mxu0 0.0
    %549 = vmatpush2.msra.mxu0 0.0
    %550 = vmatprep.subr.mxu0 0.0
    %551 = vmatpush2.msra.mxu0 0.0
    %552 = vmatprep.subr.mxu0 0.0
    %553 = vmatpush2.msra.mxu0 0.0
    %554 = vmatprep.subr.mxu0 0.0
    %555 = vmatpush2.msra.mxu0 0.0
    %556 = vmatprep.subr.mxu0 0.0
    %557 = vmatpush2.msra.mxu0 0.0
    %558 = vmatprep.mubr.f32.mxu0 0.0
    %559 = vmatmul.mubr.f32.gmra.mxu0 %v92
    %v560 = vpop.f32.mrf.mxu0
    %v561 = vadd.f32 0.0, %v560
    %v562 = vpop.f32.mrf.mxu0
    %563 = vmatprep.mubr.f32.mxu0 0.0
    %564 = vmatmul.mubr.f32.gmra.mxu0 %v93
    %v565 = vpop.f32.mrf.mxu0
    %v566 = vadd.f32 0.0, %v565
    %v567 = vpop.f32.mrf.mxu0
    %568 = vmatprep.mubr.f32.mxu0 0.0
    %569 = vmatmul.mubr.f32.gmra.mxu0 %v94
    %v570 = vpop.f32.mrf.mxu0
    %v571 = vadd.f32 0.0, %v570
    %v572 = vpop.f32.mrf.mxu0
    %573 = vmatprep.mubr.f32.mxu0 0.0
    %574 = vmatmul.mubr.f32.gmra.mxu0 %v95
    %v575 = vpop.f32.mrf.mxu0
    %v576 = vadd.f32 0.0, %v575
    %v577 = vpop.f32.mrf.mxu0
    %578 = vmatprep.mubr.f32.mxu0 0.0
    %579 = vmatmul.mubr.f32.gmra.mxu0 %v96
    %v580 = vpop.f32.mrf.mxu0
    %v581 = vadd.f32 0.0, %v580
    %v582 = vpop.f32.mrf.mxu0
    %583 = vmatprep.mubr.f32.mxu0 0.0
    %584 = vmatmul.mubr.f32.gmra.mxu0 %v97
    %v585 = vpop.f32.mrf.mxu0
    %v586 = vadd.f32 0.0, %v585
    %v587 = vpop.f32.mrf.mxu0
    %588 = vmatprep.mubr.f32.mxu0 0.0
    %589 = vmatmul.mubr.f32.gmra.mxu0 %v98
    %v590 = vpop.f32.mrf.mxu0
    %v591 = vadd.f32 0.0, %v590
    %v592 = vpop.f32.mrf.mxu0
    %593 = vmatprep.mubr.f32.mxu0 0.0
    %594 = vmatmul.mubr.f32.gmra.mxu0 %v99
    %v595 = vpop.f32.mrf.mxu0
    %v596 = vadd.f32 0.0, %v595
    %v597 = vpop.f32.mrf.mxu0
    %598 = vmatprep.mubr.f32.mxu0 0.0
    %599 = vmatmul.mubr.f32.gmra.mxu0 %v100
    %v600 = vpop.f32.mrf.mxu0
    %v601 = vadd.f32 0.0, %v600
    %v602 = vpop.f32.mrf.mxu0
    %603 = vmatprep.mubr.f32.mxu0 0.0
    %604 = vmatmul.mubr.f32.gmra.mxu0 %v101
    %v605 = vpop.f32.mrf.mxu0
    %v606 = vadd.f32 0.0, %v605
    %v607 = vpop.f32.mrf.mxu0
    %608 = vmatprep.mubr.f32.mxu0 0.0
    %609 = vmatmul.mubr.f32.gmra.mxu0 %v102
    %v610 = vpop.f32.mrf.mxu0
    %v611 = vadd.f32 0.0, %v610
    %v612 = vpop.f32.mrf.mxu0
    %613 = vmatprep.mubr.f32.mxu0 0.0
    %614 = vmatmul.mubr.f32.gmra.mxu0 %v103
    %v615 = vpop.f32.mrf.mxu0
    %v616 = vadd.f32 0.0, %v615
    %v617 = vpop.f32.mrf.mxu0
    %618 = vmatprep.mubr.f32.mxu0 0.0
    %619 = vmatmul.mubr.f32.gmra.mxu0 %v104
    %v620 = vpop.f32.mrf.mxu0
    %v621 = vadd.f32 0.0, %v620
    %v622 = vpop.f32.mrf.mxu0
    %623 = vmatprep.mubr.f32.mxu0 0.0
    %624 = vmatmul.mubr.f32.gmra.mxu0 %v105
    %v625 = vpop.f32.mrf.mxu0
    %v626 = vadd.f32 0.0, %v625
    %v627 = vpop.f32.mrf.mxu0
    %628 = vmatprep.mubr.f32.mxu0 0.0
    %629 = vmatmul.mubr.f32.gmra.mxu0 %v106
    %v630 = vpop.f32.mrf.mxu0
    %v631 = vadd.f32 0.0, %v630
    %v632 = vpop.f32.mrf.mxu0
    %633 = vmatprep.mubr.f32.mxu0 0.0
    %634 = vmatmul.mubr.f32.gmra.mxu0 %v107
    %v635 = vpop.f32.mrf.mxu0
    %v636 = vadd.f32 0.0, %v635
    %v637 = vpop.f32.mrf.mxu0
    %638 = vdwg.mxu0
    %639 = vmatprep.subr.mxu0 0.0
    %640 = vmatpush1.msra.mxu0 %v636
    %641 = vmatprep.subr.mxu0 0.0
    %642 = vmatpush1.msra.mxu0 %v631
    %643 = vmatprep.subr.mxu0 0.0
    %644 = vmatpush1.msra.mxu0 %v626
    %645 = vmatprep.subr.mxu0 0.0
    %646 = vmatpush1.msra.mxu0 %v621
    %647 = vmatprep.subr.mxu0 0.0
    %648 = vmatpush1.msra.mxu0 %v616
    %649 = vmatprep.subr.mxu0 0.0
    %650 = vmatpush1.msra.mxu0 %v611
    %651 = vmatprep.subr.mxu0 0.0
    %652 = vmatpush1.msra.mxu0 %v606
    %653 = vmatprep.subr.mxu0 0.0
    %654 = vmatpush1.msra.mxu0 %v601
    %655 = vmatprep.subr.mxu0 0.0
    %656 = vmatpush1.msra.mxu0 %v596
    %657 = vmatprep.subr.mxu0 0.0
    %658 = vmatpush1.msra.mxu0 %v591
    %659 = vmatprep.subr.mxu0 0.0
    %660 = vmatpush1.msra.mxu0 %v586
    %661 = vmatprep.subr.mxu0 0.0
    %662 = vmatpush1.msra.mxu0 %v581
    %663 = vmatprep.subr.mxu0 0.0
    %664 = vmatpush1.msra.mxu0 %v576
    %665 = vmatprep.subr.mxu0 0.0
    %666 = vmatpush1.msra.mxu0 %v571
    %667 = vmatprep.subr.mxu0 0.0
    %668 = vmatpush1.msra.mxu0 %v566
    %669 = vmatprep.subr.mxu0 0.0
    %670 = vmatpush1.msra.mxu0 %v561
    %671 = vmatprep.subr.mxu0 0.0
    %672 = vmatpush2.msra.mxu0 0.0
    %673 = vmatprep.subr.mxu0 0.0
    %674 = vmatpush2.msra.mxu0 0.0
    %675 = vmatprep.subr.mxu0 0.0
    %676 = vmatpush2.msra.mxu0 0.0
    %677 = vmatprep.subr.mxu0 0.0
    %678 = vmatpush2.msra.mxu0 0.0
    %679 = vmatprep.subr.mxu0 0.0
    %680 = vmatpush2.msra.mxu0 0.0
    %681 = vmatprep.subr.mxu0 0.0
    %682 = vmatpush2.msra.mxu0 0.0
    %683 = vmatprep.subr.mxu0 0.0
    %684 = vmatpush2.msra.mxu0 0.0
    %685 = vmatprep.subr.mxu0 0.0
    %686 = vmatpush2.msra.mxu0 0.0
    %687 = vmatprep.subr.mxu0 0.0
    %688 = vmatpush2.msra.mxu0 0.0
    %689 = vmatprep.subr.mxu0 0.0
    %690 = vmatpush2.msra.mxu0 0.0
    %691 = vmatprep.subr.mxu0 0.0
    %692 = vmatpush2.msra.mxu0 0.0
    %693 = vmatprep.subr.mxu0 0.0
    %694 = vmatpush2.msra.mxu0 0.0
    %695 = vmatprep.subr.mxu0 0.0
    %696 = vmatpush2.msra.mxu0 0.0
    %697 = vmatprep.subr.mxu0 0.0
    %698 = vmatpush2.msra.mxu0 0.0
    %699 = vmatprep.subr.mxu0 0.0
    %700 = vmatpush2.msra.mxu0 0.0
    %701 = vmatprep.subr.mxu0 0.0
    %702 = vmatpush2.msra.mxu0 0.0
    %703 = vmatprep.mubr.f32.mxu0 0.0
    %704 = vmatmul.mubr.f32.gmra.mxu0 %v76
    %v705 = vpop.f32.mrf.mxu0
    %v706 = vadd.f32 0.0, %v705
    %v707 = vpop.f32.mrf.mxu0
    %708 = vmatprep.mubr.f32.mxu0 0.0
    %709 = vmatmul.mubr.f32.gmra.mxu0 %v77
    %v710 = vpop.f32.mrf.mxu0
    %v711 = vadd.f32 0.0, %v710
    %v712 = vpop.f32.mrf.mxu0
    %713 = vmatprep.mubr.f32.mxu0 0.0
    %714 = vmatmul.mubr.f32.gmra.mxu0 %v78
    %v715 = vpop.f32.mrf.mxu0
    %v716 = vadd.f32 0.0, %v715
    %v717 = vpop.f32.mrf.mxu0
    %718 = vmatprep.mubr.f32.mxu0 0.0
    %719 = vmatmul.mubr.f32.gmra.mxu0 %v79
    %v720 = vpop.f32.mrf.mxu0
    %v721 = vadd.f32 0.0, %v720
    %v722 = vpop.f32.mrf.mxu0
    %723 = vmatprep.mubr.f32.mxu0 0.0
    %724 = vmatmul.mubr.f32.gmra.mxu0 %v80
    %v725 = vpop.f32.mrf.mxu0
    %v726 = vadd.f32 0.0, %v725
    %v727 = vpop.f32.mrf.mxu0
    %728 = vmatprep.mubr.f32.mxu0 0.0
    %729 = vmatmul.mubr.f32.gmra.mxu0 %v81
    %v730 = vpop.f32.mrf.mxu0
    %v731 = vadd.f32 0.0, %v730
    %v732 = vpop.f32.mrf.mxu0
    %733 = vmatprep.mubr.f32.mxu0 0.0
    %734 = vmatmul.mubr.f32.gmra.mxu0 %v82
    %v735 = vpop.f32.mrf.mxu0
    %v736 = vadd.f32 0.0, %v735
    %v737 = vpop.f32.mrf.mxu0
    %738 = vmatprep.mubr.f32.mxu0 0.0
    %739 = vmatmul.mubr.f32.gmra.mxu0 %v83
    %v740 = vpop.f32.mrf.mxu0
    %v741 = vadd.f32 0.0, %v740
    %v742 = vpop.f32.mrf.mxu0
    %743 = vmatprep.mubr.f32.mxu0 0.0
    %744 = vmatmul.mubr.f32.gmra.mxu0 %v84
    %v745 = vpop.f32.mrf.mxu0
    %v746 = vadd.f32 0.0, %v745
    %v747 = vpop.f32.mrf.mxu0
    %748 = vmatprep.mubr.f32.mxu0 0.0
    %749 = vmatmul.mubr.f32.gmra.mxu0 %v85
    %v750 = vpop.f32.mrf.mxu0
    %v751 = vadd.f32 0.0, %v750
    %v752 = vpop.f32.mrf.mxu0
    %753 = vmatprep.mubr.f32.mxu0 0.0
    %754 = vmatmul.mubr.f32.gmra.mxu0 %v86
    %v755 = vpop.f32.mrf.mxu0
    %v756 = vadd.f32 0.0, %v755
    %v757 = vpop.f32.mrf.mxu0
    %758 = vmatprep.mubr.f32.mxu0 0.0
    %759 = vmatmul.mubr.f32.gmra.mxu0 %v87
    %v760 = vpop.f32.mrf.mxu0
    %v761 = vadd.f32 0.0, %v760
    %v762 = vpop.f32.mrf.mxu0
    %763 = vmatprep.mubr.f32.mxu0 0.0
    %764 = vmatmul.mubr.f32.gmra.mxu0 %v88
    %v765 = vpop.f32.mrf.mxu0
    %v766 = vadd.f32 0.0, %v765
    %v767 = vpop.f32.mrf.mxu0
    %768 = vmatprep.mubr.f32.mxu0 0.0
    %769 = vmatmul.mubr.f32.gmra.mxu0 %v89
    %v770 = vpop.f32.mrf.mxu0
    %v771 = vadd.f32 0.0, %v770
    %v772 = vpop.f32.mrf.mxu0
    %773 = vmatprep.mubr.f32.mxu0 0.0
    %774 = vmatmul.mubr.f32.gmra.mxu0 %v90
    %v775 = vpop.f32.mrf.mxu0
    %v776 = vadd.f32 0.0, %v775
    %v777 = vpop.f32.mrf.mxu0
    %778 = vmatprep.mubr.f32.mxu0 0.0
    %779 = vmatmul.mubr.f32.gmra.mxu0 %v91
    %v780 = vpop.f32.mrf.mxu0
    %v781 = vadd.f32 0.0, %v780
    %v782 = vpop.f32.mrf.mxu0
    %783 = vdwg.mxu0
    %v784 = vsub.f32 %v352, %v706
    %v785 = vsub.f32 %v357, %v711
    %v786 = vsub.f32 %v362, %v716
    %v787 = vsub.f32 %v367, %v721
    %v788 = vsub.f32 %v372, %v726
    %v789 = vsub.f32 %v377, %v731
    %v790 = vsub.f32 %v382, %v736
    %v791 = vsub.f32 %v387, %v741
    %v792 = vsub.f32 %v392, %v746
    %v793 = vsub.f32 %v397, %v751
    %v794 = vsub.f32 %v402, %v756
    %v795 = vsub.f32 %v407, %v761
    %v796 = vsub.f32 %v412, %v766
    %v797 = vsub.f32 %v417, %v771
    %v798 = vsub.f32 %v422, %v776
    %v799 = vsub.f32 %v427, %v781
    %s800 = scalar_lea.vmem [#allocation10], 128
    %801 = vst [vmem:[%s800] sm:$0xff] %v784
    %802 = vst [vmem:[%s800 + $0x8] sm:$0xff] %v785
    %803 = vst [vmem:[%s800 + $0x10] sm:$0xff] %v786
    %804 = vst [vmem:[%s800 + $0x18] sm:$0xff] %v787
    %805 = vst [vmem:[%s800 + $0x20] sm:$0xff] %v788
    %806 = vst [vmem:[%s800 + $0x28] sm:$0xff] %v789
    %807 = vst [vmem:[%s800 + $0x30] sm:$0xff] %v790
    %808 = vst [vmem:[%s800 + $0x38] sm:$0xff] %v791
    %809 = vst [vmem:[%s800 + $0x40] sm:$0xff] %v792
    %810 = vst [vmem:[%s800 + $0x48] sm:$0xff] %v793
    %811 = vst [vmem:[%s800 + $0x50] sm:$0xff] %v794
    %812 = vst [vmem:[%s800 + $0x58] sm:$0xff] %v795
    %813 = vst [vmem:[%s800 + $0x60] sm:$0xff] %v796
    %814 = vst [vmem:[%s800 + $0x68] sm:$0xff] %v797
    %815 = vst [vmem:[%s800 + $0x70] sm:$0xff] %v798
    %816 = vst [vmem:[%s800 + $0x78] sm:$0xff] %v799
    %v817 = vsub.f32 %v207, %v561
    %v818 = vsub.f32 %v212, %v566
    %v819 = vsub.f32 %v217, %v571
    %v820 = vsub.f32 %v222, %v576
    %v821 = vsub.f32 %v227, %v581
    %v822 = vsub.f32 %v232, %v586
    %v823 = vsub.f32 %v237, %v591
    %v824 = vsub.f32 %v242, %v596
    %v825 = vsub.f32 %v247, %v601
    %v826 = vsub.f32 %v252, %v606
    %v827 = vsub.f32 %v257, %v611
    %v828 = vsub.f32 %v262, %v616
    %v829 = vsub.f32 %v267, %v621
    %v830 = vsub.f32 %v272, %v626
    %v831 = vsub.f32 %v277, %v631
    %v832 = vsub.f32 %v282, %v636
    %s833 = scalar_lea.vmem [#allocation11], 128
    %834 = vst [vmem:[%s833] sm:$0xff] %v817
    %835 = vst [vmem:[%s833 + $0x8] sm:$0xff] %v818
    %836 = vst [vmem:[%s833 + $0x10] sm:$0xff] %v819
    %837 = vst [vmem:[%s833 + $0x18] sm:$0xff] %v820
    %838 = vst [vmem:[%s833 + $0x20] sm:$0xff] %v821
    %839 = vst [vmem:[%s833 + $0x28] sm:$0xff] %v822
    %840 = vst [vmem:[%s833 + $0x30] sm:$0xff] %v823
    %841 = vst [vmem:[%s833 + $0x38] sm:$0xff] %v824
    %842 = vst [vmem:[%s833 + $0x40] sm:$0xff] %v825
    %843 = vst [vmem:[%s833 + $0x48] sm:$0xff] %v826
    %844 = vst [vmem:[%s833 + $0x50] sm:$0xff] %v827
    %845 = vst [vmem:[%s833 + $0x58] sm:$0xff] %v828
    %846 = vst [vmem:[%s833 + $0x60] sm:$0xff] %v829
    %847 = vst [vmem:[%s833 + $0x68] sm:$0xff] %v830
    %848 = vst [vmem:[%s833 + $0x70] sm:$0xff] %v831
    %849 = vst [vmem:[%s833 + $0x78] sm:$0xff] %v832
    %850 = vmatprep.subr.mxu0 0.0
    %851 = vmatpush1.msra.mxu0 %v781
    %852 = vmatprep.subr.mxu0 0.0
    %853 = vmatpush1.msra.mxu0 %v776
    %854 = vmatprep.subr.mxu0 0.0
    %855 = vmatpush1.msra.mxu0 %v771
    %856 = vmatprep.subr.mxu0 0.0
    %857 = vmatpush1.msra.mxu0 %v766
    %858 = vmatprep.subr.mxu0 0.0
    %859 = vmatpush1.msra.mxu0 %v761
    %860 = vmatprep.subr.mxu0 0.0
    %861 = vmatpush1.msra.mxu0 %v756
    %862 = vmatprep.subr.mxu0 0.0
    %863 = vmatpush1.msra.mxu0 %v751
    %864 = vmatprep.subr.mxu0 0.0
    %865 = vmatpush1.msra.mxu0 %v746
    %866 = vmatprep.subr.mxu0 0.0
    %867 = vmatpush1.msra.mxu0 %v741
    %868 = vmatprep.subr.mxu0 0.0
    %869 = vmatpush1.msra.mxu0 %v736
    %870 = vmatprep.subr.mxu0 0.0
    %871 = vmatpush1.msra.mxu0 %v731
    %872 = vmatprep.subr.mxu0 0.0
    %873 = vmatpush1.msra.mxu0 %v726
    %874 = vmatprep.subr.mxu0 0.0
    %875 = vmatpush1.msra.mxu0 %v721
    %876 = vmatprep.subr.mxu0 0.0
    %877 = vmatpush1.msra.mxu0 %v716
    %878 = vmatprep.subr.mxu0 0.0
    %879 = vmatpush1.msra.mxu0 %v711
    %880 = vmatprep.subr.mxu0 0.0
    %881 = vmatpush1.msra.mxu0 %v706
    %882 = vmatprep.subr.mxu0 0.0
    %883 = vmatpush2.msra.mxu0 0.0
    %884 = vmatprep.subr.mxu0 0.0
    %885 = vmatpush2.msra.mxu0 0.0
    %886 = vmatprep.subr.mxu0 0.0
    %887 = vmatpush2.msra.mxu0 0.0
    %888 = vmatprep.subr.mxu0 0.0
    %889 = vmatpush2.msra.mxu0 0.0
    %890 = vmatprep.subr.mxu0 0.0
    %891 = vmatpush2.msra.mxu0 0.0
    %892 = vmatprep.subr.mxu0 0.0
    %893 = vmatpush2.msra.mxu0 0.0
    %894 = vmatprep.subr.mxu0 0.0
    %895 = vmatpush2.msra.mxu0 0.0
    %896 = vmatprep.subr.mxu0 0.0
    %897 = vmatpush2.msra.mxu0 0.0
    %898 = vmatprep.subr.mxu0 0.0
    %899 = vmatpush2.msra.mxu0 0.0
    %900 = vmatprep.subr.mxu0 0.0
    %901 = vmatpush2.msra.mxu0 0.0
    %902 = vmatprep.subr.mxu0 0.0
    %903 = vmatpush2.msra.mxu0 0.0
    %904 = vmatprep.subr.mxu0 0.0
    %905 = vmatpush2.msra.mxu0 0.0
    %906 = vmatprep.subr.mxu0 0.0
    %907 = vmatpush2.msra.mxu0 0.0
    %908 = vmatprep.subr.mxu0 0.0
    %909 = vmatpush2.msra.mxu0 0.0
    %910 = vmatprep.subr.mxu0 0.0
    %911 = vmatpush2.msra.mxu0 0.0
    %912 = vmatprep.subr.mxu0 0.0
    %913 = vmatpush2.msra.mxu0 0.0
    %914 = vmatprep.mubr.f32.mxu0 0.0
    %915 = vmatmul.mubr.f32.gmra.mxu0 %v92
    %v916 = vpop.f32.mrf.mxu0
    %v917 = vadd.f32 0.0, %v916
    %v918 = vpop.f32.mrf.mxu0
    %919 = vmatprep.mubr.f32.mxu0 0.0
    %920 = vmatmul.mubr.f32.gmra.mxu0 %v93
    %v921 = vpop.f32.mrf.mxu0
    %v922 = vadd.f32 0.0, %v921
    %v923 = vpop.f32.mrf.mxu0
    %924 = vmatprep.mubr.f32.mxu0 0.0
    %925 = vmatmul.mubr.f32.gmra.mxu0 %v94
    %v926 = vpop.f32.mrf.mxu0
    %v927 = vadd.f32 0.0, %v926
    %v928 = vpop.f32.mrf.mxu0
    %929 = vmatprep.mubr.f32.mxu0 0.0
    %930 = vmatmul.mubr.f32.gmra.mxu0 %v95
    %v931 = vpop.f32.mrf.mxu0
    %v932 = vadd.f32 0.0, %v931
    %v933 = vpop.f32.mrf.mxu0
    %934 = vmatprep.mubr.f32.mxu0 0.0
    %935 = vmatmul.mubr.f32.gmra.mxu0 %v96
    %v936 = vpop.f32.mrf.mxu0
    %v937 = vadd.f32 0.0, %v936
    %v938 = vpop.f32.mrf.mxu0
    %939 = vmatprep.mubr.f32.mxu0 0.0
    %940 = vmatmul.mubr.f32.gmra.mxu0 %v97
    %v941 = vpop.f32.mrf.mxu0
    %v942 = vadd.f32 0.0, %v941
    %v943 = vpop.f32.mrf.mxu0
    %944 = vmatprep.mubr.f32.mxu0 0.0
    %945 = vmatmul.mubr.f32.gmra.mxu0 %v98
    %v946 = vpop.f32.mrf.mxu0
    %v947 = vadd.f32 0.0, %v946
    %v948 = vpop.f32.mrf.mxu0
    %949 = vmatprep.mubr.f32.mxu0 0.0
    %950 = vmatmul.mubr.f32.gmra.mxu0 %v99
    %v951 = vpop.f32.mrf.mxu0
    %v952 = vadd.f32 0.0, %v951
    %v953 = vpop.f32.mrf.mxu0
    %954 = vmatprep.mubr.f32.mxu0 0.0
    %955 = vmatmul.mubr.f32.gmra.mxu0 %v100
    %v956 = vpop.f32.mrf.mxu0
    %v957 = vadd.f32 0.0, %v956
    %v958 = vpop.f32.mrf.mxu0
    %959 = vmatprep.mubr.f32.mxu0 0.0
    %960 = vmatmul.mubr.f32.gmra.mxu0 %v101
    %v961 = vpop.f32.mrf.mxu0
    %v962 = vadd.f32 0.0, %v961
    %v963 = vpop.f32.mrf.mxu0
    %964 = vmatprep.mubr.f32.mxu0 0.0
    %965 = vmatmul.mubr.f32.gmra.mxu0 %v102
    %v966 = vpop.f32.mrf.mxu0
    %v967 = vadd.f32 0.0, %v966
    %v968 = vpop.f32.mrf.mxu0
    %969 = vmatprep.mubr.f32.mxu0 0.0
    %970 = vmatmul.mubr.f32.gmra.mxu0 %v103
    %v971 = vpop.f32.mrf.mxu0
    %v972 = vadd.f32 0.0, %v971
    %v973 = vpop.f32.mrf.mxu0
    %974 = vmatprep.mubr.f32.mxu0 0.0
    %975 = vmatmul.mubr.f32.gmra.mxu0 %v104
    %v976 = vpop.f32.mrf.mxu0
    %v977 = vadd.f32 0.0, %v976
    %v978 = vpop.f32.mrf.mxu0
    %979 = vmatprep.mubr.f32.mxu0 0.0
    %980 = vmatmul.mubr.f32.gmra.mxu0 %v105
    %v981 = vpop.f32.mrf.mxu0
    %v982 = vadd.f32 0.0, %v981
    %v983 = vpop.f32.mrf.mxu0
    %984 = vmatprep.mubr.f32.mxu0 0.0
    %985 = vmatmul.mubr.f32.gmra.mxu0 %v106
    %v986 = vpop.f32.mrf.mxu0
    %v987 = vadd.f32 0.0, %v986
    %v988 = vpop.f32.mrf.mxu0
    %989 = vmatprep.mubr.f32.mxu0 0.0
    %990 = vmatmul.mubr.f32.gmra.mxu0 %v107
    %v991 = vpop.f32.mrf.mxu0
    %v992 = vadd.f32 0.0, %v991
    %v993 = vpop.f32.mrf.mxu0
    %994 = vdwg.mxu0
    %995 = vmatprep.subr.mxu0 0.0
    %996 = vmatpush1.msra.mxu0 %v992
    %997 = vmatprep.subr.mxu0 0.0
    %998 = vmatpush1.msra.mxu0 %v987
    %999 = vmatprep.subr.mxu0 0.0
    %1000 = vmatpush1.msra.mxu0 %v982
    %1001 = vmatprep.subr.mxu0 0.0
    %1002 = vmatpush1.msra.mxu0 %v977
    %1003 = vmatprep.subr.mxu0 0.0
    %1004 = vmatpush1.msra.mxu0 %v972
    %1005 = vmatprep.subr.mxu0 0.0
    %1006 = vmatpush1.msra.mxu0 %v967
    %1007 = vmatprep.subr.mxu0 0.0
    %1008 = vmatpush1.msra.mxu0 %v962
    %1009 = vmatprep.subr.mxu0 0.0
    %1010 = vmatpush1.msra.mxu0 %v957
    %1011 = vmatprep.subr.mxu0 0.0
    %1012 = vmatpush1.msra.mxu0 %v952
    %1013 = vmatprep.subr.mxu0 0.0
    %1014 = vmatpush1.msra.mxu0 %v947
    %1015 = vmatprep.subr.mxu0 0.0
    %1016 = vmatpush1.msra.mxu0 %v942
    %1017 = vmatprep.subr.mxu0 0.0
    %1018 = vmatpush1.msra.mxu0 %v937
    %1019 = vmatprep.subr.mxu0 0.0
    %1020 = vmatpush1.msra.mxu0 %v932
    %1021 = vmatprep.subr.mxu0 0.0
    %1022 = vmatpush1.msra.mxu0 %v927
    %1023 = vmatprep.subr.mxu0 0.0
    %1024 = vmatpush1.msra.mxu0 %v922
    %1025 = vmatprep.subr.mxu0 0.0
    %1026 = vmatpush1.msra.mxu0 %v917
    %1027 = vmatprep.subr.mxu0 0.0
    %1028 = vmatpush2.msra.mxu0 0.0
    %1029 = vmatprep.subr.mxu0 0.0
    %1030 = vmatpush2.msra.mxu0 0.0
    %1031 = vmatprep.subr.mxu0 0.0
    %1032 = vmatpush2.msra.mxu0 0.0
    %1033 = vmatprep.subr.mxu0 0.0
    %1034 = vmatpush2.msra.mxu0 0.0
    %1035 = vmatprep.subr.mxu0 0.0
    %1036 = vmatpush2.msra.mxu0 0.0
    %1037 = vmatprep.subr.mxu0 0.0
    %1038 = vmatpush2.msra.mxu0 0.0
    %1039 = vmatprep.subr.mxu0 0.0
    %1040 = vmatpush2.msra.mxu0 0.0
    %1041 = vmatprep.subr.mxu0 0.0
    %1042 = vmatpush2.msra.mxu0 0.0
    %1043 = vmatprep.subr.mxu0 0.0
    %1044 = vmatpush2.msra.mxu0 0.0
    %1045 = vmatprep.subr.mxu0 0.0
    %1046 = vmatpush2.msra.mxu0 0.0
    %1047 = vmatprep.subr.mxu0 0.0
    %1048 = vmatpush2.msra.mxu0 0.0
    %1049 = vmatprep.subr.mxu0 0.0
    %1050 = vmatpush2.msra.mxu0 0.0
    %1051 = vmatprep.subr.mxu0 0.0
    %1052 = vmatpush2.msra.mxu0 0.0
    %1053 = vmatprep.subr.mxu0 0.0
    %1054 = vmatpush2.msra.mxu0 0.0
    %1055 = vmatprep.subr.mxu0 0.0
    %1056 = vmatpush2.msra.mxu0 0.0
    %1057 = vmatprep.subr.mxu0 0.0
    %1058 = vmatpush2.msra.mxu0 0.0
    %1059 = vmatprep.mubr.f32.mxu0 0.0
    %1060 = vmatmul.mubr.f32.gmra.mxu0 %v76
    %v1061 = vpop.f32.mrf.mxu0
    %v1062 = vadd.f32 0.0, %v1061
    %v1063 = vpop.f32.mrf.mxu0
    %1064 = vmatprep.mubr.f32.mxu0 0.0
    %1065 = vmatmul.mubr.f32.gmra.mxu0 %v77
    %v1066 = vpop.f32.mrf.mxu0
    %v1067 = vadd.f32 0.0, %v1066
    %v1068 = vpop.f32.mrf.mxu0
    %1069 = vmatprep.mubr.f32.mxu0 0.0
    %1070 = vmatmul.mubr.f32.gmra.mxu0 %v78
    %v1071 = vpop.f32.mrf.mxu0
    %v1072 = vadd.f32 0.0, %v1071
    %v1073 = vpop.f32.mrf.mxu0
    %1074 = vmatprep.mubr.f32.mxu0 0.0
    %1075 = vmatmul.mubr.f32.gmra.mxu0 %v79
    %v1076 = vpop.f32.mrf.mxu0
    %v1077 = vadd.f32 0.0, %v1076
    %v1078 = vpop.f32.mrf.mxu0
    %1079 = vmatprep.mubr.f32.mxu0 0.0
    %1080 = vmatmul.mubr.f32.gmra.mxu0 %v80
    %v1081 = vpop.f32.mrf.mxu0
    %v1082 = vadd.f32 0.0, %v1081
    %v1083 = vpop.f32.mrf.mxu0
    %1084 = vmatprep.mubr.f32.mxu0 0.0
    %1085 = vmatmul.mubr.f32.gmra.mxu0 %v81
    %v1086 = vpop.f32.mrf.mxu0
    %v1087 = vadd.f32 0.0, %v1086
    %v1088 = vpop.f32.mrf.mxu0
    %1089 = vmatprep.mubr.f32.mxu0 0.0
    %1090 = vmatmul.mubr.f32.gmra.mxu0 %v82
    %v1091 = vpop.f32.mrf.mxu0
    %v1092 = vadd.f32 0.0, %v1091
    %v1093 = vpop.f32.mrf.mxu0
    %1094 = vmatprep.mubr.f32.mxu0 0.0
    %1095 = vmatmul.mubr.f32.gmra.mxu0 %v83
    %v1096 = vpop.f32.mrf.mxu0
    %v1097 = vadd.f32 0.0, %v1096
    %v1098 = vpop.f32.mrf.mxu0
    %1099 = vmatprep.mubr.f32.mxu0 0.0
    %1100 = vmatmul.mubr.f32.gmra.mxu0 %v84
    %v1101 = vpop.f32.mrf.mxu0
    %v1102 = vadd.f32 0.0, %v1101
    %v1103 = vpop.f32.mrf.mxu0
    %1104 = vmatprep.mubr.f32.mxu0 0.0
    %1105 = vmatmul.mubr.f32.gmra.mxu0 %v85
    %v1106 = vpop.f32.mrf.mxu0
    %v1107 = vadd.f32 0.0, %v1106
    %v1108 = vpop.f32.mrf.mxu0
    %1109 = vmatprep.mubr.f32.mxu0 0.0
    %1110 = vmatmul.mubr.f32.gmra.mxu0 %v86
    %v1111 = vpop.f32.mrf.mxu0
    %v1112 = vadd.f32 0.0, %v1111
    %v1113 = vpop.f32.mrf.mxu0
    %1114 = vmatprep.mubr.f32.mxu0 0.0
    %1115 = vmatmul.mubr.f32.gmra.mxu0 %v87
    %v1116 = vpop.f32.mrf.mxu0
    %v1117 = vadd.f32 0.0, %v1116
    %v1118 = vpop.f32.mrf.mxu0
    %1119 = vmatprep.mubr.f32.mxu0 0.0
    %1120 = vmatmul.mubr.f32.gmra.mxu0 %v88
    %v1121 = vpop.f32.mrf.mxu0
    %v1122 = vadd.f32 0.0, %v1121
    %v1123 = vpop.f32.mrf.mxu0
    %1124 = vmatprep.mubr.f32.mxu0 0.0
    %1125 = vmatmul.mubr.f32.gmra.mxu0 %v89
    %v1126 = vpop.f32.mrf.mxu0
    %v1127 = vadd.f32 0.0, %v1126
    %v1128 = vpop.f32.mrf.mxu0
    %1129 = vmatprep.mubr.f32.mxu0 0.0
    %1130 = vmatmul.mubr.f32.gmra.mxu0 %v90
    %v1131 = vpop.f32.mrf.mxu0
    %v1132 = vadd.f32 0.0, %v1131
    %v1133 = vpop.f32.mrf.mxu0
    %1134 = vmatprep.mubr.f32.mxu0 0.0
    %1135 = vmatmul.mubr.f32.gmra.mxu0 %v91
    %v1136 = vpop.f32.mrf.mxu0
    %v1137 = vadd.f32 0.0, %v1136
    %v1138 = vpop.f32.mrf.mxu0
    %1139 = vdwg.mxu0
    %1140 = vmatprep.subr.mxu0 0.0
    %1141 = vmatpush1.msra.mxu0 %v1137
    %1142 = vmatprep.subr.mxu0 0.0
    %1143 = vmatpush1.msra.mxu0 %v1132
    %1144 = vmatprep.subr.mxu0 0.0
    %1145 = vmatpush1.msra.mxu0 %v1127
    %1146 = vmatprep.subr.mxu0 0.0
    %1147 = vmatpush1.msra.mxu0 %v1122
    %1148 = vmatprep.subr.mxu0 0.0
    %1149 = vmatpush1.msra.mxu0 %v1117
    %1150 = vmatprep.subr.mxu0 0.0
    %1151 = vmatpush1.msra.mxu0 %v1112
    %1152 = vmatprep.subr.mxu0 0.0
    %1153 = vmatpush1.msra.mxu0 %v1107
    %1154 = vmatprep.subr.mxu0 0.0
    %1155 = vmatpush1.msra.mxu0 %v1102
    %1156 = vmatprep.subr.mxu0 0.0
    %1157 = vmatpush1.msra.mxu0 %v1097
    %1158 = vmatprep.subr.mxu0 0.0
    %1159 = vmatpush1.msra.mxu0 %v1092
    %1160 = vmatprep.subr.mxu0 0.0
    %1161 = vmatpush1.msra.mxu0 %v1087
    %1162 = vmatprep.subr.mxu0 0.0
    %1163 = vmatpush1.msra.mxu0 %v1082
    %1164 = vmatprep.subr.mxu0 0.0
    %1165 = vmatpush1.msra.mxu0 %v1077
    %1166 = vmatprep.subr.mxu0 0.0
    %1167 = vmatpush1.msra.mxu0 %v1072
    %1168 = vmatprep.subr.mxu0 0.0
    %1169 = vmatpush1.msra.mxu0 %v1067
    %1170 = vmatprep.subr.mxu0 0.0
    %1171 = vmatpush1.msra.mxu0 %v1062
    %1172 = vmatprep.subr.mxu0 0.0
    %1173 = vmatpush2.msra.mxu0 0.0
    %1174 = vmatprep.subr.mxu0 0.0
    %1175 = vmatpush2.msra.mxu0 0.0
    %1176 = vmatprep.subr.mxu0 0.0
    %1177 = vmatpush2.msra.mxu0 0.0
    %1178 = vmatprep.subr.mxu0 0.0
    %1179 = vmatpush2.msra.mxu0 0.0
    %1180 = vmatprep.subr.mxu0 0.0
    %1181 = vmatpush2.msra.mxu0 0.0
    %1182 = vmatprep.subr.mxu0 0.0
    %1183 = vmatpush2.msra.mxu0 0.0
    %1184 = vmatprep.subr.mxu0 0.0
    %1185 = vmatpush2.msra.mxu0 0.0
    %1186 = vmatprep.subr.mxu0 0.0
    %1187 = vmatpush2.msra.mxu0 0.0
    %1188 = vmatprep.subr.mxu0 0.0
    %1189 = vmatpush2.msra.mxu0 0.0
    %1190 = vmatprep.subr.mxu0 0.0
    %1191 = vmatpush2.msra.mxu0 0.0
    %1192 = vmatprep.subr.mxu0 0.0
    %1193 = vmatpush2.msra.mxu0 0.0
    %1194 = vmatprep.subr.mxu0 0.0
    %1195 = vmatpush2.msra.mxu0 0.0
    %1196 = vmatprep.subr.mxu0 0.0
    %1197 = vmatpush2.msra.mxu0 0.0
    %1198 = vmatprep.subr.mxu0 0.0
    %1199 = vmatpush2.msra.mxu0 0.0
    %1200 = vmatprep.subr.mxu0 0.0
    %1201 = vmatpush2.msra.mxu0 0.0
    %1202 = vmatprep.subr.mxu0 0.0
    %1203 = vmatpush2.msra.mxu0 0.0
    %1204 = vmatprep.mubr.f32.mxu0 0.0
    %1205 = vmatmul.mubr.f32.gmra.mxu0 %v92
    %v1206 = vpop.f32.mrf.mxu0
    %v1207 = vadd.f32 0.0, %v1206
    %v1208 = vpop.f32.mrf.mxu0
    %1209 = vmatprep.mubr.f32.mxu0 0.0
    %1210 = vmatmul.mubr.f32.gmra.mxu0 %v93
    %v1211 = vpop.f32.mrf.mxu0
    %v1212 = vadd.f32 0.0, %v1211
    %v1213 = vpop.f32.mrf.mxu0
    %1214 = vmatprep.mubr.f32.mxu0 0.0
    %1215 = vmatmul.mubr.f32.gmra.mxu0 %v94
    %v1216 = vpop.f32.mrf.mxu0
    %v1217 = vadd.f32 0.0, %v1216
    %v1218 = vpop.f32.mrf.mxu0
    %1219 = vmatprep.mubr.f32.mxu0 0.0
    %1220 = vmatmul.mubr.f32.gmra.mxu0 %v95
    %v1221 = vpop.f32.mrf.mxu0
    %v1222 = vadd.f32 0.0, %v1221
    %v1223 = vpop.f32.mrf.mxu0
    %1224 = vmatprep.mubr.f32.mxu0 0.0
    %1225 = vmatmul.mubr.f32.gmra.mxu0 %v96
    %v1226 = vpop.f32.mrf.mxu0
    %v1227 = vadd.f32 0.0, %v1226
    %v1228 = vpop.f32.mrf.mxu0
    %1229 = vmatprep.mubr.f32.mxu0 0.0
    %1230 = vmatmul.mubr.f32.gmra.mxu0 %v97
    %v1231 = vpop.f32.mrf.mxu0
    %v1232 = vadd.f32 0.0, %v1231
    %v1233 = vpop.f32.mrf.mxu0
    %1234 = vmatprep.mubr.f32.mxu0 0.0
    %1235 = vmatmul.mubr.f32.gmra.mxu0 %v98
    %v1236 = vpop.f32.mrf.mxu0
    %v1237 = vadd.f32 0.0, %v1236
    %v1238 = vpop.f32.mrf.mxu0
    %1239 = vmatprep.mubr.f32.mxu0 0.0
    %1240 = vmatmul.mubr.f32.gmra.mxu0 %v99
    %v1241 = vpop.f32.mrf.mxu0
    %v1242 = vadd.f32 0.0, %v1241
    %v1243 = vpop.f32.mrf.mxu0
    %1244 = vmatprep.mubr.f32.mxu0 0.0
    %1245 = vmatmul.mubr.f32.gmra.mxu0 %v100
    %v1246 = vpop.f32.mrf.mxu0
    %v1247 = vadd.f32 0.0, %v1246
    %v1248 = vpop.f32.mrf.mxu0
    %1249 = vmatprep.mubr.f32.mxu0 0.0
    %1250 = vmatmul.mubr.f32.gmra.mxu0 %v101
    %v1251 = vpop.f32.mrf.mxu0
    %v1252 = vadd.f32 0.0, %v1251
    %v1253 = vpop.f32.mrf.mxu0
    %1254 = vmatprep.mubr.f32.mxu0 0.0
    %1255 = vmatmul.mubr.f32.gmra.mxu0 %v102
    %v1256 = vpop.f32.mrf.mxu0
    %v1257 = vadd.f32 0.0, %v1256
    %v1258 = vpop.f32.mrf.mxu0
    %1259 = vmatprep.mubr.f32.mxu0 0.0
    %1260 = vmatmul.mubr.f32.gmra.mxu0 %v103
    %v1261 = vpop.f32.mrf.mxu0
    %v1262 = vadd.f32 0.0, %v1261
    %v1263 = vpop.f32.mrf.mxu0
    %1264 = vmatprep.mubr.f32.mxu0 0.0
    %1265 = vmatmul.mubr.f32.gmra.mxu0 %v104
    %v1266 = vpop.f32.mrf.mxu0
    %v1267 = vadd.f32 0.0, %v1266
    %v1268 = vpop.f32.mrf.mxu0
    %1269 = vmatprep.mubr.f32.mxu0 0.0
    %1270 = vmatmul.mubr.f32.gmra.mxu0 %v105
    %v1271 = vpop.f32.mrf.mxu0
    %v1272 = vadd.f32 0.0, %v1271
    %v1273 = vpop.f32.mrf.mxu0
    %1274 = vmatprep.mubr.f32.mxu0 0.0
    %1275 = vmatmul.mubr.f32.gmra.mxu0 %v106
    %v1276 = vpop.f32.mrf.mxu0
    %v1277 = vadd.f32 0.0, %v1276
    %v1278 = vpop.f32.mrf.mxu0
    %1279 = vmatprep.mubr.f32.mxu0 0.0
    %1280 = vmatmul.mubr.f32.gmra.mxu0 %v107
    %v1281 = vpop.f32.mrf.mxu0
    %v1282 = vadd.f32 0.0, %v1281
    %v1283 = vpop.f32.mrf.mxu0
    %1284 = vdwg.mxu0
    %1285 = vmatprep.subr.mxu0 0.0
    %1286 = vmatpush1.msra.mxu0 %v1282
    %1287 = vmatprep.subr.mxu0 0.0
    %1288 = vmatpush1.msra.mxu0 %v1277
    %1289 = vmatprep.subr.mxu0 0.0
    %1290 = vmatpush1.msra.mxu0 %v1272
    %1291 = vmatprep.subr.mxu0 0.0
    %1292 = vmatpush1.msra.mxu0 %v1267
    %1293 = vmatprep.subr.mxu0 0.0
    %1294 = vmatpush1.msra.mxu0 %v1262
    %1295 = vmatprep.subr.mxu0 0.0
    %1296 = vmatpush1.msra.mxu0 %v1257
    %1297 = vmatprep.subr.mxu0 0.0
    %1298 = vmatpush1.msra.mxu0 %v1252
    %1299 = vmatprep.subr.mxu0 0.0
    %1300 = vmatpush1.msra.mxu0 %v1247
    %1301 = vmatprep.subr.mxu0 0.0
    %1302 = vmatpush1.msra.mxu0 %v1242
    %1303 = vmatprep.subr.mxu0 0.0
    %1304 = vmatpush1.msra.mxu0 %v1237
    %1305 = vmatprep.subr.mxu0 0.0
    %1306 = vmatpush1.msra.mxu0 %v1232
    %1307 = vmatprep.subr.mxu0 0.0
    %1308 = vmatpush1.msra.mxu0 %v1227
    %1309 = vmatprep.subr.mxu0 0.0
    %1310 = vmatpush1.msra.mxu0 %v1222
    %1311 = vmatprep.subr.mxu0 0.0
    %1312 = vmatpush1.msra.mxu0 %v1217
    %1313 = vmatprep.subr.mxu0 0.0
    %1314 = vmatpush1.msra.mxu0 %v1212
    %1315 = vmatprep.subr.mxu0 0.0
    %1316 = vmatpush1.msra.mxu0 %v1207
    %1317 = vmatprep.subr.mxu0 0.0
    %1318 = vmatpush2.msra.mxu0 0.0
    %1319 = vmatprep.subr.mxu0 0.0
    %1320 = vmatpush2.msra.mxu0 0.0
    %1321 = vmatprep.subr.mxu0 0.0
    %1322 = vmatpush2.msra.mxu0 0.0
    %1323 = vmatprep.subr.mxu0 0.0
    %1324 = vmatpush2.msra.mxu0 0.0
    %1325 = vmatprep.subr.mxu0 0.0
    %1326 = vmatpush2.msra.mxu0 0.0
    %1327 = vmatprep.subr.mxu0 0.0
    %1328 = vmatpush2.msra.mxu0 0.0
    %1329 = vmatprep.subr.mxu0 0.0
    %1330 = vmatpush2.msra.mxu0 0.0
    %1331 = vmatprep.subr.mxu0 0.0
    %1332 = vmatpush2.msra.mxu0 0.0
    %1333 = vmatprep.subr.mxu0 0.0
    %1334 = vmatpush2.msra.mxu0 0.0
    %1335 = vmatprep.subr.mxu0 0.0
    %1336 = vmatpush2.msra.mxu0 0.0
    %1337 = vmatprep.subr.mxu0 0.0
    %1338 = vmatpush2.msra.mxu0 0.0
    %1339 = vmatprep.subr.mxu0 0.0
    %1340 = vmatpush2.msra.mxu0 0.0
    %1341 = vmatprep.subr.mxu0 0.0
    %1342 = vmatpush2.msra.mxu0 0.0
    %1343 = vmatprep.subr.mxu0 0.0
    %1344 = vmatpush2.msra.mxu0 0.0
    %1345 = vmatprep.subr.mxu0 0.0
    %1346 = vmatpush2.msra.mxu0 0.0
    %1347 = vmatprep.subr.mxu0 0.0
    %1348 = vmatpush2.msra.mxu0 0.0
    %1349 = vmatprep.mubr.f32.mxu0 0.0
    %1350 = vmatmul.mubr.f32.gmra.mxu0 %v76
    %v1351 = vpop.f32.mrf.mxu0
    %v1352 = vadd.f32 0.0, %v1351
    %v1353 = vpop.f32.mrf.mxu0
    %1354 = vmatprep.mubr.f32.mxu0 0.0
    %1355 = vmatmul.mubr.f32.gmra.mxu0 %v77
    %v1356 = vpop.f32.mrf.mxu0
    %v1357 = vadd.f32 0.0, %v1356
    %v1358 = vpop.f32.mrf.mxu0
    %1359 = vmatprep.mubr.f32.mxu0 0.0
    %1360 = vmatmul.mubr.f32.gmra.mxu0 %v78
    %v1361 = vpop.f32.mrf.mxu0
    %v1362 = vadd.f32 0.0, %v1361
    %v1363 = vpop.f32.mrf.mxu0
    %1364 = vmatprep.mubr.f32.mxu0 0.0
    %1365 = vmatmul.mubr.f32.gmra.mxu0 %v79
    %v1366 = vpop.f32.mrf.mxu0
    %v1367 = vadd.f32 0.0, %v1366
    %v1368 = vpop.f32.mrf.mxu0
    %1369 = vmatprep.mubr.f32.mxu0 0.0
    %1370 = vmatmul.mubr.f32.gmra.mxu0 %v80
    %v1371 = vpop.f32.mrf.mxu0
    %v1372 = vadd.f32 0.0, %v1371
    %v1373 = vpop.f32.mrf.mxu0
    %1374 = vmatprep.mubr.f32.mxu0 0.0
    %1375 = vmatmul.mubr.f32.gmra.mxu0 %v81
    %v1376 = vpop.f32.mrf.mxu0
    %v1377 = vadd.f32 0.0, %v1376
    %v1378 = vpop.f32.mrf.mxu0
    %1379 = vmatprep.mubr.f32.mxu0 0.0
    %1380 = vmatmul.mubr.f32.gmra.mxu0 %v82
    %v1381 = vpop.f32.mrf.mxu0
    %v1382 = vadd.f32 0.0, %v1381
    %v1383 = vpop.f32.mrf.mxu0
    %1384 = vmatprep.mubr.f32.mxu0 0.0
    %1385 = vmatmul.mubr.f32.gmra.mxu0 %v83
    %v1386 = vpop.f32.mrf.mxu0
    %v1387 = vadd.f32 0.0, %v1386
    %v1388 = vpop.f32.mrf.mxu0
    %1389 = vmatprep.mubr.f32.mxu0 0.0
    %1390 = vmatmul.mubr.f32.gmra.mxu0 %v84
    %v1391 = vpop.f32.mrf.mxu0
    %v1392 = vadd.f32 0.0, %v1391
    %v1393 = vpop.f32.mrf.mxu0
    %1394 = vmatprep.mubr.f32.mxu0 0.0
    %1395 = vmatmul.mubr.f32.gmra.mxu0 %v85
    %v1396 = vpop.f32.mrf.mxu0
    %v1397 = vadd.f32 0.0, %v1396
    %v1398 = vpop.f32.mrf.mxu0
    %1399 = vmatprep.mubr.f32.mxu0 0.0
    %1400 = vmatmul.mubr.f32.gmra.mxu0 %v86
    %v1401 = vpop.f32.mrf.mxu0
    %v1402 = vadd.f32 0.0, %v1401
    %v1403 = vpop.f32.mrf.mxu0
    %1404 = vmatprep.mubr.f32.mxu0 0.0
    %1405 = vmatmul.mubr.f32.gmra.mxu0 %v87
    %v1406 = vpop.f32.mrf.mxu0
    %v1407 = vadd.f32 0.0, %v1406
    %v1408 = vpop.f32.mrf.mxu0
    %1409 = vmatprep.mubr.f32.mxu0 0.0
    %1410 = vmatmul.mubr.f32.gmra.mxu0 %v88
    %v1411 = vpop.f32.mrf.mxu0
    %v1412 = vadd.f32 0.0, %v1411
    %v1413 = vpop.f32.mrf.mxu0
    %1414 = vmatprep.mubr.f32.mxu0 0.0
    %1415 = vmatmul.mubr.f32.gmra.mxu0 %v89
    %v1416 = vpop.f32.mrf.mxu0
    %v1417 = vadd.f32 0.0, %v1416
    %v1418 = vpop.f32.mrf.mxu0
    %1419 = vmatprep.mubr.f32.mxu0 0.0
    %1420 = vmatmul.mubr.f32.gmra.mxu0 %v90
    %v1421 = vpop.f32.mrf.mxu0
    %v1422 = vadd.f32 0.0, %v1421
    %v1423 = vpop.f32.mrf.mxu0
    %1424 = vmatprep.mubr.f32.mxu0 0.0
    %1425 = vmatmul.mubr.f32.gmra.mxu0 %v91
    %v1426 = vpop.f32.mrf.mxu0
    %v1427 = vadd.f32 0.0, %v1426
    %v1428 = vpop.f32.mrf.mxu0
    %1429 = vdwg.mxu0
    %v1430 = vsub.f32 %v706, %v1352
    %v1431 = vsub.f32 %v711, %v1357
    %v1432 = vsub.f32 %v716, %v1362
    %v1433 = vsub.f32 %v721, %v1367
    %v1434 = vsub.f32 %v726, %v1372
    %v1435 = vsub.f32 %v731, %v1377
    %v1436 = vsub.f32 %v736, %v1382
    %v1437 = vsub.f32 %v741, %v1387
    %v1438 = vsub.f32 %v746, %v1392
    %v1439 = vsub.f32 %v751, %v1397
    %v1440 = vsub.f32 %v756, %v1402
    %v1441 = vsub.f32 %v761, %v1407
    %v1442 = vsub.f32 %v766, %v1412
    %v1443 = vsub.f32 %v771, %v1417
    %v1444 = vsub.f32 %v776, %v1422
    %v1445 = vsub.f32 %v781, %v1427
    %s1446 = scalar_lea.vmem [#allocation10], 256
    %1447 = vst [vmem:[%s1446] sm:$0xff] %v1430
    %1448 = vst [vmem:[%s1446 + $0x8] sm:$0xff] %v1431
    %1449 = vst [vmem:[%s1446 + $0x10] sm:$0xff] %v1432
    %1450 = vst [vmem:[%s1446 + $0x18] sm:$0xff] %v1433
    %1451 = vst [vmem:[%s1446 + $0x20] sm:$0xff] %v1434
    %1452 = vst [vmem:[%s1446 + $0x28] sm:$0xff] %v1435
    %1453 = vst [vmem:[%s1446 + $0x30] sm:$0xff] %v1436
    %1454 = vst [vmem:[%s1446 + $0x38] sm:$0xff] %v1437
    %1455 = vst [vmem:[%s1446 + $0x40] sm:$0xff] %v1438
    %1456 = vst [vmem:[%s1446 + $0x48] sm:$0xff] %v1439
    %1457 = vst [vmem:[%s1446 + $0x50] sm:$0xff] %v1440
    %1458 = vst [vmem:[%s1446 + $0x58] sm:$0xff] %v1441
    %1459 = vst [vmem:[%s1446 + $0x60] sm:$0xff] %v1442
    %1460 = vst [vmem:[%s1446 + $0x68] sm:$0xff] %v1443
    %1461 = vst [vmem:[%s1446 + $0x70] sm:$0xff] %v1444
    %1462 = vst [vmem:[%s1446 + $0x78] sm:$0xff] %v1445
    %v1463 = vsub.f32 %v561, %v1207
    %v1464 = vsub.f32 %v566, %v1212
    %v1465 = vsub.f32 %v571, %v1217
    %v1466 = vsub.f32 %v576, %v1222
    %v1467 = vsub.f32 %v581, %v1227
    %v1468 = vsub.f32 %v586, %v1232
    %v1469 = vsub.f32 %v591, %v1237
    %v1470 = vsub.f32 %v596, %v1242
    %v1471 = vsub.f32 %v601, %v1247
    %v1472 = vsub.f32 %v606, %v1252
    %v1473 = vsub.f32 %v611, %v1257
    %v1474 = vsub.f32 %v616, %v1262
    %v1475 = vsub.f32 %v621, %v1267
    %v1476 = vsub.f32 %v626, %v1272
    %v1477 = vsub.f32 %v631, %v1277
    %v1478 = vsub.f32 %v636, %v1282
    %s1479 = scalar_lea.vmem [#allocation11], 256
    %1480 = vst [vmem:[%s1479] sm:$0xff] %v1463
    %1481 = vst [vmem:[%s1479 + $0x8] sm:$0xff] %v1464
    %1482 = vst [vmem:[%s1479 + $0x10] sm:$0xff] %v1465
    %1483 = vst [vmem:[%s1479 + $0x18] sm:$0xff] %v1466
    %1484 = vst [vmem:[%s1479 + $0x20] sm:$0xff] %v1467
    %1485 = vst [vmem:[%s1479 + $0x28] sm:$0xff] %v1468
    %1486 = vst [vmem:[%s1479 + $0x30] sm:$0xff] %v1469
    %1487 = vst [vmem:[%s1479 + $0x38] sm:$0xff] %v1470
    %1488 = vst [vmem:[%s1479 + $0x40] sm:$0xff] %v1471
    %1489 = vst [vmem:[%s1479 + $0x48] sm:$0xff] %v1472
    %1490 = vst [vmem:[%s1479 + $0x50] sm:$0xff] %v1473
    %1491 = vst [vmem:[%s1479 + $0x58] sm:$0xff] %v1474
    %1492 = vst [vmem:[%s1479 + $0x60] sm:$0xff] %v1475
    %1493 = vst [vmem:[%s1479 + $0x68] sm:$0xff] %v1476
    %1494 = vst [vmem:[%s1479 + $0x70] sm:$0xff] %v1477
    %1495 = vst [vmem:[%s1479 + $0x78] sm:$0xff] %v1478
    %1496 = vmatprep.subr.mxu0 0.0
    %1497 = vmatpush1.msra.mxu0 %v1427
    %1498 = vmatprep.subr.mxu0 0.0
    %1499 = vmatpush1.msra.mxu0 %v1422
    %1500 = vmatprep.subr.mxu0 0.0
    %1501 = vmatpush1.msra.mxu0 %v1417
    %1502 = vmatprep.subr.mxu0 0.0
    %1503 = vmatpush1.msra.mxu0 %v1412
    %1504 = vmatprep.subr.mxu0 0.0
    %1505 = vmatpush1.msra.mxu0 %v1407
    %1506 = vmatprep.subr.mxu0 0.0
    %1507 = vmatpush1.msra.mxu0 %v1402
    %1508 = vmatprep.subr.mxu0 0.0
    %1509 = vmatpush1.msra.mxu0 %v1397
    %1510 = vmatprep.subr.mxu0 0.0
    %1511 = vmatpush1.msra.mxu0 %v1392
    %1512 = vmatprep.subr.mxu0 0.0
    %1513 = vmatpush1.msra.mxu0 %v1387
    %1514 = vmatprep.subr.mxu0 0.0
    %1515 = vmatpush1.msra.mxu0 %v1382
    %1516 = vmatprep.subr.mxu0 0.0
    %1517 = vmatpush1.msra.mxu0 %v1377
    %1518 = vmatprep.subr.mxu0 0.0
    %1519 = vmatpush1.msra.mxu0 %v1372
    %1520 = vmatprep.subr.mxu0 0.0
    %1521 = vmatpush1.msra.mxu0 %v1367
    %1522 = vmatprep.subr.mxu0 0.0
    %1523 = vmatpush1.msra.mxu0 %v1362
    %1524 = vmatprep.subr.mxu0 0.0
    %1525 = vmatpush1.msra.mxu0 %v1357
    %1526 = vmatprep.subr.mxu0 0.0
    %1527 = vmatpush1.msra.mxu0 %v1352
    %1528 = vmatprep.subr.mxu0 0.0
    %1529 = vmatpush2.msra.mxu0 0.0
    %1530 = vmatprep.subr.mxu0 0.0
    %1531 = vmatpush2.msra.mxu0 0.0
    %1532 = vmatprep.subr.mxu0 0.0
    %1533 = vmatpush2.msra.mxu0 0.0
    %1534 = vmatprep.subr.mxu0 0.0
    %1535 = vmatpush2.msra.mxu0 0.0
    %1536 = vmatprep.subr.mxu0 0.0
    %1537 = vmatpush2.msra.mxu0 0.0
    %1538 = vmatprep.subr.mxu0 0.0
    %1539 = vmatpush2.msra.mxu0 0.0
    %1540 = vmatprep.subr.mxu0 0.0
    %1541 = vmatpush2.msra.mxu0 0.0
    %1542 = vmatprep.subr.mxu0 0.0
    %1543 = vmatpush2.msra.mxu0 0.0
    %1544 = vmatprep.subr.mxu0 0.0
    %1545 = vmatpush2.msra.mxu0 0.0
    %1546 = vmatprep.subr.mxu0 0.0
    %1547 = vmatpush2.msra.mxu0 0.0
    %1548 = vmatprep.subr.mxu0 0.0
    %1549 = vmatpush2.msra.mxu0 0.0
    %1550 = vmatprep.subr.mxu0 0.0
    %1551 = vmatpush2.msra.mxu0 0.0
    %1552 = vmatprep.subr.mxu0 0.0
    %1553 = vmatpush2.msra.mxu0 0.0
    %1554 = vmatprep.subr.mxu0 0.0
    %1555 = vmatpush2.msra.mxu0 0.0
    %1556 = vmatprep.subr.mxu0 0.0
    %1557 = vmatpush2.msra.mxu0 0.0
    %1558 = vmatprep.subr.mxu0 0.0
    %1559 = vmatpush2.msra.mxu0 0.0
    %1560 = vmatprep.mubr.f32.mxu0 0.0
    %1561 = vmatmul.mubr.f32.gmra.mxu0 %v92
    %v1562 = vpop.f32.mrf.mxu0
    %v1563 = vadd.f32 0.0, %v1562
    %v1564 = vpop.f32.mrf.mxu0
    %1565 = vmatprep.mubr.f32.mxu0 0.0
    %1566 = vmatmul.mubr.f32.gmra.mxu0 %v93
    %v1567 = vpop.f32.mrf.mxu0
    %v1568 = vadd.f32 0.0, %v1567
    %v1569 = vpop.f32.mrf.mxu0
    %1570 = vmatprep.mubr.f32.mxu0 0.0
    %1571 = vmatmul.mubr.f32.gmra.mxu0 %v94
    %v1572 = vpop.f32.mrf.mxu0
    %v1573 = vadd.f32 0.0, %v1572
    %v1574 = vpop.f32.mrf.mxu0
    %1575 = vmatprep.mubr.f32.mxu0 0.0
    %1576 = vmatmul.mubr.f32.gmra.mxu0 %v95
    %v1577 = vpop.f32.mrf.mxu0
    %v1578 = vadd.f32 0.0, %v1577
    %v1579 = vpop.f32.mrf.mxu0
    %1580 = vmatprep.mubr.f32.mxu0 0.0
    %1581 = vmatmul.mubr.f32.gmra.mxu0 %v96
    %v1582 = vpop.f32.mrf.mxu0
    %v1583 = vadd.f32 0.0, %v1582
    %v1584 = vpop.f32.mrf.mxu0
    %1585 = vmatprep.mubr.f32.mxu0 0.0
    %1586 = vmatmul.mubr.f32.gmra.mxu0 %v97
    %v1587 = vpop.f32.mrf.mxu0
    %v1588 = vadd.f32 0.0, %v1587
    %v1589 = vpop.f32.mrf.mxu0
    %1590 = vmatprep.mubr.f32.mxu0 0.0
    %1591 = vmatmul.mubr.f32.gmra.mxu0 %v98
    %v1592 = vpop.f32.mrf.mxu0
    %v1593 = vadd.f32 0.0, %v1592
    %v1594 = vpop.f32.mrf.mxu0
    %1595 = vmatprep.mubr.f32.mxu0 0.0
    %1596 = vmatmul.mubr.f32.gmra.mxu0 %v99
    %v1597 = vpop.f32.mrf.mxu0
    %v1598 = vadd.f32 0.0, %v1597
    %v1599 = vpop.f32.mrf.mxu0
    %1600 = vmatprep.mubr.f32.mxu0 0.0
    %1601 = vmatmul.mubr.f32.gmra.mxu0 %v100
    %v1602 = vpop.f32.mrf.mxu0
    %v1603 = vadd.f32 0.0, %v1602
    %v1604 = vpop.f32.mrf.mxu0
    %1605 = vmatprep.mubr.f32.mxu0 0.0
    %1606 = vmatmul.mubr.f32.gmra.mxu0 %v101
    %v1607 = vpop.f32.mrf.mxu0
    %v1608 = vadd.f32 0.0, %v1607
    %v1609 = vpop.f32.mrf.mxu0
    %1610 = vmatprep.mubr.f32.mxu0 0.0
    %1611 = vmatmul.mubr.f32.gmra.mxu0 %v102
    %v1612 = vpop.f32.mrf.mxu0
    %v1613 = vadd.f32 0.0, %v1612
    %v1614 = vpop.f32.mrf.mxu0
    %1615 = vmatprep.mubr.f32.mxu0 0.0
    %1616 = vmatmul.mubr.f32.gmra.mxu0 %v103
    %v1617 = vpop.f32.mrf.mxu0
    %v1618 = vadd.f32 0.0, %v1617
    %v1619 = vpop.f32.mrf.mxu0
    %1620 = vmatprep.mubr.f32.mxu0 0.0
    %1621 = vmatmul.mubr.f32.gmra.mxu0 %v104
    %v1622 = vpop.f32.mrf.mxu0
    %v1623 = vadd.f32 0.0, %v1622
    %v1624 = vpop.f32.mrf.mxu0
    %1625 = vmatprep.mubr.f32.mxu0 0.0
    %1626 = vmatmul.mubr.f32.gmra.mxu0 %v105
    %v1627 = vpop.f32.mrf.mxu0
    %v1628 = vadd.f32 0.0, %v1627
    %v1629 = vpop.f32.mrf.mxu0
    %1630 = vmatprep.mubr.f32.mxu0 0.0
    %1631 = vmatmul.mubr.f32.gmra.mxu0 %v106
    %v1632 = vpop.f32.mrf.mxu0
    %v1633 = vadd.f32 0.0, %v1632
    %v1634 = vpop.f32.mrf.mxu0
    %1635 = vmatprep.mubr.f32.mxu0 0.0
    %1636 = vmatmul.mubr.f32.gmra.mxu0 %v107
    %v1637 = vpop.f32.mrf.mxu0
    %v1638 = vadd.f32 0.0, %v1637
    %v1639 = vpop.f32.mrf.mxu0
    %1640 = vdwg.mxu0
    %1641 = vmatprep.subr.mxu0 0.0
    %1642 = vmatpush1.msra.mxu0 %v1638
    %1643 = vmatprep.subr.mxu0 0.0
    %1644 = vmatpush1.msra.mxu0 %v1633
    %1645 = vmatprep.subr.mxu0 0.0
    %1646 = vmatpush1.msra.mxu0 %v1628
    %1647 = vmatprep.subr.mxu0 0.0
    %1648 = vmatpush1.msra.mxu0 %v1623
    %1649 = vmatprep.subr.mxu0 0.0
    %1650 = vmatpush1.msra.mxu0 %v1618
    %1651 = vmatprep.subr.mxu0 0.0
    %1652 = vmatpush1.msra.mxu0 %v1613
    %1653 = vmatprep.subr.mxu0 0.0
    %1654 = vmatpush1.msra.mxu0 %v1608
    %1655 = vmatprep.subr.mxu0 0.0
    %1656 = vmatpush1.msra.mxu0 %v1603
    %1657 = vmatprep.subr.mxu0 0.0
    %1658 = vmatpush1.msra.mxu0 %v1598
    %1659 = vmatprep.subr.mxu0 0.0
    %1660 = vmatpush1.msra.mxu0 %v1593
    %1661 = vmatprep.subr.mxu0 0.0
    %1662 = vmatpush1.msra.mxu0 %v1588
    %1663 = vmatprep.subr.mxu0 0.0
    %1664 = vmatpush1.msra.mxu0 %v1583
    %1665 = vmatprep.subr.mxu0 0.0
    %1666 = vmatpush1.msra.mxu0 %v1578
    %1667 = vmatprep.subr.mxu0 0.0
    %1668 = vmatpush1.msra.mxu0 %v1573
    %1669 = vmatprep.subr.mxu0 0.0
    %1670 = vmatpush1.msra.mxu0 %v1568
    %1671 = vmatprep.subr.mxu0 0.0
    %1672 = vmatpush1.msra.mxu0 %v1563
    %1673 = vmatprep.subr.mxu0 0.0
    %1674 = vmatpush2.msra.mxu0 0.0
    %1675 = vmatprep.subr.mxu0 0.0
    %1676 = vmatpush2.msra.mxu0 0.0
    %1677 = vmatprep.subr.mxu0 0.0
    %1678 = vmatpush2.msra.mxu0 0.0
    %1679 = vmatprep.subr.mxu0 0.0
    %1680 = vmatpush2.msra.mxu0 0.0
    %1681 = vmatprep.subr.mxu0 0.0
    %1682 = vmatpush2.msra.mxu0 0.0
    %1683 = vmatprep.subr.mxu0 0.0
    %1684 = vmatpush2.msra.mxu0 0.0
    %1685 = vmatprep.subr.mxu0 0.0
    %1686 = vmatpush2.msra.mxu0 0.0
    %1687 = vmatprep.subr.mxu0 0.0
    %1688 = vmatpush2.msra.mxu0 0.0
    %1689 = vmatprep.subr.mxu0 0.0
    %1690 = vmatpush2.msra.mxu0 0.0
    %1691 = vmatprep.subr.mxu0 0.0
    %1692 = vmatpush2.msra.mxu0 0.0
    %1693 = vmatprep.subr.mxu0 0.0
    %1694 = vmatpush2.msra.mxu0 0.0
    %1695 = vmatprep.subr.mxu0 0.0
    %1696 = vmatpush2.msra.mxu0 0.0
    %1697 = vmatprep.subr.mxu0 0.0
    %1698 = vmatpush2.msra.mxu0 0.0
    %1699 = vmatprep.subr.mxu0 0.0
    %1700 = vmatpush2.msra.mxu0 0.0
    %1701 = vmatprep.subr.mxu0 0.0
    %1702 = vmatpush2.msra.mxu0 0.0
    %1703 = vmatprep.subr.mxu0 0.0
    %1704 = vmatpush2.msra.mxu0 0.0
    %1705 = vmatprep.mubr.f32.mxu0 0.0
    %1706 = vmatmul.mubr.f32.gmra.mxu0 %v76
    %v1707 = vpop.f32.mrf.mxu0
    %v1708 = vadd.f32 0.0, %v1707
    %v1709 = vpop.f32.mrf.mxu0
    %1710 = vmatprep.mubr.f32.mxu0 0.0
    %1711 = vmatmul.mubr.f32.gmra.mxu0 %v77
    %v1712 = vpop.f32.mrf.mxu0
    %v1713 = vadd.f32 0.0, %v1712
    %v1714 = vpop.f32.mrf.mxu0
    %1715 = vmatprep.mubr.f32.mxu0 0.0
    %1716 = vmatmul.mubr.f32.gmra.mxu0 %v78
    %v1717 = vpop.f32.mrf.mxu0
    %v1718 = vadd.f32 0.0, %v1717
    %v1719 = vpop.f32.mrf.mxu0
    %1720 = vmatprep.mubr.f32.mxu0 0.0
    %1721 = vmatmul.mubr.f32.gmra.mxu0 %v79
    %v1722 = vpop.f32.mrf.mxu0
    %v1723 = vadd.f32 0.0, %v1722
    %v1724 = vpop.f32.mrf.mxu0
    %1725 = vmatprep.mubr.f32.mxu0 0.0
    %1726 = vmatmul.mubr.f32.gmra.mxu0 %v80
    %v1727 = vpop.f32.mrf.mxu0
    %v1728 = vadd.f32 0.0, %v1727
    %v1729 = vpop.f32.mrf.mxu0
    %1730 = vmatprep.mubr.f32.mxu0 0.0
    %1731 = vmatmul.mubr.f32.gmra.mxu0 %v81
    %v1732 = vpop.f32.mrf.mxu0
    %v1733 = vadd.f32 0.0, %v1732
    %v1734 = vpop.f32.mrf.mxu0
    %1735 = vmatprep.mubr.f32.mxu0 0.0
    %1736 = vmatmul.mubr.f32.gmra.mxu0 %v82
    %v1737 = vpop.f32.mrf.mxu0
    %v1738 = vadd.f32 0.0, %v1737
    %v1739 = vpop.f32.mrf.mxu0
    %1740 = vmatprep.mubr.f32.mxu0 0.0
    %1741 = vmatmul.mubr.f32.gmra.mxu0 %v83
    %v1742 = vpop.f32.mrf.mxu0
    %v1743 = vadd.f32 0.0, %v1742
    %v1744 = vpop.f32.mrf.mxu0
    %1745 = vmatprep.mubr.f32.mxu0 0.0
    %1746 = vmatmul.mubr.f32.gmra.mxu0 %v84
    %v1747 = vpop.f32.mrf.mxu0
    %v1748 = vadd.f32 0.0, %v1747
    %v1749 = vpop.f32.mrf.mxu0
    %1750 = vmatprep.mubr.f32.mxu0 0.0
    %1751 = vmatmul.mubr.f32.gmra.mxu0 %v85
    %v1752 = vpop.f32.mrf.mxu0
    %v1753 = vadd.f32 0.0, %v1752
    %v1754 = vpop.f32.mrf.mxu0
    %1755 = vmatprep.mubr.f32.mxu0 0.0
    %1756 = vmatmul.mubr.f32.gmra.mxu0 %v86
    %v1757 = vpop.f32.mrf.mxu0
    %v1758 = vadd.f32 0.0, %v1757
    %v1759 = vpop.f32.mrf.mxu0
    %1760 = vmatprep.mubr.f32.mxu0 0.0
    %1761 = vmatmul.mubr.f32.gmra.mxu0 %v87
    %v1762 = vpop.f32.mrf.mxu0
    %v1763 = vadd.f32 0.0, %v1762
    %v1764 = vpop.f32.mrf.mxu0
    %1765 = vmatprep.mubr.f32.mxu0 0.0
    %1766 = vmatmul.mubr.f32.gmra.mxu0 %v88
    %v1767 = vpop.f32.mrf.mxu0
    %v1768 = vadd.f32 0.0, %v1767
    %v1769 = vpop.f32.mrf.mxu0
    %1770 = vmatprep.mubr.f32.mxu0 0.0
    %1771 = vmatmul.mubr.f32.gmra.mxu0 %v89
    %v1772 = vpop.f32.mrf.mxu0
    %v1773 = vadd.f32 0.0, %v1772
    %v1774 = vpop.f32.mrf.mxu0
    %1775 = vmatprep.mubr.f32.mxu0 0.0
    %1776 = vmatmul.mubr.f32.gmra.mxu0 %v90
    %v1777 = vpop.f32.mrf.mxu0
    %v1778 = vadd.f32 0.0, %v1777
    %v1779 = vpop.f32.mrf.mxu0
    %1780 = vmatprep.mubr.f32.mxu0 0.0
    %1781 = vmatmul.mubr.f32.gmra.mxu0 %v91
    %v1782 = vpop.f32.mrf.mxu0
    %v1783 = vadd.f32 0.0, %v1782
    %v1784 = vpop.f32.mrf.mxu0
    %1785 = vdwg.mxu0
    %1786 = vmatprep.subr.mxu0 0.0
    %1787 = vmatpush1.msra.mxu0 %v1783
    %1788 = vmatprep.subr.mxu0 0.0
    %1789 = vmatpush1.msra.mxu0 %v1778
    %1790 = vmatprep.subr.mxu0 0.0
    %1791 = vmatpush1.msra.mxu0 %v1773
    %1792 = vmatprep.subr.mxu0 0.0
    %1793 = vmatpush1.msra.mxu0 %v1768
    %1794 = vmatprep.subr.mxu0 0.0
    %1795 = vmatpush1.msra.mxu0 %v1763
    %1796 = vmatprep.subr.mxu0 0.0
    %1797 = vmatpush1.msra.mxu0 %v1758
    %1798 = vmatprep.subr.mxu0 0.0
    %1799 = vmatpush1.msra.mxu0 %v1753
    %1800 = vmatprep.subr.mxu0 0.0
    %1801 = vmatpush1.msra.mxu0 %v1748
    %1802 = vmatprep.subr.mxu0 0.0
    %1803 = vmatpush1.msra.mxu0 %v1743
    %1804 = vmatprep.subr.mxu0 0.0
    %1805 = vmatpush1.msra.mxu0 %v1738
    %1806 = vmatprep.subr.mxu0 0.0
    %1807 = vmatpush1.msra.mxu0 %v1733
    %1808 = vmatprep.subr.mxu0 0.0
    %1809 = vmatpush1.msra.mxu0 %v1728
    %1810 = vmatprep.subr.mxu0 0.0
    %1811 = vmatpush1.msra.mxu0 %v1723
    %1812 = vmatprep.subr.mxu0 0.0
    %1813 = vmatpush1.msra.mxu0 %v1718
    %1814 = vmatprep.subr.mxu0 0.0
    %1815 = vmatpush1.msra.mxu0 %v1713
    %1816 = vmatprep.subr.mxu0 0.0
    %1817 = vmatpush1.msra.mxu0 %v1708
    %1818 = vmatprep.subr.mxu0 0.0
    %1819 = vmatpush2.msra.mxu0 0.0
    %1820 = vmatprep.subr.mxu0 0.0
    %1821 = vmatpush2.msra.mxu0 0.0
    %1822 = vmatprep.subr.mxu0 0.0
    %1823 = vmatpush2.msra.mxu0 0.0
    %1824 = vmatprep.subr.mxu0 0.0
    %1825 = vmatpush2.msra.mxu0 0.0
    %1826 = vmatprep.subr.mxu0 0.0
    %1827 = vmatpush2.msra.mxu0 0.0
    %1828 = vmatprep.subr.mxu0 0.0
    %1829 = vmatpush2.msra.mxu0 0.0
    %1830 = vmatprep.subr.mxu0 0.0
    %1831 = vmatpush2.msra.mxu0 0.0
    %1832 = vmatprep.subr.mxu0 0.0
    %1833 = vmatpush2.msra.mxu0 0.0
    %1834 = vmatprep.subr.mxu0 0.0
    %1835 = vmatpush2.msra.mxu0 0.0
    %1836 = vmatprep.subr.mxu0 0.0
    %1837 = vmatpush2.msra.mxu0 0.0
    %1838 = vmatprep.subr.mxu0 0.0
    %1839 = vmatpush2.msra.mxu0 0.0
    %1840 = vmatprep.subr.mxu0 0.0
    %1841 = vmatpush2.msra.mxu0 0.0
    %1842 = vmatprep.subr.mxu0 0.0
    %1843 = vmatpush2.msra.mxu0 0.0
    %1844 = vmatprep.subr.mxu0 0.0
    %1845 = vmatpush2.msra.mxu0 0.0
    %1846 = vmatprep.subr.mxu0 0.0
    %1847 = vmatpush2.msra.mxu0 0.0
    %1848 = vmatprep.subr.mxu0 0.0
    %1849 = vmatpush2.msra.mxu0 0.0
    %1850 = vmatprep.mubr.f32.mxu0 0.0
    %1851 = vmatmul.mubr.f32.gmra.mxu0 %v92
    %v1852 = vpop.f32.mrf.mxu0
    %v1853 = vadd.f32 0.0, %v1852
    %v1854 = vpop.f32.mrf.mxu0
    %1855 = vmatprep.mubr.f32.mxu0 0.0
    %1856 = vmatmul.mubr.f32.gmra.mxu0 %v93
    %v1857 = vpop.f32.mrf.mxu0
    %v1858 = vadd.f32 0.0, %v1857
    %v1859 = vpop.f32.mrf.mxu0
    %1860 = vmatprep.mubr.f32.mxu0 0.0
    %1861 = vmatmul.mubr.f32.gmra.mxu0 %v94
    %v1862 = vpop.f32.mrf.mxu0
    %v1863 = vadd.f32 0.0, %v1862
    %v1864 = vpop.f32.mrf.mxu0
    %1865 = vmatprep.mubr.f32.mxu0 0.0
    %1866 = vmatmul.mubr.f32.gmra.mxu0 %v95
    %v1867 = vpop.f32.mrf.mxu0
    %v1868 = vadd.f32 0.0, %v1867
    %v1869 = vpop.f32.mrf.mxu0
    %1870 = vmatprep.mubr.f32.mxu0 0.0
    %1871 = vmatmul.mubr.f32.gmra.mxu0 %v96
    %v1872 = vpop.f32.mrf.mxu0
    %v1873 = vadd.f32 0.0, %v1872
    %v1874 = vpop.f32.mrf.mxu0
    %1875 = vmatprep.mubr.f32.mxu0 0.0
    %1876 = vmatmul.mubr.f32.gmra.mxu0 %v97
    %v1877 = vpop.f32.mrf.mxu0
    %v1878 = vadd.f32 0.0, %v1877
    %v1879 = vpop.f32.mrf.mxu0
    %1880 = vmatprep.mubr.f32.mxu0 0.0
    %1881 = vmatmul.mubr.f32.gmra.mxu0 %v98
    %v1882 = vpop.f32.mrf.mxu0
    %v1883 = vadd.f32 0.0, %v1882
    %v1884 = vpop.f32.mrf.mxu0
    %1885 = vmatprep.mubr.f32.mxu0 0.0
    %1886 = vmatmul.mubr.f32.gmra.mxu0 %v99
    %v1887 = vpop.f32.mrf.mxu0
    %v1888 = vadd.f32 0.0, %v1887
    %v1889 = vpop.f32.mrf.mxu0
    %1890 = vmatprep.mubr.f32.mxu0 0.0
    %1891 = vmatmul.mubr.f32.gmra.mxu0 %v100
    %v1892 = vpop.f32.mrf.mxu0
    %v1893 = vadd.f32 0.0, %v1892
    %v1894 = vpop.f32.mrf.mxu0
    %1895 = vmatprep.mubr.f32.mxu0 0.0
    %1896 = vmatmul.mubr.f32.gmra.mxu0 %v101
    %v1897 = vpop.f32.mrf.mxu0
    %v1898 = vadd.f32 0.0, %v1897
    %v1899 = vpop.f32.mrf.mxu0
    %1900 = vmatprep.mubr.f32.mxu0 0.0
    %1901 = vmatmul.mubr.f32.gmra.mxu0 %v102
    %v1902 = vpop.f32.mrf.mxu0
    %v1903 = vadd.f32 0.0, %v1902
    %v1904 = vpop.f32.mrf.mxu0
    %1905 = vmatprep.mubr.f32.mxu0 0.0
    %1906 = vmatmul.mubr.f32.gmra.mxu0 %v103
    %v1907 = vpop.f32.mrf.mxu0
    %v1908 = vadd.f32 0.0, %v1907
    %v1909 = vpop.f32.mrf.mxu0
    %1910 = vmatprep.mubr.f32.mxu0 0.0
    %1911 = vmatmul.mubr.f32.gmra.mxu0 %v104
    %v1912 = vpop.f32.mrf.mxu0
    %v1913 = vadd.f32 0.0, %v1912
    %v1914 = vpop.f32.mrf.mxu0
    %1915 = vmatprep.mubr.f32.mxu0 0.0
    %1916 = vmatmul.mubr.f32.gmra.mxu0 %v105
    %v1917 = vpop.f32.mrf.mxu0
    %v1918 = vadd.f32 0.0, %v1917
    %v1919 = vpop.f32.mrf.mxu0
    %1920 = vmatprep.mubr.f32.mxu0 0.0
    %1921 = vmatmul.mubr.f32.gmra.mxu0 %v106
    %v1922 = vpop.f32.mrf.mxu0
    %v1923 = vadd.f32 0.0, %v1922
    %v1924 = vpop.f32.mrf.mxu0
    %1925 = vmatprep.mubr.f32.mxu0 0.0
    %1926 = vmatmul.mubr.f32.gmra.mxu0 %v107
    %v1927 = vpop.f32.mrf.mxu0
    %v1928 = vadd.f32 0.0, %v1927
    %v1929 = vpop.f32.mrf.mxu0
    %1930 = vdwg.mxu0
    %1931 = vmatprep.subr.mxu0 0.0
    %1932 = vmatpush1.msra.mxu0 %v1928
    %1933 = vmatprep.subr.mxu0 0.0
    %1934 = vmatpush1.msra.mxu0 %v1923
    %1935 = vmatprep.subr.mxu0 0.0
    %1936 = vmatpush1.msra.mxu0 %v1918
    %1937 = vmatprep.subr.mxu0 0.0
    %1938 = vmatpush1.msra.mxu0 %v1913
    %1939 = vmatprep.subr.mxu0 0.0
    %1940 = vmatpush1.msra.mxu0 %v1908
    %1941 = vmatprep.subr.mxu0 0.0
    %1942 = vmatpush1.msra.mxu0 %v1903
    %1943 = vmatprep.subr.mxu0 0.0
    %1944 = vmatpush1.msra.mxu0 %v1898
    %1945 = vmatprep.subr.mxu0 0.0
    %1946 = vmatpush1.msra.mxu0 %v1893
    %1947 = vmatprep.subr.mxu0 0.0
    %1948 = vmatpush1.msra.mxu0 %v1888
    %1949 = vmatprep.subr.mxu0 0.0
    %1950 = vmatpush1.msra.mxu0 %v1883
    %1951 = vmatprep.subr.mxu0 0.0
    %1952 = vmatpush1.msra.mxu0 %v1878
    %1953 = vmatprep.subr.mxu0 0.0
    %1954 = vmatpush1.msra.mxu0 %v1873
    %1955 = vmatprep.subr.mxu0 0.0
    %1956 = vmatpush1.msra.mxu0 %v1868
    %1957 = vmatprep.subr.mxu0 0.0
    %1958 = vmatpush1.msra.mxu0 %v1863
    %1959 = vmatprep.subr.mxu0 0.0
    %1960 = vmatpush1.msra.mxu0 %v1858
    %1961 = vmatprep.subr.mxu0 0.0
    %1962 = vmatpush1.msra.mxu0 %v1853
    %1963 = vmatprep.subr.mxu0 0.0
    %1964 = vmatpush2.msra.mxu0 0.0
    %1965 = vmatprep.subr.mxu0 0.0
    %1966 = vmatpush2.msra.mxu0 0.0
    %1967 = vmatprep.subr.mxu0 0.0
    %1968 = vmatpush2.msra.mxu0 0.0
    %1969 = vmatprep.subr.mxu0 0.0
    %1970 = vmatpush2.msra.mxu0 0.0
    %1971 = vmatprep.subr.mxu0 0.0
    %1972 = vmatpush2.msra.mxu0 0.0
    %1973 = vmatprep.subr.mxu0 0.0
    %1974 = vmatpush2.msra.mxu0 0.0
    %1975 = vmatprep.subr.mxu0 0.0
    %1976 = vmatpush2.msra.mxu0 0.0
    %1977 = vmatprep.subr.mxu0 0.0
    %1978 = vmatpush2.msra.mxu0 0.0
    %1979 = vmatprep.subr.mxu0 0.0
    %1980 = vmatpush2.msra.mxu0 0.0
    %1981 = vmatprep.subr.mxu0 0.0
    %1982 = vmatpush2.msra.mxu0 0.0
    %1983 = vmatprep.subr.mxu0 0.0
    %1984 = vmatpush2.msra.mxu0 0.0
    %1985 = vmatprep.subr.mxu0 0.0
    %1986 = vmatpush2.msra.mxu0 0.0
    %1987 = vmatprep.subr.mxu0 0.0
    %1988 = vmatpush2.msra.mxu0 0.0
    %1989 = vmatprep.subr.mxu0 0.0
    %1990 = vmatpush2.msra.mxu0 0.0
    %1991 = vmatprep.subr.mxu0 0.0
    %1992 = vmatpush2.msra.mxu0 0.0
    %1993 = vmatprep.subr.mxu0 0.0
    %1994 = vmatpush2.msra.mxu0 0.0
    %1995 = vmatprep.mubr.f32.mxu0 0.0
    %1996 = vmatmul.mubr.f32.gmra.mxu0 %v76
    %v1997 = vpop.f32.mrf.mxu0
    %v1998 = vadd.f32 0.0, %v1997
    %v1999 = vpop.f32.mrf.mxu0
    %2000 = vmatprep.mubr.f32.mxu0 0.0
    %2001 = vmatmul.mubr.f32.gmra.mxu0 %v77
    %v2002 = vpop.f32.mrf.mxu0
    %v2003 = vadd.f32 0.0, %v2002
    %v2004 = vpop.f32.mrf.mxu0
    %2005 = vmatprep.mubr.f32.mxu0 0.0
    %2006 = vmatmul.mubr.f32.gmra.mxu0 %v78
    %v2007 = vpop.f32.mrf.mxu0
    %v2008 = vadd.f32 0.0, %v2007
    %v2009 = vpop.f32.mrf.mxu0
    %2010 = vmatprep.mubr.f32.mxu0 0.0
    %2011 = vmatmul.mubr.f32.gmra.mxu0 %v79
    %v2012 = vpop.f32.mrf.mxu0
    %v2013 = vadd.f32 0.0, %v2012
    %v2014 = vpop.f32.mrf.mxu0
    %2015 = vmatprep.mubr.f32.mxu0 0.0
    %2016 = vmatmul.mubr.f32.gmra.mxu0 %v80
    %v2017 = vpop.f32.mrf.mxu0
    %v2018 = vadd.f32 0.0, %v2017
    %v2019 = vpop.f32.mrf.mxu0
    %2020 = vmatprep.mubr.f32.mxu0 0.0
    %2021 = vmatmul.mubr.f32.gmra.mxu0 %v81
    %v2022 = vpop.f32.mrf.mxu0
    %v2023 = vadd.f32 0.0, %v2022
    %v2024 = vpop.f32.mrf.mxu0
    %2025 = vmatprep.mubr.f32.mxu0 0.0
    %2026 = vmatmul.mubr.f32.gmra.mxu0 %v82
    %v2027 = vpop.f32.mrf.mxu0
    %v2028 = vadd.f32 0.0, %v2027
    %v2029 = vpop.f32.mrf.mxu0
    %2030 = vmatprep.mubr.f32.mxu0 0.0
    %2031 = vmatmul.mubr.f32.gmra.mxu0 %v83
    %v2032 = vpop.f32.mrf.mxu0
    %v2033 = vadd.f32 0.0, %v2032
    %v2034 = vpop.f32.mrf.mxu0
    %2035 = vmatprep.mubr.f32.mxu0 0.0
    %2036 = vmatmul.mubr.f32.gmra.mxu0 %v84
    %v2037 = vpop.f32.mrf.mxu0
    %v2038 = vadd.f32 0.0, %v2037
    %v2039 = vpop.f32.mrf.mxu0
    %2040 = vmatprep.mubr.f32.mxu0 0.0
    %2041 = vmatmul.mubr.f32.gmra.mxu0 %v85
    %v2042 = vpop.f32.mrf.mxu0
    %v2043 = vadd.f32 0.0, %v2042
    %v2044 = vpop.f32.mrf.mxu0
    %2045 = vmatprep.mubr.f32.mxu0 0.0
    %2046 = vmatmul.mubr.f32.gmra.mxu0 %v86
    %v2047 = vpop.f32.mrf.mxu0
    %v2048 = vadd.f32 0.0, %v2047
    %v2049 = vpop.f32.mrf.mxu0
    %2050 = vmatprep.mubr.f32.mxu0 0.0
    %2051 = vmatmul.mubr.f32.gmra.mxu0 %v87
    %v2052 = vpop.f32.mrf.mxu0
    %v2053 = vadd.f32 0.0, %v2052
    %v2054 = vpop.f32.mrf.mxu0
    %2055 = vmatprep.mubr.f32.mxu0 0.0
    %2056 = vmatmul.mubr.f32.gmra.mxu0 %v88
    %v2057 = vpop.f32.mrf.mxu0
    %v2058 = vadd.f32 0.0, %v2057
    %v2059 = vpop.f32.mrf.mxu0
    %2060 = vmatprep.mubr.f32.mxu0 0.0
    %2061 = vmatmul.mubr.f32.gmra.mxu0 %v89
    %v2062 = vpop.f32.mrf.mxu0
    %v2063 = vadd.f32 0.0, %v2062
    %v2064 = vpop.f32.mrf.mxu0
    %2065 = vmatprep.mubr.f32.mxu0 0.0
    %2066 = vmatmul.mubr.f32.gmra.mxu0 %v90
    %v2067 = vpop.f32.mrf.mxu0
    %v2068 = vadd.f32 0.0, %v2067
    %v2069 = vpop.f32.mrf.mxu0
    %2070 = vmatprep.mubr.f32.mxu0 0.0
    %2071 = vmatmul.mubr.f32.gmra.mxu0 %v91
    %v2072 = vpop.f32.mrf.mxu0
    %v2073 = vadd.f32 0.0, %v2072
    %v2074 = vpop.f32.mrf.mxu0
    %2075 = vdwg.mxu0
    %2076 = vmatprep.subr.mxu0 0.0
    %2077 = vmatpush1.msra.mxu0 %v2073
    %2078 = vmatprep.subr.mxu0 0.0
    %2079 = vmatpush1.msra.mxu0 %v2068
    %2080 = vmatprep.subr.mxu0 0.0
    %2081 = vmatpush1.msra.mxu0 %v2063
    %2082 = vmatprep.subr.mxu0 0.0
    %2083 = vmatpush1.msra.mxu0 %v2058
    %2084 = vmatprep.subr.mxu0 0.0
    %2085 = vmatpush1.msra.mxu0 %v2053
    %2086 = vmatprep.subr.mxu0 0.0
    %2087 = vmatpush1.msra.mxu0 %v2048
    %2088 = vmatprep.subr.mxu0 0.0
    %2089 = vmatpush1.msra.mxu0 %v2043
    %2090 = vmatprep.subr.mxu0 0.0
    %2091 = vmatpush1.msra.mxu0 %v2038
    %2092 = vmatprep.subr.mxu0 0.0
    %2093 = vmatpush1.msra.mxu0 %v2033
    %2094 = vmatprep.subr.mxu0 0.0
    %2095 = vmatpush1.msra.mxu0 %v2028
    %2096 = vmatprep.subr.mxu0 0.0
    %2097 = vmatpush1.msra.mxu0 %v2023
    %2098 = vmatprep.subr.mxu0 0.0
    %2099 = vmatpush1.msra.mxu0 %v2018
    %2100 = vmatprep.subr.mxu0 0.0
    %2101 = vmatpush1.msra.mxu0 %v2013
    %2102 = vmatprep.subr.mxu0 0.0
    %2103 = vmatpush1.msra.mxu0 %v2008
    %2104 = vmatprep.subr.mxu0 0.0
    %2105 = vmatpush1.msra.mxu0 %v2003
    %2106 = vmatprep.subr.mxu0 0.0
    %2107 = vmatpush1.msra.mxu0 %v1998
    %2108 = vmatprep.subr.mxu0 0.0
    %2109 = vmatpush2.msra.mxu0 0.0
    %2110 = vmatprep.subr.mxu0 0.0
    %2111 = vmatpush2.msra.mxu0 0.0
    %2112 = vmatprep.subr.mxu0 0.0
    %2113 = vmatpush2.msra.mxu0 0.0
    %2114 = vmatprep.subr.mxu0 0.0
    %2115 = vmatpush2.msra.mxu0 0.0
    %2116 = vmatprep.subr.mxu0 0.0
    %2117 = vmatpush2.msra.mxu0 0.0
    %2118 = vmatprep.subr.mxu0 0.0
    %2119 = vmatpush2.msra.mxu0 0.0
    %2120 = vmatprep.subr.mxu0 0.0
    %2121 = vmatpush2.msra.mxu0 0.0
    %2122 = vmatprep.subr.mxu0 0.0
    %2123 = vmatpush2.msra.mxu0 0.0
    %2124 = vmatprep.subr.mxu0 0.0
    %2125 = vmatpush2.msra.mxu0 0.0
    %2126 = vmatprep.subr.mxu0 0.0
    %2127 = vmatpush2.msra.mxu0 0.0
    %2128 = vmatprep.subr.mxu0 0.0
    %2129 = vmatpush2.msra.mxu0 0.0
    %2130 = vmatprep.subr.mxu0 0.0
    %2131 = vmatpush2.msra.mxu0 0.0
    %2132 = vmatprep.subr.mxu0 0.0
    %2133 = vmatpush2.msra.mxu0 0.0
    %2134 = vmatprep.subr.mxu0 0.0
    %2135 = vmatpush2.msra.mxu0 0.0
    %2136 = vmatprep.subr.mxu0 0.0
    %2137 = vmatpush2.msra.mxu0 0.0
    %2138 = vmatprep.subr.mxu0 0.0
    %2139 = vmatpush2.msra.mxu0 0.0
    %2140 = vmatprep.mubr.f32.mxu0 0.0
    %2141 = vmatmul.mubr.f32.gmra.mxu0 %v92
    %v2142 = vpop.f32.mrf.mxu0
    %v2143 = vadd.f32 0.0, %v2142
    %v2144 = vpop.f32.mrf.mxu0
    %2145 = vmatprep.mubr.f32.mxu0 0.0
    %2146 = vmatmul.mubr.f32.gmra.mxu0 %v93
    %v2147 = vpop.f32.mrf.mxu0
    %v2148 = vadd.f32 0.0, %v2147
    %v2149 = vpop.f32.mrf.mxu0
    %2150 = vmatprep.mubr.f32.mxu0 0.0
    %2151 = vmatmul.mubr.f32.gmra.mxu0 %v94
    %v2152 = vpop.f32.mrf.mxu0
    %v2153 = vadd.f32 0.0, %v2152
    %v2154 = vpop.f32.mrf.mxu0
    %2155 = vmatprep.mubr.f32.mxu0 0.0
    %2156 = vmatmul.mubr.f32.gmra.mxu0 %v95
    %v2157 = vpop.f32.mrf.mxu0
    %v2158 = vadd.f32 0.0, %v2157
    %v2159 = vpop.f32.mrf.mxu0
    %2160 = vmatprep.mubr.f32.mxu0 0.0
    %2161 = vmatmul.mubr.f32.gmra.mxu0 %v96
    %v2162 = vpop.f32.mrf.mxu0
    %v2163 = vadd.f32 0.0, %v2162
    %v2164 = vpop.f32.mrf.mxu0
    %2165 = vmatprep.mubr.f32.mxu0 0.0
    %2166 = vmatmul.mubr.f32.gmra.mxu0 %v97
    %v2167 = vpop.f32.mrf.mxu0
    %v2168 = vadd.f32 0.0, %v2167
    %v2169 = vpop.f32.mrf.mxu0
    %2170 = vmatprep.mubr.f32.mxu0 0.0
    %2171 = vmatmul.mubr.f32.gmra.mxu0 %v98
    %v2172 = vpop.f32.mrf.mxu0
    %v2173 = vadd.f32 0.0, %v2172
    %v2174 = vpop.f32.mrf.mxu0
    %2175 = vmatprep.mubr.f32.mxu0 0.0
    %2176 = vmatmul.mubr.f32.gmra.mxu0 %v99
    %v2177 = vpop.f32.mrf.mxu0
    %v2178 = vadd.f32 0.0, %v2177
    %v2179 = vpop.f32.mrf.mxu0
    %2180 = vmatprep.mubr.f32.mxu0 0.0
    %2181 = vmatmul.mubr.f32.gmra.mxu0 %v100
    %v2182 = vpop.f32.mrf.mxu0
    %v2183 = vadd.f32 0.0, %v2182
    %v2184 = vpop.f32.mrf.mxu0
    %2185 = vmatprep.mubr.f32.mxu0 0.0
    %2186 = vmatmul.mubr.f32.gmra.mxu0 %v101
    %v2187 = vpop.f32.mrf.mxu0
    %v2188 = vadd.f32 0.0, %v2187
    %v2189 = vpop.f32.mrf.mxu0
    %2190 = vmatprep.mubr.f32.mxu0 0.0
    %2191 = vmatmul.mubr.f32.gmra.mxu0 %v102
    %v2192 = vpop.f32.mrf.mxu0
    %v2193 = vadd.f32 0.0, %v2192
    %v2194 = vpop.f32.mrf.mxu0
    %2195 = vmatprep.mubr.f32.mxu0 0.0
    %2196 = vmatmul.mubr.f32.gmra.mxu0 %v103
    %v2197 = vpop.f32.mrf.mxu0
    %v2198 = vadd.f32 0.0, %v2197
    %v2199 = vpop.f32.mrf.mxu0
    %2200 = vmatprep.mubr.f32.mxu0 0.0
    %2201 = vmatmul.mubr.f32.gmra.mxu0 %v104
    %v2202 = vpop.f32.mrf.mxu0
    %v2203 = vadd.f32 0.0, %v2202
    %v2204 = vpop.f32.mrf.mxu0
    %2205 = vmatprep.mubr.f32.mxu0 0.0
    %2206 = vmatmul.mubr.f32.gmra.mxu0 %v105
    %v2207 = vpop.f32.mrf.mxu0
    %v2208 = vadd.f32 0.0, %v2207
    %v2209 = vpop.f32.mrf.mxu0
    %2210 = vmatprep.mubr.f32.mxu0 0.0
    %2211 = vmatmul.mubr.f32.gmra.mxu0 %v106
    %v2212 = vpop.f32.mrf.mxu0
    %v2213 = vadd.f32 0.0, %v2212
    %v2214 = vpop.f32.mrf.mxu0
    %2215 = vmatprep.mubr.f32.mxu0 0.0
    %2216 = vmatmul.mubr.f32.gmra.mxu0 %v107
    %v2217 = vpop.f32.mrf.mxu0
    %v2218 = vadd.f32 0.0, %v2217
    %v2219 = vpop.f32.mrf.mxu0
    %2220 = vdwg.mxu0
    %2221 = vmatprep.subr.mxu0 0.0
    %2222 = vmatpush1.msra.mxu0 %v2218
    %2223 = vmatprep.subr.mxu0 0.0
    %2224 = vmatpush1.msra.mxu0 %v2213
    %2225 = vmatprep.subr.mxu0 0.0
    %2226 = vmatpush1.msra.mxu0 %v2208
    %2227 = vmatprep.subr.mxu0 0.0
    %2228 = vmatpush1.msra.mxu0 %v2203
    %2229 = vmatprep.subr.mxu0 0.0
    %2230 = vmatpush1.msra.mxu0 %v2198
    %2231 = vmatprep.subr.mxu0 0.0
    %2232 = vmatpush1.msra.mxu0 %v2193
    %2233 = vmatprep.subr.mxu0 0.0
    %2234 = vmatpush1.msra.mxu0 %v2188
    %2235 = vmatprep.subr.mxu0 0.0
    %2236 = vmatpush1.msra.mxu0 %v2183
    %2237 = vmatprep.subr.mxu0 0.0
    %2238 = vmatpush1.msra.mxu0 %v2178
    %2239 = vmatprep.subr.mxu0 0.0
    %2240 = vmatpush1.msra.mxu0 %v2173
    %2241 = vmatprep.subr.mxu0 0.0
    %2242 = vmatpush1.msra.mxu0 %v2168
    %2243 = vmatprep.subr.mxu0 0.0
    %2244 = vmatpush1.msra.mxu0 %v2163
    %2245 = vmatprep.subr.mxu0 0.0
    %2246 = vmatpush1.msra.mxu0 %v2158
    %2247 = vmatprep.subr.mxu0 0.0
    %2248 = vmatpush1.msra.mxu0 %v2153
    %2249 = vmatprep.subr.mxu0 0.0
    %2250 = vmatpush1.msra.mxu0 %v2148
    %2251 = vmatprep.subr.mxu0 0.0
    %2252 = vmatpush1.msra.mxu0 %v2143
    %2253 = vmatprep.subr.mxu0 0.0
    %2254 = vmatpush2.msra.mxu0 0.0
    %2255 = vmatprep.subr.mxu0 0.0
    %2256 = vmatpush2.msra.mxu0 0.0
    %2257 = vmatprep.subr.mxu0 0.0
    %2258 = vmatpush2.msra.mxu0 0.0
    %2259 = vmatprep.subr.mxu0 0.0
    %2260 = vmatpush2.msra.mxu0 0.0
    %2261 = vmatprep.subr.mxu0 0.0
    %2262 = vmatpush2.msra.mxu0 0.0
    %2263 = vmatprep.subr.mxu0 0.0
    %2264 = vmatpush2.msra.mxu0 0.0
    %2265 = vmatprep.subr.mxu0 0.0
    %2266 = vmatpush2.msra.mxu0 0.0
    %2267 = vmatprep.subr.mxu0 0.0
    %2268 = vmatpush2.msra.mxu0 0.0
    %2269 = vmatprep.subr.mxu0 0.0
    %2270 = vmatpush2.msra.mxu0 0.0
    %2271 = vmatprep.subr.mxu0 0.0
    %2272 = vmatpush2.msra.mxu0 0.0
    %2273 = vmatprep.subr.mxu0 0.0
    %2274 = vmatpush2.msra.mxu0 0.0
    %2275 = vmatprep.subr.mxu0 0.0
    %2276 = vmatpush2.msra.mxu0 0.0
    %2277 = vmatprep.subr.mxu0 0.0
    %2278 = vmatpush2.msra.mxu0 0.0
    %2279 = vmatprep.subr.mxu0 0.0
    %2280 = vmatpush2.msra.mxu0 0.0
    %2281 = vmatprep.subr.mxu0 0.0
    %2282 = vmatpush2.msra.mxu0 0.0
    %2283 = vmatprep.subr.mxu0 0.0
    %2284 = vmatpush2.msra.mxu0 0.0
    %2285 = vmatprep.mubr.f32.mxu0 0.0
    %2286 = vmatmul.mubr.f32.gmra.mxu0 %v76
    %v2287 = vpop.f32.mrf.mxu0
    %v2288 = vadd.f32 0.0, %v2287
    %v2289 = vpop.f32.mrf.mxu0
    %2290 = vmatprep.mubr.f32.mxu0 0.0
    %2291 = vmatmul.mubr.f32.gmra.mxu0 %v77
    %v2292 = vpop.f32.mrf.mxu0
    %v2293 = vadd.f32 0.0, %v2292
    %v2294 = vpop.f32.mrf.mxu0
    %2295 = vmatprep.mubr.f32.mxu0 0.0
    %2296 = vmatmul.mubr.f32.gmra.mxu0 %v78
    %v2297 = vpop.f32.mrf.mxu0
    %v2298 = vadd.f32 0.0, %v2297
    %v2299 = vpop.f32.mrf.mxu0
    %2300 = vmatprep.mubr.f32.mxu0 0.0
    %2301 = vmatmul.mubr.f32.gmra.mxu0 %v79
    %v2302 = vpop.f32.mrf.mxu0
    %v2303 = vadd.f32 0.0, %v2302
    %v2304 = vpop.f32.mrf.mxu0
    %2305 = vmatprep.mubr.f32.mxu0 0.0
    %2306 = vmatmul.mubr.f32.gmra.mxu0 %v80
    %v2307 = vpop.f32.mrf.mxu0
    %v2308 = vadd.f32 0.0, %v2307
    %v2309 = vpop.f32.mrf.mxu0
    %2310 = vmatprep.mubr.f32.mxu0 0.0
    %2311 = vmatmul.mubr.f32.gmra.mxu0 %v81
    %v2312 = vpop.f32.mrf.mxu0
    %v2313 = vadd.f32 0.0, %v2312
    %v2314 = vpop.f32.mrf.mxu0
    %2315 = vmatprep.mubr.f32.mxu0 0.0
    %2316 = vmatmul.mubr.f32.gmra.mxu0 %v82
    %v2317 = vpop.f32.mrf.mxu0
    %v2318 = vadd.f32 0.0, %v2317
    %v2319 = vpop.f32.mrf.mxu0
    %2320 = vmatprep.mubr.f32.mxu0 0.0
    %2321 = vmatmul.mubr.f32.gmra.mxu0 %v83
    %v2322 = vpop.f32.mrf.mxu0
    %v2323 = vadd.f32 0.0, %v2322
    %v2324 = vpop.f32.mrf.mxu0
    %2325 = vmatprep.mubr.f32.mxu0 0.0
    %2326 = vmatmul.mubr.f32.gmra.mxu0 %v84
    %v2327 = vpop.f32.mrf.mxu0
    %v2328 = vadd.f32 0.0, %v2327
    %v2329 = vpop.f32.mrf.mxu0
    %2330 = vmatprep.mubr.f32.mxu0 0.0
    %2331 = vmatmul.mubr.f32.gmra.mxu0 %v85
    %v2332 = vpop.f32.mrf.mxu0
    %v2333 = vadd.f32 0.0, %v2332
    %v2334 = vpop.f32.mrf.mxu0
    %2335 = vmatprep.mubr.f32.mxu0 0.0
    %2336 = vmatmul.mubr.f32.gmra.mxu0 %v86
    %v2337 = vpop.f32.mrf.mxu0
    %v2338 = vadd.f32 0.0, %v2337
    %v2339 = vpop.f32.mrf.mxu0
    %2340 = vmatprep.mubr.f32.mxu0 0.0
    %2341 = vmatmul.mubr.f32.gmra.mxu0 %v87
    %v2342 = vpop.f32.mrf.mxu0
    %v2343 = vadd.f32 0.0, %v2342
    %v2344 = vpop.f32.mrf.mxu0
    %2345 = vmatprep.mubr.f32.mxu0 0.0
    %2346 = vmatmul.mubr.f32.gmra.mxu0 %v88
    %v2347 = vpop.f32.mrf.mxu0
    %v2348 = vadd.f32 0.0, %v2347
    %v2349 = vpop.f32.mrf.mxu0
    %2350 = vmatprep.mubr.f32.mxu0 0.0
    %2351 = vmatmul.mubr.f32.gmra.mxu0 %v89
    %v2352 = vpop.f32.mrf.mxu0
    %v2353 = vadd.f32 0.0, %v2352
    %v2354 = vpop.f32.mrf.mxu0
    %2355 = vmatprep.mubr.f32.mxu0 0.0
    %2356 = vmatmul.mubr.f32.gmra.mxu0 %v90
    %v2357 = vpop.f32.mrf.mxu0
    %v2358 = vadd.f32 0.0, %v2357
    %v2359 = vpop.f32.mrf.mxu0
    %2360 = vmatprep.mubr.f32.mxu0 0.0
    %2361 = vmatmul.mubr.f32.gmra.mxu0 %v91
    %v2362 = vpop.f32.mrf.mxu0
    %v2363 = vadd.f32 0.0, %v2362
    %v2364 = vpop.f32.mrf.mxu0
    %2365 = vdwg.mxu0
    %2366 = vmatprep.subr.mxu0 0.0
    %2367 = vmatpush1.msra.mxu0 %v2363
    %2368 = vmatprep.subr.mxu0 0.0
    %2369 = vmatpush1.msra.mxu0 %v2358
    %2370 = vmatprep.subr.mxu0 0.0
    %2371 = vmatpush1.msra.mxu0 %v2353
    %2372 = vmatprep.subr.mxu0 0.0
    %2373 = vmatpush1.msra.mxu0 %v2348
    %2374 = vmatprep.subr.mxu0 0.0
    %2375 = vmatpush1.msra.mxu0 %v2343
    %2376 = vmatprep.subr.mxu0 0.0
    %2377 = vmatpush1.msra.mxu0 %v2338
    %2378 = vmatprep.subr.mxu0 0.0
    %2379 = vmatpush1.msra.mxu0 %v2333
    %2380 = vmatprep.subr.mxu0 0.0
    %2381 = vmatpush1.msra.mxu0 %v2328
    %2382 = vmatprep.subr.mxu0 0.0
    %2383 = vmatpush1.msra.mxu0 %v2323
    %2384 = vmatprep.subr.mxu0 0.0
    %2385 = vmatpush1.msra.mxu0 %v2318
    %2386 = vmatprep.subr.mxu0 0.0
    %2387 = vmatpush1.msra.mxu0 %v2313
    %2388 = vmatprep.subr.mxu0 0.0
    %2389 = vmatpush1.msra.mxu0 %v2308
    %2390 = vmatprep.subr.mxu0 0.0
    %2391 = vmatpush1.msra.mxu0 %v2303
    %2392 = vmatprep.subr.mxu0 0.0
    %2393 = vmatpush1.msra.mxu0 %v2298
    %2394 = vmatprep.subr.mxu0 0.0
    %2395 = vmatpush1.msra.mxu0 %v2293
    %2396 = vmatprep.subr.mxu0 0.0
    %2397 = vmatpush1.msra.mxu0 %v2288
    %2398 = vmatprep.subr.mxu0 0.0
    %2399 = vmatpush2.msra.mxu0 0.0
    %2400 = vmatprep.subr.mxu0 0.0
    %2401 = vmatpush2.msra.mxu0 0.0
    %2402 = vmatprep.subr.mxu0 0.0
    %2403 = vmatpush2.msra.mxu0 0.0
    %2404 = vmatprep.subr.mxu0 0.0
    %2405 = vmatpush2.msra.mxu0 0.0
    %2406 = vmatprep.subr.mxu0 0.0
    %2407 = vmatpush2.msra.mxu0 0.0
    %2408 = vmatprep.subr.mxu0 0.0
    %2409 = vmatpush2.msra.mxu0 0.0
    %2410 = vmatprep.subr.mxu0 0.0
    %2411 = vmatpush2.msra.mxu0 0.0
    %2412 = vmatprep.subr.mxu0 0.0
    %2413 = vmatpush2.msra.mxu0 0.0
    %2414 = vmatprep.subr.mxu0 0.0
    %2415 = vmatpush2.msra.mxu0 0.0
    %2416 = vmatprep.subr.mxu0 0.0
    %2417 = vmatpush2.msra.mxu0 0.0
    %2418 = vmatprep.subr.mxu0 0.0
    %2419 = vmatpush2.msra.mxu0 0.0
    %2420 = vmatprep.subr.mxu0 0.0
    %2421 = vmatpush2.msra.mxu0 0.0
    %2422 = vmatprep.subr.mxu0 0.0
    %2423 = vmatpush2.msra.mxu0 0.0
    %2424 = vmatprep.subr.mxu0 0.0
    %2425 = vmatpush2.msra.mxu0 0.0
    %2426 = vmatprep.subr.mxu0 0.0
    %2427 = vmatpush2.msra.mxu0 0.0
    %2428 = vmatprep.subr.mxu0 0.0
    %2429 = vmatpush2.msra.mxu0 0.0
    %2430 = vmatprep.mubr.f32.mxu0 0.0
    %2431 = vmatmul.mubr.f32.gmra.mxu0 %v92
    %v2432 = vpop.f32.mrf.mxu0
    %v2433 = vadd.f32 0.0, %v2432
    %v2434 = vpop.f32.mrf.mxu0
    %2435 = vmatprep.mubr.f32.mxu0 0.0
    %2436 = vmatmul.mubr.f32.gmra.mxu0 %v93
    %v2437 = vpop.f32.mrf.mxu0
    %v2438 = vadd.f32 0.0, %v2437
    %v2439 = vpop.f32.mrf.mxu0
    %2440 = vmatprep.mubr.f32.mxu0 0.0
    %2441 = vmatmul.mubr.f32.gmra.mxu0 %v94
    %v2442 = vpop.f32.mrf.mxu0
    %v2443 = vadd.f32 0.0, %v2442
    %v2444 = vpop.f32.mrf.mxu0
    %2445 = vmatprep.mubr.f32.mxu0 0.0
    %2446 = vmatmul.mubr.f32.gmra.mxu0 %v95
    %v2447 = vpop.f32.mrf.mxu0
    %v2448 = vadd.f32 0.0, %v2447
    %v2449 = vpop.f32.mrf.mxu0
    %2450 = vmatprep.mubr.f32.mxu0 0.0
    %2451 = vmatmul.mubr.f32.gmra.mxu0 %v96
    %v2452 = vpop.f32.mrf.mxu0
    %v2453 = vadd.f32 0.0, %v2452
    %v2454 = vpop.f32.mrf.mxu0
    %2455 = vmatprep.mubr.f32.mxu0 0.0
    %2456 = vmatmul.mubr.f32.gmra.mxu0 %v97
    %v2457 = vpop.f32.mrf.mxu0
    %v2458 = vadd.f32 0.0, %v2457
    %v2459 = vpop.f32.mrf.mxu0
    %2460 = vmatprep.mubr.f32.mxu0 0.0
    %2461 = vmatmul.mubr.f32.gmra.mxu0 %v98
    %v2462 = vpop.f32.mrf.mxu0
    %v2463 = vadd.f32 0.0, %v2462
    %v2464 = vpop.f32.mrf.mxu0
    %2465 = vmatprep.mubr.f32.mxu0 0.0
    %2466 = vmatmul.mubr.f32.gmra.mxu0 %v99
    %v2467 = vpop.f32.mrf.mxu0
    %v2468 = vadd.f32 0.0, %v2467
    %v2469 = vpop.f32.mrf.mxu0
    %2470 = vmatprep.mubr.f32.mxu0 0.0
    %2471 = vmatmul.mubr.f32.gmra.mxu0 %v100
    %v2472 = vpop.f32.mrf.mxu0
    %v2473 = vadd.f32 0.0, %v2472
    %v2474 = vpop.f32.mrf.mxu0
    %2475 = vmatprep.mubr.f32.mxu0 0.0
    %2476 = vmatmul.mubr.f32.gmra.mxu0 %v101
    %v2477 = vpop.f32.mrf.mxu0
    %v2478 = vadd.f32 0.0, %v2477
    %v2479 = vpop.f32.mrf.mxu0
    %2480 = vmatprep.mubr.f32.mxu0 0.0
    %2481 = vmatmul.mubr.f32.gmra.mxu0 %v102
    %v2482 = vpop.f32.mrf.mxu0
    %v2483 = vadd.f32 0.0, %v2482
    %v2484 = vpop.f32.mrf.mxu0
    %2485 = vmatprep.mubr.f32.mxu0 0.0
    %2486 = vmatmul.mubr.f32.gmra.mxu0 %v103
    %v2487 = vpop.f32.mrf.mxu0
    %v2488 = vadd.f32 0.0, %v2487
    %v2489 = vpop.f32.mrf.mxu0
    %2490 = vmatprep.mubr.f32.mxu0 0.0
    %2491 = vmatmul.mubr.f32.gmra.mxu0 %v104
    %v2492 = vpop.f32.mrf.mxu0
    %v2493 = vadd.f32 0.0, %v2492
    %v2494 = vpop.f32.mrf.mxu0
    %2495 = vmatprep.mubr.f32.mxu0 0.0
    %2496 = vmatmul.mubr.f32.gmra.mxu0 %v105
    %v2497 = vpop.f32.mrf.mxu0
    %v2498 = vadd.f32 0.0, %v2497
    %v2499 = vpop.f32.mrf.mxu0
    %2500 = vmatprep.mubr.f32.mxu0 0.0
    %2501 = vmatmul.mubr.f32.gmra.mxu0 %v106
    %v2502 = vpop.f32.mrf.mxu0
    %v2503 = vadd.f32 0.0, %v2502
    %v2504 = vpop.f32.mrf.mxu0
    %2505 = vmatprep.mubr.f32.mxu0 0.0
    %2506 = vmatmul.mubr.f32.gmra.mxu0 %v107
    %v2507 = vpop.f32.mrf.mxu0
    %v2508 = vadd.f32 0.0, %v2507
    %v2509 = vpop.f32.mrf.mxu0
    %2510 = vdwg.mxu0
    %2511 = vmatprep.subr.mxu0 0.0
    %2512 = vmatpush1.msra.mxu0 %v2508
    %2513 = vmatprep.subr.mxu0 0.0
    %2514 = vmatpush1.msra.mxu0 %v2503
    %2515 = vmatprep.subr.mxu0 0.0
    %2516 = vmatpush1.msra.mxu0 %v2498
    %2517 = vmatprep.subr.mxu0 0.0
    %2518 = vmatpush1.msra.mxu0 %v2493
    %2519 = vmatprep.subr.mxu0 0.0
    %2520 = vmatpush1.msra.mxu0 %v2488
    %2521 = vmatprep.subr.mxu0 0.0
    %2522 = vmatpush1.msra.mxu0 %v2483
    %2523 = vmatprep.subr.mxu0 0.0
    %2524 = vmatpush1.msra.mxu0 %v2478
    %2525 = vmatprep.subr.mxu0 0.0
    %2526 = vmatpush1.msra.mxu0 %v2473
    %2527 = vmatprep.subr.mxu0 0.0
    %2528 = vmatpush1.msra.mxu0 %v2468
    %2529 = vmatprep.subr.mxu0 0.0
    %2530 = vmatpush1.msra.mxu0 %v2463
    %2531 = vmatprep.subr.mxu0 0.0
    %2532 = vmatpush1.msra.mxu0 %v2458
    %2533 = vmatprep.subr.mxu0 0.0
    %2534 = vmatpush1.msra.mxu0 %v2453
    %2535 = vmatprep.subr.mxu0 0.0
    %2536 = vmatpush1.msra.mxu0 %v2448
    %2537 = vmatprep.subr.mxu0 0.0
    %2538 = vmatpush1.msra.mxu0 %v2443
    %2539 = vmatprep.subr.mxu0 0.0
    %2540 = vmatpush1.msra.mxu0 %v2438
    %2541 = vmatprep.subr.mxu0 0.0
    %2542 = vmatpush1.msra.mxu0 %v2433
    %2543 = vmatprep.subr.mxu0 0.0
    %2544 = vmatpush2.msra.mxu0 0.0
    %2545 = vmatprep.subr.mxu0 0.0
    %2546 = vmatpush2.msra.mxu0 0.0
    %2547 = vmatprep.subr.mxu0 0.0
    %2548 = vmatpush2.msra.mxu0 0.0
    %2549 = vmatprep.subr.mxu0 0.0
    %2550 = vmatpush2.msra.mxu0 0.0
    %2551 = vmatprep.subr.mxu0 0.0
    %2552 = vmatpush2.msra.mxu0 0.0
    %2553 = vmatprep.subr.mxu0 0.0
    %2554 = vmatpush2.msra.mxu0 0.0
    %2555 = vmatprep.subr.mxu0 0.0
    %2556 = vmatpush2.msra.mxu0 0.0
    %2557 = vmatprep.subr.mxu0 0.0
    %2558 = vmatpush2.msra.mxu0 0.0
    %2559 = vmatprep.subr.mxu0 0.0
    %2560 = vmatpush2.msra.mxu0 0.0
    %2561 = vmatprep.subr.mxu0 0.0
    %2562 = vmatpush2.msra.mxu0 0.0
    %2563 = vmatprep.subr.mxu0 0.0
    %2564 = vmatpush2.msra.mxu0 0.0
    %2565 = vmatprep.subr.mxu0 0.0
    %2566 = vmatpush2.msra.mxu0 0.0
    %2567 = vmatprep.subr.mxu0 0.0
    %2568 = vmatpush2.msra.mxu0 0.0
    %2569 = vmatprep.subr.mxu0 0.0
    %2570 = vmatpush2.msra.mxu0 0.0
    %2571 = vmatprep.subr.mxu0 0.0
    %2572 = vmatpush2.msra.mxu0 0.0
    %2573 = vmatprep.subr.mxu0 0.0
    %2574 = vmatpush2.msra.mxu0 0.0
    %2575 = vmatprep.mubr.f32.mxu0 0.0
    %2576 = vmatmul.mubr.f32.gmra.mxu0 %v76
    %v2577 = vpop.f32.mrf.mxu0
    %v2578 = vadd.f32 0.0, %v2577
    %v2579 = vpop.f32.mrf.mxu0
    %2580 = vmatprep.mubr.f32.mxu0 0.0
    %2581 = vmatmul.mubr.f32.gmra.mxu0 %v77
    %v2582 = vpop.f32.mrf.mxu0
    %v2583 = vadd.f32 0.0, %v2582
    %v2584 = vpop.f32.mrf.mxu0
    %2585 = vmatprep.mubr.f32.mxu0 0.0
    %2586 = vmatmul.mubr.f32.gmra.mxu0 %v78
    %v2587 = vpop.f32.mrf.mxu0
    %v2588 = vadd.f32 0.0, %v2587
    %v2589 = vpop.f32.mrf.mxu0
    %2590 = vmatprep.mubr.f32.mxu0 0.0
    %2591 = vmatmul.mubr.f32.gmra.mxu0 %v79
    %v2592 = vpop.f32.mrf.mxu0
    %v2593 = vadd.f32 0.0, %v2592
    %v2594 = vpop.f32.mrf.mxu0
    %2595 = vmatprep.mubr.f32.mxu0 0.0
    %2596 = vmatmul.mubr.f32.gmra.mxu0 %v80
    %v2597 = vpop.f32.mrf.mxu0
    %v2598 = vadd.f32 0.0, %v2597
    %v2599 = vpop.f32.mrf.mxu0
    %2600 = vmatprep.mubr.f32.mxu0 0.0
    %2601 = vmatmul.mubr.f32.gmra.mxu0 %v81
    %v2602 = vpop.f32.mrf.mxu0
    %v2603 = vadd.f32 0.0, %v2602
    %v2604 = vpop.f32.mrf.mxu0
    %2605 = vmatprep.mubr.f32.mxu0 0.0
    %2606 = vmatmul.mubr.f32.gmra.mxu0 %v82
    %v2607 = vpop.f32.mrf.mxu0
    %v2608 = vadd.f32 0.0, %v2607
    %v2609 = vpop.f32.mrf.mxu0
    %2610 = vmatprep.mubr.f32.mxu0 0.0
    %2611 = vmatmul.mubr.f32.gmra.mxu0 %v83
    %v2612 = vpop.f32.mrf.mxu0
    %v2613 = vadd.f32 0.0, %v2612
    %v2614 = vpop.f32.mrf.mxu0
    %2615 = vmatprep.mubr.f32.mxu0 0.0
    %2616 = vmatmul.mubr.f32.gmra.mxu0 %v84
    %v2617 = vpop.f32.mrf.mxu0
    %v2618 = vadd.f32 0.0, %v2617
    %v2619 = vpop.f32.mrf.mxu0
    %2620 = vmatprep.mubr.f32.mxu0 0.0
    %2621 = vmatmul.mubr.f32.gmra.mxu0 %v85
    %v2622 = vpop.f32.mrf.mxu0
    %v2623 = vadd.f32 0.0, %v2622
    %v2624 = vpop.f32.mrf.mxu0
    %2625 = vmatprep.mubr.f32.mxu0 0.0
    %2626 = vmatmul.mubr.f32.gmra.mxu0 %v86
    %v2627 = vpop.f32.mrf.mxu0
    %v2628 = vadd.f32 0.0, %v2627
    %v2629 = vpop.f32.mrf.mxu0
    %2630 = vmatprep.mubr.f32.mxu0 0.0
    %2631 = vmatmul.mubr.f32.gmra.mxu0 %v87
    %v2632 = vpop.f32.mrf.mxu0
    %v2633 = vadd.f32 0.0, %v2632
    %v2634 = vpop.f32.mrf.mxu0
    %2635 = vmatprep.mubr.f32.mxu0 0.0
    %2636 = vmatmul.mubr.f32.gmra.mxu0 %v88
    %v2637 = vpop.f32.mrf.mxu0
    %v2638 = vadd.f32 0.0, %v2637
    %v2639 = vpop.f32.mrf.mxu0
    %2640 = vmatprep.mubr.f32.mxu0 0.0
    %2641 = vmatmul.mubr.f32.gmra.mxu0 %v89
    %v2642 = vpop.f32.mrf.mxu0
    %v2643 = vadd.f32 0.0, %v2642
    %v2644 = vpop.f32.mrf.mxu0
    %2645 = vmatprep.mubr.f32.mxu0 0.0
    %2646 = vmatmul.mubr.f32.gmra.mxu0 %v90
    %v2647 = vpop.f32.mrf.mxu0
    %v2648 = vadd.f32 0.0, %v2647
    %v2649 = vpop.f32.mrf.mxu0
    %2650 = vmatprep.mubr.f32.mxu0 0.0
    %2651 = vmatmul.mubr.f32.gmra.mxu0 %v91
    %v2652 = vpop.f32.mrf.mxu0
    %v2653 = vadd.f32 0.0, %v2652
    %v2654 = vpop.f32.mrf.mxu0
    %2655 = vdwg.mxu0
    %v2656 = vsub.f32 %v1352, %v2578
    %v2657 = vsub.f32 %v1357, %v2583
    %v2658 = vsub.f32 %v1362, %v2588
    %v2659 = vsub.f32 %v1367, %v2593
    %v2660 = vsub.f32 %v1372, %v2598
    %v2661 = vsub.f32 %v1377, %v2603
    %v2662 = vsub.f32 %v1382, %v2608
    %v2663 = vsub.f32 %v1387, %v2613
    %v2664 = vsub.f32 %v1392, %v2618
    %v2665 = vsub.f32 %v1397, %v2623
    %v2666 = vsub.f32 %v1402, %v2628
    %v2667 = vsub.f32 %v1407, %v2633
    %v2668 = vsub.f32 %v1412, %v2638
    %v2669 = vsub.f32 %v1417, %v2643
    %v2670 = vsub.f32 %v1422, %v2648
    %v2671 = vsub.f32 %v1427, %v2653
    %s2672 = scalar_lea.vmem [#allocation10], 384
    %2673 = vst [vmem:[%s2672] sm:$0xff] %v2656
    %2674 = vst [vmem:[%s2672 + $0x8] sm:$0xff] %v2657
    %2675 = vst [vmem:[%s2672 + $0x10] sm:$0xff] %v2658
    %2676 = vst [vmem:[%s2672 + $0x18] sm:$0xff] %v2659
    %2677 = vst [vmem:[%s2672 + $0x20] sm:$0xff] %v2660
    %2678 = vst [vmem:[%s2672 + $0x28] sm:$0xff] %v2661
    %2679 = vst [vmem:[%s2672 + $0x30] sm:$0xff] %v2662
    %2680 = vst [vmem:[%s2672 + $0x38] sm:$0xff] %v2663
    %2681 = vst [vmem:[%s2672 + $0x40] sm:$0xff] %v2664
    %2682 = vst [vmem:[%s2672 + $0x48] sm:$0xff] %v2665
    %2683 = vst [vmem:[%s2672 + $0x50] sm:$0xff] %v2666
    %2684 = vst [vmem:[%s2672 + $0x58] sm:$0xff] %v2667
    %2685 = vst [vmem:[%s2672 + $0x60] sm:$0xff] %v2668
    %2686 = vst [vmem:[%s2672 + $0x68] sm:$0xff] %v2669
    %2687 = vst [vmem:[%s2672 + $0x70] sm:$0xff] %v2670
    %2688 = vst [vmem:[%s2672 + $0x78] sm:$0xff] %v2671
    %v2689 = vsub.f32 %v1207, %v2433
    %v2690 = vsub.f32 %v1212, %v2438
    %v2691 = vsub.f32 %v1217, %v2443
    %v2692 = vsub.f32 %v1222, %v2448
    %v2693 = vsub.f32 %v1227, %v2453
    %v2694 = vsub.f32 %v1232, %v2458
    %v2695 = vsub.f32 %v1237, %v2463
    %v2696 = vsub.f32 %v1242, %v2468
    %v2697 = vsub.f32 %v1247, %v2473
    %v2698 = vsub.f32 %v1252, %v2478
    %v2699 = vsub.f32 %v1257, %v2483
    %v2700 = vsub.f32 %v1262, %v2488
    %v2701 = vsub.f32 %v1267, %v2493
    %v2702 = vsub.f32 %v1272, %v2498
    %v2703 = vsub.f32 %v1277, %v2503
    %v2704 = vsub.f32 %v1282, %v2508
    %s2705 = scalar_lea.vmem [#allocation11], 384
    %2706 = vst [vmem:[%s2705] sm:$0xff] %v2689
    %2707 = vst [vmem:[%s2705 + $0x8] sm:$0xff] %v2690
    %2708 = vst [vmem:[%s2705 + $0x10] sm:$0xff] %v2691
    %2709 = vst [vmem:[%s2705 + $0x18] sm:$0xff] %v2692
    %2710 = vst [vmem:[%s2705 + $0x20] sm:$0xff] %v2693
    %2711 = vst [vmem:[%s2705 + $0x28] sm:$0xff] %v2694
    %2712 = vst [vmem:[%s2705 + $0x30] sm:$0xff] %v2695
    %2713 = vst [vmem:[%s2705 + $0x38] sm:$0xff] %v2696
    %2714 = vst [vmem:[%s2705 + $0x40] sm:$0xff] %v2697
    %2715 = vst [vmem:[%s2705 + $0x48] sm:$0xff] %v2698
    %2716 = vst [vmem:[%s2705 + $0x50] sm:$0xff] %v2699
    %2717 = vst [vmem:[%s2705 + $0x58] sm:$0xff] %v2700
    %2718 = vst [vmem:[%s2705 + $0x60] sm:$0xff] %v2701
    %2719 = vst [vmem:[%s2705 + $0x68] sm:$0xff] %v2702
    %2720 = vst [vmem:[%s2705 + $0x70] sm:$0xff] %v2703
    %2721 = vst [vmem:[%s2705 + $0x78] sm:$0xff] %v2704
    %2722 = vmatprep.subr.mxu0 0.0
    %2723 = vmatpush1.msra.mxu0 %v2653
    %2724 = vmatprep.subr.mxu0 0.0
    %2725 = vmatpush1.msra.mxu0 %v2648
    %2726 = vmatprep.subr.mxu0 0.0
    %2727 = vmatpush1.msra.mxu0 %v2643
    %2728 = vmatprep.subr.mxu0 0.0
    %2729 = vmatpush1.msra.mxu0 %v2638
    %2730 = vmatprep.subr.mxu0 0.0
    %2731 = vmatpush1.msra.mxu0 %v2633
    %2732 = vmatprep.subr.mxu0 0.0
    %2733 = vmatpush1.msra.mxu0 %v2628
    %2734 = vmatprep.subr.mxu0 0.0
    %2735 = vmatpush1.msra.mxu0 %v2623
    %2736 = vmatprep.subr.mxu0 0.0
    %2737 = vmatpush1.msra.mxu0 %v2618
    %2738 = vmatprep.subr.mxu0 0.0
    %2739 = vmatpush1.msra.mxu0 %v2613
    %2740 = vmatprep.subr.mxu0 0.0
    %2741 = vmatpush1.msra.mxu0 %v2608
    %2742 = vmatprep.subr.mxu0 0.0
    %2743 = vmatpush1.msra.mxu0 %v2603
    %2744 = vmatprep.subr.mxu0 0.0
    %2745 = vmatpush1.msra.mxu0 %v2598
    %2746 = vmatprep.subr.mxu0 0.0
    %2747 = vmatpush1.msra.mxu0 %v2593
    %2748 = vmatprep.subr.mxu0 0.0
    %2749 = vmatpush1.msra.mxu0 %v2588
    %2750 = vmatprep.subr.mxu0 0.0
    %2751 = vmatpush1.msra.mxu0 %v2583
    %2752 = vmatprep.subr.mxu0 0.0
    %2753 = vmatpush1.msra.mxu0 %v2578
    %2754 = vmatprep.subr.mxu0 0.0
    %2755 = vmatpush2.msra.mxu0 0.0
    %2756 = vmatprep.subr.mxu0 0.0
    %2757 = vmatpush2.msra.mxu0 0.0
    %2758 = vmatprep.subr.mxu0 0.0
    %2759 = vmatpush2.msra.mxu0 0.0
    %2760 = vmatprep.subr.mxu0 0.0
    %2761 = vmatpush2.msra.mxu0 0.0
    %2762 = vmatprep.subr.mxu0 0.0
    %2763 = vmatpush2.msra.mxu0 0.0
    %2764 = vmatprep.subr.mxu0 0.0
    %2765 = vmatpush2.msra.mxu0 0.0
    %2766 = vmatprep.subr.mxu0 0.0
    %2767 = vmatpush2.msra.mxu0 0.0
    %2768 = vmatprep.subr.mxu0 0.0
    %2769 = vmatpush2.msra.mxu0 0.0
    %2770 = vmatprep.subr.mxu0 0.0
    %2771 = vmatpush2.msra.mxu0 0.0
    %2772 = vmatprep.subr.mxu0 0.0
    %2773 = vmatpush2.msra.mxu0 0.0
    %2774 = vmatprep.subr.mxu0 0.0
    %2775 = vmatpush2.msra.mxu0 0.0
    %2776 = vmatprep.subr.mxu0 0.0
    %2777 = vmatpush2.msra.mxu0 0.0
    %2778 = vmatprep.subr.mxu0 0.0
    %2779 = vmatpush2.msra.mxu0 0.0
    %2780 = vmatprep.subr.mxu0 0.0
    %2781 = vmatpush2.msra.mxu0 0.0
    %2782 = vmatprep.subr.mxu0 0.0
    %2783 = vmatpush2.msra.mxu0 0.0
    %2784 = vmatprep.subr.mxu0 0.0
    %2785 = vmatpush2.msra.mxu0 0.0
    %2786 = vmatprep.mubr.f32.mxu0 0.0
    %2787 = vmatmul.mubr.f32.gmra.mxu0 %v92
    %v2788 = vpop.f32.mrf.mxu0
    %v2789 = vadd.f32 0.0, %v2788
    %v2790 = vpop.f32.mrf.mxu0
    %2791 = vmatprep.mubr.f32.mxu0 0.0
    %2792 = vmatmul.mubr.f32.gmra.mxu0 %v93
    %v2793 = vpop.f32.mrf.mxu0
    %v2794 = vadd.f32 0.0, %v2793
    %v2795 = vpop.f32.mrf.mxu0
    %2796 = vmatprep.mubr.f32.mxu0 0.0
    %2797 = vmatmul.mubr.f32.gmra.mxu0 %v94
    %v2798 = vpop.f32.mrf.mxu0
    %v2799 = vadd.f32 0.0, %v2798
    %v2800 = vpop.f32.mrf.mxu0
    %2801 = vmatprep.mubr.f32.mxu0 0.0
    %2802 = vmatmul.mubr.f32.gmra.mxu0 %v95
    %v2803 = vpop.f32.mrf.mxu0
    %v2804 = vadd.f32 0.0, %v2803
    %v2805 = vpop.f32.mrf.mxu0
    %2806 = vmatprep.mubr.f32.mxu0 0.0
    %2807 = vmatmul.mubr.f32.gmra.mxu0 %v96
    %v2808 = vpop.f32.mrf.mxu0
    %v2809 = vadd.f32 0.0, %v2808
    %v2810 = vpop.f32.mrf.mxu0
    %2811 = vmatprep.mubr.f32.mxu0 0.0
    %2812 = vmatmul.mubr.f32.gmra.mxu0 %v97
    %v2813 = vpop.f32.mrf.mxu0
    %v2814 = vadd.f32 0.0, %v2813
    %v2815 = vpop.f32.mrf.mxu0
    %2816 = vmatprep.mubr.f32.mxu0 0.0
    %2817 = vmatmul.mubr.f32.gmra.mxu0 %v98
    %v2818 = vpop.f32.mrf.mxu0
    %v2819 = vadd.f32 0.0, %v2818
    %v2820 = vpop.f32.mrf.mxu0
    %2821 = vmatprep.mubr.f32.mxu0 0.0
    %2822 = vmatmul.mubr.f32.gmra.mxu0 %v99
    %v2823 = vpop.f32.mrf.mxu0
    %v2824 = vadd.f32 0.0, %v2823
    %v2825 = vpop.f32.mrf.mxu0
    %2826 = vmatprep.mubr.f32.mxu0 0.0
    %2827 = vmatmul.mubr.f32.gmra.mxu0 %v100
    %v2828 = vpop.f32.mrf.mxu0
    %v2829 = vadd.f32 0.0, %v2828
    %v2830 = vpop.f32.mrf.mxu0
    %2831 = vmatprep.mubr.f32.mxu0 0.0
    %2832 = vmatmul.mubr.f32.gmra.mxu0 %v101
    %v2833 = vpop.f32.mrf.mxu0
    %v2834 = vadd.f32 0.0, %v2833
    %v2835 = vpop.f32.mrf.mxu0
    %2836 = vmatprep.mubr.f32.mxu0 0.0
    %2837 = vmatmul.mubr.f32.gmra.mxu0 %v102
    %v2838 = vpop.f32.mrf.mxu0
    %v2839 = vadd.f32 0.0, %v2838
    %v2840 = vpop.f32.mrf.mxu0
    %2841 = vmatprep.mubr.f32.mxu0 0.0
    %2842 = vmatmul.mubr.f32.gmra.mxu0 %v103
    %v2843 = vpop.f32.mrf.mxu0
    %v2844 = vadd.f32 0.0, %v2843
    %v2845 = vpop.f32.mrf.mxu0
    %2846 = vmatprep.mubr.f32.mxu0 0.0
    %2847 = vmatmul.mubr.f32.gmra.mxu0 %v104
    %v2848 = vpop.f32.mrf.mxu0
    %v2849 = vadd.f32 0.0, %v2848
    %v2850 = vpop.f32.mrf.mxu0
    %2851 = vmatprep.mubr.f32.mxu0 0.0
    %2852 = vmatmul.mubr.f32.gmra.mxu0 %v105
    %v2853 = vpop.f32.mrf.mxu0
    %v2854 = vadd.f32 0.0, %v2853
    %v2855 = vpop.f32.mrf.mxu0
    %2856 = vmatprep.mubr.f32.mxu0 0.0
    %2857 = vmatmul.mubr.f32.gmra.mxu0 %v106
    %v2858 = vpop.f32.mrf.mxu0
    %v2859 = vadd.f32 0.0, %v2858
    %v2860 = vpop.f32.mrf.mxu0
    %2861 = vmatprep.mubr.f32.mxu0 0.0
    %2862 = vmatmul.mubr.f32.gmra.mxu0 %v107
    %v2863 = vpop.f32.mrf.mxu0
    %v2864 = vadd.f32 0.0, %v2863
    %v2865 = vpop.f32.mrf.mxu0
    %2866 = vdwg.mxu0
    %2867 = vmatprep.subr.mxu0 0.0
    %2868 = vmatpush1.msra.mxu0 %v2864
    %2869 = vmatprep.subr.mxu0 0.0
    %2870 = vmatpush1.msra.mxu0 %v2859
    %2871 = vmatprep.subr.mxu0 0.0
    %2872 = vmatpush1.msra.mxu0 %v2854
    %2873 = vmatprep.subr.mxu0 0.0
    %2874 = vmatpush1.msra.mxu0 %v2849
    %2875 = vmatprep.subr.mxu0 0.0
    %2876 = vmatpush1.msra.mxu0 %v2844
    %2877 = vmatprep.subr.mxu0 0.0
    %2878 = vmatpush1.msra.mxu0 %v2839
    %2879 = vmatprep.subr.mxu0 0.0
    %2880 = vmatpush1.msra.mxu0 %v2834
    %2881 = vmatprep.subr.mxu0 0.0
    %2882 = vmatpush1.msra.mxu0 %v2829
    %2883 = vmatprep.subr.mxu0 0.0
    %2884 = vmatpush1.msra.mxu0 %v2824
    %2885 = vmatprep.subr.mxu0 0.0
    %2886 = vmatpush1.msra.mxu0 %v2819
    %2887 = vmatprep.subr.mxu0 0.0
    %2888 = vmatpush1.msra.mxu0 %v2814
    %2889 = vmatprep.subr.mxu0 0.0
    %2890 = vmatpush1.msra.mxu0 %v2809
    %2891 = vmatprep.subr.mxu0 0.0
    %2892 = vmatpush1.msra.mxu0 %v2804
    %2893 = vmatprep.subr.mxu0 0.0
    %2894 = vmatpush1.msra.mxu0 %v2799
    %2895 = vmatprep.subr.mxu0 0.0
    %2896 = vmatpush1.msra.mxu0 %v2794
    %2897 = vmatprep.subr.mxu0 0.0
    %2898 = vmatpush1.msra.mxu0 %v2789
    %2899 = vmatprep.subr.mxu0 0.0
    %2900 = vmatpush2.msra.mxu0 0.0
    %2901 = vmatprep.subr.mxu0 0.0
    %2902 = vmatpush2.msra.mxu0 0.0
    %2903 = vmatprep.subr.mxu0 0.0
    %2904 = vmatpush2.msra.mxu0 0.0
    %2905 = vmatprep.subr.mxu0 0.0
    %2906 = vmatpush2.msra.mxu0 0.0
    %2907 = vmatprep.subr.mxu0 0.0
    %2908 = vmatpush2.msra.mxu0 0.0
    %2909 = vmatprep.subr.mxu0 0.0
    %2910 = vmatpush2.msra.mxu0 0.0
    %2911 = vmatprep.subr.mxu0 0.0
    %2912 = vmatpush2.msra.mxu0 0.0
    %2913 = vmatprep.subr.mxu0 0.0
    %2914 = vmatpush2.msra.mxu0 0.0
    %2915 = vmatprep.subr.mxu0 0.0
    %2916 = vmatpush2.msra.mxu0 0.0
    %2917 = vmatprep.subr.mxu0 0.0
    %2918 = vmatpush2.msra.mxu0 0.0
    %2919 = vmatprep.subr.mxu0 0.0
    %2920 = vmatpush2.msra.mxu0 0.0
    %2921 = vmatprep.subr.mxu0 0.0
    %2922 = vmatpush2.msra.mxu0 0.0
    %2923 = vmatprep.subr.mxu0 0.0
    %2924 = vmatpush2.msra.mxu0 0.0
    %2925 = vmatprep.subr.mxu0 0.0
    %2926 = vmatpush2.msra.mxu0 0.0
    %2927 = vmatprep.subr.mxu0 0.0
    %2928 = vmatpush2.msra.mxu0 0.0
    %2929 = vmatprep.subr.mxu0 0.0
    %2930 = vmatpush2.msra.mxu0 0.0
    %2931 = vmatprep.mubr.f32.mxu0 0.0
    %2932 = vmatmul.mubr.f32.gmra.mxu0 %v76
    %v2933 = vpop.f32.mrf.mxu0
    %v2934 = vadd.f32 0.0, %v2933
    %v2935 = vpop.f32.mrf.mxu0
    %2936 = vmatprep.mubr.f32.mxu0 0.0
    %2937 = vmatmul.mubr.f32.gmra.mxu0 %v77
    %v2938 = vpop.f32.mrf.mxu0
    %v2939 = vadd.f32 0.0, %v2938
    %v2940 = vpop.f32.mrf.mxu0
    %2941 = vmatprep.mubr.f32.mxu0 0.0
    %2942 = vmatmul.mubr.f32.gmra.mxu0 %v78
    %v2943 = vpop.f32.mrf.mxu0
    %v2944 = vadd.f32 0.0, %v2943
    %v2945 = vpop.f32.mrf.mxu0
    %2946 = vmatprep.mubr.f32.mxu0 0.0
    %2947 = vmatmul.mubr.f32.gmra.mxu0 %v79
    %v2948 = vpop.f32.mrf.mxu0
    %v2949 = vadd.f32 0.0, %v2948
    %v2950 = vpop.f32.mrf.mxu0
    %2951 = vmatprep.mubr.f32.mxu0 0.0
    %2952 = vmatmul.mubr.f32.gmra.mxu0 %v80
    %v2953 = vpop.f32.mrf.mxu0
    %v2954 = vadd.f32 0.0, %v2953
    %v2955 = vpop.f32.mrf.mxu0
    %2956 = vmatprep.mubr.f32.mxu0 0.0
    %2957 = vmatmul.mubr.f32.gmra.mxu0 %v81
    %v2958 = vpop.f32.mrf.mxu0
    %v2959 = vadd.f32 0.0, %v2958
    %v2960 = vpop.f32.mrf.mxu0
    %2961 = vmatprep.mubr.f32.mxu0 0.0
    %2962 = vmatmul.mubr.f32.gmra.mxu0 %v82
    %v2963 = vpop.f32.mrf.mxu0
    %v2964 = vadd.f32 0.0, %v2963
    %v2965 = vpop.f32.mrf.mxu0
    %2966 = vmatprep.mubr.f32.mxu0 0.0
    %2967 = vmatmul.mubr.f32.gmra.mxu0 %v83
    %v2968 = vpop.f32.mrf.mxu0
    %v2969 = vadd.f32 0.0, %v2968
    %v2970 = vpop.f32.mrf.mxu0
    %2971 = vmatprep.mubr.f32.mxu0 0.0
    %2972 = vmatmul.mubr.f32.gmra.mxu0 %v84
    %v2973 = vpop.f32.mrf.mxu0
    %v2974 = vadd.f32 0.0, %v2973
    %v2975 = vpop.f32.mrf.mxu0
    %2976 = vmatprep.mubr.f32.mxu0 0.0
    %2977 = vmatmul.mubr.f32.gmra.mxu0 %v85
    %v2978 = vpop.f32.mrf.mxu0
    %v2979 = vadd.f32 0.0, %v2978
    %v2980 = vpop.f32.mrf.mxu0
    %2981 = vmatprep.mubr.f32.mxu0 0.0
    %2982 = vmatmul.mubr.f32.gmra.mxu0 %v86
    %v2983 = vpop.f32.mrf.mxu0
    %v2984 = vadd.f32 0.0, %v2983
    %v2985 = vpop.f32.mrf.mxu0
    %2986 = vmatprep.mubr.f32.mxu0 0.0
    %2987 = vmatmul.mubr.f32.gmra.mxu0 %v87
    %v2988 = vpop.f32.mrf.mxu0
    %v2989 = vadd.f32 0.0, %v2988
    %v2990 = vpop.f32.mrf.mxu0
    %2991 = vmatprep.mubr.f32.mxu0 0.0
    %2992 = vmatmul.mubr.f32.gmra.mxu0 %v88
    %v2993 = vpop.f32.mrf.mxu0
    %v2994 = vadd.f32 0.0, %v2993
    %v2995 = vpop.f32.mrf.mxu0
    %2996 = vmatprep.mubr.f32.mxu0 0.0
    %2997 = vmatmul.mubr.f32.gmra.mxu0 %v89
    %v2998 = vpop.f32.mrf.mxu0
    %v2999 = vadd.f32 0.0, %v2998
    %v3000 = vpop.f32.mrf.mxu0
    %3001 = vmatprep.mubr.f32.mxu0 0.0
    %3002 = vmatmul.mubr.f32.gmra.mxu0 %v90
    %v3003 = vpop.f32.mrf.mxu0
    %v3004 = vadd.f32 0.0, %v3003
    %v3005 = vpop.f32.mrf.mxu0
    %3006 = vmatprep.mubr.f32.mxu0 0.0
    %3007 = vmatmul.mubr.f32.gmra.mxu0 %v91
    %v3008 = vpop.f32.mrf.mxu0
    %v3009 = vadd.f32 0.0, %v3008
    %v3010 = vpop.f32.mrf.mxu0
    %3011 = vdwg.mxu0
    %3012 = vmatprep.subr.mxu0 0.0
    %3013 = vmatpush1.msra.mxu0 %v3009
    %3014 = vmatprep.subr.mxu0 0.0
    %3015 = vmatpush1.msra.mxu0 %v3004
    %3016 = vmatprep.subr.mxu0 0.0
    %3017 = vmatpush1.msra.mxu0 %v2999
    %3018 = vmatprep.subr.mxu0 0.0
    %3019 = vmatpush1.msra.mxu0 %v2994
    %3020 = vmatprep.subr.mxu0 0.0
    %3021 = vmatpush1.msra.mxu0 %v2989
    %3022 = vmatprep.subr.mxu0 0.0
    %3023 = vmatpush1.msra.mxu0 %v2984
    %3024 = vmatprep.subr.mxu0 0.0
    %3025 = vmatpush1.msra.mxu0 %v2979
    %3026 = vmatprep.subr.mxu0 0.0
    %3027 = vmatpush1.msra.mxu0 %v2974
    %3028 = vmatprep.subr.mxu0 0.0
    %3029 = vmatpush1.msra.mxu0 %v2969
    %3030 = vmatprep.subr.mxu0 0.0
    %3031 = vmatpush1.msra.mxu0 %v2964
    %3032 = vmatprep.subr.mxu0 0.0
    %3033 = vmatpush1.msra.mxu0 %v2959
    %3034 = vmatprep.subr.mxu0 0.0
    %3035 = vmatpush1.msra.mxu0 %v2954
    %3036 = vmatprep.subr.mxu0 0.0
    %3037 = vmatpush1.msra.mxu0 %v2949
    %3038 = vmatprep.subr.mxu0 0.0
    %3039 = vmatpush1.msra.mxu0 %v2944
    %3040 = vmatprep.subr.mxu0 0.0
    %3041 = vmatpush1.msra.mxu0 %v2939
    %3042 = vmatprep.subr.mxu0 0.0
    %3043 = vmatpush1.msra.mxu0 %v2934
    %3044 = vmatprep.subr.mxu0 0.0
    %3045 = vmatpush2.msra.mxu0 0.0
    %3046 = vmatprep.subr.mxu0 0.0
    %3047 = vmatpush2.msra.mxu0 0.0
    %3048 = vmatprep.subr.mxu0 0.0
    %3049 = vmatpush2.msra.mxu0 0.0
    %3050 = vmatprep.subr.mxu0 0.0
    %3051 = vmatpush2.msra.mxu0 0.0
    %3052 = vmatprep.subr.mxu0 0.0
    %3053 = vmatpush2.msra.mxu0 0.0
    %3054 = vmatprep.subr.mxu0 0.0
    %3055 = vmatpush2.msra.mxu0 0.0
    %3056 = vmatprep.subr.mxu0 0.0
    %3057 = vmatpush2.msra.mxu0 0.0
    %3058 = vmatprep.subr.mxu0 0.0
    %3059 = vmatpush2.msra.mxu0 0.0
    %3060 = vmatprep.subr.mxu0 0.0
    %3061 = vmatpush2.msra.mxu0 0.0
    %3062 = vmatprep.subr.mxu0 0.0
    %3063 = vmatpush2.msra.mxu0 0.0
    %3064 = vmatprep.subr.mxu0 0.0
    %3065 = vmatpush2.msra.mxu0 0.0
    %3066 = vmatprep.subr.mxu0 0.0
    %3067 = vmatpush2.msra.mxu0 0.0
    %3068 = vmatprep.subr.mxu0 0.0
    %3069 = vmatpush2.msra.mxu0 0.0
    %3070 = vmatprep.subr.mxu0 0.0
    %3071 = vmatpush2.msra.mxu0 0.0
    %3072 = vmatprep.subr.mxu0 0.0
    %3073 = vmatpush2.msra.mxu0 0.0
    %3074 = vmatprep.subr.mxu0 0.0
    %3075 = vmatpush2.msra.mxu0 0.0
    %3076 = vmatprep.mubr.f32.mxu0 0.0
    %3077 = vmatmul.mubr.f32.gmra.mxu0 %v92
    %v3078 = vpop.f32.mrf.mxu0
    %v3079 = vadd.f32 0.0, %v3078
    %v3080 = vpop.f32.mrf.mxu0
    %3081 = vmatprep.mubr.f32.mxu0 0.0
    %3082 = vmatmul.mubr.f32.gmra.mxu0 %v93
    %v3083 = vpop.f32.mrf.mxu0
    %v3084 = vadd.f32 0.0, %v3083
    %v3085 = vpop.f32.mrf.mxu0
    %3086 = vmatprep.mubr.f32.mxu0 0.0
    %3087 = vmatmul.mubr.f32.gmra.mxu0 %v94
    %v3088 = vpop.f32.mrf.mxu0
    %v3089 = vadd.f32 0.0, %v3088
    %v3090 = vpop.f32.mrf.mxu0
    %3091 = vmatprep.mubr.f32.mxu0 0.0
    %3092 = vmatmul.mubr.f32.gmra.mxu0 %v95
    %v3093 = vpop.f32.mrf.mxu0
    %v3094 = vadd.f32 0.0, %v3093
    %v3095 = vpop.f32.mrf.mxu0
    %3096 = vmatprep.mubr.f32.mxu0 0.0
    %3097 = vmatmul.mubr.f32.gmra.mxu0 %v96
    %v3098 = vpop.f32.mrf.mxu0
    %v3099 = vadd.f32 0.0, %v3098
    %v3100 = vpop.f32.mrf.mxu0
    %3101 = vmatprep.mubr.f32.mxu0 0.0
    %3102 = vmatmul.mubr.f32.gmra.mxu0 %v97
    %v3103 = vpop.f32.mrf.mxu0
    %v3104 = vadd.f32 0.0, %v3103
    %v3105 = vpop.f32.mrf.mxu0
    %3106 = vmatprep.mubr.f32.mxu0 0.0
    %3107 = vmatmul.mubr.f32.gmra.mxu0 %v98
    %v3108 = vpop.f32.mrf.mxu0
    %v3109 = vadd.f32 0.0, %v3108
    %v3110 = vpop.f32.mrf.mxu0
    %3111 = vmatprep.mubr.f32.mxu0 0.0
    %3112 = vmatmul.mubr.f32.gmra.mxu0 %v99
    %v3113 = vpop.f32.mrf.mxu0
    %v3114 = vadd.f32 0.0, %v3113
    %v3115 = vpop.f32.mrf.mxu0
    %3116 = vmatprep.mubr.f32.mxu0 0.0
    %3117 = vmatmul.mubr.f32.gmra.mxu0 %v100
    %v3118 = vpop.f32.mrf.mxu0
    %v3119 = vadd.f32 0.0, %v3118
    %v3120 = vpop.f32.mrf.mxu0
    %3121 = vmatprep.mubr.f32.mxu0 0.0
    %3122 = vmatmul.mubr.f32.gmra.mxu0 %v101
    %v3123 = vpop.f32.mrf.mxu0
    %v3124 = vadd.f32 0.0, %v3123
    %v3125 = vpop.f32.mrf.mxu0
    %3126 = vmatprep.mubr.f32.mxu0 0.0
    %3127 = vmatmul.mubr.f32.gmra.mxu0 %v102
    %v3128 = vpop.f32.mrf.mxu0
    %v3129 = vadd.f32 0.0, %v3128
    %v3130 = vpop.f32.mrf.mxu0
    %3131 = vmatprep.mubr.f32.mxu0 0.0
    %3132 = vmatmul.mubr.f32.gmra.mxu0 %v103
    %v3133 = vpop.f32.mrf.mxu0
    %v3134 = vadd.f32 0.0, %v3133
    %v3135 = vpop.f32.mrf.mxu0
    %3136 = vmatprep.mubr.f32.mxu0 0.0
    %3137 = vmatmul.mubr.f32.gmra.mxu0 %v104
    %v3138 = vpop.f32.mrf.mxu0
    %v3139 = vadd.f32 0.0, %v3138
    %v3140 = vpop.f32.mrf.mxu0
    %3141 = vmatprep.mubr.f32.mxu0 0.0
    %3142 = vmatmul.mubr.f32.gmra.mxu0 %v105
    %v3143 = vpop.f32.mrf.mxu0
    %v3144 = vadd.f32 0.0, %v3143
    %v3145 = vpop.f32.mrf.mxu0
    %3146 = vmatprep.mubr.f32.mxu0 0.0
    %3147 = vmatmul.mubr.f32.gmra.mxu0 %v106
    %v3148 = vpop.f32.mrf.mxu0
    %v3149 = vadd.f32 0.0, %v3148
    %v3150 = vpop.f32.mrf.mxu0
    %3151 = vmatprep.mubr.f32.mxu0 0.0
    %3152 = vmatmul.mubr.f32.gmra.mxu0 %v107
    %v3153 = vpop.f32.mrf.mxu0
    %v3154 = vadd.f32 0.0, %v3153
    %v3155 = vpop.f32.mrf.mxu0
    %3156 = vdwg.mxu0
    %3157 = vmatprep.subr.mxu0 0.0
    %3158 = vmatpush1.msra.mxu0 %v3154
    %3159 = vmatprep.subr.mxu0 0.0
    %3160 = vmatpush1.msra.mxu0 %v3149
    %3161 = vmatprep.subr.mxu0 0.0
    %3162 = vmatpush1.msra.mxu0 %v3144
    %3163 = vmatprep.subr.mxu0 0.0
    %3164 = vmatpush1.msra.mxu0 %v3139
    %3165 = vmatprep.subr.mxu0 0.0
    %3166 = vmatpush1.msra.mxu0 %v3134
    %3167 = vmatprep.subr.mxu0 0.0
    %3168 = vmatpush1.msra.mxu0 %v3129
    %3169 = vmatprep.subr.mxu0 0.0
    %3170 = vmatpush1.msra.mxu0 %v3124
    %3171 = vmatprep.subr.mxu0 0.0
    %3172 = vmatpush1.msra.mxu0 %v3119
    %3173 = vmatprep.subr.mxu0 0.0
    %3174 = vmatpush1.msra.mxu0 %v3114
    %3175 = vmatprep.subr.mxu0 0.0
    %3176 = vmatpush1.msra.mxu0 %v3109
    %3177 = vmatprep.subr.mxu0 0.0
    %3178 = vmatpush1.msra.mxu0 %v3104
    %3179 = vmatprep.subr.mxu0 0.0
    %3180 = vmatpush1.msra.mxu0 %v3099
    %3181 = vmatprep.subr.mxu0 0.0
    %3182 = vmatpush1.msra.mxu0 %v3094
    %3183 = vmatprep.subr.mxu0 0.0
    %3184 = vmatpush1.msra.mxu0 %v3089
    %3185 = vmatprep.subr.mxu0 0.0
    %3186 = vmatpush1.msra.mxu0 %v3084
    %3187 = vmatprep.subr.mxu0 0.0
    %3188 = vmatpush1.msra.mxu0 %v3079
    %3189 = vmatprep.subr.mxu0 0.0
    %3190 = vmatpush2.msra.mxu0 0.0
    %3191 = vmatprep.subr.mxu0 0.0
    %3192 = vmatpush2.msra.mxu0 0.0
    %3193 = vmatprep.subr.mxu0 0.0
    %3194 = vmatpush2.msra.mxu0 0.0
    %3195 = vmatprep.subr.mxu0 0.0
    %3196 = vmatpush2.msra.mxu0 0.0
    %3197 = vmatprep.subr.mxu0 0.0
    %3198 = vmatpush2.msra.mxu0 0.0
    %3199 = vmatprep.subr.mxu0 0.0
    %3200 = vmatpush2.msra.mxu0 0.0
    %3201 = vmatprep.subr.mxu0 0.0
    %3202 = vmatpush2.msra.mxu0 0.0
    %3203 = vmatprep.subr.mxu0 0.0
    %3204 = vmatpush2.msra.mxu0 0.0
    %3205 = vmatprep.subr.mxu0 0.0
    %3206 = vmatpush2.msra.mxu0 0.0
    %3207 = vmatprep.subr.mxu0 0.0
    %3208 = vmatpush2.msra.mxu0 0.0
    %3209 = vmatprep.subr.mxu0 0.0
    %3210 = vmatpush2.msra.mxu0 0.0
    %3211 = vmatprep.subr.mxu0 0.0
    %3212 = vmatpush2.msra.mxu0 0.0
    %3213 = vmatprep.subr.mxu0 0.0
    %3214 = vmatpush2.msra.mxu0 0.0
    %3215 = vmatprep.subr.mxu0 0.0
    %3216 = vmatpush2.msra.mxu0 0.0
    %3217 = vmatprep.subr.mxu0 0.0
    %3218 = vmatpush2.msra.mxu0 0.0
    %3219 = vmatprep.subr.mxu0 0.0
    %3220 = vmatpush2.msra.mxu0 0.0
    %3221 = vmatprep.mubr.f32.mxu0 0.0
    %3222 = vmatmul.mubr.f32.gmra.mxu0 %v76
    %v3223 = vpop.f32.mrf.mxu0
    %v3224 = vadd.f32 0.0, %v3223
    %v3225 = vpop.f32.mrf.mxu0
    %3226 = vmatprep.mubr.f32.mxu0 0.0
    %3227 = vmatmul.mubr.f32.gmra.mxu0 %v77
    %v3228 = vpop.f32.mrf.mxu0
    %v3229 = vadd.f32 0.0, %v3228
    %v3230 = vpop.f32.mrf.mxu0
    %3231 = vmatprep.mubr.f32.mxu0 0.0
    %3232 = vmatmul.mubr.f32.gmra.mxu0 %v78
    %v3233 = vpop.f32.mrf.mxu0
    %v3234 = vadd.f32 0.0, %v3233
    %v3235 = vpop.f32.mrf.mxu0
    %3236 = vmatprep.mubr.f32.mxu0 0.0
    %3237 = vmatmul.mubr.f32.gmra.mxu0 %v79
    %v3238 = vpop.f32.mrf.mxu0
    %v3239 = vadd.f32 0.0, %v3238
    %v3240 = vpop.f32.mrf.mxu0
    %3241 = vmatprep.mubr.f32.mxu0 0.0
    %3242 = vmatmul.mubr.f32.gmra.mxu0 %v80
    %v3243 = vpop.f32.mrf.mxu0
    %v3244 = vadd.f32 0.0, %v3243
    %v3245 = vpop.f32.mrf.mxu0
    %3246 = vmatprep.mubr.f32.mxu0 0.0
    %3247 = vmatmul.mubr.f32.gmra.mxu0 %v81
    %v3248 = vpop.f32.mrf.mxu0
    %v3249 = vadd.f32 0.0, %v3248
    %v3250 = vpop.f32.mrf.mxu0
    %3251 = vmatprep.mubr.f32.mxu0 0.0
    %3252 = vmatmul.mubr.f32.gmra.mxu0 %v82
    %v3253 = vpop.f32.mrf.mxu0
    %v3254 = vadd.f32 0.0, %v3253
    %v3255 = vpop.f32.mrf.mxu0
    %3256 = vmatprep.mubr.f32.mxu0 0.0
    %3257 = vmatmul.mubr.f32.gmra.mxu0 %v83
    %v3258 = vpop.f32.mrf.mxu0
    %v3259 = vadd.f32 0.0, %v3258
    %v3260 = vpop.f32.mrf.mxu0
    %3261 = vmatprep.mubr.f32.mxu0 0.0
    %3262 = vmatmul.mubr.f32.gmra.mxu0 %v84
    %v3263 = vpop.f32.mrf.mxu0
    %v3264 = vadd.f32 0.0, %v3263
    %v3265 = vpop.f32.mrf.mxu0
    %3266 = vmatprep.mubr.f32.mxu0 0.0
    %3267 = vmatmul.mubr.f32.gmra.mxu0 %v85
    %v3268 = vpop.f32.mrf.mxu0
    %v3269 = vadd.f32 0.0, %v3268
    %v3270 = vpop.f32.mrf.mxu0
    %3271 = vmatprep.mubr.f32.mxu0 0.0
    %3272 = vmatmul.mubr.f32.gmra.mxu0 %v86
    %v3273 = vpop.f32.mrf.mxu0
    %v3274 = vadd.f32 0.0, %v3273
    %v3275 = vpop.f32.mrf.mxu0
    %3276 = vmatprep.mubr.f32.mxu0 0.0
    %3277 = vmatmul.mubr.f32.gmra.mxu0 %v87
    %v3278 = vpop.f32.mrf.mxu0
    %v3279 = vadd.f32 0.0, %v3278
    %v3280 = vpop.f32.mrf.mxu0
    %3281 = vmatprep.mubr.f32.mxu0 0.0
    %3282 = vmatmul.mubr.f32.gmra.mxu0 %v88
    %v3283 = vpop.f32.mrf.mxu0
    %v3284 = vadd.f32 0.0, %v3283
    %v3285 = vpop.f32.mrf.mxu0
    %3286 = vmatprep.mubr.f32.mxu0 0.0
    %3287 = vmatmul.mubr.f32.gmra.mxu0 %v89
    %v3288 = vpop.f32.mrf.mxu0
    %v3289 = vadd.f32 0.0, %v3288
    %v3290 = vpop.f32.mrf.mxu0
    %3291 = vmatprep.mubr.f32.mxu0 0.0
    %3292 = vmatmul.mubr.f32.gmra.mxu0 %v90
    %v3293 = vpop.f32.mrf.mxu0
    %v3294 = vadd.f32 0.0, %v3293
    %v3295 = vpop.f32.mrf.mxu0
    %3296 = vmatprep.mubr.f32.mxu0 0.0
    %3297 = vmatmul.mubr.f32.gmra.mxu0 %v91
    %v3298 = vpop.f32.mrf.mxu0
    %v3299 = vadd.f32 0.0, %v3298
    %v3300 = vpop.f32.mrf.mxu0
    %3301 = vdwg.mxu0
    %3302 = vmatprep.subr.mxu0 0.0
    %3303 = vmatpush1.msra.mxu0 %v3299
    %3304 = vmatprep.subr.mxu0 0.0
    %3305 = vmatpush1.msra.mxu0 %v3294
    %3306 = vmatprep.subr.mxu0 0.0
    %3307 = vmatpush1.msra.mxu0 %v3289
    %3308 = vmatprep.subr.mxu0 0.0
    %3309 = vmatpush1.msra.mxu0 %v3284
    %3310 = vmatprep.subr.mxu0 0.0
    %3311 = vmatpush1.msra.mxu0 %v3279
    %3312 = vmatprep.subr.mxu0 0.0
    %3313 = vmatpush1.msra.mxu0 %v3274
    %3314 = vmatprep.subr.mxu0 0.0
    %3315 = vmatpush1.msra.mxu0 %v3269
    %3316 = vmatprep.subr.mxu0 0.0
    %3317 = vmatpush1.msra.mxu0 %v3264
    %3318 = vmatprep.subr.mxu0 0.0
    %3319 = vmatpush1.msra.mxu0 %v3259
    %3320 = vmatprep.subr.mxu0 0.0
    %3321 = vmatpush1.msra.mxu0 %v3254
    %3322 = vmatprep.subr.mxu0 0.0
    %3323 = vmatpush1.msra.mxu0 %v3249
    %3324 = vmatprep.subr.mxu0 0.0
    %3325 = vmatpush1.msra.mxu0 %v3244
    %3326 = vmatprep.subr.mxu0 0.0
    %3327 = vmatpush1.msra.mxu0 %v3239
    %3328 = vmatprep.subr.mxu0 0.0
    %3329 = vmatpush1.msra.mxu0 %v3234
    %3330 = vmatprep.subr.mxu0 0.0
    %3331 = vmatpush1.msra.mxu0 %v3229
    %3332 = vmatprep.subr.mxu0 0.0
    %3333 = vmatpush1.msra.mxu0 %v3224
    %3334 = vmatprep.subr.mxu0 0.0
    %3335 = vmatpush2.msra.mxu0 0.0
    %3336 = vmatprep.subr.mxu0 0.0
    %3337 = vmatpush2.msra.mxu0 0.0
    %3338 = vmatprep.subr.mxu0 0.0
    %3339 = vmatpush2.msra.mxu0 0.0
    %3340 = vmatprep.subr.mxu0 0.0
    %3341 = vmatpush2.msra.mxu0 0.0
    %3342 = vmatprep.subr.mxu0 0.0
    %3343 = vmatpush2.msra.mxu0 0.0
    %3344 = vmatprep.subr.mxu0 0.0
    %3345 = vmatpush2.msra.mxu0 0.0
    %3346 = vmatprep.subr.mxu0 0.0
    %3347 = vmatpush2.msra.mxu0 0.0
    %3348 = vmatprep.subr.mxu0 0.0
    %3349 = vmatpush2.msra.mxu0 0.0
    %3350 = vmatprep.subr.mxu0 0.0
    %3351 = vmatpush2.msra.mxu0 0.0
    %3352 = vmatprep.subr.mxu0 0.0
    %3353 = vmatpush2.msra.mxu0 0.0
    %3354 = vmatprep.subr.mxu0 0.0
    %3355 = vmatpush2.msra.mxu0 0.0
    %3356 = vmatprep.subr.mxu0 0.0
    %3357 = vmatpush2.msra.mxu0 0.0
    %3358 = vmatprep.subr.mxu0 0.0
    %3359 = vmatpush2.msra.mxu0 0.0
    %3360 = vmatprep.subr.mxu0 0.0
    %3361 = vmatpush2.msra.mxu0 0.0
    %3362 = vmatprep.subr.mxu0 0.0
    %3363 = vmatpush2.msra.mxu0 0.0
    %3364 = vmatprep.subr.mxu0 0.0
    %3365 = vmatpush2.msra.mxu0 0.0
    %3366 = vmatprep.mubr.f32.mxu0 0.0
    %3367 = vmatmul.mubr.f32.gmra.mxu0 %v92
    %v3368 = vpop.f32.mrf.mxu0
    %v3369 = vadd.f32 0.0, %v3368
    %v3370 = vpop.f32.mrf.mxu0
    %3371 = vmatprep.mubr.f32.mxu0 0.0
    %3372 = vmatmul.mubr.f32.gmra.mxu0 %v93
    %v3373 = vpop.f32.mrf.mxu0
    %v3374 = vadd.f32 0.0, %v3373
    %v3375 = vpop.f32.mrf.mxu0
    %3376 = vmatprep.mubr.f32.mxu0 0.0
    %3377 = vmatmul.mubr.f32.gmra.mxu0 %v94
    %v3378 = vpop.f32.mrf.mxu0
    %v3379 = vadd.f32 0.0, %v3378
    %v3380 = vpop.f32.mrf.mxu0
    %3381 = vmatprep.mubr.f32.mxu0 0.0
    %3382 = vmatmul.mubr.f32.gmra.mxu0 %v95
    %v3383 = vpop.f32.mrf.mxu0
    %v3384 = vadd.f32 0.0, %v3383
    %v3385 = vpop.f32.mrf.mxu0
    %3386 = vmatprep.mubr.f32.mxu0 0.0
    %3387 = vmatmul.mubr.f32.gmra.mxu0 %v96
    %v3388 = vpop.f32.mrf.mxu0
    %v3389 = vadd.f32 0.0, %v3388
    %v3390 = vpop.f32.mrf.mxu0
    %3391 = vmatprep.mubr.f32.mxu0 0.0
    %3392 = vmatmul.mubr.f32.gmra.mxu0 %v97
    %v3393 = vpop.f32.mrf.mxu0
    %v3394 = vadd.f32 0.0, %v3393
    %v3395 = vpop.f32.mrf.mxu0
    %3396 = vmatprep.mubr.f32.mxu0 0.0
    %3397 = vmatmul.mubr.f32.gmra.mxu0 %v98
    %v3398 = vpop.f32.mrf.mxu0
    %v3399 = vadd.f32 0.0, %v3398
    %v3400 = vpop.f32.mrf.mxu0
    %3401 = vmatprep.mubr.f32.mxu0 0.0
    %3402 = vmatmul.mubr.f32.gmra.mxu0 %v99
    %v3403 = vpop.f32.mrf.mxu0
    %v3404 = vadd.f32 0.0, %v3403
    %v3405 = vpop.f32.mrf.mxu0
    %3406 = vmatprep.mubr.f32.mxu0 0.0
    %3407 = vmatmul.mubr.f32.gmra.mxu0 %v100
    %v3408 = vpop.f32.mrf.mxu0
    %v3409 = vadd.f32 0.0, %v3408
    %v3410 = vpop.f32.mrf.mxu0
    %3411 = vmatprep.mubr.f32.mxu0 0.0
    %3412 = vmatmul.mubr.f32.gmra.mxu0 %v101
    %v3413 = vpop.f32.mrf.mxu0
    %v3414 = vadd.f32 0.0, %v3413
    %v3415 = vpop.f32.mrf.mxu0
    %3416 = vmatprep.mubr.f32.mxu0 0.0
    %3417 = vmatmul.mubr.f32.gmra.mxu0 %v102
    %v3418 = vpop.f32.mrf.mxu0
    %v3419 = vadd.f32 0.0, %v3418
    %v3420 = vpop.f32.mrf.mxu0
    %3421 = vmatprep.mubr.f32.mxu0 0.0
    %3422 = vmatmul.mubr.f32.gmra.mxu0 %v103
    %v3423 = vpop.f32.mrf.mxu0
    %v3424 = vadd.f32 0.0, %v3423
    %v3425 = vpop.f32.mrf.mxu0
    %3426 = vmatprep.mubr.f32.mxu0 0.0
    %3427 = vmatmul.mubr.f32.gmra.mxu0 %v104
    %v3428 = vpop.f32.mrf.mxu0
    %v3429 = vadd.f32 0.0, %v3428
    %v3430 = vpop.f32.mrf.mxu0
    %3431 = vmatprep.mubr.f32.mxu0 0.0
    %3432 = vmatmul.mubr.f32.gmra.mxu0 %v105
    %v3433 = vpop.f32.mrf.mxu0
    %v3434 = vadd.f32 0.0, %v3433
    %v3435 = vpop.f32.mrf.mxu0
    %3436 = vmatprep.mubr.f32.mxu0 0.0
    %3437 = vmatmul.mubr.f32.gmra.mxu0 %v106
    %v3438 = vpop.f32.mrf.mxu0
    %v3439 = vadd.f32 0.0, %v3438
    %v3440 = vpop.f32.mrf.mxu0
    %3441 = vmatprep.mubr.f32.mxu0 0.0
    %3442 = vmatmul.mubr.f32.gmra.mxu0 %v107
    %v3443 = vpop.f32.mrf.mxu0
    %v3444 = vadd.f32 0.0, %v3443
    %v3445 = vpop.f32.mrf.mxu0
    %3446 = vdwg.mxu0
    %3447 = vmatprep.subr.mxu0 0.0
    %3448 = vmatpush1.msra.mxu0 %v3444
    %3449 = vmatprep.subr.mxu0 0.0
    %3450 = vmatpush1.msra.mxu0 %v3439
    %3451 = vmatprep.subr.mxu0 0.0
    %3452 = vmatpush1.msra.mxu0 %v3434
    %3453 = vmatprep.subr.mxu0 0.0
    %3454 = vmatpush1.msra.mxu0 %v3429
    %3455 = vmatprep.subr.mxu0 0.0
    %3456 = vmatpush1.msra.mxu0 %v3424
    %3457 = vmatprep.subr.mxu0 0.0
    %3458 = vmatpush1.msra.mxu0 %v3419
    %3459 = vmatprep.subr.mxu0 0.0
    %3460 = vmatpush1.msra.mxu0 %v3414
    %3461 = vmatprep.subr.mxu0 0.0
    %3462 = vmatpush1.msra.mxu0 %v3409
    %3463 = vmatprep.subr.mxu0 0.0
    %3464 = vmatpush1.msra.mxu0 %v3404
    %3465 = vmatprep.subr.mxu0 0.0
    %3466 = vmatpush1.msra.mxu0 %v3399
    %3467 = vmatprep.subr.mxu0 0.0
    %3468 = vmatpush1.msra.mxu0 %v3394
    %3469 = vmatprep.subr.mxu0 0.0
    %3470 = vmatpush1.msra.mxu0 %v3389
    %3471 = vmatprep.subr.mxu0 0.0
    %3472 = vmatpush1.msra.mxu0 %v3384
    %3473 = vmatprep.subr.mxu0 0.0
    %3474 = vmatpush1.msra.mxu0 %v3379
    %3475 = vmatprep.subr.mxu0 0.0
    %3476 = vmatpush1.msra.mxu0 %v3374
    %3477 = vmatprep.subr.mxu0 0.0
    %3478 = vmatpush1.msra.mxu0 %v3369
    %3479 = vmatprep.subr.mxu0 0.0
    %3480 = vmatpush2.msra.mxu0 0.0
    %3481 = vmatprep.subr.mxu0 0.0
    %3482 = vmatpush2.msra.mxu0 0.0
    %3483 = vmatprep.subr.mxu0 0.0
    %3484 = vmatpush2.msra.mxu0 0.0
    %3485 = vmatprep.subr.mxu0 0.0
    %3486 = vmatpush2.msra.mxu0 0.0
    %3487 = vmatprep.subr.mxu0 0.0
    %3488 = vmatpush2.msra.mxu0 0.0
    %3489 = vmatprep.subr.mxu0 0.0
    %3490 = vmatpush2.msra.mxu0 0.0
    %3491 = vmatprep.subr.mxu0 0.0
    %3492 = vmatpush2.msra.mxu0 0.0
    %3493 = vmatprep.subr.mxu0 0.0
    %3494 = vmatpush2.msra.mxu0 0.0
    %3495 = vmatprep.subr.mxu0 0.0
    %3496 = vmatpush2.msra.mxu0 0.0
    %3497 = vmatprep.subr.mxu0 0.0
    %3498 = vmatpush2.msra.mxu0 0.0
    %3499 = vmatprep.subr.mxu0 0.0
    %3500 = vmatpush2.msra.mxu0 0.0
    %3501 = vmatprep.subr.mxu0 0.0
    %3502 = vmatpush2.msra.mxu0 0.0
    %3503 = vmatprep.subr.mxu0 0.0
    %3504 = vmatpush2.msra.mxu0 0.0
    %3505 = vmatprep.subr.mxu0 0.0
    %3506 = vmatpush2.msra.mxu0 0.0
    %3507 = vmatprep.subr.mxu0 0.0
    %3508 = vmatpush2.msra.mxu0 0.0
    %3509 = vmatprep.subr.mxu0 0.0
    %3510 = vmatpush2.msra.mxu0 0.0
    %3511 = vmatprep.mubr.f32.mxu0 0.0
    %3512 = vmatmul.mubr.f32.gmra.mxu0 %v76
    %v3513 = vpop.f32.mrf.mxu0
    %v3514 = vadd.f32 0.0, %v3513
    %v3515 = vpop.f32.mrf.mxu0
    %3516 = vmatprep.mubr.f32.mxu0 0.0
    %3517 = vmatmul.mubr.f32.gmra.mxu0 %v77
    %v3518 = vpop.f32.mrf.mxu0
    %v3519 = vadd.f32 0.0, %v3518
    %v3520 = vpop.f32.mrf.mxu0
    %3521 = vmatprep.mubr.f32.mxu0 0.0
    %3522 = vmatmul.mubr.f32.gmra.mxu0 %v78
    %v3523 = vpop.f32.mrf.mxu0
    %v3524 = vadd.f32 0.0, %v3523
    %v3525 = vpop.f32.mrf.mxu0
    %3526 = vmatprep.mubr.f32.mxu0 0.0
    %3527 = vmatmul.mubr.f32.gmra.mxu0 %v79
    %v3528 = vpop.f32.mrf.mxu0
    %v3529 = vadd.f32 0.0, %v3528
    %v3530 = vpop.f32.mrf.mxu0
    %3531 = vmatprep.mubr.f32.mxu0 0.0
    %3532 = vmatmul.mubr.f32.gmra.mxu0 %v80
    %v3533 = vpop.f32.mrf.mxu0
    %v3534 = vadd.f32 0.0, %v3533
    %v3535 = vpop.f32.mrf.mxu0
    %3536 = vmatprep.mubr.f32.mxu0 0.0
    %3537 = vmatmul.mubr.f32.gmra.mxu0 %v81
    %v3538 = vpop.f32.mrf.mxu0
    %v3539 = vadd.f32 0.0, %v3538
    %v3540 = vpop.f32.mrf.mxu0
    %3541 = vmatprep.mubr.f32.mxu0 0.0
    %3542 = vmatmul.mubr.f32.gmra.mxu0 %v82
    %v3543 = vpop.f32.mrf.mxu0
    %v3544 = vadd.f32 0.0, %v3543
    %v3545 = vpop.f32.mrf.mxu0
    %3546 = vmatprep.mubr.f32.mxu0 0.0
    %3547 = vmatmul.mubr.f32.gmra.mxu0 %v83
    %v3548 = vpop.f32.mrf.mxu0
    %v3549 = vadd.f32 0.0, %v3548
    %v3550 = vpop.f32.mrf.mxu0
    %3551 = vmatprep.mubr.f32.mxu0 0.0
    %3552 = vmatmul.mubr.f32.gmra.mxu0 %v84
    %v3553 = vpop.f32.mrf.mxu0
    %v3554 = vadd.f32 0.0, %v3553
    %v3555 = vpop.f32.mrf.mxu0
    %3556 = vmatprep.mubr.f32.mxu0 0.0
    %3557 = vmatmul.mubr.f32.gmra.mxu0 %v85
    %v3558 = vpop.f32.mrf.mxu0
    %v3559 = vadd.f32 0.0, %v3558
    %v3560 = vpop.f32.mrf.mxu0
    %3561 = vmatprep.mubr.f32.mxu0 0.0
    %3562 = vmatmul.mubr.f32.gmra.mxu0 %v86
    %v3563 = vpop.f32.mrf.mxu0
    %v3564 = vadd.f32 0.0, %v3563
    %v3565 = vpop.f32.mrf.mxu0
    %3566 = vmatprep.mubr.f32.mxu0 0.0
    %3567 = vmatmul.mubr.f32.gmra.mxu0 %v87
    %v3568 = vpop.f32.mrf.mxu0
    %v3569 = vadd.f32 0.0, %v3568
    %v3570 = vpop.f32.mrf.mxu0
    %3571 = vmatprep.mubr.f32.mxu0 0.0
    %3572 = vmatmul.mubr.f32.gmra.mxu0 %v88
    %v3573 = vpop.f32.mrf.mxu0
    %v3574 = vadd.f32 0.0, %v3573
    %v3575 = vpop.f32.mrf.mxu0
    %3576 = vmatprep.mubr.f32.mxu0 0.0
    %3577 = vmatmul.mubr.f32.gmra.mxu0 %v89
    %v3578 = vpop.f32.mrf.mxu0
    %v3579 = vadd.f32 0.0, %v3578
    %v3580 = vpop.f32.mrf.mxu0
    %3581 = vmatprep.mubr.f32.mxu0 0.0
    %3582 = vmatmul.mubr.f32.gmra.mxu0 %v90
    %v3583 = vpop.f32.mrf.mxu0
    %v3584 = vadd.f32 0.0, %v3583
    %v3585 = vpop.f32.mrf.mxu0
    %3586 = vmatprep.mubr.f32.mxu0 0.0
    %3587 = vmatmul.mubr.f32.gmra.mxu0 %v91
    %v3588 = vpop.f32.mrf.mxu0
    %v3589 = vadd.f32 0.0, %v3588
    %v3590 = vpop.f32.mrf.mxu0
    %3591 = vdwg.mxu0
    %3592 = vmatprep.subr.mxu0 0.0
    %3593 = vmatpush1.msra.mxu0 %v3589
    %3594 = vmatprep.subr.mxu0 0.0
    %3595 = vmatpush1.msra.mxu0 %v3584
    %3596 = vmatprep.subr.mxu0 0.0
    %3597 = vmatpush1.msra.mxu0 %v3579
    %3598 = vmatprep.subr.mxu0 0.0
    %3599 = vmatpush1.msra.mxu0 %v3574
    %3600 = vmatprep.subr.mxu0 0.0
    %3601 = vmatpush1.msra.mxu0 %v3569
    %3602 = vmatprep.subr.mxu0 0.0
    %3603 = vmatpush1.msra.mxu0 %v3564
    %3604 = vmatprep.subr.mxu0 0.0
    %3605 = vmatpush1.msra.mxu0 %v3559
    %3606 = vmatprep.subr.mxu0 0.0
    %3607 = vmatpush1.msra.mxu0 %v3554
    %3608 = vmatprep.subr.mxu0 0.0
    %3609 = vmatpush1.msra.mxu0 %v3549
    %3610 = vmatprep.subr.mxu0 0.0
    %3611 = vmatpush1.msra.mxu0 %v3544
    %3612 = vmatprep.subr.mxu0 0.0
    %3613 = vmatpush1.msra.mxu0 %v3539
    %3614 = vmatprep.subr.mxu0 0.0
    %3615 = vmatpush1.msra.mxu0 %v3534
    %3616 = vmatprep.subr.mxu0 0.0
    %3617 = vmatpush1.msra.mxu0 %v3529
    %3618 = vmatprep.subr.mxu0 0.0
    %3619 = vmatpush1.msra.mxu0 %v3524
    %3620 = vmatprep.subr.mxu0 0.0
    %3621 = vmatpush1.msra.mxu0 %v3519
    %3622 = vmatprep.subr.mxu0 0.0
    %3623 = vmatpush1.msra.mxu0 %v3514
    %3624 = vmatprep.subr.mxu0 0.0
    %3625 = vmatpush2.msra.mxu0 0.0
    %3626 = vmatprep.subr.mxu0 0.0
    %3627 = vmatpush2.msra.mxu0 0.0
    %3628 = vmatprep.subr.mxu0 0.0
    %3629 = vmatpush2.msra.mxu0 0.0
    %3630 = vmatprep.subr.mxu0 0.0
    %3631 = vmatpush2.msra.mxu0 0.0
    %3632 = vmatprep.subr.mxu0 0.0
    %3633 = vmatpush2.msra.mxu0 0.0
    %3634 = vmatprep.subr.mxu0 0.0
    %3635 = vmatpush2.msra.mxu0 0.0
    %3636 = vmatprep.subr.mxu0 0.0
    %3637 = vmatpush2.msra.mxu0 0.0
    %3638 = vmatprep.subr.mxu0 0.0
    %3639 = vmatpush2.msra.mxu0 0.0
    %3640 = vmatprep.subr.mxu0 0.0
    %3641 = vmatpush2.msra.mxu0 0.0
    %3642 = vmatprep.subr.mxu0 0.0
    %3643 = vmatpush2.msra.mxu0 0.0
    %3644 = vmatprep.subr.mxu0 0.0
    %3645 = vmatpush2.msra.mxu0 0.0
    %3646 = vmatprep.subr.mxu0 0.0
    %3647 = vmatpush2.msra.mxu0 0.0
    %3648 = vmatprep.subr.mxu0 0.0
    %3649 = vmatpush2.msra.mxu0 0.0
    %3650 = vmatprep.subr.mxu0 0.0
    %3651 = vmatpush2.msra.mxu0 0.0
    %3652 = vmatprep.subr.mxu0 0.0
    %3653 = vmatpush2.msra.mxu0 0.0
    %3654 = vmatprep.subr.mxu0 0.0
    %3655 = vmatpush2.msra.mxu0 0.0
    %3656 = vmatprep.mubr.f32.mxu0 0.0
    %3657 = vmatmul.mubr.f32.gmra.mxu0 %v92
    %v3658 = vpop.f32.mrf.mxu0
    %v3659 = vadd.f32 0.0, %v3658
    %v3660 = vpop.f32.mrf.mxu0
    %3661 = vmatprep.mubr.f32.mxu0 0.0
    %3662 = vmatmul.mubr.f32.gmra.mxu0 %v93
    %v3663 = vpop.f32.mrf.mxu0
    %v3664 = vadd.f32 0.0, %v3663
    %v3665 = vpop.f32.mrf.mxu0
    %3666 = vmatprep.mubr.f32.mxu0 0.0
    %3667 = vmatmul.mubr.f32.gmra.mxu0 %v94
    %v3668 = vpop.f32.mrf.mxu0
    %v3669 = vadd.f32 0.0, %v3668
    %v3670 = vpop.f32.mrf.mxu0
    %3671 = vmatprep.mubr.f32.mxu0 0.0
    %3672 = vmatmul.mubr.f32.gmra.mxu0 %v95
    %v3673 = vpop.f32.mrf.mxu0
    %v3674 = vadd.f32 0.0, %v3673
    %v3675 = vpop.f32.mrf.mxu0
    %3676 = vmatprep.mubr.f32.mxu0 0.0
    %3677 = vmatmul.mubr.f32.gmra.mxu0 %v96
    %v3678 = vpop.f32.mrf.mxu0
    %v3679 = vadd.f32 0.0, %v3678
    %v3680 = vpop.f32.mrf.mxu0
    %3681 = vmatprep.mubr.f32.mxu0 0.0
    %3682 = vmatmul.mubr.f32.gmra.mxu0 %v97
    %v3683 = vpop.f32.mrf.mxu0
    %v3684 = vadd.f32 0.0, %v3683
    %v3685 = vpop.f32.mrf.mxu0
    %3686 = vmatprep.mubr.f32.mxu0 0.0
    %3687 = vmatmul.mubr.f32.gmra.mxu0 %v98
    %v3688 = vpop.f32.mrf.mxu0
    %v3689 = vadd.f32 0.0, %v3688
    %v3690 = vpop.f32.mrf.mxu0
    %3691 = vmatprep.mubr.f32.mxu0 0.0
    %3692 = vmatmul.mubr.f32.gmra.mxu0 %v99
    %v3693 = vpop.f32.mrf.mxu0
    %v3694 = vadd.f32 0.0, %v3693
    %v3695 = vpop.f32.mrf.mxu0
    %3696 = vmatprep.mubr.f32.mxu0 0.0
    %3697 = vmatmul.mubr.f32.gmra.mxu0 %v100
    %v3698 = vpop.f32.mrf.mxu0
    %v3699 = vadd.f32 0.0, %v3698
    %v3700 = vpop.f32.mrf.mxu0
    %3701 = vmatprep.mubr.f32.mxu0 0.0
    %3702 = vmatmul.mubr.f32.gmra.mxu0 %v101
    %v3703 = vpop.f32.mrf.mxu0
    %v3704 = vadd.f32 0.0, %v3703
    %v3705 = vpop.f32.mrf.mxu0
    %3706 = vmatprep.mubr.f32.mxu0 0.0
    %3707 = vmatmul.mubr.f32.gmra.mxu0 %v102
    %v3708 = vpop.f32.mrf.mxu0
    %v3709 = vadd.f32 0.0, %v3708
    %v3710 = vpop.f32.mrf.mxu0
    %3711 = vmatprep.mubr.f32.mxu0 0.0
    %3712 = vmatmul.mubr.f32.gmra.mxu0 %v103
    %v3713 = vpop.f32.mrf.mxu0
    %v3714 = vadd.f32 0.0, %v3713
    %v3715 = vpop.f32.mrf.mxu0
    %3716 = vmatprep.mubr.f32.mxu0 0.0
    %3717 = vmatmul.mubr.f32.gmra.mxu0 %v104
    %v3718 = vpop.f32.mrf.mxu0
    %v3719 = vadd.f32 0.0, %v3718
    %v3720 = vpop.f32.mrf.mxu0
    %3721 = vmatprep.mubr.f32.mxu0 0.0
    %3722 = vmatmul.mubr.f32.gmra.mxu0 %v105
    %v3723 = vpop.f32.mrf.mxu0
    %v3724 = vadd.f32 0.0, %v3723
    %v3725 = vpop.f32.mrf.mxu0
    %3726 = vmatprep.mubr.f32.mxu0 0.0
    %3727 = vmatmul.mubr.f32.gmra.mxu0 %v106
    %v3728 = vpop.f32.mrf.mxu0
    %v3729 = vadd.f32 0.0, %v3728
    %v3730 = vpop.f32.mrf.mxu0
    %3731 = vmatprep.mubr.f32.mxu0 0.0
    %3732 = vmatmul.mubr.f32.gmra.mxu0 %v107
    %v3733 = vpop.f32.mrf.mxu0
    %v3734 = vadd.f32 0.0, %v3733
    %v3735 = vpop.f32.mrf.mxu0
    %3736 = vdwg.mxu0
    %3737 = vmatprep.subr.mxu0 0.0
    %3738 = vmatpush1.msra.mxu0 %v3734
    %3739 = vmatprep.subr.mxu0 0.0
    %3740 = vmatpush1.msra.mxu0 %v3729
    %3741 = vmatprep.subr.mxu0 0.0
    %3742 = vmatpush1.msra.mxu0 %v3724
    %3743 = vmatprep.subr.mxu0 0.0
    %3744 = vmatpush1.msra.mxu0 %v3719
    %3745 = vmatprep.subr.mxu0 0.0
    %3746 = vmatpush1.msra.mxu0 %v3714
    %3747 = vmatprep.subr.mxu0 0.0
    %3748 = vmatpush1.msra.mxu0 %v3709
    %3749 = vmatprep.subr.mxu0 0.0
    %3750 = vmatpush1.msra.mxu0 %v3704
    %3751 = vmatprep.subr.mxu0 0.0
    %3752 = vmatpush1.msra.mxu0 %v3699
    %3753 = vmatprep.subr.mxu0 0.0
    %3754 = vmatpush1.msra.mxu0 %v3694
    %3755 = vmatprep.subr.mxu0 0.0
    %3756 = vmatpush1.msra.mxu0 %v3689
    %3757 = vmatprep.subr.mxu0 0.0
    %3758 = vmatpush1.msra.mxu0 %v3684
    %3759 = vmatprep.subr.mxu0 0.0
    %3760 = vmatpush1.msra.mxu0 %v3679
    %3761 = vmatprep.subr.mxu0 0.0
    %3762 = vmatpush1.msra.mxu0 %v3674
    %3763 = vmatprep.subr.mxu0 0.0
    %3764 = vmatpush1.msra.mxu0 %v3669
    %3765 = vmatprep.subr.mxu0 0.0
    %3766 = vmatpush1.msra.mxu0 %v3664
    %3767 = vmatprep.subr.mxu0 0.0
    %3768 = vmatpush1.msra.mxu0 %v3659
    %3769 = vmatprep.subr.mxu0 0.0
    %3770 = vmatpush2.msra.mxu0 0.0
    %3771 = vmatprep.subr.mxu0 0.0
    %3772 = vmatpush2.msra.mxu0 0.0
    %3773 = vmatprep.subr.mxu0 0.0
    %3774 = vmatpush2.msra.mxu0 0.0
    %3775 = vmatprep.subr.mxu0 0.0
    %3776 = vmatpush2.msra.mxu0 0.0
    %3777 = vmatprep.subr.mxu0 0.0
    %3778 = vmatpush2.msra.mxu0 0.0
    %3779 = vmatprep.subr.mxu0 0.0
    %3780 = vmatpush2.msra.mxu0 0.0
    %3781 = vmatprep.subr.mxu0 0.0
    %3782 = vmatpush2.msra.mxu0 0.0
    %3783 = vmatprep.subr.mxu0 0.0
    %3784 = vmatpush2.msra.mxu0 0.0
    %3785 = vmatprep.subr.mxu0 0.0
    %3786 = vmatpush2.msra.mxu0 0.0
    %3787 = vmatprep.subr.mxu0 0.0
    %3788 = vmatpush2.msra.mxu0 0.0
    %3789 = vmatprep.subr.mxu0 0.0
    %3790 = vmatpush2.msra.mxu0 0.0
    %3791 = vmatprep.subr.mxu0 0.0
    %3792 = vmatpush2.msra.mxu0 0.0
    %3793 = vmatprep.subr.mxu0 0.0
    %3794 = vmatpush2.msra.mxu0 0.0
    %3795 = vmatprep.subr.mxu0 0.0
    %3796 = vmatpush2.msra.mxu0 0.0
    %3797 = vmatprep.subr.mxu0 0.0
    %3798 = vmatpush2.msra.mxu0 0.0
    %3799 = vmatprep.subr.mxu0 0.0
    %3800 = vmatpush2.msra.mxu0 0.0
    %3801 = vmatprep.mubr.f32.mxu0 0.0
    %3802 = vmatmul.mubr.f32.gmra.mxu0 %v76
    %v3803 = vpop.f32.mrf.mxu0
    %v3804 = vadd.f32 0.0, %v3803
    %v3805 = vpop.f32.mrf.mxu0
    %3806 = vmatprep.mubr.f32.mxu0 0.0
    %3807 = vmatmul.mubr.f32.gmra.mxu0 %v77
    %v3808 = vpop.f32.mrf.mxu0
    %v3809 = vadd.f32 0.0, %v3808
    %v3810 = vpop.f32.mrf.mxu0
    %3811 = vmatprep.mubr.f32.mxu0 0.0
    %3812 = vmatmul.mubr.f32.gmra.mxu0 %v78
    %v3813 = vpop.f32.mrf.mxu0
    %v3814 = vadd.f32 0.0, %v3813
    %v3815 = vpop.f32.mrf.mxu0
    %3816 = vmatprep.mubr.f32.mxu0 0.0
    %3817 = vmatmul.mubr.f32.gmra.mxu0 %v79
    %v3818 = vpop.f32.mrf.mxu0
    %v3819 = vadd.f32 0.0, %v3818
    %v3820 = vpop.f32.mrf.mxu0
    %3821 = vmatprep.mubr.f32.mxu0 0.0
    %3822 = vmatmul.mubr.f32.gmra.mxu0 %v80
    %v3823 = vpop.f32.mrf.mxu0
    %v3824 = vadd.f32 0.0, %v3823
    %v3825 = vpop.f32.mrf.mxu0
    %3826 = vmatprep.mubr.f32.mxu0 0.0
    %3827 = vmatmul.mubr.f32.gmra.mxu0 %v81
    %v3828 = vpop.f32.mrf.mxu0
    %v3829 = vadd.f32 0.0, %v3828
    %v3830 = vpop.f32.mrf.mxu0
    %3831 = vmatprep.mubr.f32.mxu0 0.0
    %3832 = vmatmul.mubr.f32.gmra.mxu0 %v82
    %v3833 = vpop.f32.mrf.mxu0
    %v3834 = vadd.f32 0.0, %v3833
    %v3835 = vpop.f32.mrf.mxu0
    %3836 = vmatprep.mubr.f32.mxu0 0.0
    %3837 = vmatmul.mubr.f32.gmra.mxu0 %v83
    %v3838 = vpop.f32.mrf.mxu0
    %v3839 = vadd.f32 0.0, %v3838
    %v3840 = vpop.f32.mrf.mxu0
    %3841 = vmatprep.mubr.f32.mxu0 0.0
    %3842 = vmatmul.mubr.f32.gmra.mxu0 %v84
    %v3843 = vpop.f32.mrf.mxu0
    %v3844 = vadd.f32 0.0, %v3843
    %v3845 = vpop.f32.mrf.mxu0
    %3846 = vmatprep.mubr.f32.mxu0 0.0
    %3847 = vmatmul.mubr.f32.gmra.mxu0 %v85
    %v3848 = vpop.f32.mrf.mxu0
    %v3849 = vadd.f32 0.0, %v3848
    %v3850 = vpop.f32.mrf.mxu0
    %3851 = vmatprep.mubr.f32.mxu0 0.0
    %3852 = vmatmul.mubr.f32.gmra.mxu0 %v86
    %v3853 = vpop.f32.mrf.mxu0
    %v3854 = vadd.f32 0.0, %v3853
    %v3855 = vpop.f32.mrf.mxu0
    %3856 = vmatprep.mubr.f32.mxu0 0.0
    %3857 = vmatmul.mubr.f32.gmra.mxu0 %v87
    %v3858 = vpop.f32.mrf.mxu0
    %v3859 = vadd.f32 0.0, %v3858
    %v3860 = vpop.f32.mrf.mxu0
    %3861 = vmatprep.mubr.f32.mxu0 0.0
    %3862 = vmatmul.mubr.f32.gmra.mxu0 %v88
    %v3863 = vpop.f32.mrf.mxu0
    %v3864 = vadd.f32 0.0, %v3863
    %v3865 = vpop.f32.mrf.mxu0
    %3866 = vmatprep.mubr.f32.mxu0 0.0
    %3867 = vmatmul.mubr.f32.gmra.mxu0 %v89
    %v3868 = vpop.f32.mrf.mxu0
    %v3869 = vadd.f32 0.0, %v3868
    %v3870 = vpop.f32.mrf.mxu0
    %3871 = vmatprep.mubr.f32.mxu0 0.0
    %3872 = vmatmul.mubr.f32.gmra.mxu0 %v90
    %v3873 = vpop.f32.mrf.mxu0
    %v3874 = vadd.f32 0.0, %v3873
    %v3875 = vpop.f32.mrf.mxu0
    %3876 = vmatprep.mubr.f32.mxu0 0.0
    %3877 = vmatmul.mubr.f32.gmra.mxu0 %v91
    %v3878 = vpop.f32.mrf.mxu0
    %v3879 = vadd.f32 0.0, %v3878
    %v3880 = vpop.f32.mrf.mxu0
    %3881 = vdwg.mxu0
    %3882 = vmatprep.subr.mxu0 0.0
    %3883 = vmatpush1.msra.mxu0 %v3879
    %3884 = vmatprep.subr.mxu0 0.0
    %3885 = vmatpush1.msra.mxu0 %v3874
    %3886 = vmatprep.subr.mxu0 0.0
    %3887 = vmatpush1.msra.mxu0 %v3869
    %3888 = vmatprep.subr.mxu0 0.0
    %3889 = vmatpush1.msra.mxu0 %v3864
    %3890 = vmatprep.subr.mxu0 0.0
    %3891 = vmatpush1.msra.mxu0 %v3859
    %3892 = vmatprep.subr.mxu0 0.0
    %3893 = vmatpush1.msra.mxu0 %v3854
    %3894 = vmatprep.subr.mxu0 0.0
    %3895 = vmatpush1.msra.mxu0 %v3849
    %3896 = vmatprep.subr.mxu0 0.0
    %3897 = vmatpush1.msra.mxu0 %v3844
    %3898 = vmatprep.subr.mxu0 0.0
    %3899 = vmatpush1.msra.mxu0 %v3839
    %3900 = vmatprep.subr.mxu0 0.0
    %3901 = vmatpush1.msra.mxu0 %v3834
    %3902 = vmatprep.subr.mxu0 0.0
    %3903 = vmatpush1.msra.mxu0 %v3829
    %3904 = vmatprep.subr.mxu0 0.0
    %3905 = vmatpush1.msra.mxu0 %v3824
    %3906 = vmatprep.subr.mxu0 0.0
    %3907 = vmatpush1.msra.mxu0 %v3819
    %3908 = vmatprep.subr.mxu0 0.0
    %3909 = vmatpush1.msra.mxu0 %v3814
    %3910 = vmatprep.subr.mxu0 0.0
    %3911 = vmatpush1.msra.mxu0 %v3809
    %3912 = vmatprep.subr.mxu0 0.0
    %3913 = vmatpush1.msra.mxu0 %v3804
    %3914 = vmatprep.subr.mxu0 0.0
    %3915 = vmatpush2.msra.mxu0 0.0
    %3916 = vmatprep.subr.mxu0 0.0
    %3917 = vmatpush2.msra.mxu0 0.0
    %3918 = vmatprep.subr.mxu0 0.0
    %3919 = vmatpush2.msra.mxu0 0.0
    %3920 = vmatprep.subr.mxu0 0.0
    %3921 = vmatpush2.msra.mxu0 0.0
    %3922 = vmatprep.subr.mxu0 0.0
    %3923 = vmatpush2.msra.mxu0 0.0
    %3924 = vmatprep.subr.mxu0 0.0
    %3925 = vmatpush2.msra.mxu0 0.0
    %3926 = vmatprep.subr.mxu0 0.0
    %3927 = vmatpush2.msra.mxu0 0.0
    %3928 = vmatprep.subr.mxu0 0.0
    %3929 = vmatpush2.msra.mxu0 0.0
    %3930 = vmatprep.subr.mxu0 0.0
    %3931 = vmatpush2.msra.mxu0 0.0
    %3932 = vmatprep.subr.mxu0 0.0
    %3933 = vmatpush2.msra.mxu0 0.0
    %3934 = vmatprep.subr.mxu0 0.0
    %3935 = vmatpush2.msra.mxu0 0.0
    %3936 = vmatprep.subr.mxu0 0.0
    %3937 = vmatpush2.msra.mxu0 0.0
    %3938 = vmatprep.subr.mxu0 0.0
    %3939 = vmatpush2.msra.mxu0 0.0
    %3940 = vmatprep.subr.mxu0 0.0
    %3941 = vmatpush2.msra.mxu0 0.0
    %3942 = vmatprep.subr.mxu0 0.0
    %3943 = vmatpush2.msra.mxu0 0.0
    %3944 = vmatprep.subr.mxu0 0.0
    %3945 = vmatpush2.msra.mxu0 0.0
    %3946 = vmatprep.mubr.f32.mxu0 0.0
    %3947 = vmatmul.mubr.f32.gmra.mxu0 %v92
    %v3948 = vpop.f32.mrf.mxu0
    %v3949 = vadd.f32 0.0, %v3948
    %v3950 = vpop.f32.mrf.mxu0
    %3951 = vmatprep.mubr.f32.mxu0 0.0
    %3952 = vmatmul.mubr.f32.gmra.mxu0 %v93
    %v3953 = vpop.f32.mrf.mxu0
    %v3954 = vadd.f32 0.0, %v3953
    %v3955 = vpop.f32.mrf.mxu0
    %3956 = vmatprep.mubr.f32.mxu0 0.0
    %3957 = vmatmul.mubr.f32.gmra.mxu0 %v94
    %v3958 = vpop.f32.mrf.mxu0
    %v3959 = vadd.f32 0.0, %v3958
    %v3960 = vpop.f32.mrf.mxu0
    %3961 = vmatprep.mubr.f32.mxu0 0.0
    %3962 = vmatmul.mubr.f32.gmra.mxu0 %v95
    %v3963 = vpop.f32.mrf.mxu0
    %v3964 = vadd.f32 0.0, %v3963
    %v3965 = vpop.f32.mrf.mxu0
    %3966 = vmatprep.mubr.f32.mxu0 0.0
    %3967 = vmatmul.mubr.f32.gmra.mxu0 %v96
    %v3968 = vpop.f32.mrf.mxu0
    %v3969 = vadd.f32 0.0, %v3968
    %v3970 = vpop.f32.mrf.mxu0
    %3971 = vmatprep.mubr.f32.mxu0 0.0
    %3972 = vmatmul.mubr.f32.gmra.mxu0 %v97
    %v3973 = vpop.f32.mrf.mxu0
    %v3974 = vadd.f32 0.0, %v3973
    %v3975 = vpop.f32.mrf.mxu0
    %3976 = vmatprep.mubr.f32.mxu0 0.0
    %3977 = vmatmul.mubr.f32.gmra.mxu0 %v98
    %v3978 = vpop.f32.mrf.mxu0
    %v3979 = vadd.f32 0.0, %v3978
    %v3980 = vpop.f32.mrf.mxu0
    %3981 = vmatprep.mubr.f32.mxu0 0.0
    %3982 = vmatmul.mubr.f32.gmra.mxu0 %v99
    %v3983 = vpop.f32.mrf.mxu0
    %v3984 = vadd.f32 0.0, %v3983
    %v3985 = vpop.f32.mrf.mxu0
    %3986 = vmatprep.mubr.f32.mxu0 0.0
    %3987 = vmatmul.mubr.f32.gmra.mxu0 %v100
    %v3988 = vpop.f32.mrf.mxu0
    %v3989 = vadd.f32 0.0, %v3988
    %v3990 = vpop.f32.mrf.mxu0
    %3991 = vmatprep.mubr.f32.mxu0 0.0
    %3992 = vmatmul.mubr.f32.gmra.mxu0 %v101
    %v3993 = vpop.f32.mrf.mxu0
    %v3994 = vadd.f32 0.0, %v3993
    %v3995 = vpop.f32.mrf.mxu0
    %3996 = vmatprep.mubr.f32.mxu0 0.0
    %3997 = vmatmul.mubr.f32.gmra.mxu0 %v102
    %v3998 = vpop.f32.mrf.mxu0
    %v3999 = vadd.f32 0.0, %v3998
    %v4000 = vpop.f32.mrf.mxu0
    %4001 = vmatprep.mubr.f32.mxu0 0.0
    %4002 = vmatmul.mubr.f32.gmra.mxu0 %v103
    %v4003 = vpop.f32.mrf.mxu0
    %v4004 = vadd.f32 0.0, %v4003
    %v4005 = vpop.f32.mrf.mxu0
    %4006 = vmatprep.mubr.f32.mxu0 0.0
    %4007 = vmatmul.mubr.f32.gmra.mxu0 %v104
    %v4008 = vpop.f32.mrf.mxu0
    %v4009 = vadd.f32 0.0, %v4008
    %v4010 = vpop.f32.mrf.mxu0
    %4011 = vmatprep.mubr.f32.mxu0 0.0
    %4012 = vmatmul.mubr.f32.gmra.mxu0 %v105
    %v4013 = vpop.f32.mrf.mxu0
    %v4014 = vadd.f32 0.0, %v4013
    %v4015 = vpop.f32.mrf.mxu0
    %4016 = vmatprep.mubr.f32.mxu0 0.0
    %4017 = vmatmul.mubr.f32.gmra.mxu0 %v106
    %v4018 = vpop.f32.mrf.mxu0
    %v4019 = vadd.f32 0.0, %v4018
    %v4020 = vpop.f32.mrf.mxu0
    %4021 = vmatprep.mubr.f32.mxu0 0.0
    %4022 = vmatmul.mubr.f32.gmra.mxu0 %v107
    %v4023 = vpop.f32.mrf.mxu0
    %v4024 = vadd.f32 0.0, %v4023
    %v4025 = vpop.f32.mrf.mxu0
    %4026 = vdwg.mxu0
    %4027 = vmatprep.subr.mxu0 0.0
    %4028 = vmatpush1.msra.mxu0 %v4024
    %4029 = vmatprep.subr.mxu0 0.0
    %4030 = vmatpush1.msra.mxu0 %v4019
    %4031 = vmatprep.subr.mxu0 0.0
    %4032 = vmatpush1.msra.mxu0 %v4014
    %4033 = vmatprep.subr.mxu0 0.0
    %4034 = vmatpush1.msra.mxu0 %v4009
    %4035 = vmatprep.subr.mxu0 0.0
    %4036 = vmatpush1.msra.mxu0 %v4004
    %4037 = vmatprep.subr.mxu0 0.0
    %4038 = vmatpush1.msra.mxu0 %v3999
    %4039 = vmatprep.subr.mxu0 0.0
    %4040 = vmatpush1.msra.mxu0 %v3994
    %4041 = vmatprep.subr.mxu0 0.0
    %4042 = vmatpush1.msra.mxu0 %v3989
    %4043 = vmatprep.subr.mxu0 0.0
    %4044 = vmatpush1.msra.mxu0 %v3984
    %4045 = vmatprep.subr.mxu0 0.0
    %4046 = vmatpush1.msra.mxu0 %v3979
    %4047 = vmatprep.subr.mxu0 0.0
    %4048 = vmatpush1.msra.mxu0 %v3974
    %4049 = vmatprep.subr.mxu0 0.0
    %4050 = vmatpush1.msra.mxu0 %v3969
    %4051 = vmatprep.subr.mxu0 0.0
    %4052 = vmatpush1.msra.mxu0 %v3964
    %4053 = vmatprep.subr.mxu0 0.0
    %4054 = vmatpush1.msra.mxu0 %v3959
    %4055 = vmatprep.subr.mxu0 0.0
    %4056 = vmatpush1.msra.mxu0 %v3954
    %4057 = vmatprep.subr.mxu0 0.0
    %4058 = vmatpush1.msra.mxu0 %v3949
    %4059 = vmatprep.subr.mxu0 0.0
    %4060 = vmatpush2.msra.mxu0 0.0
    %4061 = vmatprep.subr.mxu0 0.0
    %4062 = vmatpush2.msra.mxu0 0.0
    %4063 = vmatprep.subr.mxu0 0.0
    %4064 = vmatpush2.msra.mxu0 0.0
    %4065 = vmatprep.subr.mxu0 0.0
    %4066 = vmatpush2.msra.mxu0 0.0
    %4067 = vmatprep.subr.mxu0 0.0
    %4068 = vmatpush2.msra.mxu0 0.0
    %4069 = vmatprep.subr.mxu0 0.0
    %4070 = vmatpush2.msra.mxu0 0.0
    %4071 = vmatprep.subr.mxu0 0.0
    %4072 = vmatpush2.msra.mxu0 0.0
    %4073 = vmatprep.subr.mxu0 0.0
    %4074 = vmatpush2.msra.mxu0 0.0
    %4075 = vmatprep.subr.mxu0 0.0
    %4076 = vmatpush2.msra.mxu0 0.0
    %4077 = vmatprep.subr.mxu0 0.0
    %4078 = vmatpush2.msra.mxu0 0.0
    %4079 = vmatprep.subr.mxu0 0.0
    %4080 = vmatpush2.msra.mxu0 0.0
    %4081 = vmatprep.subr.mxu0 0.0
    %4082 = vmatpush2.msra.mxu0 0.0
    %4083 = vmatprep.subr.mxu0 0.0
    %4084 = vmatpush2.msra.mxu0 0.0
    %4085 = vmatprep.subr.mxu0 0.0
    %4086 = vmatpush2.msra.mxu0 0.0
    %4087 = vmatprep.subr.mxu0 0.0
    %4088 = vmatpush2.msra.mxu0 0.0
    %4089 = vmatprep.subr.mxu0 0.0
    %4090 = vmatpush2.msra.mxu0 0.0
    %4091 = vmatprep.mubr.f32.mxu0 0.0
    %4092 = vmatmul.mubr.f32.gmra.mxu0 %v76
    %v4093 = vpop.f32.mrf.mxu0
    %v4094 = vadd.f32 0.0, %v4093
    %v4095 = vpop.f32.mrf.mxu0
    %4096 = vmatprep.mubr.f32.mxu0 0.0
    %4097 = vmatmul.mubr.f32.gmra.mxu0 %v77
    %v4098 = vpop.f32.mrf.mxu0
    %v4099 = vadd.f32 0.0, %v4098
    %v4100 = vpop.f32.mrf.mxu0
    %4101 = vmatprep.mubr.f32.mxu0 0.0
    %4102 = vmatmul.mubr.f32.gmra.mxu0 %v78
    %v4103 = vpop.f32.mrf.mxu0
    %v4104 = vadd.f32 0.0, %v4103
    %v4105 = vpop.f32.mrf.mxu0
    %4106 = vmatprep.mubr.f32.mxu0 0.0
    %4107 = vmatmul.mubr.f32.gmra.mxu0 %v79
    %v4108 = vpop.f32.mrf.mxu0
    %v4109 = vadd.f32 0.0, %v4108
    %v4110 = vpop.f32.mrf.mxu0
    %4111 = vmatprep.mubr.f32.mxu0 0.0
    %4112 = vmatmul.mubr.f32.gmra.mxu0 %v80
    %v4113 = vpop.f32.mrf.mxu0
    %v4114 = vadd.f32 0.0, %v4113
    %v4115 = vpop.f32.mrf.mxu0
    %4116 = vmatprep.mubr.f32.mxu0 0.0
    %4117 = vmatmul.mubr.f32.gmra.mxu0 %v81
    %v4118 = vpop.f32.mrf.mxu0
    %v4119 = vadd.f32 0.0, %v4118
    %v4120 = vpop.f32.mrf.mxu0
    %4121 = vmatprep.mubr.f32.mxu0 0.0
    %4122 = vmatmul.mubr.f32.gmra.mxu0 %v82
    %v4123 = vpop.f32.mrf.mxu0
    %v4124 = vadd.f32 0.0, %v4123
    %v4125 = vpop.f32.mrf.mxu0
    %4126 = vmatprep.mubr.f32.mxu0 0.0
    %4127 = vmatmul.mubr.f32.gmra.mxu0 %v83
    %v4128 = vpop.f32.mrf.mxu0
    %v4129 = vadd.f32 0.0, %v4128
    %v4130 = vpop.f32.mrf.mxu0
    %4131 = vmatprep.mubr.f32.mxu0 0.0
    %4132 = vmatmul.mubr.f32.gmra.mxu0 %v84
    %v4133 = vpop.f32.mrf.mxu0
    %v4134 = vadd.f32 0.0, %v4133
    %v4135 = vpop.f32.mrf.mxu0
    %4136 = vmatprep.mubr.f32.mxu0 0.0
    %4137 = vmatmul.mubr.f32.gmra.mxu0 %v85
    %v4138 = vpop.f32.mrf.mxu0
    %v4139 = vadd.f32 0.0, %v4138
    %v4140 = vpop.f32.mrf.mxu0
    %4141 = vmatprep.mubr.f32.mxu0 0.0
    %4142 = vmatmul.mubr.f32.gmra.mxu0 %v86
    %v4143 = vpop.f32.mrf.mxu0
    %v4144 = vadd.f32 0.0, %v4143
    %v4145 = vpop.f32.mrf.mxu0
    %4146 = vmatprep.mubr.f32.mxu0 0.0
    %4147 = vmatmul.mubr.f32.gmra.mxu0 %v87
    %v4148 = vpop.f32.mrf.mxu0
    %v4149 = vadd.f32 0.0, %v4148
    %v4150 = vpop.f32.mrf.mxu0
    %4151 = vmatprep.mubr.f32.mxu0 0.0
    %4152 = vmatmul.mubr.f32.gmra.mxu0 %v88
    %v4153 = vpop.f32.mrf.mxu0
    %v4154 = vadd.f32 0.0, %v4153
    %v4155 = vpop.f32.mrf.mxu0
    %4156 = vmatprep.mubr.f32.mxu0 0.0
    %4157 = vmatmul.mubr.f32.gmra.mxu0 %v89
    %v4158 = vpop.f32.mrf.mxu0
    %v4159 = vadd.f32 0.0, %v4158
    %v4160 = vpop.f32.mrf.mxu0
    %4161 = vmatprep.mubr.f32.mxu0 0.0
    %4162 = vmatmul.mubr.f32.gmra.mxu0 %v90
    %v4163 = vpop.f32.mrf.mxu0
    %v4164 = vadd.f32 0.0, %v4163
    %v4165 = vpop.f32.mrf.mxu0
    %4166 = vmatprep.mubr.f32.mxu0 0.0
    %4167 = vmatmul.mubr.f32.gmra.mxu0 %v91
    %v4168 = vpop.f32.mrf.mxu0
    %v4169 = vadd.f32 0.0, %v4168
    %v4170 = vpop.f32.mrf.mxu0
    %4171 = vdwg.mxu0
    %4172 = vmatprep.subr.mxu0 0.0
    %4173 = vmatpush1.msra.mxu0 %v4169
    %4174 = vmatprep.subr.mxu0 0.0
    %4175 = vmatpush1.msra.mxu0 %v4164
    %4176 = vmatprep.subr.mxu0 0.0
    %4177 = vmatpush1.msra.mxu0 %v4159
    %4178 = vmatprep.subr.mxu0 0.0
    %4179 = vmatpush1.msra.mxu0 %v4154
    %4180 = vmatprep.subr.mxu0 0.0
    %4181 = vmatpush1.msra.mxu0 %v4149
    %4182 = vmatprep.subr.mxu0 0.0
    %4183 = vmatpush1.msra.mxu0 %v4144
    %4184 = vmatprep.subr.mxu0 0.0
    %4185 = vmatpush1.msra.mxu0 %v4139
    %4186 = vmatprep.subr.mxu0 0.0
    %4187 = vmatpush1.msra.mxu0 %v4134
    %4188 = vmatprep.subr.mxu0 0.0
    %4189 = vmatpush1.msra.mxu0 %v4129
    %4190 = vmatprep.subr.mxu0 0.0
    %4191 = vmatpush1.msra.mxu0 %v4124
    %4192 = vmatprep.subr.mxu0 0.0
    %4193 = vmatpush1.msra.mxu0 %v4119
    %4194 = vmatprep.subr.mxu0 0.0
    %4195 = vmatpush1.msra.mxu0 %v4114
    %4196 = vmatprep.subr.mxu0 0.0
    %4197 = vmatpush1.msra.mxu0 %v4109
    %4198 = vmatprep.subr.mxu0 0.0
    %4199 = vmatpush1.msra.mxu0 %v4104
    %4200 = vmatprep.subr.mxu0 0.0
    %4201 = vmatpush1.msra.mxu0 %v4099
    %4202 = vmatprep.subr.mxu0 0.0
    %4203 = vmatpush1.msra.mxu0 %v4094
    %4204 = vmatprep.subr.mxu0 0.0
    %4205 = vmatpush2.msra.mxu0 0.0
    %4206 = vmatprep.subr.mxu0 0.0
    %4207 = vmatpush2.msra.mxu0 0.0
    %4208 = vmatprep.subr.mxu0 0.0
    %4209 = vmatpush2.msra.mxu0 0.0
    %4210 = vmatprep.subr.mxu0 0.0
    %4211 = vmatpush2.msra.mxu0 0.0
    %4212 = vmatprep.subr.mxu0 0.0
    %4213 = vmatpush2.msra.mxu0 0.0
    %4214 = vmatprep.subr.mxu0 0.0
    %4215 = vmatpush2.msra.mxu0 0.0
    %4216 = vmatprep.subr.mxu0 0.0
    %4217 = vmatpush2.msra.mxu0 0.0
    %4218 = vmatprep.subr.mxu0 0.0
    %4219 = vmatpush2.msra.mxu0 0.0
    %4220 = vmatprep.subr.mxu0 0.0
    %4221 = vmatpush2.msra.mxu0 0.0
    %4222 = vmatprep.subr.mxu0 0.0
    %4223 = vmatpush2.msra.mxu0 0.0
    %4224 = vmatprep.subr.mxu0 0.0
    %4225 = vmatpush2.msra.mxu0 0.0
    %4226 = vmatprep.subr.mxu0 0.0
    %4227 = vmatpush2.msra.mxu0 0.0
    %4228 = vmatprep.subr.mxu0 0.0
    %4229 = vmatpush2.msra.mxu0 0.0
    %4230 = vmatprep.subr.mxu0 0.0
    %4231 = vmatpush2.msra.mxu0 0.0
    %4232 = vmatprep.subr.mxu0 0.0
    %4233 = vmatpush2.msra.mxu0 0.0
    %4234 = vmatprep.subr.mxu0 0.0
    %4235 = vmatpush2.msra.mxu0 0.0
    %4236 = vmatprep.mubr.f32.mxu0 0.0
    %4237 = vmatmul.mubr.f32.gmra.mxu0 %v92
    %v4238 = vpop.f32.mrf.mxu0
    %v4239 = vadd.f32 0.0, %v4238
    %v4240 = vpop.f32.mrf.mxu0
    %4241 = vmatprep.mubr.f32.mxu0 0.0
    %4242 = vmatmul.mubr.f32.gmra.mxu0 %v93
    %v4243 = vpop.f32.mrf.mxu0
    %v4244 = vadd.f32 0.0, %v4243
    %v4245 = vpop.f32.mrf.mxu0
    %4246 = vmatprep.mubr.f32.mxu0 0.0
    %4247 = vmatmul.mubr.f32.gmra.mxu0 %v94
    %v4248 = vpop.f32.mrf.mxu0
    %v4249 = vadd.f32 0.0, %v4248
    %v4250 = vpop.f32.mrf.mxu0
    %4251 = vmatprep.mubr.f32.mxu0 0.0
    %4252 = vmatmul.mubr.f32.gmra.mxu0 %v95
    %v4253 = vpop.f32.mrf.mxu0
    %v4254 = vadd.f32 0.0, %v4253
    %v4255 = vpop.f32.mrf.mxu0
    %4256 = vmatprep.mubr.f32.mxu0 0.0
    %4257 = vmatmul.mubr.f32.gmra.mxu0 %v96
    %v4258 = vpop.f32.mrf.mxu0
    %v4259 = vadd.f32 0.0, %v4258
    %v4260 = vpop.f32.mrf.mxu0
    %4261 = vmatprep.mubr.f32.mxu0 0.0
    %4262 = vmatmul.mubr.f32.gmra.mxu0 %v97
    %v4263 = vpop.f32.mrf.mxu0
    %v4264 = vadd.f32 0.0, %v4263
    %v4265 = vpop.f32.mrf.mxu0
    %4266 = vmatprep.mubr.f32.mxu0 0.0
    %4267 = vmatmul.mubr.f32.gmra.mxu0 %v98
    %v4268 = vpop.f32.mrf.mxu0
    %v4269 = vadd.f32 0.0, %v4268
    %v4270 = vpop.f32.mrf.mxu0
    %4271 = vmatprep.mubr.f32.mxu0 0.0
    %4272 = vmatmul.mubr.f32.gmra.mxu0 %v99
    %v4273 = vpop.f32.mrf.mxu0
    %v4274 = vadd.f32 0.0, %v4273
    %v4275 = vpop.f32.mrf.mxu0
    %4276 = vmatprep.mubr.f32.mxu0 0.0
    %4277 = vmatmul.mubr.f32.gmra.mxu0 %v100
    %v4278 = vpop.f32.mrf.mxu0
    %v4279 = vadd.f32 0.0, %v4278
    %v4280 = vpop.f32.mrf.mxu0
    %4281 = vmatprep.mubr.f32.mxu0 0.0
    %4282 = vmatmul.mubr.f32.gmra.mxu0 %v101
    %v4283 = vpop.f32.mrf.mxu0
    %v4284 = vadd.f32 0.0, %v4283
    %v4285 = vpop.f32.mrf.mxu0
    %4286 = vmatprep.mubr.f32.mxu0 0.0
    %4287 = vmatmul.mubr.f32.gmra.mxu0 %v102
    %v4288 = vpop.f32.mrf.mxu0
    %v4289 = vadd.f32 0.0, %v4288
    %v4290 = vpop.f32.mrf.mxu0
    %4291 = vmatprep.mubr.f32.mxu0 0.0
    %4292 = vmatmul.mubr.f32.gmra.mxu0 %v103
    %v4293 = vpop.f32.mrf.mxu0
    %v4294 = vadd.f32 0.0, %v4293
    %v4295 = vpop.f32.mrf.mxu0
    %4296 = vmatprep.mubr.f32.mxu0 0.0
    %4297 = vmatmul.mubr.f32.gmra.mxu0 %v104
    %v4298 = vpop.f32.mrf.mxu0
    %v4299 = vadd.f32 0.0, %v4298
    %v4300 = vpop.f32.mrf.mxu0
    %4301 = vmatprep.mubr.f32.mxu0 0.0
    %4302 = vmatmul.mubr.f32.gmra.mxu0 %v105
    %v4303 = vpop.f32.mrf.mxu0
    %v4304 = vadd.f32 0.0, %v4303
    %v4305 = vpop.f32.mrf.mxu0
    %4306 = vmatprep.mubr.f32.mxu0 0.0
    %4307 = vmatmul.mubr.f32.gmra.mxu0 %v106
    %v4308 = vpop.f32.mrf.mxu0
    %v4309 = vadd.f32 0.0, %v4308
    %v4310 = vpop.f32.mrf.mxu0
    %4311 = vmatprep.mubr.f32.mxu0 0.0
    %4312 = vmatmul.mubr.f32.gmra.mxu0 %v107
    %v4313 = vpop.f32.mrf.mxu0
    %v4314 = vadd.f32 0.0, %v4313
    %v4315 = vpop.f32.mrf.mxu0
    %4316 = vdwg.mxu0
    %4317 = vmatprep.subr.mxu0 0.0
    %4318 = vmatpush1.msra.mxu0 %v4314
    %4319 = vmatprep.subr.mxu0 0.0
    %4320 = vmatpush1.msra.mxu0 %v4309
    %4321 = vmatprep.subr.mxu0 0.0
    %4322 = vmatpush1.msra.mxu0 %v4304
    %4323 = vmatprep.subr.mxu0 0.0
    %4324 = vmatpush1.msra.mxu0 %v4299
    %4325 = vmatprep.subr.mxu0 0.0
    %4326 = vmatpush1.msra.mxu0 %v4294
    %4327 = vmatprep.subr.mxu0 0.0
    %4328 = vmatpush1.msra.mxu0 %v4289
    %4329 = vmatprep.subr.mxu0 0.0
    %4330 = vmatpush1.msra.mxu0 %v4284
    %4331 = vmatprep.subr.mxu0 0.0
    %4332 = vmatpush1.msra.mxu0 %v4279
    %4333 = vmatprep.subr.mxu0 0.0
    %4334 = vmatpush1.msra.mxu0 %v4274
    %4335 = vmatprep.subr.mxu0 0.0
    %4336 = vmatpush1.msra.mxu0 %v4269
    %4337 = vmatprep.subr.mxu0 0.0
    %4338 = vmatpush1.msra.mxu0 %v4264
    %4339 = vmatprep.subr.mxu0 0.0
    %4340 = vmatpush1.msra.mxu0 %v4259
    %4341 = vmatprep.subr.mxu0 0.0
    %4342 = vmatpush1.msra.mxu0 %v4254
    %4343 = vmatprep.subr.mxu0 0.0
    %4344 = vmatpush1.msra.mxu0 %v4249
    %4345 = vmatprep.subr.mxu0 0.0
    %4346 = vmatpush1.msra.mxu0 %v4244
    %4347 = vmatprep.subr.mxu0 0.0
    %4348 = vmatpush1.msra.mxu0 %v4239
    %4349 = vmatprep.subr.mxu0 0.0
    %4350 = vmatpush2.msra.mxu0 0.0
    %4351 = vmatprep.subr.mxu0 0.0
    %4352 = vmatpush2.msra.mxu0 0.0
    %4353 = vmatprep.subr.mxu0 0.0
    %4354 = vmatpush2.msra.mxu0 0.0
    %4355 = vmatprep.subr.mxu0 0.0
    %4356 = vmatpush2.msra.mxu0 0.0
    %4357 = vmatprep.subr.mxu0 0.0
    %4358 = vmatpush2.msra.mxu0 0.0
    %4359 = vmatprep.subr.mxu0 0.0
    %4360 = vmatpush2.msra.mxu0 0.0
    %4361 = vmatprep.subr.mxu0 0.0
    %4362 = vmatpush2.msra.mxu0 0.0
    %4363 = vmatprep.subr.mxu0 0.0
    %4364 = vmatpush2.msra.mxu0 0.0
    %4365 = vmatprep.subr.mxu0 0.0
    %4366 = vmatpush2.msra.mxu0 0.0
    %4367 = vmatprep.subr.mxu0 0.0
    %4368 = vmatpush2.msra.mxu0 0.0
    %4369 = vmatprep.subr.mxu0 0.0
    %4370 = vmatpush2.msra.mxu0 0.0
    %4371 = vmatprep.subr.mxu0 0.0
    %4372 = vmatpush2.msra.mxu0 0.0
    %4373 = vmatprep.subr.mxu0 0.0
    %4374 = vmatpush2.msra.mxu0 0.0
    %4375 = vmatprep.subr.mxu0 0.0
    %4376 = vmatpush2.msra.mxu0 0.0
    %4377 = vmatprep.subr.mxu0 0.0
    %4378 = vmatpush2.msra.mxu0 0.0
    %4379 = vmatprep.subr.mxu0 0.0
    %4380 = vmatpush2.msra.mxu0 0.0
    %4381 = vmatprep.mubr.f32.mxu0 0.0
    %4382 = vmatmul.mubr.f32.gmra.mxu0 %v76
    %v4383 = vpop.f32.mrf.mxu0
    %v4384 = vadd.f32 0.0, %v4383
    %v4385 = vpop.f32.mrf.mxu0
    %4386 = vmatprep.mubr.f32.mxu0 0.0
    %4387 = vmatmul.mubr.f32.gmra.mxu0 %v77
    %v4388 = vpop.f32.mrf.mxu0
    %v4389 = vadd.f32 0.0, %v4388
    %v4390 = vpop.f32.mrf.mxu0
    %4391 = vmatprep.mubr.f32.mxu0 0.0
    %4392 = vmatmul.mubr.f32.gmra.mxu0 %v78
    %v4393 = vpop.f32.mrf.mxu0
    %v4394 = vadd.f32 0.0, %v4393
    %v4395 = vpop.f32.mrf.mxu0
    %4396 = vmatprep.mubr.f32.mxu0 0.0
    %4397 = vmatmul.mubr.f32.gmra.mxu0 %v79
    %v4398 = vpop.f32.mrf.mxu0
    %v4399 = vadd.f32 0.0, %v4398
    %v4400 = vpop.f32.mrf.mxu0
    %4401 = vmatprep.mubr.f32.mxu0 0.0
    %4402 = vmatmul.mubr.f32.gmra.mxu0 %v80
    %v4403 = vpop.f32.mrf.mxu0
    %v4404 = vadd.f32 0.0, %v4403
    %v4405 = vpop.f32.mrf.mxu0
    %4406 = vmatprep.mubr.f32.mxu0 0.0
    %4407 = vmatmul.mubr.f32.gmra.mxu0 %v81
    %v4408 = vpop.f32.mrf.mxu0
    %v4409 = vadd.f32 0.0, %v4408
    %v4410 = vpop.f32.mrf.mxu0
    %4411 = vmatprep.mubr.f32.mxu0 0.0
    %4412 = vmatmul.mubr.f32.gmra.mxu0 %v82
    %v4413 = vpop.f32.mrf.mxu0
    %v4414 = vadd.f32 0.0, %v4413
    %v4415 = vpop.f32.mrf.mxu0
    %4416 = vmatprep.mubr.f32.mxu0 0.0
    %4417 = vmatmul.mubr.f32.gmra.mxu0 %v83
    %v4418 = vpop.f32.mrf.mxu0
    %v4419 = vadd.f32 0.0, %v4418
    %v4420 = vpop.f32.mrf.mxu0
    %4421 = vmatprep.mubr.f32.mxu0 0.0
    %4422 = vmatmul.mubr.f32.gmra.mxu0 %v84
    %v4423 = vpop.f32.mrf.mxu0
    %v4424 = vadd.f32 0.0, %v4423
    %v4425 = vpop.f32.mrf.mxu0
    %4426 = vmatprep.mubr.f32.mxu0 0.0
    %4427 = vmatmul.mubr.f32.gmra.mxu0 %v85
    %v4428 = vpop.f32.mrf.mxu0
    %v4429 = vadd.f32 0.0, %v4428
    %v4430 = vpop.f32.mrf.mxu0
    %4431 = vmatprep.mubr.f32.mxu0 0.0
    %4432 = vmatmul.mubr.f32.gmra.mxu0 %v86
    %v4433 = vpop.f32.mrf.mxu0
    %v4434 = vadd.f32 0.0, %v4433
    %v4435 = vpop.f32.mrf.mxu0
    %4436 = vmatprep.mubr.f32.mxu0 0.0
    %4437 = vmatmul.mubr.f32.gmra.mxu0 %v87
    %v4438 = vpop.f32.mrf.mxu0
    %v4439 = vadd.f32 0.0, %v4438
    %v4440 = vpop.f32.mrf.mxu0
    %4441 = vmatprep.mubr.f32.mxu0 0.0
    %4442 = vmatmul.mubr.f32.gmra.mxu0 %v88
    %v4443 = vpop.f32.mrf.mxu0
    %v4444 = vadd.f32 0.0, %v4443
    %v4445 = vpop.f32.mrf.mxu0
    %4446 = vmatprep.mubr.f32.mxu0 0.0
    %4447 = vmatmul.mubr.f32.gmra.mxu0 %v89
    %v4448 = vpop.f32.mrf.mxu0
    %v4449 = vadd.f32 0.0, %v4448
    %v4450 = vpop.f32.mrf.mxu0
    %4451 = vmatprep.mubr.f32.mxu0 0.0
    %4452 = vmatmul.mubr.f32.gmra.mxu0 %v90
    %v4453 = vpop.f32.mrf.mxu0
    %v4454 = vadd.f32 0.0, %v4453
    %v4455 = vpop.f32.mrf.mxu0
    %4456 = vmatprep.mubr.f32.mxu0 0.0
    %4457 = vmatmul.mubr.f32.gmra.mxu0 %v91
    %v4458 = vpop.f32.mrf.mxu0
    %v4459 = vadd.f32 0.0, %v4458
    %v4460 = vpop.f32.mrf.mxu0
    %4461 = vdwg.mxu0
    %4462 = vmatprep.subr.mxu0 0.0
    %4463 = vmatpush1.msra.mxu0 %v4459
    %4464 = vmatprep.subr.mxu0 0.0
    %4465 = vmatpush1.msra.mxu0 %v4454
    %4466 = vmatprep.subr.mxu0 0.0
    %4467 = vmatpush1.msra.mxu0 %v4449
    %4468 = vmatprep.subr.mxu0 0.0
    %4469 = vmatpush1.msra.mxu0 %v4444
    %4470 = vmatprep.subr.mxu0 0.0
    %4471 = vmatpush1.msra.mxu0 %v4439
    %4472 = vmatprep.subr.mxu0 0.0
    %4473 = vmatpush1.msra.mxu0 %v4434
    %4474 = vmatprep.subr.mxu0 0.0
    %4475 = vmatpush1.msra.mxu0 %v4429
    %4476 = vmatprep.subr.mxu0 0.0
    %4477 = vmatpush1.msra.mxu0 %v4424
    %4478 = vmatprep.subr.mxu0 0.0
    %4479 = vmatpush1.msra.mxu0 %v4419
    %4480 = vmatprep.subr.mxu0 0.0
    %4481 = vmatpush1.msra.mxu0 %v4414
    %4482 = vmatprep.subr.mxu0 0.0
    %4483 = vmatpush1.msra.mxu0 %v4409
    %4484 = vmatprep.subr.mxu0 0.0
    %4485 = vmatpush1.msra.mxu0 %v4404
    %4486 = vmatprep.subr.mxu0 0.0
    %4487 = vmatpush1.msra.mxu0 %v4399
    %4488 = vmatprep.subr.mxu0 0.0
    %4489 = vmatpush1.msra.mxu0 %v4394
    %4490 = vmatprep.subr.mxu0 0.0
    %4491 = vmatpush1.msra.mxu0 %v4389
    %4492 = vmatprep.subr.mxu0 0.0
    %4493 = vmatpush1.msra.mxu0 %v4384
    %4494 = vmatprep.subr.mxu0 0.0
    %4495 = vmatpush2.msra.mxu0 0.0
    %4496 = vmatprep.subr.mxu0 0.0
    %4497 = vmatpush2.msra.mxu0 0.0
    %4498 = vmatprep.subr.mxu0 0.0
    %4499 = vmatpush2.msra.mxu0 0.0
    %4500 = vmatprep.subr.mxu0 0.0
    %4501 = vmatpush2.msra.mxu0 0.0
    %4502 = vmatprep.subr.mxu0 0.0
    %4503 = vmatpush2.msra.mxu0 0.0
    %4504 = vmatprep.subr.mxu0 0.0
    %4505 = vmatpush2.msra.mxu0 0.0
    %4506 = vmatprep.subr.mxu0 0.0
    %4507 = vmatpush2.msra.mxu0 0.0
    %4508 = vmatprep.subr.mxu0 0.0
    %4509 = vmatpush2.msra.mxu0 0.0
    %4510 = vmatprep.subr.mxu0 0.0
    %4511 = vmatpush2.msra.mxu0 0.0
    %4512 = vmatprep.subr.mxu0 0.0
    %4513 = vmatpush2.msra.mxu0 0.0
    %4514 = vmatprep.subr.mxu0 0.0
    %4515 = vmatpush2.msra.mxu0 0.0
    %4516 = vmatprep.subr.mxu0 0.0
    %4517 = vmatpush2.msra.mxu0 0.0
    %4518 = vmatprep.subr.mxu0 0.0
    %4519 = vmatpush2.msra.mxu0 0.0
    %4520 = vmatprep.subr.mxu0 0.0
    %4521 = vmatpush2.msra.mxu0 0.0
    %4522 = vmatprep.subr.mxu0 0.0
    %4523 = vmatpush2.msra.mxu0 0.0
    %4524 = vmatprep.subr.mxu0 0.0
    %4525 = vmatpush2.msra.mxu0 0.0
    %4526 = vmatprep.mubr.f32.mxu0 0.0
    %4527 = vmatmul.mubr.f32.gmra.mxu0 %v92
    %v4528 = vpop.f32.mrf.mxu0
    %v4529 = vadd.f32 0.0, %v4528
    %v4530 = vpop.f32.mrf.mxu0
    %4531 = vmatprep.mubr.f32.mxu0 0.0
    %4532 = vmatmul.mubr.f32.gmra.mxu0 %v93
    %v4533 = vpop.f32.mrf.mxu0
    %v4534 = vadd.f32 0.0, %v4533
    %v4535 = vpop.f32.mrf.mxu0
    %4536 = vmatprep.mubr.f32.mxu0 0.0
    %4537 = vmatmul.mubr.f32.gmra.mxu0 %v94
    %v4538 = vpop.f32.mrf.mxu0
    %v4539 = vadd.f32 0.0, %v4538
    %v4540 = vpop.f32.mrf.mxu0
    %4541 = vmatprep.mubr.f32.mxu0 0.0
    %4542 = vmatmul.mubr.f32.gmra.mxu0 %v95
    %v4543 = vpop.f32.mrf.mxu0
    %v4544 = vadd.f32 0.0, %v4543
    %v4545 = vpop.f32.mrf.mxu0
    %4546 = vmatprep.mubr.f32.mxu0 0.0
    %4547 = vmatmul.mubr.f32.gmra.mxu0 %v96
    %v4548 = vpop.f32.mrf.mxu0
    %v4549 = vadd.f32 0.0, %v4548
    %v4550 = vpop.f32.mrf.mxu0
    %4551 = vmatprep.mubr.f32.mxu0 0.0
    %4552 = vmatmul.mubr.f32.gmra.mxu0 %v97
    %v4553 = vpop.f32.mrf.mxu0
    %v4554 = vadd.f32 0.0, %v4553
    %v4555 = vpop.f32.mrf.mxu0
    %4556 = vmatprep.mubr.f32.mxu0 0.0
    %4557 = vmatmul.mubr.f32.gmra.mxu0 %v98
    %v4558 = vpop.f32.mrf.mxu0
    %v4559 = vadd.f32 0.0, %v4558
    %v4560 = vpop.f32.mrf.mxu0
    %4561 = vmatprep.mubr.f32.mxu0 0.0
    %4562 = vmatmul.mubr.f32.gmra.mxu0 %v99
    %v4563 = vpop.f32.mrf.mxu0
    %v4564 = vadd.f32 0.0, %v4563
    %v4565 = vpop.f32.mrf.mxu0
    %4566 = vmatprep.mubr.f32.mxu0 0.0
    %4567 = vmatmul.mubr.f32.gmra.mxu0 %v100
    %v4568 = vpop.f32.mrf.mxu0
    %v4569 = vadd.f32 0.0, %v4568
    %v4570 = vpop.f32.mrf.mxu0
    %4571 = vmatprep.mubr.f32.mxu0 0.0
    %4572 = vmatmul.mubr.f32.gmra.mxu0 %v101
    %v4573 = vpop.f32.mrf.mxu0
    %v4574 = vadd.f32 0.0, %v4573
    %v4575 = vpop.f32.mrf.mxu0
    %4576 = vmatprep.mubr.f32.mxu0 0.0
    %4577 = vmatmul.mubr.f32.gmra.mxu0 %v102
    %v4578 = vpop.f32.mrf.mxu0
    %v4579 = vadd.f32 0.0, %v4578
    %v4580 = vpop.f32.mrf.mxu0
    %4581 = vmatprep.mubr.f32.mxu0 0.0
    %4582 = vmatmul.mubr.f32.gmra.mxu0 %v103
    %v4583 = vpop.f32.mrf.mxu0
    %v4584 = vadd.f32 0.0, %v4583
    %v4585 = vpop.f32.mrf.mxu0
    %4586 = vmatprep.mubr.f32.mxu0 0.0
    %4587 = vmatmul.mubr.f32.gmra.mxu0 %v104
    %v4588 = vpop.f32.mrf.mxu0
    %v4589 = vadd.f32 0.0, %v4588
    %v4590 = vpop.f32.mrf.mxu0
    %4591 = vmatprep.mubr.f32.mxu0 0.0
    %4592 = vmatmul.mubr.f32.gmra.mxu0 %v105
    %v4593 = vpop.f32.mrf.mxu0
    %v4594 = vadd.f32 0.0, %v4593
    %v4595 = vpop.f32.mrf.mxu0
    %4596 = vmatprep.mubr.f32.mxu0 0.0
    %4597 = vmatmul.mubr.f32.gmra.mxu0 %v106
    %v4598 = vpop.f32.mrf.mxu0
    %v4599 = vadd.f32 0.0, %v4598
    %v4600 = vpop.f32.mrf.mxu0
    %4601 = vmatprep.mubr.f32.mxu0 0.0
    %4602 = vmatmul.mubr.f32.gmra.mxu0 %v107
    %v4603 = vpop.f32.mrf.mxu0
    %v4604 = vadd.f32 0.0, %v4603
    %v4605 = vpop.f32.mrf.mxu0
    %4606 = vdwg.mxu0
    %4607 = vmatprep.subr.mxu0 0.0
    %4608 = vmatpush1.msra.mxu0 %v4604
    %4609 = vmatprep.subr.mxu0 0.0
    %4610 = vmatpush1.msra.mxu0 %v4599
    %4611 = vmatprep.subr.mxu0 0.0
    %4612 = vmatpush1.msra.mxu0 %v4594
    %4613 = vmatprep.subr.mxu0 0.0
    %4614 = vmatpush1.msra.mxu0 %v4589
    %4615 = vmatprep.subr.mxu0 0.0
    %4616 = vmatpush1.msra.mxu0 %v4584
    %4617 = vmatprep.subr.mxu0 0.0
    %4618 = vmatpush1.msra.mxu0 %v4579
    %4619 = vmatprep.subr.mxu0 0.0
    %4620 = vmatpush1.msra.mxu0 %v4574
    %4621 = vmatprep.subr.mxu0 0.0
    %4622 = vmatpush1.msra.mxu0 %v4569
    %4623 = vmatprep.subr.mxu0 0.0
    %4624 = vmatpush1.msra.mxu0 %v4564
    %4625 = vmatprep.subr.mxu0 0.0
    %4626 = vmatpush1.msra.mxu0 %v4559
    %4627 = vmatprep.subr.mxu0 0.0
    %4628 = vmatpush1.msra.mxu0 %v4554
    %4629 = vmatprep.subr.mxu0 0.0
    %4630 = vmatpush1.msra.mxu0 %v4549
    %4631 = vmatprep.subr.mxu0 0.0
    %4632 = vmatpush1.msra.mxu0 %v4544
    %4633 = vmatprep.subr.mxu0 0.0
    %4634 = vmatpush1.msra.mxu0 %v4539
    %4635 = vmatprep.subr.mxu0 0.0
    %4636 = vmatpush1.msra.mxu0 %v4534
    %4637 = vmatprep.subr.mxu0 0.0
    %4638 = vmatpush1.msra.mxu0 %v4529
    %4639 = vmatprep.subr.mxu0 0.0
    %4640 = vmatpush2.msra.mxu0 0.0
    %4641 = vmatprep.subr.mxu0 0.0
    %4642 = vmatpush2.msra.mxu0 0.0
    %4643 = vmatprep.subr.mxu0 0.0
    %4644 = vmatpush2.msra.mxu0 0.0
    %4645 = vmatprep.subr.mxu0 0.0
    %4646 = vmatpush2.msra.mxu0 0.0
    %4647 = vmatprep.subr.mxu0 0.0
    %4648 = vmatpush2.msra.mxu0 0.0
    %4649 = vmatprep.subr.mxu0 0.0
    %4650 = vmatpush2.msra.mxu0 0.0
    %4651 = vmatprep.subr.mxu0 0.0
    %4652 = vmatpush2.msra.mxu0 0.0
    %4653 = vmatprep.subr.mxu0 0.0
    %4654 = vmatpush2.msra.mxu0 0.0
    %4655 = vmatprep.subr.mxu0 0.0
    %4656 = vmatpush2.msra.mxu0 0.0
    %4657 = vmatprep.subr.mxu0 0.0
    %4658 = vmatpush2.msra.mxu0 0.0
    %4659 = vmatprep.subr.mxu0 0.0
    %4660 = vmatpush2.msra.mxu0 0.0
    %4661 = vmatprep.subr.mxu0 0.0
    %4662 = vmatpush2.msra.mxu0 0.0
    %4663 = vmatprep.subr.mxu0 0.0
    %4664 = vmatpush2.msra.mxu0 0.0
    %4665 = vmatprep.subr.mxu0 0.0
    %4666 = vmatpush2.msra.mxu0 0.0
    %4667 = vmatprep.subr.mxu0 0.0
    %4668 = vmatpush2.msra.mxu0 0.0
    %4669 = vmatprep.subr.mxu0 0.0
    %4670 = vmatpush2.msra.mxu0 0.0
    %4671 = vmatprep.mubr.f32.mxu0 0.0
    %4672 = vmatmul.mubr.f32.gmra.mxu0 %v76
    %v4673 = vpop.f32.mrf.mxu0
    %v4674 = vadd.f32 0.0, %v4673
    %v4675 = vpop.f32.mrf.mxu0
    %4676 = vmatprep.mubr.f32.mxu0 0.0
    %4677 = vmatmul.mubr.f32.gmra.mxu0 %v77
    %v4678 = vpop.f32.mrf.mxu0
    %v4679 = vadd.f32 0.0, %v4678
    %v4680 = vpop.f32.mrf.mxu0
    %4681 = vmatprep.mubr.f32.mxu0 0.0
    %4682 = vmatmul.mubr.f32.gmra.mxu0 %v78
    %v4683 = vpop.f32.mrf.mxu0
    %v4684 = vadd.f32 0.0, %v4683
    %v4685 = vpop.f32.mrf.mxu0
    %4686 = vmatprep.mubr.f32.mxu0 0.0
    %4687 = vmatmul.mubr.f32.gmra.mxu0 %v79
    %v4688 = vpop.f32.mrf.mxu0
    %v4689 = vadd.f32 0.0, %v4688
    %v4690 = vpop.f32.mrf.mxu0
    %4691 = vmatprep.mubr.f32.mxu0 0.0
    %4692 = vmatmul.mubr.f32.gmra.mxu0 %v80
    %v4693 = vpop.f32.mrf.mxu0
    %v4694 = vadd.f32 0.0, %v4693
    %v4695 = vpop.f32.mrf.mxu0
    %4696 = vmatprep.mubr.f32.mxu0 0.0
    %4697 = vmatmul.mubr.f32.gmra.mxu0 %v81
    %v4698 = vpop.f32.mrf.mxu0
    %v4699 = vadd.f32 0.0, %v4698
    %v4700 = vpop.f32.mrf.mxu0
    %4701 = vmatprep.mubr.f32.mxu0 0.0
    %4702 = vmatmul.mubr.f32.gmra.mxu0 %v82
    %v4703 = vpop.f32.mrf.mxu0
    %v4704 = vadd.f32 0.0, %v4703
    %v4705 = vpop.f32.mrf.mxu0
    %4706 = vmatprep.mubr.f32.mxu0 0.0
    %4707 = vmatmul.mubr.f32.gmra.mxu0 %v83
    %v4708 = vpop.f32.mrf.mxu0
    %v4709 = vadd.f32 0.0, %v4708
    %v4710 = vpop.f32.mrf.mxu0
    %4711 = vmatprep.mubr.f32.mxu0 0.0
    %4712 = vmatmul.mubr.f32.gmra.mxu0 %v84
    %v4713 = vpop.f32.mrf.mxu0
    %v4714 = vadd.f32 0.0, %v4713
    %v4715 = vpop.f32.mrf.mxu0
    %4716 = vmatprep.mubr.f32.mxu0 0.0
    %4717 = vmatmul.mubr.f32.gmra.mxu0 %v85
    %v4718 = vpop.f32.mrf.mxu0
    %v4719 = vadd.f32 0.0, %v4718
    %v4720 = vpop.f32.mrf.mxu0
    %4721 = vmatprep.mubr.f32.mxu0 0.0
    %4722 = vmatmul.mubr.f32.gmra.mxu0 %v86
    %v4723 = vpop.f32.mrf.mxu0
    %v4724 = vadd.f32 0.0, %v4723
    %v4725 = vpop.f32.mrf.mxu0
    %4726 = vmatprep.mubr.f32.mxu0 0.0
    %4727 = vmatmul.mubr.f32.gmra.mxu0 %v87
    %v4728 = vpop.f32.mrf.mxu0
    %v4729 = vadd.f32 0.0, %v4728
    %v4730 = vpop.f32.mrf.mxu0
    %4731 = vmatprep.mubr.f32.mxu0 0.0
    %4732 = vmatmul.mubr.f32.gmra.mxu0 %v88
    %v4733 = vpop.f32.mrf.mxu0
    %v4734 = vadd.f32 0.0, %v4733
    %v4735 = vpop.f32.mrf.mxu0
    %4736 = vmatprep.mubr.f32.mxu0 0.0
    %4737 = vmatmul.mubr.f32.gmra.mxu0 %v89
    %v4738 = vpop.f32.mrf.mxu0
    %v4739 = vadd.f32 0.0, %v4738
    %v4740 = vpop.f32.mrf.mxu0
    %4741 = vmatprep.mubr.f32.mxu0 0.0
    %4742 = vmatmul.mubr.f32.gmra.mxu0 %v90
    %v4743 = vpop.f32.mrf.mxu0
    %v4744 = vadd.f32 0.0, %v4743
    %v4745 = vpop.f32.mrf.mxu0
    %4746 = vmatprep.mubr.f32.mxu0 0.0
    %4747 = vmatmul.mubr.f32.gmra.mxu0 %v91
    %v4748 = vpop.f32.mrf.mxu0
    %v4749 = vadd.f32 0.0, %v4748
    %v4750 = vpop.f32.mrf.mxu0
    %4751 = vdwg.mxu0
    %4752 = vmatprep.subr.mxu0 0.0
    %4753 = vmatpush1.msra.mxu0 %v4749
    %4754 = vmatprep.subr.mxu0 0.0
    %4755 = vmatpush1.msra.mxu0 %v4744
    %4756 = vmatprep.subr.mxu0 0.0
    %4757 = vmatpush1.msra.mxu0 %v4739
    %4758 = vmatprep.subr.mxu0 0.0
    %4759 = vmatpush1.msra.mxu0 %v4734
    %4760 = vmatprep.subr.mxu0 0.0
    %4761 = vmatpush1.msra.mxu0 %v4729
    %4762 = vmatprep.subr.mxu0 0.0
    %4763 = vmatpush1.msra.mxu0 %v4724
    %4764 = vmatprep.subr.mxu0 0.0
    %4765 = vmatpush1.msra.mxu0 %v4719
    %4766 = vmatprep.subr.mxu0 0.0
    %4767 = vmatpush1.msra.mxu0 %v4714
    %4768 = vmatprep.subr.mxu0 0.0
    %4769 = vmatpush1.msra.mxu0 %v4709
    %4770 = vmatprep.subr.mxu0 0.0
    %4771 = vmatpush1.msra.mxu0 %v4704
    %4772 = vmatprep.subr.mxu0 0.0
    %4773 = vmatpush1.msra.mxu0 %v4699
    %4774 = vmatprep.subr.mxu0 0.0
    %4775 = vmatpush1.msra.mxu0 %v4694
    %4776 = vmatprep.subr.mxu0 0.0
    %4777 = vmatpush1.msra.mxu0 %v4689
    %4778 = vmatprep.subr.mxu0 0.0
    %4779 = vmatpush1.msra.mxu0 %v4684
    %4780 = vmatprep.subr.mxu0 0.0
    %4781 = vmatpush1.msra.mxu0 %v4679
    %4782 = vmatprep.subr.mxu0 0.0
    %4783 = vmatpush1.msra.mxu0 %v4674
    %4784 = vmatprep.subr.mxu0 0.0
    %4785 = vmatpush2.msra.mxu0 0.0
    %4786 = vmatprep.subr.mxu0 0.0
    %4787 = vmatpush2.msra.mxu0 0.0
    %4788 = vmatprep.subr.mxu0 0.0
    %4789 = vmatpush2.msra.mxu0 0.0
    %4790 = vmatprep.subr.mxu0 0.0
    %4791 = vmatpush2.msra.mxu0 0.0
    %4792 = vmatprep.subr.mxu0 0.0
    %4793 = vmatpush2.msra.mxu0 0.0
    %4794 = vmatprep.subr.mxu0 0.0
    %4795 = vmatpush2.msra.mxu0 0.0
    %4796 = vmatprep.subr.mxu0 0.0
    %4797 = vmatpush2.msra.mxu0 0.0
    %4798 = vmatprep.subr.mxu0 0.0
    %4799 = vmatpush2.msra.mxu0 0.0
    %4800 = vmatprep.subr.mxu0 0.0
    %4801 = vmatpush2.msra.mxu0 0.0
    %4802 = vmatprep.subr.mxu0 0.0
    %4803 = vmatpush2.msra.mxu0 0.0
    %4804 = vmatprep.subr.mxu0 0.0
    %4805 = vmatpush2.msra.mxu0 0.0
    %4806 = vmatprep.subr.mxu0 0.0
    %4807 = vmatpush2.msra.mxu0 0.0
    %4808 = vmatprep.subr.mxu0 0.0
    %4809 = vmatpush2.msra.mxu0 0.0
    %4810 = vmatprep.subr.mxu0 0.0
    %4811 = vmatpush2.msra.mxu0 0.0
    %4812 = vmatprep.subr.mxu0 0.0
    %4813 = vmatpush2.msra.mxu0 0.0
    %4814 = vmatprep.subr.mxu0 0.0
    %4815 = vmatpush2.msra.mxu0 0.0
    %4816 = vmatprep.mubr.f32.mxu0 0.0
    %4817 = vmatmul.mubr.f32.gmra.mxu0 %v92
    %v4818 = vpop.f32.mrf.mxu0
    %v4819 = vadd.f32 0.0, %v4818
    %v4820 = vpop.f32.mrf.mxu0
    %4821 = vmatprep.mubr.f32.mxu0 0.0
    %4822 = vmatmul.mubr.f32.gmra.mxu0 %v93
    %v4823 = vpop.f32.mrf.mxu0
    %v4824 = vadd.f32 0.0, %v4823
    %v4825 = vpop.f32.mrf.mxu0
    %4826 = vmatprep.mubr.f32.mxu0 0.0
    %4827 = vmatmul.mubr.f32.gmra.mxu0 %v94
    %v4828 = vpop.f32.mrf.mxu0
    %v4829 = vadd.f32 0.0, %v4828
    %v4830 = vpop.f32.mrf.mxu0
    %4831 = vmatprep.mubr.f32.mxu0 0.0
    %4832 = vmatmul.mubr.f32.gmra.mxu0 %v95
    %v4833 = vpop.f32.mrf.mxu0
    %v4834 = vadd.f32 0.0, %v4833
    %v4835 = vpop.f32.mrf.mxu0
    %4836 = vmatprep.mubr.f32.mxu0 0.0
    %4837 = vmatmul.mubr.f32.gmra.mxu0 %v96
    %v4838 = vpop.f32.mrf.mxu0
    %v4839 = vadd.f32 0.0, %v4838
    %v4840 = vpop.f32.mrf.mxu0
    %4841 = vmatprep.mubr.f32.mxu0 0.0
    %4842 = vmatmul.mubr.f32.gmra.mxu0 %v97
    %v4843 = vpop.f32.mrf.mxu0
    %v4844 = vadd.f32 0.0, %v4843
    %v4845 = vpop.f32.mrf.mxu0
    %4846 = vmatprep.mubr.f32.mxu0 0.0
    %4847 = vmatmul.mubr.f32.gmra.mxu0 %v98
    %v4848 = vpop.f32.mrf.mxu0
    %v4849 = vadd.f32 0.0, %v4848
    %v4850 = vpop.f32.mrf.mxu0
    %4851 = vmatprep.mubr.f32.mxu0 0.0
    %4852 = vmatmul.mubr.f32.gmra.mxu0 %v99
    %v4853 = vpop.f32.mrf.mxu0
    %v4854 = vadd.f32 0.0, %v4853
    %v4855 = vpop.f32.mrf.mxu0
    %4856 = vmatprep.mubr.f32.mxu0 0.0
    %4857 = vmatmul.mubr.f32.gmra.mxu0 %v100
    %v4858 = vpop.f32.mrf.mxu0
    %v4859 = vadd.f32 0.0, %v4858
    %v4860 = vpop.f32.mrf.mxu0
    %4861 = vmatprep.mubr.f32.mxu0 0.0
    %4862 = vmatmul.mubr.f32.gmra.mxu0 %v101
    %v4863 = vpop.f32.mrf.mxu0
    %v4864 = vadd.f32 0.0, %v4863
    %v4865 = vpop.f32.mrf.mxu0
    %4866 = vmatprep.mubr.f32.mxu0 0.0
    %4867 = vmatmul.mubr.f32.gmra.mxu0 %v102
    %v4868 = vpop.f32.mrf.mxu0
    %v4869 = vadd.f32 0.0, %v4868
    %v4870 = vpop.f32.mrf.mxu0
    %4871 = vmatprep.mubr.f32.mxu0 0.0
    %4872 = vmatmul.mubr.f32.gmra.mxu0 %v103
    %v4873 = vpop.f32.mrf.mxu0
    %v4874 = vadd.f32 0.0, %v4873
    %v4875 = vpop.f32.mrf.mxu0
    %4876 = vmatprep.mubr.f32.mxu0 0.0
    %4877 = vmatmul.mubr.f32.gmra.mxu0 %v104
    %v4878 = vpop.f32.mrf.mxu0
    %v4879 = vadd.f32 0.0, %v4878
    %v4880 = vpop.f32.mrf.mxu0
    %4881 = vmatprep.mubr.f32.mxu0 0.0
    %4882 = vmatmul.mubr.f32.gmra.mxu0 %v105
    %v4883 = vpop.f32.mrf.mxu0
    %v4884 = vadd.f32 0.0, %v4883
    %v4885 = vpop.f32.mrf.mxu0
    %4886 = vmatprep.mubr.f32.mxu0 0.0
    %4887 = vmatmul.mubr.f32.gmra.mxu0 %v106
    %v4888 = vpop.f32.mrf.mxu0
    %v4889 = vadd.f32 0.0, %v4888
    %v4890 = vpop.f32.mrf.mxu0
    %4891 = vmatprep.mubr.f32.mxu0 0.0
    %4892 = vmatmul.mubr.f32.gmra.mxu0 %v107
    %v4893 = vpop.f32.mrf.mxu0
    %v4894 = vadd.f32 0.0, %v4893
    %v4895 = vpop.f32.mrf.mxu0
    %4896 = vdwg.mxu0
    %4897 = vmatprep.subr.mxu0 0.0
    %4898 = vmatpush1.msra.mxu0 %v4894
    %4899 = vmatprep.subr.mxu0 0.0
    %4900 = vmatpush1.msra.mxu0 %v4889
    %4901 = vmatprep.subr.mxu0 0.0
    %4902 = vmatpush1.msra.mxu0 %v4884
    %4903 = vmatprep.subr.mxu0 0.0
    %4904 = vmatpush1.msra.mxu0 %v4879
    %4905 = vmatprep.subr.mxu0 0.0
    %4906 = vmatpush1.msra.mxu0 %v4874
    %4907 = vmatprep.subr.mxu0 0.0
    %4908 = vmatpush1.msra.mxu0 %v4869
    %4909 = vmatprep.subr.mxu0 0.0
    %4910 = vmatpush1.msra.mxu0 %v4864
    %4911 = vmatprep.subr.mxu0 0.0
    %4912 = vmatpush1.msra.mxu0 %v4859
    %4913 = vmatprep.subr.mxu0 0.0
    %4914 = vmatpush1.msra.mxu0 %v4854
    %4915 = vmatprep.subr.mxu0 0.0
    %4916 = vmatpush1.msra.mxu0 %v4849
    %4917 = vmatprep.subr.mxu0 0.0
    %4918 = vmatpush1.msra.mxu0 %v4844
    %4919 = vmatprep.subr.mxu0 0.0
    %4920 = vmatpush1.msra.mxu0 %v4839
    %4921 = vmatprep.subr.mxu0 0.0
    %4922 = vmatpush1.msra.mxu0 %v4834
    %4923 = vmatprep.subr.mxu0 0.0
    %4924 = vmatpush1.msra.mxu0 %v4829
    %4925 = vmatprep.subr.mxu0 0.0
    %4926 = vmatpush1.msra.mxu0 %v4824
    %4927 = vmatprep.subr.mxu0 0.0
    %4928 = vmatpush1.msra.mxu0 %v4819
    %4929 = vmatprep.subr.mxu0 0.0
    %4930 = vmatpush2.msra.mxu0 0.0
    %4931 = vmatprep.subr.mxu0 0.0
    %4932 = vmatpush2.msra.mxu0 0.0
    %4933 = vmatprep.subr.mxu0 0.0
    %4934 = vmatpush2.msra.mxu0 0.0
    %4935 = vmatprep.subr.mxu0 0.0
    %4936 = vmatpush2.msra.mxu0 0.0
    %4937 = vmatprep.subr.mxu0 0.0
    %4938 = vmatpush2.msra.mxu0 0.0
    %4939 = vmatprep.subr.mxu0 0.0
    %4940 = vmatpush2.msra.mxu0 0.0
    %4941 = vmatprep.subr.mxu0 0.0
    %4942 = vmatpush2.msra.mxu0 0.0
    %4943 = vmatprep.subr.mxu0 0.0
    %4944 = vmatpush2.msra.mxu0 0.0
    %4945 = vmatprep.subr.mxu0 0.0
    %4946 = vmatpush2.msra.mxu0 0.0
    %4947 = vmatprep.subr.mxu0 0.0
    %4948 = vmatpush2.msra.mxu0 0.0
    %4949 = vmatprep.subr.mxu0 0.0
    %4950 = vmatpush2.msra.mxu0 0.0
    %4951 = vmatprep.subr.mxu0 0.0
    %4952 = vmatpush2.msra.mxu0 0.0
    %4953 = vmatprep.subr.mxu0 0.0
    %4954 = vmatpush2.msra.mxu0 0.0
    %4955 = vmatprep.subr.mxu0 0.0
    %4956 = vmatpush2.msra.mxu0 0.0
    %4957 = vmatprep.subr.mxu0 0.0
    %4958 = vmatpush2.msra.mxu0 0.0
    %4959 = vmatprep.subr.mxu0 0.0
    %4960 = vmatpush2.msra.mxu0 0.0
    %4961 = vmatprep.mubr.f32.mxu0 0.0
    %4962 = vmatmul.mubr.f32.gmra.mxu0 %v76
    %v4963 = vpop.f32.mrf.mxu0
    %v4964 = vadd.f32 0.0, %v4963
    %v4965 = vpop.f32.mrf.mxu0
    %4966 = vmatprep.mubr.f32.mxu0 0.0
    %4967 = vmatmul.mubr.f32.gmra.mxu0 %v77
    %v4968 = vpop.f32.mrf.mxu0
    %v4969 = vadd.f32 0.0, %v4968
    %v4970 = vpop.f32.mrf.mxu0
    %4971 = vmatprep.mubr.f32.mxu0 0.0
    %4972 = vmatmul.mubr.f32.gmra.mxu0 %v78
    %v4973 = vpop.f32.mrf.mxu0
    %v4974 = vadd.f32 0.0, %v4973
    %v4975 = vpop.f32.mrf.mxu0
    %4976 = vmatprep.mubr.f32.mxu0 0.0
    %4977 = vmatmul.mubr.f32.gmra.mxu0 %v79
    %v4978 = vpop.f32.mrf.mxu0
    %v4979 = vadd.f32 0.0, %v4978
    %v4980 = vpop.f32.mrf.mxu0
    %4981 = vmatprep.mubr.f32.mxu0 0.0
    %4982 = vmatmul.mubr.f32.gmra.mxu0 %v80
    %v4983 = vpop.f32.mrf.mxu0
    %v4984 = vadd.f32 0.0, %v4983
    %v4985 = vpop.f32.mrf.mxu0
    %4986 = vmatprep.mubr.f32.mxu0 0.0
    %4987 = vmatmul.mubr.f32.gmra.mxu0 %v81
    %v4988 = vpop.f32.mrf.mxu0
    %v4989 = vadd.f32 0.0, %v4988
    %v4990 = vpop.f32.mrf.mxu0
    %4991 = vmatprep.mubr.f32.mxu0 0.0
    %4992 = vmatmul.mubr.f32.gmra.mxu0 %v82
    %v4993 = vpop.f32.mrf.mxu0
    %v4994 = vadd.f32 0.0, %v4993
    %v4995 = vpop.f32.mrf.mxu0
    %4996 = vmatprep.mubr.f32.mxu0 0.0
    %4997 = vmatmul.mubr.f32.gmra.mxu0 %v83
    %v4998 = vpop.f32.mrf.mxu0
    %v4999 = vadd.f32 0.0, %v4998
    %v5000 = vpop.f32.mrf.mxu0
    %5001 = vmatprep.mubr.f32.mxu0 0.0
    %5002 = vmatmul.mubr.f32.gmra.mxu0 %v84
    %v5003 = vpop.f32.mrf.mxu0
    %v5004 = vadd.f32 0.0, %v5003
    %v5005 = vpop.f32.mrf.mxu0
    %5006 = vmatprep.mubr.f32.mxu0 0.0
    %5007 = vmatmul.mubr.f32.gmra.mxu0 %v85
    %v5008 = vpop.f32.mrf.mxu0
    %v5009 = vadd.f32 0.0, %v5008
    %v5010 = vpop.f32.mrf.mxu0
    %5011 = vmatprep.mubr.f32.mxu0 0.0
    %5012 = vmatmul.mubr.f32.gmra.mxu0 %v86
    %v5013 = vpop.f32.mrf.mxu0
    %v5014 = vadd.f32 0.0, %v5013
    %v5015 = vpop.f32.mrf.mxu0
    %5016 = vmatprep.mubr.f32.mxu0 0.0
    %5017 = vmatmul.mubr.f32.gmra.mxu0 %v87
    %v5018 = vpop.f32.mrf.mxu0
    %v5019 = vadd.f32 0.0, %v5018
    %v5020 = vpop.f32.mrf.mxu0
    %5021 = vmatprep.mubr.f32.mxu0 0.0
    %5022 = vmatmul.mubr.f32.gmra.mxu0 %v88
    %v5023 = vpop.f32.mrf.mxu0
    %v5024 = vadd.f32 0.0, %v5023
    %v5025 = vpop.f32.mrf.mxu0
    %5026 = vmatprep.mubr.f32.mxu0 0.0
    %5027 = vmatmul.mubr.f32.gmra.mxu0 %v89
    %v5028 = vpop.f32.mrf.mxu0
    %v5029 = vadd.f32 0.0, %v5028
    %v5030 = vpop.f32.mrf.mxu0
    %5031 = vmatprep.mubr.f32.mxu0 0.0
    %5032 = vmatmul.mubr.f32.gmra.mxu0 %v90
    %v5033 = vpop.f32.mrf.mxu0
    %v5034 = vadd.f32 0.0, %v5033
    %v5035 = vpop.f32.mrf.mxu0
    %5036 = vmatprep.mubr.f32.mxu0 0.0
    %5037 = vmatmul.mubr.f32.gmra.mxu0 %v91
    %v5038 = vpop.f32.mrf.mxu0
    %v5039 = vadd.f32 0.0, %v5038
    %v5040 = vpop.f32.mrf.mxu0
    %5041 = vdwg.mxu0
    %v5042 = vsub.f32 %v2578, %v4964
    %v5043 = vsub.f32 %v2583, %v4969
    %v5044 = vsub.f32 %v2588, %v4974
    %v5045 = vsub.f32 %v2593, %v4979
    %v5046 = vsub.f32 %v2598, %v4984
    %v5047 = vsub.f32 %v2603, %v4989
    %v5048 = vsub.f32 %v2608, %v4994
    %v5049 = vsub.f32 %v2613, %v4999
    %v5050 = vsub.f32 %v2618, %v5004
    %v5051 = vsub.f32 %v2623, %v5009
    %v5052 = vsub.f32 %v2628, %v5014
    %v5053 = vsub.f32 %v2633, %v5019
    %v5054 = vsub.f32 %v2638, %v5024
    %v5055 = vsub.f32 %v2643, %v5029
    %v5056 = vsub.f32 %v2648, %v5034
    %v5057 = vsub.f32 %v2653, %v5039
    %s5058 = scalar_lea.vmem [#allocation10], 512
    %5059 = vst [vmem:[%s5058] sm:$0xff] %v5042
    %5060 = vst [vmem:[%s5058 + $0x8] sm:$0xff] %v5043
    %5061 = vst [vmem:[%s5058 + $0x10] sm:$0xff] %v5044
    %5062 = vst [vmem:[%s5058 + $0x18] sm:$0xff] %v5045
    %5063 = vst [vmem:[%s5058 + $0x20] sm:$0xff] %v5046
    %5064 = vst [vmem:[%s5058 + $0x28] sm:$0xff] %v5047
    %5065 = vst [vmem:[%s5058 + $0x30] sm:$0xff] %v5048
    %5066 = vst [vmem:[%s5058 + $0x38] sm:$0xff] %v5049
    %5067 = vst [vmem:[%s5058 + $0x40] sm:$0xff] %v5050
    %5068 = vst [vmem:[%s5058 + $0x48] sm:$0xff] %v5051
    %5069 = vst [vmem:[%s5058 + $0x50] sm:$0xff] %v5052
    %5070 = vst [vmem:[%s5058 + $0x58] sm:$0xff] %v5053
    %5071 = vst [vmem:[%s5058 + $0x60] sm:$0xff] %v5054
    %5072 = vst [vmem:[%s5058 + $0x68] sm:$0xff] %v5055
    %5073 = vst [vmem:[%s5058 + $0x70] sm:$0xff] %v5056
    %5074 = vst [vmem:[%s5058 + $0x78] sm:$0xff] %v5057
    %v5075 = vsub.f32 %v2433, %v4819
    %v5076 = vsub.f32 %v2438, %v4824
    %v5077 = vsub.f32 %v2443, %v4829
    %v5078 = vsub.f32 %v2448, %v4834
    %v5079 = vsub.f32 %v2453, %v4839
    %v5080 = vsub.f32 %v2458, %v4844
    %v5081 = vsub.f32 %v2463, %v4849
    %v5082 = vsub.f32 %v2468, %v4854
    %v5083 = vsub.f32 %v2473, %v4859
    %v5084 = vsub.f32 %v2478, %v4864
    %v5085 = vsub.f32 %v2483, %v4869
    %v5086 = vsub.f32 %v2488, %v4874
    %v5087 = vsub.f32 %v2493, %v4879
    %v5088 = vsub.f32 %v2498, %v4884
    %v5089 = vsub.f32 %v2503, %v4889
    %v5090 = vsub.f32 %v2508, %v4894
    %s5091 = scalar_lea.vmem [#allocation11], 512
    %5092 = vst [vmem:[%s5091] sm:$0xff] %v5075
    %5093 = vst [vmem:[%s5091 + $0x8] sm:$0xff] %v5076
    %5094 = vst [vmem:[%s5091 + $0x10] sm:$0xff] %v5077
    %5095 = vst [vmem:[%s5091 + $0x18] sm:$0xff] %v5078
    %5096 = vst [vmem:[%s5091 + $0x20] sm:$0xff] %v5079
    %5097 = vst [vmem:[%s5091 + $0x28] sm:$0xff] %v5080
    %5098 = vst [vmem:[%s5091 + $0x30] sm:$0xff] %v5081
    %5099 = vst [vmem:[%s5091 + $0x38] sm:$0xff] %v5082
    %5100 = vst [vmem:[%s5091 + $0x40] sm:$0xff] %v5083
    %5101 = vst [vmem:[%s5091 + $0x48] sm:$0xff] %v5084
    %5102 = vst [vmem:[%s5091 + $0x50] sm:$0xff] %v5085
    %5103 = vst [vmem:[%s5091 + $0x58] sm:$0xff] %v5086
    %5104 = vst [vmem:[%s5091 + $0x60] sm:$0xff] %v5087
    %5105 = vst [vmem:[%s5091 + $0x68] sm:$0xff] %v5088
    %5106 = vst [vmem:[%s5091 + $0x70] sm:$0xff] %v5089
    %5107 = vst [vmem:[%s5091 + $0x78] sm:$0xff] %v5090
    %s5108 = scalar_lea.vmem [#allocation10], 640
    %5109 = vst [vmem:[%s5108] sm:$0xff] %v4964
    %5110 = vst [vmem:[%s5108 + $0x8] sm:$0xff] %v4969
    %5111 = vst [vmem:[%s5108 + $0x10] sm:$0xff] %v4974
    %5112 = vst [vmem:[%s5108 + $0x18] sm:$0xff] %v4979
    %5113 = vst [vmem:[%s5108 + $0x20] sm:$0xff] %v4984
    %5114 = vst [vmem:[%s5108 + $0x28] sm:$0xff] %v4989
    %5115 = vst [vmem:[%s5108 + $0x30] sm:$0xff] %v4994
    %5116 = vst [vmem:[%s5108 + $0x38] sm:$0xff] %v4999
    %5117 = vst [vmem:[%s5108 + $0x40] sm:$0xff] %v5004
    %5118 = vst [vmem:[%s5108 + $0x48] sm:$0xff] %v5009
    %5119 = vst [vmem:[%s5108 + $0x50] sm:$0xff] %v5014
    %5120 = vst [vmem:[%s5108 + $0x58] sm:$0xff] %v5019
    %5121 = vst [vmem:[%s5108 + $0x60] sm:$0xff] %v5024
    %5122 = vst [vmem:[%s5108 + $0x68] sm:$0xff] %v5029
    %5123 = vst [vmem:[%s5108 + $0x70] sm:$0xff] %v5034
    %5124 = vst [vmem:[%s5108 + $0x78] sm:$0xff] %v5039
    %s5125 = scalar_lea.vmem [#allocation11], 640
    %5126 = vst [vmem:[%s5125] sm:$0xff] %v4819
    %5127 = vst [vmem:[%s5125 + $0x8] sm:$0xff] %v4824
    %5128 = vst [vmem:[%s5125 + $0x10] sm:$0xff] %v4829
    %5129 = vst [vmem:[%s5125 + $0x18] sm:$0xff] %v4834
    %5130 = vst [vmem:[%s5125 + $0x20] sm:$0xff] %v4839
    %5131 = vst [vmem:[%s5125 + $0x28] sm:$0xff] %v4844
    %5132 = vst [vmem:[%s5125 + $0x30] sm:$0xff] %v4849
    %5133 = vst [vmem:[%s5125 + $0x38] sm:$0xff] %v4854
    %5134 = vst [vmem:[%s5125 + $0x40] sm:$0xff] %v4859
    %5135 = vst [vmem:[%s5125 + $0x48] sm:$0xff] %v4864
    %5136 = vst [vmem:[%s5125 + $0x50] sm:$0xff] %v4869
    %5137 = vst [vmem:[%s5125 + $0x58] sm:$0xff] %v4874
    %5138 = vst [vmem:[%s5125 + $0x60] sm:$0xff] %v4879
    %5139 = vst [vmem:[%s5125 + $0x68] sm:$0xff] %v4884
    %5140 = vst [vmem:[%s5125 + $0x70] sm:$0xff] %v4889
    %5141 = vst [vmem:[%s5125 + $0x78] sm:$0xff] %v4894
    // Predicated region
    $region34: #{tpu_custom_call.1} parent=1 // pred_check
      _
    $region35: #{tpu_custom_call.1} parent=1 // pred_check_branch
      %5143 = sbr.rel (0) target = $region37
    $region36: #{tpu_custom_call.1} parent=1 // pred_region
      %s5145 = ssub.s32 12288, 12288
      %5146 = vsyncadd [#allocation4], %s5145
      %s5147 = sshll.u32 [#allocation10], 4
      %s5148 = int_to_ptr.vmem [resolvable:$true] %s5147
      %5153 = dma.vmem_to_hbm [thread:$0]  %s5148, 12288, %s4, [#allocation4], 128, 128, 8
    $region37: #{tpu_custom_call.1} parent=1 // pred_fallthru
      _
    // Predicated region
    $region38: #{tpu_custom_call.1} parent=1 // pred_check
      _
    $region39: #{tpu_custom_call.1} parent=1 // pred_check_branch
      %5155 = sbr.rel (0) target = $region41
    $region40: #{tpu_custom_call.1} parent=1 // pred_region
      %s5157 = ssub.s32 12288, 12288
      %5158 = vsyncadd [#allocation12], %s5157
      %s5159 = sshll.u32 [#allocation11], 4
      %s5160 = int_to_ptr.vmem [resolvable:$true] %s5159
      %5165 = dma.vmem_to_hbm [thread:$0]  %s5160, 12288, %s5, [#allocation12], 128, 128, 8
    $region41: #{tpu_custom_call.1} parent=1 // pred_fallthru
      _
    // Predicated region
    $region42: #{tpu_custom_call.1} parent=1 // pred_check
      _
    $region43: #{tpu_custom_call.1} parent=1 // pred_check_branch
      %5167 = sbr.rel (0) target = $region45
    $region44: #{tpu_custom_call.1} parent=1 // pred_region
      %5168 = dma.done [#allocation4], 12288
    $region45: #{tpu_custom_call.1} parent=1 // pred_fallthru
      _
    // Predicated region
    $region46: #{tpu_custom_call.1} parent=1 // pred_check
      _
    $region47: #{tpu_custom_call.1} parent=1 // pred_check_branch
      %5170 = sbr.rel (0) target = $region49
    $region48: #{tpu_custom_call.1} parent=1 // pred_region
      %5171 = dma.done [#allocation12], 12288
    $region49: #{tpu_custom_call.1} parent=1 // pred_fallthru
      _
    %5172 = vsyncpa [#allocation3], 1
    %5173 = vsyncpa [#allocation6], 1
    %5174 = vsyncpa [#allocation9], 1
    %5175 = vsyncpa [#allocation4], 1
    %5176 = vsyncpa [#allocation12], 1

</llo_original>
